<compile_context>
chip_gen: v5e
topology: v5e:2x2
jax: 0.10.0
libtpu: 0.0.40
codegen_flags: <defaults>
</compile_context>

<pallas_src>
import numpy as np
import jax
import jax.numpy as jnp
from jax.experimental import pallas as pl
from jax.experimental.pallas import tpu as pltpu

KH = KW = 5            # conv kernel size
PAD = 2                # padding = 5 // 2
C1 = C2 = C3 = 12      # conv output channels
NUM_CLASSES = 10
S2 = 8                 # spatial size after conv2 / conv3 (8 x 8)
NPOS = S2 * S2         # 64 spatial positions feeding the FC
PW = 16                # padded W of the scratch planes (reads only touch [0, 12))
KTAP = KH * KW * C1    # 300: im2col K for conv2 / conv3


# ----------------------------------------------------------------------------
# The fused kernel.
#   inputs : p1   (4*B*64, 75) bf16   conv1 patches, rows ordered (ph, pw, b, u, v)
#            w1   (75, 12) bf16, b1 (1, 12) f32
#            w2   (300, 12) bf16, b2 (1, 12) f32     rows (i*5+j)*12 + cin
#            w3   (300, 12) bf16, b3 (1, 12) f32
#            wfc  (12, 640) bf16                      cols hw*10 + n
#            mask (B*64, 640) f32   [q//10 == r%64]
#            sel  (B, B*64) bf16    [r//64 == b]
#            fold (640, 10) bf16    [q%10 == n]
#            bfc  (1, 10) f32
#   output : logits (B, 10) f32
#   scratch: ph    (4, B, 10, 16, 12) f32   zero-bordered stride-2 phase planes
#            z3    (B, 12, 16, 12) f32      zero-bordered conv3 input
#            patch (B*64, 300) f32          shared im2col patch (conv2 & conv3)
# ----------------------------------------------------------------------------
def _lenet_kernel(p1_ref, w1_ref, b1_ref, w2_ref, b2_ref, w3_ref, b3_ref,
                  wfc_ref, mask_ref, sel_ref, fold_ref, bfc_ref,
                  out_ref, ph_ref, z3_ref, patch_ref):
    f32 = jnp.float32
    bf16 = jnp.bfloat16
    B = z3_ref.shape[0]
    nblk = B * NPOS

    def sigmoid(x):
        # exact reciprocal (review correctness note); exp issues on the EUP.
        return 1.0 / (1.0 + jnp.exp(-x))

    # ---------------- conv1: one MXU matmul on pre-gathered patches ----------
    acc1 = jnp.dot(p1_ref[...], w1_ref[...], preferred_element_type=f32)
    h1 = sigmoid(acc1 + b1_ref[...])                       # (4*B*64, 12) f32

    # ------ conv2 input: 4 stride-2 phase planes, border-only zero fill ------
    # plane[2*ph+pw][b, 1+u, 1+v, c] = H1[b, 2u+ph, 2v+pw, c]; conv2's taps
    # read H, W in [0, 10), so only the 1-wide borders at index 0 and 9 need
    # zeros (W columns >= 10 are never read).
    ph_ref[:, :, 0:1, :, :] = jnp.zeros((4, B, 1, PW, C1), f32)
    ph_ref[:, :, S2 + 1:S2 + 2, :, :] = jnp.zeros((4, B, 1, PW, C1), f32)
    ph_ref[:, :, :, 0:1, :] = jnp.zeros((4, B, S2 + 2, 1, C1), f32)
    ph_ref[:, :, :, S2 + 1:S2 + 2, :] = jnp.zeros((4, B, S2 + 2, 1, C1), f32)
    for k in range(4):
        blk = h1[k * nblk:(k + 1) * nblk, :].reshape(B, S2, S2, C1)
        ph_ref[k, :, 1:1 + S2, 1:1 + S2, :] = blk

    # ---------------- conv2 (stride 2): im2col scratch + ONE matmul ----------
    for i in range(KH):
        di = i - PAD
        h0 = 1 + di // 2                                   # 0, 1 or 2
        for j in range(KW):
            dj = j - PAD
            w0 = 1 + dj // 2                               # 0, 1 or 2
            k = 2 * (di % 2) + (dj % 2)                    # phase plane index
            slab = ph_ref[k, :, h0:h0 + S2, w0:w0 + S2, :]          # (B,8,8,12)
            c0 = (i * KW + j) * C1
            patch_ref[:, c0:c0 + C1] = slab.reshape(nblk, C1)
    acc2 = jnp.dot(patch_ref[...].astype(bf16), w2_ref[...],
                   preferred_element_type=f32)
    h2 = sigmoid(acc2 + b2_ref[...])                       # (B*64, 12), rows (b,h,w)

    # ------ conv3 input plane, border-only zero fill --------------------------
    z3_ref[:, 0:2, :, :] = jnp.zeros((B, 2, PW, C2), f32)
    z3_ref[:, S2 + 2:S2 + 4, :, :] = jnp.zeros((B, 2, PW, C2), f32)
    z3_ref[:, :, 0:2, :] = jnp.zeros((B, S2 + 4, 2, C2), f32)
    z3_ref[:, :, S2 + 2:S2 + 4, :] = jnp.zeros((B, S2 + 4, 2, C2), f32)
    z3_ref[:, 2:2 + S2, 2:2 + S2, :] = h2.reshape(B, S2, S2, C2)

    # ---------------- conv3 (stride 1): im2col scratch + ONE matmul ----------
    for i in range(KH):
        for j in range(KW):
            slab = z3_ref[:, i:i + S2, j:j + S2, :]                 # (B,8,8,12)
            c0 = (i * KW + j) * C2
            patch_ref[:, c0:c0 + C2] = slab.reshape(nblk, C2)
    acc3 = jnp.dot(patch_ref[...].astype(bf16), w3_ref[...],
                   preferred_element_type=f32)
    h3 = sigmoid(acc3 + b3_ref[...])                       # (B*64, 12), rows (b,h,w)

    # ---------------- FC with preloaded block-mask / select / fold -----------
    # t[r, hw*10+n] = sum_c h3[r, c] * Wfc[n, c*64+hw]; only the hw == r%64
    # block is valid (mask), rows are summed per batch element (sel matmul)
    # and the 64 groups of 10 columns are folded (fold matmul).  No in-kernel
    # iota / integer division; selection matrices are exact in bf16.
    t = jnp.dot(h3.astype(bf16), wfc_ref[...], preferred_element_type=f32)
    tm = (t * mask_ref[...]).astype(bf16)                  # (B*64, 640)
    per_b = jnp.dot(sel_ref[...], tm, preferred_element_type=f32)     # (B, 640)
    out_ref[...] = (jnp.dot(per_b.astype(bf16), fold_ref[...],
                            preferred_element_type=f32) + bfc_ref[...])


# ----------------------------------------------------------------------------
# One-time weight layout preparation (runs eagerly, tiny tensors).
# ----------------------------------------------------------------------------
def prepare_lenet(params):
    w1, w2, w3, wfc = params["w1"], params["w2"], params["w3"], params["wfc"]
    co1, ci1, kh, kw = w1.shape
    return {
        # conv1 as a single (Cin*kh*kw, Cout) matmul operand (K on sublanes).
        "w1": w1.reshape(co1, ci1 * kh * kw).T.astype(jnp.bfloat16),
        "b1": params["b1"].reshape(1, -1).astype(jnp.float32),
        # conv2/conv3 as ONE (kh*kw*Cin, Cout) im2col weight, row = (i*kw+j)*Cin+ci.
        "w2": jnp.transpose(w2, (2, 3, 1, 0)).reshape(
            kh * kw * w2.shape[1], w2.shape[0]).astype(jnp.bfloat16),
        "b2": params["b2"].reshape(1, -1).astype(jnp.float32),
        "w3": jnp.transpose(w3, (2, 3, 1, 0)).reshape(
            kh * kw * w3.shape[1], w3.shape[0]).astype(jnp.bfloat16),
        "b3": params["b3"].reshape(1, -1).astype(jnp.float32),
        # FC weight regrouped per spatial position: [c, hw*num_classes + n],
        # matching torch's (c, h, w) flatten order of the conv output.
        "wfc": jnp.transpose(wfc.reshape(wfc.shape[0], C3, NPOS),
                             (1, 2, 0)).reshape(C3, NPOS * wfc.shape[0]
                                                ).astype(jnp.bfloat16),
        "bfc": params["bfc"].reshape(1, -1).astype(jnp.float32),
    }


def _fc_constants(B):
    """Precomputed FC block-mask / batch-select / column-fold (trace-time consts)."""
    nblk = B * NPOS
    q = NPOS * NUM_CLASSES
    r = np.arange(nblk)
    c = np.arange(q)
    mask = jnp.asarray(((r[:, None] % NPOS) == (c[None, :] // NUM_CLASSES)
                        ).astype(np.float32), dtype=jnp.float32)        # (nblk, 640)
    sel = jnp.asarray((np.arange(B)[:, None] == (r[None, :] // NPOS)
                       ).astype(np.float32), dtype=jnp.bfloat16)        # (B, nblk)
    fold = jnp.asarray(((c[:, None] % NUM_CLASSES) == np.arange(NUM_CLASSES)[None, :]
                        ).astype(np.float32), dtype=jnp.bfloat16)       # (640, 10)
    return mask, sel, fold


def _conv1_patches(x):
    """im2col for conv1 only (depends only on the network input).

    Returns (4*B*(Ho//2)*(Wo//2), Cin*kh*kw) bf16 patches whose rows are ordered
    (ph, pw, b, u, v) with output pixel (h1, w1) = (2u+ph, 2v+pw), so the kernel
    can phase-split conv1's output with contiguous row blocks.
    """
    B, C, H, W = x.shape
    xp = jnp.pad(x, ((0, 0), (0, 0), (PAD, PAD), (PAD, PAD)))
    Ho = (H + 2 * PAD - KH) // 2 + 1       # 16
    Wo = (W + 2 * PAD - KW) // 2 + 1       # 16
    cols = []
    for i in range(KH):
        for j in range(KW):
            cols.append(xp[:, :, i:i + 2 * Ho:2, j:j + 2 * Wo:2])
    cols = jnp.stack(cols, 0).reshape(KH, KW, B, C, Ho, Wo)
    cols = jnp.transpose(cols, (2, 4, 5, 3, 0, 1))          # (B, Ho, Wo, C, kh, kw)
    cols = cols.reshape(B, Ho // 2, 2, Wo // 2, 2, C * KH * KW)
    cols = jnp.transpose(cols, (2, 4, 0, 1, 3, 5))          # (ph, pw, B, u, v, K)
    return cols.reshape(4 * B * (Ho // 2) * (Wo // 2),
                        C * KH * KW).astype(jnp.bfloat16)


def lenet_forward(prep, x):
    """x: (B, 3, 32, 32) NCHW -> logits (B, 10). Single fused Pallas kernel."""
    B = x.shape[0]
    nblk = B * NPOS
    p1 = _conv1_patches(x)
    mask, sel, fold = _fc_constants(B)

    flops = 2 * (4 * nblk * 75 * C1                     # conv1
                 + nblk * KTAP * C2 + nblk * KTAP * C3  # conv2 / conv3
                 + nblk * C3 * NPOS * NUM_CLASSES       # fc expand
                 + B * nblk * NPOS * NUM_CLASSES        # row select
                 + B * NPOS * NUM_CLASSES * NUM_CLASSES)
    bytes_accessed = (p1.size * 2 + mask.size * 4 + sel.size * 2 + fold.size * 2
                      + (75 + 2 * KTAP) * 12 * 2 + C3 * NPOS * NUM_CLASSES * 2
                      + B * NUM_CLASSES * 4 + 4 * 12 * 4 + NUM_CLASSES * 4)

    return pl.pallas_call(
        _lenet_kernel,
        out_shape=jax.ShapeDtypeStruct((B, NUM_CLASSES), jnp.float32),
        scratch_shapes=[
            # conv2's stride-2 phase planes: [2*ph+pw, b, 1+u, 1+v, c]
            pltpu.VMEM((4, B, S2 + 2, PW, C1), jnp.float32),
            # conv3's zero-bordered input: [b, 2+h, 2+w, c]
            pltpu.VMEM((B, S2 + 4, PW, C2), jnp.float32),
            # shared im2col patch matrix (conv2 then conv3)
            pltpu.VMEM((nblk, KTAP), jnp.float32),
        ],
        cost_estimate=pl.CostEstimate(flops=flops,
                                      transcendentals=6 * nblk * C1,
                                      bytes_accessed=bytes_accessed),
        # NOTE: no grid needed at this size.  If batch is scaled up, tile the
        # patch / output rows with a grid axis marked "parallel" (v7x has 2 TCs
        # and only 64 MiB VMEM) and raise vmem_limit_bytes via
        # pltpu.CompilerParams accordingly.
    )(p1, prep["w1"], prep["b1"], prep["w2"], prep["b2"],
      prep["w3"], prep["b3"], prep["wfc"], mask, sel, fold, prep["bfc"])


# ----------------------------------------------------------------------------
# Plain-JAX f32 reference (straightforward im2col path) for a sanity check.
# ----------------------------------------------------------------------------
def _im2col_ref(x, kh, kw, stride, pad):
    x = jnp.pad(x, ((0, 0), (0, 0), (pad, pad), (pad, pad)))
    B, C, Hp, Wp = x.shape
    Ho = (Hp - kh) // stride + 1
    Wo = (Wp - kw) // stride + 1
    cols = []
    for i in range(kh):
        for j in range(kw):
            cols.append(x[:, :, i:i + Ho * stride:stride, j:j + Wo * stride:stride])
    cols = jnp.stack(cols, 0).reshape(kh, kw, B, C, Ho, Wo)
    cols = jnp.transpose(cols, (2, 4, 5, 3, 0, 1))
    return cols.reshape(B * Ho * Wo, C * kh * kw), (B, Ho, Wo)


def _conv_sigmoid_ref(x, w, b, stride, pad):
    cout = w.shape[0]
    patches, (B, Ho, Wo) = _im2col_ref(x, w.shape[2], w.shape[3], stride, pad)
    out = patches @ w.reshape(cout, -1).T + b
    out = 1.0 / (1.0 + jnp.exp(-out))
    return jnp.transpose(out.reshape(B, Ho, Wo, cout), (0, 3, 1, 2))


def lenet_reference(params, x):
    out = _conv_sigmoid_ref(x, params["w1"], params["b1"], 2, PAD)
    out = _conv_sigmoid_ref(out, params["w2"], params["b2"], 2, PAD)
    out = _conv_sigmoid_ref(out, params["w3"], params["b3"], 1, PAD)
    flat = out.reshape(out.shape[0], -1)
    return flat @ params["wfc"].T + params["bfc"]


def init_params(key, channel=3, num_classes=NUM_CLASSES):
    ks = jax.random.split(key, 8)
    s = 0.05
    return {
        "w1": jax.random.normal(ks[0], (C1, channel, KH, KW), jnp.float32) * s,
        "b1": jax.random.normal(ks[1], (C1,), jnp.float32) * s,
        "w2": jax.random.normal(ks[2], (C2, C1, KH, KW), jnp.float32) * s,
        "b2": jax.random.normal(ks[3], (C2,), jnp.float32) * s,
        "w3": jax.random.normal(ks[4], (C3, C2, KH, KW), jnp.float32) * s,
        "b3": jax.random.normal(ks[5], (C3,), jnp.float32) * s,
        "wfc": jax.random.normal(ks[6], (num_classes, C3 * NPOS), jnp.float32) * s,
        "bfc": jax.random.normal(ks[7], (num_classes,), jnp.float32) * s,
    }


if __name__ == "__main__":
    key = jax.random.PRNGKey(0)
    pkey, xkey = jax.random.split(key)
    params = init_params(pkey)
    # 3x32x32 -> conv(s2) 16x16 -> conv(s2) 8x8 -> conv(s1) 8x8 -> 12*8*8 = 768.
    x = jax.random.normal(xkey, (2, 3, 32, 32), jnp.float32)

    prep = prepare_lenet(params)
    logits = jax.jit(lenet_forward)(prep, x)
    jax.block_until_ready(logits)
    assert logits.shape == (2, NUM_CLASSES), logits.shape

    # Numerical sanity check vs a plain-JAX f32 reference (tolerance covers the
    # bf16 MXU operands).
    ref = lenet_reference(params, x)
    err = float(jnp.max(jnp.abs(logits - ref)))
    assert err < 1e-1, f"max |pallas - reference| = {err}"
    print("KERNEL_OK")
</pallas_src>

<mosaic_0001>
module attributes {stable_mosaic.version = 11 : i64} {
  func.func @_lenet_kernel(%arg0: memref<512x75xbf16, #tpu.memory_space<vmem>>, %arg1: memref<75x12xbf16, #tpu.memory_space<vmem>>, %arg2: memref<1x12xf32, #tpu.memory_space<vmem>>, %arg3: memref<300x12xbf16, #tpu.memory_space<vmem>>, %arg4: memref<1x12xf32, #tpu.memory_space<vmem>>, %arg5: memref<300x12xbf16, #tpu.memory_space<vmem>>, %arg6: memref<1x12xf32, #tpu.memory_space<vmem>>, %arg7: memref<12x640xbf16, #tpu.memory_space<vmem>>, %arg8: memref<128x640xf32, #tpu.memory_space<vmem>>, %arg9: memref<2x128xbf16, #tpu.memory_space<vmem>>, %arg10: memref<640x10xbf16, #tpu.memory_space<vmem>>, %arg11: memref<1x10xf32, #tpu.memory_space<vmem>>, %arg12: memref<2x10xf32, #tpu.memory_space<vmem>>, %arg13: memref<4x2x10x16x12xf32, #tpu.memory_space<vmem>>, %arg14: memref<2x12x16x12xf32, #tpu.memory_space<vmem>>, %arg15: memref<128x300xf32, #tpu.memory_space<vmem>>) attributes {dimension_semantics = [], scalar_prefetch = 0 : i64, scratch_operands = 3 : i64, tpu.core_type = #tpu.core_type<tc>} {
    %c0 = arith.constant 0 : index
    %c0_0 = arith.constant 0 : index
    %0 = vector.load %arg0[%c0, %c0_0] : memref<512x75xbf16, #tpu.memory_space<vmem>>, vector<512x75xbf16>
    %c0_1 = arith.constant 0 : index
    %c0_2 = arith.constant 0 : index
    %1 = vector.load %arg1[%c0_1, %c0_2] : memref<75x12xbf16, #tpu.memory_space<vmem>>, vector<75x12xbf16>
    %cst = arith.constant dense<0.000000e+00> : vector<512x12xf32>
    %2 = tpu.matmul %0, %1, %cst {dimension_numbers = #tpu.dot_dimension_numbers<[1], [0], [0], [1], [0, 0, 1, 1], [], []>} : vector<512x75xbf16>, vector<75x12xbf16>, vector<512x12xf32> -> vector<512x12xf32>
    %c0_3 = arith.constant 0 : index
    %c0_4 = arith.constant 0 : index
    %3 = vector.load %arg2[%c0_3, %c0_4] : memref<1x12xf32, #tpu.memory_space<vmem>>, vector<1x12xf32>
    %4 = vector.broadcast %3 : vector<1x12xf32> to vector<512x12xf32>
    %5 = arith.addf %2, %4 : vector<512x12xf32>
    %cst_5 = arith.constant 0.000000e+00 : f32
    %6 = vector.broadcast %cst_5 : f32 to vector<512x12xf32>
    %7 = arith.subf %6, %5 : vector<512x12xf32>
    %8 = math.exp %7 : vector<512x12xf32>
    %cst_6 = arith.constant 1.000000e+00 : f32
    %9 = vector.broadcast %cst_6 : f32 to vector<512x12xf32>
    %10 = arith.addf %9, %8 : vector<512x12xf32>
    %cst_7 = arith.constant 1.000000e+00 : f32
    %11 = vector.broadcast %cst_7 : f32 to vector<512x12xf32>
    %12 = arith.divf %11, %10 : vector<512x12xf32>
    %cst_8 = arith.constant 0.000000e+00 : f32
    %13 = vector.broadcast %cst_8 : f32 to vector<4x2x1x16x12xf32>
    %c0_9 = arith.constant 0 : index
    %c0_10 = arith.constant 0 : index
    %c0_11 = arith.constant 0 : index
    %c0_12 = arith.constant 0 : index
    %c0_13 = arith.constant 0 : index
    %14 = vector.load %arg13[%c0_9, %c0_10, %c0_11, %c0_12, %c0_13] : memref<4x2x10x16x12xf32, #tpu.memory_space<vmem>>, vector<4x2x1x16x12xf32>
    tpu.vector_store %arg13[%c0_9, %c0_10, %c0_11, %c0_12, %c0_13], %13 {strides = array<i32>} : memref<4x2x10x16x12xf32, #tpu.memory_space<vmem>>, vector<4x2x1x16x12xf32>,
    %cst_14 = arith.constant 0.000000e+00 : f32
    %15 = vector.broadcast %cst_14 : f32 to vector<4x2x1x16x12xf32>
    %c0_15 = arith.constant 0 : index
    %c0_16 = arith.constant 0 : index
    %c9 = arith.constant 9 : index
    %c0_17 = arith.constant 0 : index
    %c0_18 = arith.constant 0 : index
    %16 = vector.load %arg13[%c0_15, %c0_16, %c9, %c0_17, %c0_18] : memref<4x2x10x16x12xf32, #tpu.memory_space<vmem>>, vector<4x2x1x16x12xf32>
    tpu.vector_store %arg13[%c0_15, %c0_16, %c9, %c0_17, %c0_18], %15 {strides = array<i32>} : memref<4x2x10x16x12xf32, #tpu.memory_space<vmem>>, vector<4x2x1x16x12xf32>,
    %cst_19 = arith.constant 0.000000e+00 : f32
    %17 = vector.broadcast %cst_19 : f32 to vector<4x2x10x1x12xf32>
    %c0_20 = arith.constant 0 : index
    %c0_21 = arith.constant 0 : index
    %c0_22 = arith.constant 0 : index
    %c0_23 = arith.constant 0 : index
    %c0_24 = arith.constant 0 : index
    %18 = vector.load %arg13[%c0_20, %c0_21, %c0_22, %c0_23, %c0_24] : memref<4x2x10x16x12xf32, #tpu.memory_space<vmem>>, vector<4x2x10x1x12xf32>
    tpu.vector_store %arg13[%c0_20, %c0_21, %c0_22, %c0_23, %c0_24], %17 {strides = array<i32>} : memref<4x2x10x16x12xf32, #tpu.memory_space<vmem>>, vector<4x2x10x1x12xf32>,
    %cst_25 = arith.constant 0.000000e+00 : f32
    %19 = vector.broadcast %cst_25 : f32 to vector<4x2x10x1x12xf32>
    %c0_26 = arith.constant 0 : index
    %c0_27 = arith.constant 0 : index
    %c0_28 = arith.constant 0 : index
    %c9_29 = arith.constant 9 : index
    %c0_30 = arith.constant 0 : index
    %20 = vector.load %arg13[%c0_26, %c0_27, %c0_28, %c9_29, %c0_30] : memref<4x2x10x16x12xf32, #tpu.memory_space<vmem>>, vector<4x2x10x1x12xf32>
    tpu.vector_store %arg13[%c0_26, %c0_27, %c0_28, %c9_29, %c0_30], %19 {strides = array<i32>} : memref<4x2x10x16x12xf32, #tpu.memory_space<vmem>>, vector<4x2x10x1x12xf32>,
    %21 = vector.extract_strided_slice %12 {offsets = [0, 0], sizes = [128, 12], strides = [1, 1]} : vector<512x12xf32> to vector<128x12xf32>
    %22 = vector.shape_cast %21 : vector<128x12xf32> to vector<2x8x8x12xf32>
    %c0_31 = arith.constant 0 : index
    %c0_32 = arith.constant 0 : index
    %c1 = arith.constant 1 : index
    %c1_33 = arith.constant 1 : index
    %c0_34 = arith.constant 0 : index
    %23 = vector.load %arg13[%c0_31, %c0_32, %c1, %c1_33, %c0_34] : memref<4x2x10x16x12xf32, #tpu.memory_space<vmem>>, vector<1x2x8x8x12xf32>
    %24 = vector.shape_cast %23 : vector<1x2x8x8x12xf32> to vector<2x8x8x12xf32>
    %25 = vector.shape_cast %22 : vector<2x8x8x12xf32> to vector<1x2x8x8x12xf32>
    tpu.vector_store %arg13[%c0_31, %c0_32, %c1, %c1_33, %c0_34], %25 {strides = array<i32>} : memref<4x2x10x16x12xf32, #tpu.memory_space<vmem>>, vector<1x2x8x8x12xf32>,
    %26 = vector.extract_strided_slice %12 {offsets = [128, 0], sizes = [128, 12], strides = [1, 1]} : vector<512x12xf32> to vector<128x12xf32>
    %27 = vector.shape_cast %26 : vector<128x12xf32> to vector<2x8x8x12xf32>
    %c1_35 = arith.constant 1 : index
    %c0_36 = arith.constant 0 : index
    %c1_37 = arith.constant 1 : index
    %c1_38 = arith.constant 1 : index
    %c0_39 = arith.constant 0 : index
    %28 = vector.load %arg13[%c1_35, %c0_36, %c1_37, %c1_38, %c0_39] : memref<4x2x10x16x12xf32, #tpu.memory_space<vmem>>, vector<1x2x8x8x12xf32>
    %29 = vector.shape_cast %28 : vector<1x2x8x8x12xf32> to vector<2x8x8x12xf32>
    %30 = vector.shape_cast %27 : vector<2x8x8x12xf32> to vector<1x2x8x8x12xf32>
    tpu.vector_store %arg13[%c1_35, %c0_36, %c1_37, %c1_38, %c0_39], %30 {strides = array<i32>} : memref<4x2x10x16x12xf32, #tpu.memory_space<vmem>>, vector<1x2x8x8x12xf32>,
    %31 = vector.extract_strided_slice %12 {offsets = [256, 0], sizes = [128, 12], strides = [1, 1]} : vector<512x12xf32> to vector<128x12xf32>
    %32 = vector.shape_cast %31 : vector<128x12xf32> to vector<2x8x8x12xf32>
    %c2 = arith.constant 2 : index
    %c0_40 = arith.constant 0 : index
    %c1_41 = arith.constant 1 : index
    %c1_42 = arith.constant 1 : index
    %c0_43 = arith.constant 0 : index
    %33 = vector.load %arg13[%c2, %c0_40, %c1_41, %c1_42, %c0_43] : memref<4x2x10x16x12xf32, #tpu.memory_space<vmem>>, vector<1x2x8x8x12xf32>
    %34 = vector.shape_cast %33 : vector<1x2x8x8x12xf32> to vector<2x8x8x12xf32>
    %35 = vector.shape_cast %32 : vector<2x8x8x12xf32> to vector<1x2x8x8x12xf32>
    tpu.vector_store %arg13[%c2, %c0_40, %c1_41, %c1_42, %c0_43], %35 {strides = array<i32>} : memref<4x2x10x16x12xf32, #tpu.memory_space<vmem>>, vector<1x2x8x8x12xf32>,
    %36 = vector.extract_strided_slice %12 {offsets = [384, 0], sizes = [128, 12], strides = [1, 1]} : vector<512x12xf32> to vector<128x12xf32>
    %37 = vector.shape_cast %36 : vector<128x12xf32> to vector<2x8x8x12xf32>
    %c3 = arith.constant 3 : index
    %c0_44 = arith.constant 0 : index
    %c1_45 = arith.constant 1 : index
    %c1_46 = arith.constant 1 : index
    %c0_47 = arith.constant 0 : index
    %38 = vector.load %arg13[%c3, %c0_44, %c1_45, %c1_46, %c0_47] : memref<4x2x10x16x12xf32, #tpu.memory_space<vmem>>, vector<1x2x8x8x12xf32>
    %39 = vector.shape_cast %38 : vector<1x2x8x8x12xf32> to vector<2x8x8x12xf32>
    %40 = vector.shape_cast %37 : vector<2x8x8x12xf32> to vector<1x2x8x8x12xf32>
    tpu.vector_store %arg13[%c3, %c0_44, %c1_45, %c1_46, %c0_47], %40 {strides = array<i32>} : memref<4x2x10x16x12xf32, #tpu.memory_space<vmem>>, vector<1x2x8x8x12xf32>,
    %c0_48 = arith.constant 0 : index
    %c0_49 = arith.constant 0 : index
    %c0_50 = arith.constant 0 : index
    %c0_51 = arith.constant 0 : index
    %c0_52 = arith.constant 0 : index
    %41 = vector.load %arg13[%c0_48, %c0_49, %c0_50, %c0_51, %c0_52] : memref<4x2x10x16x12xf32, #tpu.memory_space<vmem>>, vector<1x2x8x8x12xf32>
    %42 = vector.shape_cast %41 : vector<1x2x8x8x12xf32> to vector<2x8x8x12xf32>
    %43 = vector.shape_cast %42 : vector<2x8x8x12xf32> to vector<128x12xf32>
    %c0_53 = arith.constant 0 : index
    %c0_54 = arith.constant 0 : index
    %44 = vector.load %arg15[%c0_53, %c0_54] : memref<128x300xf32, #tpu.memory_space<vmem>>, vector<128x12xf32>
    tpu.vector_store %arg15[%c0_53, %c0_54], %43 {strides = array<i32>} : memref<128x300xf32, #tpu.memory_space<vmem>>, vector<128x12xf32>,
    %c1_55 = arith.constant 1 : index
    %c0_56 = arith.constant 0 : index
    %c0_57 = arith.constant 0 : index
    %c0_58 = arith.constant 0 : index
    %c0_59 = arith.constant 0 : index
    %45 = vector.load %arg13[%c1_55, %c0_56, %c0_57, %c0_58, %c0_59] : memref<4x2x10x16x12xf32, #tpu.memory_space<vmem>>, vector<1x2x8x8x12xf32>
    %46 = vector.shape_cast %45 : vector<1x2x8x8x12xf32> to vector<2x8x8x12xf32>
    %47 = vector.shape_cast %46 : vector<2x8x8x12xf32> to vector<128x12xf32>
    %c0_60 = arith.constant 0 : index
    %c12 = arith.constant 12 : index
    %48 = vector.load %arg15[%c0_60, %c12] : memref<128x300xf32, #tpu.memory_space<vmem>>, vector<128x12xf32>
    tpu.vector_store %arg15[%c0_60, %c12], %47 {strides = array<i32>} : memref<128x300xf32, #tpu.memory_space<vmem>>, vector<128x12xf32>,
    %c0_61 = arith.constant 0 : index
    %c0_62 = arith.constant 0 : index
    %c0_63 = arith.constant 0 : index
    %c1_64 = arith.constant 1 : index
    %c0_65 = arith.constant 0 : index
    %49 = vector.load %arg13[%c0_61, %c0_62, %c0_63, %c1_64, %c0_65] : memref<4x2x10x16x12xf32, #tpu.memory_space<vmem>>, vector<1x2x8x8x12xf32>
    %50 = vector.shape_cast %49 : vector<1x2x8x8x12xf32> to vector<2x8x8x12xf32>
    %51 = vector.shape_cast %50 : vector<2x8x8x12xf32> to vector<128x12xf32>
    %c0_66 = arith.constant 0 : index
    %c24 = arith.constant 24 : index
    %52 = vector.load %arg15[%c0_66, %c24] : memref<128x300xf32, #tpu.memory_space<vmem>>, vector<128x12xf32>
    tpu.vector_store %arg15[%c0_66, %c24], %51 {strides = array<i32>} : memref<128x300xf32, #tpu.memory_space<vmem>>, vector<128x12xf32>,
    %c1_67 = arith.constant 1 : index
    %c0_68 = arith.constant 0 : index
    %c0_69 = arith.constant 0 : index
    %c1_70 = arith.constant 1 : index
    %c0_71 = arith.constant 0 : index
    %53 = vector.load %arg13[%c1_67, %c0_68, %c0_69, %c1_70, %c0_71] : memref<4x2x10x16x12xf32, #tpu.memory_space<vmem>>, vector<1x2x8x8x12xf32>
    %54 = vector.shape_cast %53 : vector<1x2x8x8x12xf32> to vector<2x8x8x12xf32>
    %55 = vector.shape_cast %54 : vector<2x8x8x12xf32> to vector<128x12xf32>
    %c0_72 = arith.constant 0 : index
    %c36 = arith.constant 36 : index
    %56 = vector.load %arg15[%c0_72, %c36] : memref<128x300xf32, #tpu.memory_space<vmem>>, vector<128x12xf32>
    tpu.vector_store %arg15[%c0_72, %c36], %55 {strides = array<i32>} : memref<128x300xf32, #tpu.memory_space<vmem>>, vector<128x12xf32>,
    %c0_73 = arith.constant 0 : index
    %c0_74 = arith.constant 0 : index
    %c0_75 = arith.constant 0 : index
    %c2_76 = arith.constant 2 : index
    %c0_77 = arith.constant 0 : index
    %57 = vector.load %arg13[%c0_73, %c0_74, %c0_75, %c2_76, %c0_77] : memref<4x2x10x16x12xf32, #tpu.memory_space<vmem>>, vector<1x2x8x8x12xf32>
    %58 = vector.shape_cast %57 : vector<1x2x8x8x12xf32> to vector<2x8x8x12xf32>
    %59 = vector.shape_cast %58 : vector<2x8x8x12xf32> to vector<128x12xf32>
    %c0_78 = arith.constant 0 : index
    %c48 = arith.constant 48 : index
    %60 = vector.load %arg15[%c0_78, %c48] : memref<128x300xf32, #tpu.memory_space<vmem>>, vector<128x12xf32>
    tpu.vector_store %arg15[%c0_78, %c48], %59 {strides = array<i32>} : memref<128x300xf32, #tpu.memory_space<vmem>>, vector<128x12xf32>,
    %c2_79 = arith.constant 2 : index
    %c0_80 = arith.constant 0 : index
    %c0_81 = arith.constant 0 : index
    %c0_82 = arith.constant 0 : index
    %c0_83 = arith.constant 0 : index
    %61 = vector.load %arg13[%c2_79, %c0_80, %c0_81, %c0_82, %c0_83] : memref<4x2x10x16x12xf32, #tpu.memory_space<vmem>>, vector<1x2x8x8x12xf32>
    %62 = vector.shape_cast %61 : vector<1x2x8x8x12xf32> to vector<2x8x8x12xf32>
    %63 = vector.shape_cast %62 : vector<2x8x8x12xf32> to vector<128x12xf32>
    %c0_84 = arith.constant 0 : index
    %c60 = arith.constant 60 : index
    %64 = vector.load %arg15[%c0_84, %c60] : memref<128x300xf32, #tpu.memory_space<vmem>>, vector<128x12xf32>
    tpu.vector_store %arg15[%c0_84, %c60], %63 {strides = array<i32>} : memref<128x300xf32, #tpu.memory_space<vmem>>, vector<128x12xf32>,
    %c3_85 = arith.constant 3 : index
    %c0_86 = arith.constant 0 : index
    %c0_87 = arith.constant 0 : index
    %c0_88 = arith.constant 0 : index
    %c0_89 = arith.constant 0 : index
    %65 = vector.load %arg13[%c3_85, %c0_86, %c0_87, %c0_88, %c0_89] : memref<4x2x10x16x12xf32, #tpu.memory_space<vmem>>, vector<1x2x8x8x12xf32>
    %66 = vector.shape_cast %65 : vector<1x2x8x8x12xf32> to vector<2x8x8x12xf32>
    %67 = vector.shape_cast %66 : vector<2x8x8x12xf32> to vector<128x12xf32>
    %c0_90 = arith.constant 0 : index
    %c72 = arith.constant 72 : index
    %68 = vector.load %arg15[%c0_90, %c72] : memref<128x300xf32, #tpu.memory_space<vmem>>, vector<128x12xf32>
    tpu.vector_store %arg15[%c0_90, %c72], %67 {strides = array<i32>} : memref<128x300xf32, #tpu.memory_space<vmem>>, vector<128x12xf32>,
    %c2_91 = arith.constant 2 : index
    %c0_92 = arith.constant 0 : index
    %c0_93 = arith.constant 0 : index
    %c1_94 = arith.constant 1 : index
    %c0_95 = arith.constant 0 : index
    %69 = vector.load %arg13[%c2_91, %c0_92, %c0_93, %c1_94, %c0_95] : memref<4x2x10x16x12xf32, #tpu.memory_space<vmem>>, vector<1x2x8x8x12xf32>
    %70 = vector.shape_cast %69 : vector<1x2x8x8x12xf32> to vector<2x8x8x12xf32>
    %71 = vector.shape_cast %70 : vector<2x8x8x12xf32> to vector<128x12xf32>
    %c0_96 = arith.constant 0 : index
    %c84 = arith.constant 84 : index
    %72 = vector.load %arg15[%c0_96, %c84] : memref<128x300xf32, #tpu.memory_space<vmem>>, vector<128x12xf32>
    tpu.vector_store %arg15[%c0_96, %c84], %71 {strides = array<i32>} : memref<128x300xf32, #tpu.memory_space<vmem>>, vector<128x12xf32>,
    %c3_97 = arith.constant 3 : index
    %c0_98 = arith.constant 0 : index
    %c0_99 = arith.constant 0 : index
    %c1_100 = arith.constant 1 : index
    %c0_101 = arith.constant 0 : index
    %73 = vector.load %arg13[%c3_97, %c0_98, %c0_99, %c1_100, %c0_101] : memref<4x2x10x16x12xf32, #tpu.memory_space<vmem>>, vector<1x2x8x8x12xf32>
    %74 = vector.shape_cast %73 : vector<1x2x8x8x12xf32> to vector<2x8x8x12xf32>
    %75 = vector.shape_cast %74 : vector<2x8x8x12xf32> to vector<128x12xf32>
    %c0_102 = arith.constant 0 : index
    %c96 = arith.constant 96 : index
    %76 = vector.load %arg15[%c0_102, %c96] : memref<128x300xf32, #tpu.memory_space<vmem>>, vector<128x12xf32>
    tpu.vector_store %arg15[%c0_102, %c96], %75 {strides = array<i32>} : memref<128x300xf32, #tpu.memory_space<vmem>>, vector<128x12xf32>,
    %c2_103 = arith.constant 2 : index
    %c0_104 = arith.constant 0 : index
    %c0_105 = arith.constant 0 : index
    %c2_106 = arith.constant 2 : index
    %c0_107 = arith.constant 0 : index
    %77 = vector.load %arg13[%c2_103, %c0_104, %c0_105, %c2_106, %c0_107] : memref<4x2x10x16x12xf32, #tpu.memory_space<vmem>>, vector<1x2x8x8x12xf32>
    %78 = vector.shape_cast %77 : vector<1x2x8x8x12xf32> to vector<2x8x8x12xf32>
    %79 = vector.shape_cast %78 : vector<2x8x8x12xf32> to vector<128x12xf32>
    %c0_108 = arith.constant 0 : index
    %c108 = arith.constant 108 : index
    %80 = vector.load %arg15[%c0_108, %c108] : memref<128x300xf32, #tpu.memory_space<vmem>>, vector<128x12xf32>
    tpu.vector_store %arg15[%c0_108, %c108], %79 {strides = array<i32>} : memref<128x300xf32, #tpu.memory_space<vmem>>, vector<128x12xf32>,
    %c0_109 = arith.constant 0 : index
    %c0_110 = arith.constant 0 : index
    %c1_111 = arith.constant 1 : index
    %c0_112 = arith.constant 0 : index
    %c0_113 = arith.constant 0 : index
    %81 = vector.load %arg13[%c0_109, %c0_110, %c1_111, %c0_112, %c0_113] : memref<4x2x10x16x12xf32, #tpu.memory_space<vmem>>, vector<1x2x8x8x12xf32>
    %82 = vector.shape_cast %81 : vector<1x2x8x8x12xf32> to vector<2x8x8x12xf32>
    %83 = vector.shape_cast %82 : vector<2x8x8x12xf32> to vector<128x12xf32>
    %c0_114 = arith.constant 0 : index
    %c120 = arith.constant 120 : index
    %84 = vector.load %arg15[%c0_114, %c120] : memref<128x300xf32, #tpu.memory_space<vmem>>, vector<128x12xf32>
    tpu.vector_store %arg15[%c0_114, %c120], %83 {strides = array<i32>} : memref<128x300xf32, #tpu.memory_space<vmem>>, vector<128x12xf32>,
    %c1_115 = arith.constant 1 : index
    %c0_116 = arith.constant 0 : index
    %c1_117 = arith.constant 1 : index
    %c0_118 = arith.constant 0 : index
    %c0_119 = arith.constant 0 : index
    %85 = vector.load %arg13[%c1_115, %c0_116, %c1_117, %c0_118, %c0_119] : memref<4x2x10x16x12xf32, #tpu.memory_space<vmem>>, vector<1x2x8x8x12xf32>
    %86 = vector.shape_cast %85 : vector<1x2x8x8x12xf32> to vector<2x8x8x12xf32>
    %87 = vector.shape_cast %86 : vector<2x8x8x12xf32> to vector<128x12xf32>
    %c0_120 = arith.constant 0 : index
    %c132 = arith.constant 132 : index
    %88 = vector.load %arg15[%c0_120, %c132] : memref<128x300xf32, #tpu.memory_space<vmem>>, vector<128x12xf32>
    tpu.vector_store %arg15[%c0_120, %c132], %87 {strides = array<i32>} : memref<128x300xf32, #tpu.memory_space<vmem>>, vector<128x12xf32>,
    %c0_121 = arith.constant 0 : index
    %c0_122 = arith.constant 0 : index
    %c1_123 = arith.constant 1 : index
    %c1_124 = arith.constant 1 : index
    %c0_125 = arith.constant 0 : index
    %89 = vector.load %arg13[%c0_121, %c0_122, %c1_123, %c1_124, %c0_125] : memref<4x2x10x16x12xf32, #tpu.memory_space<vmem>>, vector<1x2x8x8x12xf32>
    %90 = vector.shape_cast %89 : vector<1x2x8x8x12xf32> to vector<2x8x8x12xf32>
    %91 = vector.shape_cast %90 : vector<2x8x8x12xf32> to vector<128x12xf32>
    %c0_126 = arith.constant 0 : index
    %c144 = arith.constant 144 : index
    %92 = vector.load %arg15[%c0_126, %c144] : memref<128x300xf32, #tpu.memory_space<vmem>>, vector<128x12xf32>
    tpu.vector_store %arg15[%c0_126, %c144], %91 {strides = array<i32>} : memref<128x300xf32, #tpu.memory_space<vmem>>, vector<128x12xf32>,
    %c1_127 = arith.constant 1 : index
    %c0_128 = arith.constant 0 : index
    %c1_129 = arith.constant 1 : index
    %c1_130 = arith.constant 1 : index
    %c0_131 = arith.constant 0 : index
    %93 = vector.load %arg13[%c1_127, %c0_128, %c1_129, %c1_130, %c0_131] : memref<4x2x10x16x12xf32, #tpu.memory_space<vmem>>, vector<1x2x8x8x12xf32>
    %94 = vector.shape_cast %93 : vector<1x2x8x8x12xf32> to vector<2x8x8x12xf32>
    %95 = vector.shape_cast %94 : vector<2x8x8x12xf32> to vector<128x12xf32>
    %c0_132 = arith.constant 0 : index
    %c156 = arith.constant 156 : index
    %96 = vector.load %arg15[%c0_132, %c156] : memref<128x300xf32, #tpu.memory_space<vmem>>, vector<128x12xf32>
    tpu.vector_store %arg15[%c0_132, %c156], %95 {strides = array<i32>} : memref<128x300xf32, #tpu.memory_space<vmem>>, vector<128x12xf32>,
    %c0_133 = arith.constant 0 : index
    %c0_134 = arith.constant 0 : index
    %c1_135 = arith.constant 1 : index
    %c2_136 = arith.constant 2 : index
    %c0_137 = arith.constant 0 : index
    %97 = vector.load %arg13[%c0_133, %c0_134, %c1_135, %c2_136, %c0_137] : memref<4x2x10x16x12xf32, #tpu.memory_space<vmem>>, vector<1x2x8x8x12xf32>
    %98 = vector.shape_cast %97 : vector<1x2x8x8x12xf32> to vector<2x8x8x12xf32>
    %99 = vector.shape_cast %98 : vector<2x8x8x12xf32> to vector<128x12xf32>
    %c0_138 = arith.constant 0 : index
    %c168 = arith.constant 168 : index
    %100 = vector.load %arg15[%c0_138, %c168] : memref<128x300xf32, #tpu.memory_space<vmem>>, vector<128x12xf32>
    tpu.vector_store %arg15[%c0_138, %c168], %99 {strides = array<i32>} : memref<128x300xf32, #tpu.memory_space<vmem>>, vector<128x12xf32>,
    %c2_139 = arith.constant 2 : index
    %c0_140 = arith.constant 0 : index
    %c1_141 = arith.constant 1 : index
    %c0_142 = arith.constant 0 : index
    %c0_143 = arith.constant 0 : index
    %101 = vector.load %arg13[%c2_139, %c0_140, %c1_141, %c0_142, %c0_143] : memref<4x2x10x16x12xf32, #tpu.memory_space<vmem>>, vector<1x2x8x8x12xf32>
    %102 = vector.shape_cast %101 : vector<1x2x8x8x12xf32> to vector<2x8x8x12xf32>
    %103 = vector.shape_cast %102 : vector<2x8x8x12xf32> to vector<128x12xf32>
    %c0_144 = arith.constant 0 : index
    %c180 = arith.constant 180 : index
    %104 = vector.load %arg15[%c0_144, %c180] : memref<128x300xf32, #tpu.memory_space<vmem>>, vector<128x12xf32>
    tpu.vector_store %arg15[%c0_144, %c180], %103 {strides = array<i32>} : memref<128x300xf32, #tpu.memory_space<vmem>>, vector<128x12xf32>,
    %c3_145 = arith.constant 3 : index
    %c0_146 = arith.constant 0 : index
    %c1_147 = arith.constant 1 : index
    %c0_148 = arith.constant 0 : index
    %c0_149 = arith.constant 0 : index
    %105 = vector.load %arg13[%c3_145, %c0_146, %c1_147, %c0_148, %c0_149] : memref<4x2x10x16x12xf32, #tpu.memory_space<vmem>>, vector<1x2x8x8x12xf32>
    %106 = vector.shape_cast %105 : vector<1x2x8x8x12xf32> to vector<2x8x8x12xf32>
    %107 = vector.shape_cast %106 : vector<2x8x8x12xf32> to vector<128x12xf32>
    %c0_150 = arith.constant 0 : index
    %c192 = arith.constant 192 : index
    %108 = vector.load %arg15[%c0_150, %c192] : memref<128x300xf32, #tpu.memory_space<vmem>>, vector<128x12xf32>
    tpu.vector_store %arg15[%c0_150, %c192], %107 {strides = array<i32>} : memref<128x300xf32, #tpu.memory_space<vmem>>, vector<128x12xf32>,
    %c2_151 = arith.constant 2 : index
    %c0_152 = arith.constant 0 : index
    %c1_153 = arith.constant 1 : index
    %c1_154 = arith.constant 1 : index
    %c0_155 = arith.constant 0 : index
    %109 = vector.load %arg13[%c2_151, %c0_152, %c1_153, %c1_154, %c0_155] : memref<4x2x10x16x12xf32, #tpu.memory_space<vmem>>, vector<1x2x8x8x12xf32>
    %110 = vector.shape_cast %109 : vector<1x2x8x8x12xf32> to vector<2x8x8x12xf32>
    %111 = vector.shape_cast %110 : vector<2x8x8x12xf32> to vector<128x12xf32>
    %c0_156 = arith.constant 0 : index
    %c204 = arith.constant 204 : index
    %112 = vector.load %arg15[%c0_156, %c204] : memref<128x300xf32, #tpu.memory_space<vmem>>, vector<128x12xf32>
    tpu.vector_store %arg15[%c0_156, %c204], %111 {strides = array<i32>} : memref<128x300xf32, #tpu.memory_space<vmem>>, vector<128x12xf32>,
    %c3_157 = arith.constant 3 : index
    %c0_158 = arith.constant 0 : index
    %c1_159 = arith.constant 1 : index
    %c1_160 = arith.constant 1 : index
    %c0_161 = arith.constant 0 : index
    %113 = vector.load %arg13[%c3_157, %c0_158, %c1_159, %c1_160, %c0_161] : memref<4x2x10x16x12xf32, #tpu.memory_space<vmem>>, vector<1x2x8x8x12xf32>
    %114 = vector.shape_cast %113 : vector<1x2x8x8x12xf32> to vector<2x8x8x12xf32>
    %115 = vector.shape_cast %114 : vector<2x8x8x12xf32> to vector<128x12xf32>
    %c0_162 = arith.constant 0 : index
    %c216 = arith.constant 216 : index
    %116 = vector.load %arg15[%c0_162, %c216] : memref<128x300xf32, #tpu.memory_space<vmem>>, vector<128x12xf32>
    tpu.vector_store %arg15[%c0_162, %c216], %115 {strides = array<i32>} : memref<128x300xf32, #tpu.memory_space<vmem>>, vector<128x12xf32>,
    %c2_163 = arith.constant 2 : index
    %c0_164 = arith.constant 0 : index
    %c1_165 = arith.constant 1 : index
    %c2_166 = arith.constant 2 : index
    %c0_167 = arith.constant 0 : index
    %117 = vector.load %arg13[%c2_163, %c0_164, %c1_165, %c2_166, %c0_167] : memref<4x2x10x16x12xf32, #tpu.memory_space<vmem>>, vector<1x2x8x8x12xf32>
    %118 = vector.shape_cast %117 : vector<1x2x8x8x12xf32> to vector<2x8x8x12xf32>
    %119 = vector.shape_cast %118 : vector<2x8x8x12xf32> to vector<128x12xf32>
    %c0_168 = arith.constant 0 : index
    %c228 = arith.constant 228 : index
    %120 = vector.load %arg15[%c0_168, %c228] : memref<128x300xf32, #tpu.memory_space<vmem>>, vector<128x12xf32>
    tpu.vector_store %arg15[%c0_168, %c228], %119 {strides = array<i32>} : memref<128x300xf32, #tpu.memory_space<vmem>>, vector<128x12xf32>,
    %c0_169 = arith.constant 0 : index
    %c0_170 = arith.constant 0 : index
    %c2_171 = arith.constant 2 : index
    %c0_172 = arith.constant 0 : index
    %c0_173 = arith.constant 0 : index
    %121 = vector.load %arg13[%c0_169, %c0_170, %c2_171, %c0_172, %c0_173] : memref<4x2x10x16x12xf32, #tpu.memory_space<vmem>>, vector<1x2x8x8x12xf32>
    %122 = vector.shape_cast %121 : vector<1x2x8x8x12xf32> to vector<2x8x8x12xf32>
    %123 = vector.shape_cast %122 : vector<2x8x8x12xf32> to vector<128x12xf32>
    %c0_174 = arith.constant 0 : index
    %c240 = arith.constant 240 : index
    %124 = vector.load %arg15[%c0_174, %c240] : memref<128x300xf32, #tpu.memory_space<vmem>>, vector<128x12xf32>
    tpu.vector_store %arg15[%c0_174, %c240], %123 {strides = array<i32>} : memref<128x300xf32, #tpu.memory_space<vmem>>, vector<128x12xf32>,
    %c1_175 = arith.constant 1 : index
    %c0_176 = arith.constant 0 : index
    %c2_177 = arith.constant 2 : index
    %c0_178 = arith.constant 0 : index
    %c0_179 = arith.constant 0 : index
    %125 = vector.load %arg13[%c1_175, %c0_176, %c2_177, %c0_178, %c0_179] : memref<4x2x10x16x12xf32, #tpu.memory_space<vmem>>, vector<1x2x8x8x12xf32>
    %126 = vector.shape_cast %125 : vector<1x2x8x8x12xf32> to vector<2x8x8x12xf32>
    %127 = vector.shape_cast %126 : vector<2x8x8x12xf32> to vector<128x12xf32>
    %c0_180 = arith.constant 0 : index
    %c252 = arith.constant 252 : index
    %128 = vector.load %arg15[%c0_180, %c252] : memref<128x300xf32, #tpu.memory_space<vmem>>, vector<128x12xf32>
    tpu.vector_store %arg15[%c0_180, %c252], %127 {strides = array<i32>} : memref<128x300xf32, #tpu.memory_space<vmem>>, vector<128x12xf32>,
    %c0_181 = arith.constant 0 : index
    %c0_182 = arith.constant 0 : index
    %c2_183 = arith.constant 2 : index
    %c1_184 = arith.constant 1 : index
    %c0_185 = arith.constant 0 : index
    %129 = vector.load %arg13[%c0_181, %c0_182, %c2_183, %c1_184, %c0_185] : memref<4x2x10x16x12xf32, #tpu.memory_space<vmem>>, vector<1x2x8x8x12xf32>
    %130 = vector.shape_cast %129 : vector<1x2x8x8x12xf32> to vector<2x8x8x12xf32>
    %131 = vector.shape_cast %130 : vector<2x8x8x12xf32> to vector<128x12xf32>
    %c0_186 = arith.constant 0 : index
    %c264 = arith.constant 264 : index
    %132 = vector.load %arg15[%c0_186, %c264] : memref<128x300xf32, #tpu.memory_space<vmem>>, vector<128x12xf32>
    tpu.vector_store %arg15[%c0_186, %c264], %131 {strides = array<i32>} : memref<128x300xf32, #tpu.memory_space<vmem>>, vector<128x12xf32>,
    %c1_187 = arith.constant 1 : index
    %c0_188 = arith.constant 0 : index
    %c2_189 = arith.constant 2 : index
    %c1_190 = arith.constant 1 : index
    %c0_191 = arith.constant 0 : index
    %133 = vector.load %arg13[%c1_187, %c0_188, %c2_189, %c1_190, %c0_191] : memref<4x2x10x16x12xf32, #tpu.memory_space<vmem>>, vector<1x2x8x8x12xf32>
    %134 = vector.shape_cast %133 : vector<1x2x8x8x12xf32> to vector<2x8x8x12xf32>
    %135 = vector.shape_cast %134 : vector<2x8x8x12xf32> to vector<128x12xf32>
    %c0_192 = arith.constant 0 : index
    %c276 = arith.constant 276 : index
    %136 = vector.load %arg15[%c0_192, %c276] : memref<128x300xf32, #tpu.memory_space<vmem>>, vector<128x12xf32>
    tpu.vector_store %arg15[%c0_192, %c276], %135 {strides = array<i32>} : memref<128x300xf32, #tpu.memory_space<vmem>>, vector<128x12xf32>,
    %c0_193 = arith.constant 0 : index
    %c0_194 = arith.constant 0 : index
    %c2_195 = arith.constant 2 : index
    %c2_196 = arith.constant 2 : index
    %c0_197 = arith.constant 0 : index
    %137 = vector.load %arg13[%c0_193, %c0_194, %c2_195, %c2_196, %c0_197] : memref<4x2x10x16x12xf32, #tpu.memory_space<vmem>>, vector<1x2x8x8x12xf32>
    %138 = vector.shape_cast %137 : vector<1x2x8x8x12xf32> to vector<2x8x8x12xf32>
    %139 = vector.shape_cast %138 : vector<2x8x8x12xf32> to vector<128x12xf32>
    %c0_198 = arith.constant 0 : index
    %c288 = arith.constant 288 : index
    %140 = vector.load %arg15[%c0_198, %c288] : memref<128x300xf32, #tpu.memory_space<vmem>>, vector<128x12xf32>
    tpu.vector_store %arg15[%c0_198, %c288], %139 {strides = array<i32>} : memref<128x300xf32, #tpu.memory_space<vmem>>, vector<128x12xf32>,
    %c0_199 = arith.constant 0 : index
    %c0_200 = arith.constant 0 : index
    %141 = vector.load %arg15[%c0_199, %c0_200] : memref<128x300xf32, #tpu.memory_space<vmem>>, vector<128x300xf32>
    %142 = arith.truncf %141 : vector<128x300xf32> to vector<128x300xbf16>
    %c0_201 = arith.constant 0 : index
    %c0_202 = arith.constant 0 : index
    %143 = vector.load %arg3[%c0_201, %c0_202] : memref<300x12xbf16, #tpu.memory_space<vmem>>, vector<300x12xbf16>
    %cst_203 = arith.constant dense<0.000000e+00> : vector<128x12xf32>
    %144 = tpu.matmul %142, %143, %cst_203 {dimension_numbers = #tpu.dot_dimension_numbers<[1], [0], [0], [1], [0, 0, 1, 1], [], []>} : vector<128x300xbf16>, vector<300x12xbf16>, vector<128x12xf32> -> vector<128x12xf32>
    %c0_204 = arith.constant 0 : index
    %c0_205 = arith.constant 0 : index
    %145 = vector.load %arg4[%c0_204, %c0_205] : memref<1x12xf32, #tpu.memory_space<vmem>>, vector<1x12xf32>
    %146 = vector.broadcast %145 : vector<1x12xf32> to vector<128x12xf32>
    %147 = arith.addf %144, %146 : vector<128x12xf32>
    %cst_206 = arith.constant 0.000000e+00 : f32
    %148 = vector.broadcast %cst_206 : f32 to vector<128x12xf32>
    %149 = arith.subf %148, %147 : vector<128x12xf32>
    %150 = math.exp %149 : vector<128x12xf32>
    %cst_207 = arith.constant 1.000000e+00 : f32
    %151 = vector.broadcast %cst_207 : f32 to vector<128x12xf32>
    %152 = arith.addf %151, %150 : vector<128x12xf32>
    %cst_208 = arith.constant 1.000000e+00 : f32
    %153 = vector.broadcast %cst_208 : f32 to vector<128x12xf32>
    %154 = arith.divf %153, %152 : vector<128x12xf32>
    %cst_209 = arith.constant 0.000000e+00 : f32
    %155 = vector.broadcast %cst_209 : f32 to vector<2x2x16x12xf32>
    %c0_210 = arith.constant 0 : index
    %c0_211 = arith.constant 0 : index
    %c0_212 = arith.constant 0 : index
    %c0_213 = arith.constant 0 : index
    %156 = vector.load %arg14[%c0_210, %c0_211, %c0_212, %c0_213] : memref<2x12x16x12xf32, #tpu.memory_space<vmem>>, vector<2x2x16x12xf32>
    tpu.vector_store %arg14[%c0_210, %c0_211, %c0_212, %c0_213], %155 {strides = array<i32>} : memref<2x12x16x12xf32, #tpu.memory_space<vmem>>, vector<2x2x16x12xf32>,
    %cst_214 = arith.constant 0.000000e+00 : f32
    %157 = vector.broadcast %cst_214 : f32 to vector<2x2x16x12xf32>
    %c0_215 = arith.constant 0 : index
    %c10 = arith.constant 10 : index
    %c0_216 = arith.constant 0 : index
    %c0_217 = arith.constant 0 : index
    %158 = vector.load %arg14[%c0_215, %c10, %c0_216, %c0_217] : memref<2x12x16x12xf32, #tpu.memory_space<vmem>>, vector<2x2x16x12xf32>
    tpu.vector_store %arg14[%c0_215, %c10, %c0_216, %c0_217], %157 {strides = array<i32>} : memref<2x12x16x12xf32, #tpu.memory_space<vmem>>, vector<2x2x16x12xf32>,
    %cst_218 = arith.constant 0.000000e+00 : f32
    %159 = vector.broadcast %cst_218 : f32 to vector<2x12x2x12xf32>
    %c0_219 = arith.constant 0 : index
    %c0_220 = arith.constant 0 : index
    %c0_221 = arith.constant 0 : index
    %c0_222 = arith.constant 0 : index
    %160 = vector.load %arg14[%c0_219, %c0_220, %c0_221, %c0_222] : memref<2x12x16x12xf32, #tpu.memory_space<vmem>>, vector<2x12x2x12xf32>
    tpu.vector_store %arg14[%c0_219, %c0_220, %c0_221, %c0_222], %159 {strides = array<i32>} : memref<2x12x16x12xf32, #tpu.memory_space<vmem>>, vector<2x12x2x12xf32>,
    %cst_223 = arith.constant 0.000000e+00 : f32
    %161 = vector.broadcast %cst_223 : f32 to vector<2x12x2x12xf32>
    %c0_224 = arith.constant 0 : index
    %c0_225 = arith.constant 0 : index
    %c10_226 = arith.constant 10 : index
    %c0_227 = arith.constant 0 : index
    %162 = vector.load %arg14[%c0_224, %c0_225, %c10_226, %c0_227] : memref<2x12x16x12xf32, #tpu.memory_space<vmem>>, vector<2x12x2x12xf32>
    tpu.vector_store %arg14[%c0_224, %c0_225, %c10_226, %c0_227], %161 {strides = array<i32>} : memref<2x12x16x12xf32, #tpu.memory_space<vmem>>, vector<2x12x2x12xf32>,
    %163 = vector.shape_cast %154 : vector<128x12xf32> to vector<2x8x8x12xf32>
    %c0_228 = arith.constant 0 : index
    %c2_229 = arith.constant 2 : index
    %c2_230 = arith.constant 2 : index
    %c0_231 = arith.constant 0 : index
    %164 = vector.load %arg14[%c0_228, %c2_229, %c2_230, %c0_231] : memref<2x12x16x12xf32, #tpu.memory_space<vmem>>, vector<2x8x8x12xf32>
    tpu.vector_store %arg14[%c0_228, %c2_229, %c2_230, %c0_231], %163 {strides = array<i32>} : memref<2x12x16x12xf32, #tpu.memory_space<vmem>>, vector<2x8x8x12xf32>,
    %c0_232 = arith.constant 0 : index
    %c0_233 = arith.constant 0 : index
    %c0_234 = arith.constant 0 : index
    %c0_235 = arith.constant 0 : index
    %165 = vector.load %arg14[%c0_232, %c0_233, %c0_234, %c0_235] : memref<2x12x16x12xf32, #tpu.memory_space<vmem>>, vector<2x8x8x12xf32>
    %166 = vector.shape_cast %165 : vector<2x8x8x12xf32> to vector<128x12xf32>
    %c0_236 = arith.constant 0 : index
    %c0_237 = arith.constant 0 : index
    %167 = vector.load %arg15[%c0_236, %c0_237] : memref<128x300xf32, #tpu.memory_space<vmem>>, vector<128x12xf32>
    tpu.vector_store %arg15[%c0_236, %c0_237], %166 {strides = array<i32>} : memref<128x300xf32, #tpu.memory_space<vmem>>, vector<128x12xf32>,
    %c0_238 = arith.constant 0 : index
    %c0_239 = arith.constant 0 : index
    %c1_240 = arith.constant 1 : index
    %c0_241 = arith.constant 0 : index
    %168 = vector.load %arg14[%c0_238, %c0_239, %c1_240, %c0_241] : memref<2x12x16x12xf32, #tpu.memory_space<vmem>>, vector<2x8x8x12xf32>
    %169 = vector.shape_cast %168 : vector<2x8x8x12xf32> to vector<128x12xf32>
    %c0_242 = arith.constant 0 : index
    %c12_243 = arith.constant 12 : index
    %170 = vector.load %arg15[%c0_242, %c12_243] : memref<128x300xf32, #tpu.memory_space<vmem>>, vector<128x12xf32>
    tpu.vector_store %arg15[%c0_242, %c12_243], %169 {strides = array<i32>} : memref<128x300xf32, #tpu.memory_space<vmem>>, vector<128x12xf32>,
    %c0_244 = arith.constant 0 : index
    %c0_245 = arith.constant 0 : index
    %c2_246 = arith.constant 2 : index
    %c0_247 = arith.constant 0 : index
    %171 = vector.load %arg14[%c0_244, %c0_245, %c2_246, %c0_247] : memref<2x12x16x12xf32, #tpu.memory_space<vmem>>, vector<2x8x8x12xf32>
    %172 = vector.shape_cast %171 : vector<2x8x8x12xf32> to vector<128x12xf32>
    %c0_248 = arith.constant 0 : index
    %c24_249 = arith.constant 24 : index
    %173 = vector.load %arg15[%c0_248, %c24_249] : memref<128x300xf32, #tpu.memory_space<vmem>>, vector<128x12xf32>
    tpu.vector_store %arg15[%c0_248, %c24_249], %172 {strides = array<i32>} : memref<128x300xf32, #tpu.memory_space<vmem>>, vector<128x12xf32>,
    %c0_250 = arith.constant 0 : index
    %c0_251 = arith.constant 0 : index
    %c3_252 = arith.constant 3 : index
    %c0_253 = arith.constant 0 : index
    %174 = vector.load %arg14[%c0_250, %c0_251, %c3_252, %c0_253] : memref<2x12x16x12xf32, #tpu.memory_space<vmem>>, vector<2x8x8x12xf32>
    %175 = vector.shape_cast %174 : vector<2x8x8x12xf32> to vector<128x12xf32>
    %c0_254 = arith.constant 0 : index
    %c36_255 = arith.constant 36 : index
    %176 = vector.load %arg15[%c0_254, %c36_255] : memref<128x300xf32, #tpu.memory_space<vmem>>, vector<128x12xf32>
    tpu.vector_store %arg15[%c0_254, %c36_255], %175 {strides = array<i32>} : memref<128x300xf32, #tpu.memory_space<vmem>>, vector<128x12xf32>,
    %c0_256 = arith.constant 0 : index
    %c0_257 = arith.constant 0 : index
    %c4 = arith.constant 4 : index
    %c0_258 = arith.constant 0 : index
    %177 = vector.load %arg14[%c0_256, %c0_257, %c4, %c0_258] : memref<2x12x16x12xf32, #tpu.memory_space<vmem>>, vector<2x8x8x12xf32>
    %178 = vector.shape_cast %177 : vector<2x8x8x12xf32> to vector<128x12xf32>
    %c0_259 = arith.constant 0 : index
    %c48_260 = arith.constant 48 : index
    %179 = vector.load %arg15[%c0_259, %c48_260] : memref<128x300xf32, #tpu.memory_space<vmem>>, vector<128x12xf32>
    tpu.vector_store %arg15[%c0_259, %c48_260], %178 {strides = array<i32>} : memref<128x300xf32, #tpu.memory_space<vmem>>, vector<128x12xf32>,
    %c0_261 = arith.constant 0 : index
    %c1_262 = arith.constant 1 : index
    %c0_263 = arith.constant 0 : index
    %c0_264 = arith.constant 0 : index
    %180 = vector.load %arg14[%c0_261, %c1_262, %c0_263, %c0_264] : memref<2x12x16x12xf32, #tpu.memory_space<vmem>>, vector<2x8x8x12xf32>
    %181 = vector.shape_cast %180 : vector<2x8x8x12xf32> to vector<128x12xf32>
    %c0_265 = arith.constant 0 : index
    %c60_266 = arith.constant 60 : index
    %182 = vector.load %arg15[%c0_265, %c60_266] : memref<128x300xf32, #tpu.memory_space<vmem>>, vector<128x12xf32>
    tpu.vector_store %arg15[%c0_265, %c60_266], %181 {strides = array<i32>} : memref<128x300xf32, #tpu.memory_space<vmem>>, vector<128x12xf32>,
    %c0_267 = arith.constant 0 : index
    %c1_268 = arith.constant 1 : index
    %c1_269 = arith.constant 1 : index
    %c0_270 = arith.constant 0 : index
    %183 = vector.load %arg14[%c0_267, %c1_268, %c1_269, %c0_270] : memref<2x12x16x12xf32, #tpu.memory_space<vmem>>, vector<2x8x8x12xf32>
    %184 = vector.shape_cast %183 : vector<2x8x8x12xf32> to vector<128x12xf32>
    %c0_271 = arith.constant 0 : index
    %c72_272 = arith.constant 72 : index
    %185 = vector.load %arg15[%c0_271, %c72_272] : memref<128x300xf32, #tpu.memory_space<vmem>>, vector<128x12xf32>
    tpu.vector_store %arg15[%c0_271, %c72_272], %184 {strides = array<i32>} : memref<128x300xf32, #tpu.memory_space<vmem>>, vector<128x12xf32>,
    %c0_273 = arith.constant 0 : index
    %c1_274 = arith.constant 1 : index
    %c2_275 = arith.constant 2 : index
    %c0_276 = arith.constant 0 : index
    %186 = vector.load %arg14[%c0_273, %c1_274, %c2_275, %c0_276] : memref<2x12x16x12xf32, #tpu.memory_space<vmem>>, vector<2x8x8x12xf32>
    %187 = vector.shape_cast %186 : vector<2x8x8x12xf32> to vector<128x12xf32>
    %c0_277 = arith.constant 0 : index
    %c84_278 = arith.constant 84 : index
    %188 = vector.load %arg15[%c0_277, %c84_278] : memref<128x300xf32, #tpu.memory_space<vmem>>, vector<128x12xf32>
    tpu.vector_store %arg15[%c0_277, %c84_278], %187 {strides = array<i32>} : memref<128x300xf32, #tpu.memory_space<vmem>>, vector<128x12xf32>,
    %c0_279 = arith.constant 0 : index
    %c1_280 = arith.constant 1 : index
    %c3_281 = arith.constant 3 : index
    %c0_282 = arith.constant 0 : index
    %189 = vector.load %arg14[%c0_279, %c1_280, %c3_281, %c0_282] : memref<2x12x16x12xf32, #tpu.memory_space<vmem>>, vector<2x8x8x12xf32>
    %190 = vector.shape_cast %189 : vector<2x8x8x12xf32> to vector<128x12xf32>
    %c0_283 = arith.constant 0 : index
    %c96_284 = arith.constant 96 : index
    %191 = vector.load %arg15[%c0_283, %c96_284] : memref<128x300xf32, #tpu.memory_space<vmem>>, vector<128x12xf32>
    tpu.vector_store %arg15[%c0_283, %c96_284], %190 {strides = array<i32>} : memref<128x300xf32, #tpu.memory_space<vmem>>, vector<128x12xf32>,
    %c0_285 = arith.constant 0 : index
    %c1_286 = arith.constant 1 : index
    %c4_287 = arith.constant 4 : index
    %c0_288 = arith.constant 0 : index
    %192 = vector.load %arg14[%c0_285, %c1_286, %c4_287, %c0_288] : memref<2x12x16x12xf32, #tpu.memory_space<vmem>>, vector<2x8x8x12xf32>
    %193 = vector.shape_cast %192 : vector<2x8x8x12xf32> to vector<128x12xf32>
    %c0_289 = arith.constant 0 : index
    %c108_290 = arith.constant 108 : index
    %194 = vector.load %arg15[%c0_289, %c108_290] : memref<128x300xf32, #tpu.memory_space<vmem>>, vector<128x12xf32>
    tpu.vector_store %arg15[%c0_289, %c108_290], %193 {strides = array<i32>} : memref<128x300xf32, #tpu.memory_space<vmem>>, vector<128x12xf32>,
    %c0_291 = arith.constant 0 : index
    %c2_292 = arith.constant 2 : index
    %c0_293 = arith.constant 0 : index
    %c0_294 = arith.constant 0 : index
    %195 = vector.load %arg14[%c0_291, %c2_292, %c0_293, %c0_294] : memref<2x12x16x12xf32, #tpu.memory_space<vmem>>, vector<2x8x8x12xf32>
    %196 = vector.shape_cast %195 : vector<2x8x8x12xf32> to vector<128x12xf32>
    %c0_295 = arith.constant 0 : index
    %c120_296 = arith.constant 120 : index
    %197 = vector.load %arg15[%c0_295, %c120_296] : memref<128x300xf32, #tpu.memory_space<vmem>>, vector<128x12xf32>
    tpu.vector_store %arg15[%c0_295, %c120_296], %196 {strides = array<i32>} : memref<128x300xf32, #tpu.memory_space<vmem>>, vector<128x12xf32>,
    %c0_297 = arith.constant 0 : index
    %c2_298 = arith.constant 2 : index
    %c1_299 = arith.constant 1 : index
    %c0_300 = arith.constant 0 : index
    %198 = vector.load %arg14[%c0_297, %c2_298, %c1_299, %c0_300] : memref<2x12x16x12xf32, #tpu.memory_space<vmem>>, vector<2x8x8x12xf32>
    %199 = vector.shape_cast %198 : vector<2x8x8x12xf32> to vector<128x12xf32>
    %c0_301 = arith.constant 0 : index
    %c132_302 = arith.constant 132 : index
    %200 = vector.load %arg15[%c0_301, %c132_302] : memref<128x300xf32, #tpu.memory_space<vmem>>, vector<128x12xf32>
    tpu.vector_store %arg15[%c0_301, %c132_302], %199 {strides = array<i32>} : memref<128x300xf32, #tpu.memory_space<vmem>>, vector<128x12xf32>,
    %c0_303 = arith.constant 0 : index
    %c2_304 = arith.constant 2 : index
    %c2_305 = arith.constant 2 : index
    %c0_306 = arith.constant 0 : index
    %201 = vector.load %arg14[%c0_303, %c2_304, %c2_305, %c0_306] : memref<2x12x16x12xf32, #tpu.memory_space<vmem>>, vector<2x8x8x12xf32>
    %202 = vector.shape_cast %201 : vector<2x8x8x12xf32> to vector<128x12xf32>
    %c0_307 = arith.constant 0 : index
    %c144_308 = arith.constant 144 : index
    %203 = vector.load %arg15[%c0_307, %c144_308] : memref<128x300xf32, #tpu.memory_space<vmem>>, vector<128x12xf32>
    tpu.vector_store %arg15[%c0_307, %c144_308], %202 {strides = array<i32>} : memref<128x300xf32, #tpu.memory_space<vmem>>, vector<128x12xf32>,
    %c0_309 = arith.constant 0 : index
    %c2_310 = arith.constant 2 : index
    %c3_311 = arith.constant 3 : index
    %c0_312 = arith.constant 0 : index
    %204 = vector.load %arg14[%c0_309, %c2_310, %c3_311, %c0_312] : memref<2x12x16x12xf32, #tpu.memory_space<vmem>>, vector<2x8x8x12xf32>
    %205 = vector.shape_cast %204 : vector<2x8x8x12xf32> to vector<128x12xf32>
    %c0_313 = arith.constant 0 : index
    %c156_314 = arith.constant 156 : index
    %206 = vector.load %arg15[%c0_313, %c156_314] : memref<128x300xf32, #tpu.memory_space<vmem>>, vector<128x12xf32>
    tpu.vector_store %arg15[%c0_313, %c156_314], %205 {strides = array<i32>} : memref<128x300xf32, #tpu.memory_space<vmem>>, vector<128x12xf32>,
    %c0_315 = arith.constant 0 : index
    %c2_316 = arith.constant 2 : index
    %c4_317 = arith.constant 4 : index
    %c0_318 = arith.constant 0 : index
    %207 = vector.load %arg14[%c0_315, %c2_316, %c4_317, %c0_318] : memref<2x12x16x12xf32, #tpu.memory_space<vmem>>, vector<2x8x8x12xf32>
    %208 = vector.shape_cast %207 : vector<2x8x8x12xf32> to vector<128x12xf32>
    %c0_319 = arith.constant 0 : index
    %c168_320 = arith.constant 168 : index
    %209 = vector.load %arg15[%c0_319, %c168_320] : memref<128x300xf32, #tpu.memory_space<vmem>>, vector<128x12xf32>
    tpu.vector_store %arg15[%c0_319, %c168_320], %208 {strides = array<i32>} : memref<128x300xf32, #tpu.memory_space<vmem>>, vector<128x12xf32>,
    %c0_321 = arith.constant 0 : index
    %c3_322 = arith.constant 3 : index
    %c0_323 = arith.constant 0 : index
    %c0_324 = arith.constant 0 : index
    %210 = vector.load %arg14[%c0_321, %c3_322, %c0_323, %c0_324] : memref<2x12x16x12xf32, #tpu.memory_space<vmem>>, vector<2x8x8x12xf32>
    %211 = vector.shape_cast %210 : vector<2x8x8x12xf32> to vector<128x12xf32>
    %c0_325 = arith.constant 0 : index
    %c180_326 = arith.constant 180 : index
    %212 = vector.load %arg15[%c0_325, %c180_326] : memref<128x300xf32, #tpu.memory_space<vmem>>, vector<128x12xf32>
    tpu.vector_store %arg15[%c0_325, %c180_326], %211 {strides = array<i32>} : memref<128x300xf32, #tpu.memory_space<vmem>>, vector<128x12xf32>,
    %c0_327 = arith.constant 0 : index
    %c3_328 = arith.constant 3 : index
    %c1_329 = arith.constant 1 : index
    %c0_330 = arith.constant 0 : index
    %213 = vector.load %arg14[%c0_327, %c3_328, %c1_329, %c0_330] : memref<2x12x16x12xf32, #tpu.memory_space<vmem>>, vector<2x8x8x12xf32>
    %214 = vector.shape_cast %213 : vector<2x8x8x12xf32> to vector<128x12xf32>
    %c0_331 = arith.constant 0 : index
    %c192_332 = arith.constant 192 : index
    %215 = vector.load %arg15[%c0_331, %c192_332] : memref<128x300xf32, #tpu.memory_space<vmem>>, vector<128x12xf32>
    tpu.vector_store %arg15[%c0_331, %c192_332], %214 {strides = array<i32>} : memref<128x300xf32, #tpu.memory_space<vmem>>, vector<128x12xf32>,
    %c0_333 = arith.constant 0 : index
    %c3_334 = arith.constant 3 : index
    %c2_335 = arith.constant 2 : index
    %c0_336 = arith.constant 0 : index
    %216 = vector.load %arg14[%c0_333, %c3_334, %c2_335, %c0_336] : memref<2x12x16x12xf32, #tpu.memory_space<vmem>>, vector<2x8x8x12xf32>
    %217 = vector.shape_cast %216 : vector<2x8x8x12xf32> to vector<128x12xf32>
    %c0_337 = arith.constant 0 : index
    %c204_338 = arith.constant 204 : index
    %218 = vector.load %arg15[%c0_337, %c204_338] : memref<128x300xf32, #tpu.memory_space<vmem>>, vector<128x12xf32>
    tpu.vector_store %arg15[%c0_337, %c204_338], %217 {strides = array<i32>} : memref<128x300xf32, #tpu.memory_space<vmem>>, vector<128x12xf32>,
    %c0_339 = arith.constant 0 : index
    %c3_340 = arith.constant 3 : index
    %c3_341 = arith.constant 3 : index
    %c0_342 = arith.constant 0 : index
    %219 = vector.load %arg14[%c0_339, %c3_340, %c3_341, %c0_342] : memref<2x12x16x12xf32, #tpu.memory_space<vmem>>, vector<2x8x8x12xf32>
    %220 = vector.shape_cast %219 : vector<2x8x8x12xf32> to vector<128x12xf32>
    %c0_343 = arith.constant 0 : index
    %c216_344 = arith.constant 216 : index
    %221 = vector.load %arg15[%c0_343, %c216_344] : memref<128x300xf32, #tpu.memory_space<vmem>>, vector<128x12xf32>
    tpu.vector_store %arg15[%c0_343, %c216_344], %220 {strides = array<i32>} : memref<128x300xf32, #tpu.memory_space<vmem>>, vector<128x12xf32>,
    %c0_345 = arith.constant 0 : index
    %c3_346 = arith.constant 3 : index
    %c4_347 = arith.constant 4 : index
    %c0_348 = arith.constant 0 : index
    %222 = vector.load %arg14[%c0_345, %c3_346, %c4_347, %c0_348] : memref<2x12x16x12xf32, #tpu.memory_space<vmem>>, vector<2x8x8x12xf32>
    %223 = vector.shape_cast %222 : vector<2x8x8x12xf32> to vector<128x12xf32>
    %c0_349 = arith.constant 0 : index
    %c228_350 = arith.constant 228 : index
    %224 = vector.load %arg15[%c0_349, %c228_350] : memref<128x300xf32, #tpu.memory_space<vmem>>, vector<128x12xf32>
    tpu.vector_store %arg15[%c0_349, %c228_350], %223 {strides = array<i32>} : memref<128x300xf32, #tpu.memory_space<vmem>>, vector<128x12xf32>,
    %c0_351 = arith.constant 0 : index
    %c4_352 = arith.constant 4 : index
    %c0_353 = arith.constant 0 : index
    %c0_354 = arith.constant 0 : index
    %225 = vector.load %arg14[%c0_351, %c4_352, %c0_353, %c0_354] : memref<2x12x16x12xf32, #tpu.memory_space<vmem>>, vector<2x8x8x12xf32>
    %226 = vector.shape_cast %225 : vector<2x8x8x12xf32> to vector<128x12xf32>
    %c0_355 = arith.constant 0 : index
    %c240_356 = arith.constant 240 : index
    %227 = vector.load %arg15[%c0_355, %c240_356] : memref<128x300xf32, #tpu.memory_space<vmem>>, vector<128x12xf32>
    tpu.vector_store %arg15[%c0_355, %c240_356], %226 {strides = array<i32>} : memref<128x300xf32, #tpu.memory_space<vmem>>, vector<128x12xf32>,
    %c0_357 = arith.constant 0 : index
    %c4_358 = arith.constant 4 : index
    %c1_359 = arith.constant 1 : index
    %c0_360 = arith.constant 0 : index
    %228 = vector.load %arg14[%c0_357, %c4_358, %c1_359, %c0_360] : memref<2x12x16x12xf32, #tpu.memory_space<vmem>>, vector<2x8x8x12xf32>
    %229 = vector.shape_cast %228 : vector<2x8x8x12xf32> to vector<128x12xf32>
    %c0_361 = arith.constant 0 : index
    %c252_362 = arith.constant 252 : index
    %230 = vector.load %arg15[%c0_361, %c252_362] : memref<128x300xf32, #tpu.memory_space<vmem>>, vector<128x12xf32>
    tpu.vector_store %arg15[%c0_361, %c252_362], %229 {strides = array<i32>} : memref<128x300xf32, #tpu.memory_space<vmem>>, vector<128x12xf32>,
    %c0_363 = arith.constant 0 : index
    %c4_364 = arith.constant 4 : index
    %c2_365 = arith.constant 2 : index
    %c0_366 = arith.constant 0 : index
    %231 = vector.load %arg14[%c0_363, %c4_364, %c2_365, %c0_366] : memref<2x12x16x12xf32, #tpu.memory_space<vmem>>, vector<2x8x8x12xf32>
    %232 = vector.shape_cast %231 : vector<2x8x8x12xf32> to vector<128x12xf32>
    %c0_367 = arith.constant 0 : index
    %c264_368 = arith.constant 264 : index
    %233 = vector.load %arg15[%c0_367, %c264_368] : memref<128x300xf32, #tpu.memory_space<vmem>>, vector<128x12xf32>
    tpu.vector_store %arg15[%c0_367, %c264_368], %232 {strides = array<i32>} : memref<128x300xf32, #tpu.memory_space<vmem>>, vector<128x12xf32>,
    %c0_369 = arith.constant 0 : index
    %c4_370 = arith.constant 4 : index
    %c3_371 = arith.constant 3 : index
    %c0_372 = arith.constant 0 : index
    %234 = vector.load %arg14[%c0_369, %c4_370, %c3_371, %c0_372] : memref<2x12x16x12xf32, #tpu.memory_space<vmem>>, vector<2x8x8x12xf32>
    %235 = vector.shape_cast %234 : vector<2x8x8x12xf32> to vector<128x12xf32>
    %c0_373 = arith.constant 0 : index
    %c276_374 = arith.constant 276 : index
    %236 = vector.load %arg15[%c0_373, %c276_374] : memref<128x300xf32, #tpu.memory_space<vmem>>, vector<128x12xf32>
    tpu.vector_store %arg15[%c0_373, %c276_374], %235 {strides = array<i32>} : memref<128x300xf32, #tpu.memory_space<vmem>>, vector<128x12xf32>,
    %c0_375 = arith.constant 0 : index
    %c4_376 = arith.constant 4 : index
    %c4_377 = arith.constant 4 : index
    %c0_378 = arith.constant 0 : index
    %237 = vector.load %arg14[%c0_375, %c4_376, %c4_377, %c0_378] : memref<2x12x16x12xf32, #tpu.memory_space<vmem>>, vector<2x8x8x12xf32>
    %238 = vector.shape_cast %237 : vector<2x8x8x12xf32> to vector<128x12xf32>
    %c0_379 = arith.constant 0 : index
    %c288_380 = arith.constant 288 : index
    %239 = vector.load %arg15[%c0_379, %c288_380] : memref<128x300xf32, #tpu.memory_space<vmem>>, vector<128x12xf32>
    tpu.vector_store %arg15[%c0_379, %c288_380], %238 {strides = array<i32>} : memref<128x300xf32, #tpu.memory_space<vmem>>, vector<128x12xf32>,
    %c0_381 = arith.constant 0 : index
    %c0_382 = arith.constant 0 : index
    %240 = vector.load %arg15[%c0_381, %c0_382] : memref<128x300xf32, #tpu.memory_space<vmem>>, vector<128x300xf32>
    %241 = arith.truncf %240 : vector<128x300xf32> to vector<128x300xbf16>
    %c0_383 = arith.constant 0 : index
    %c0_384 = arith.constant 0 : index
    %242 = vector.load %arg5[%c0_383, %c0_384] : memref<300x12xbf16, #tpu.memory_space<vmem>>, vector<300x12xbf16>
    %cst_385 = arith.constant dense<0.000000e+00> : vector<128x12xf32>
    %243 = tpu.matmul %241, %242, %cst_385 {dimension_numbers = #tpu.dot_dimension_numbers<[1], [0], [0], [1], [0, 0, 1, 1], [], []>} : vector<128x300xbf16>, vector<300x12xbf16>, vector<128x12xf32> -> vector<128x12xf32>
    %c0_386 = arith.constant 0 : index
    %c0_387 = arith.constant 0 : index
    %244 = vector.load %arg6[%c0_386, %c0_387] : memref<1x12xf32, #tpu.memory_space<vmem>>, vector<1x12xf32>
    %245 = vector.broadcast %244 : vector<1x12xf32> to vector<128x12xf32>
    %246 = arith.addf %243, %245 : vector<128x12xf32>
    %cst_388 = arith.constant 0.000000e+00 : f32
    %247 = vector.broadcast %cst_388 : f32 to vector<128x12xf32>
    %248 = arith.subf %247, %246 : vector<128x12xf32>
    %249 = math.exp %248 : vector<128x12xf32>
    %cst_389 = arith.constant 1.000000e+00 : f32
    %250 = vector.broadcast %cst_389 : f32 to vector<128x12xf32>
    %251 = arith.addf %250, %249 : vector<128x12xf32>
    %cst_390 = arith.constant 1.000000e+00 : f32
    %252 = vector.broadcast %cst_390 : f32 to vector<128x12xf32>
    %253 = arith.divf %252, %251 : vector<128x12xf32>
    %254 = arith.truncf %253 : vector<128x12xf32> to vector<128x12xbf16>
    %c0_391 = arith.constant 0 : index
    %c0_392 = arith.constant 0 : index
    %255 = vector.load %arg7[%c0_391, %c0_392] : memref<12x640xbf16, #tpu.memory_space<vmem>>, vector<12x640xbf16>
    %cst_393 = arith.constant dense<0.000000e+00> : vector<128x640xf32>
    %256 = tpu.matmul %254, %255, %cst_393 {dimension_numbers = #tpu.dot_dimension_numbers<[1], [0], [0], [1], [0, 0, 1, 1], [], []>} : vector<128x12xbf16>, vector<12x640xbf16>, vector<128x640xf32> -> vector<128x640xf32>
    %c0_394 = arith.constant 0 : index
    %c0_395 = arith.constant 0 : index
    %257 = vector.load %arg8[%c0_394, %c0_395] : memref<128x640xf32, #tpu.memory_space<vmem>>, vector<128x640xf32>
    %258 = arith.mulf %256, %257 : vector<128x640xf32>
    %259 = arith.truncf %258 : vector<128x640xf32> to vector<128x640xbf16>
    %c0_396 = arith.constant 0 : index
    %c0_397 = arith.constant 0 : index
    %260 = vector.load %arg9[%c0_396, %c0_397] : memref<2x128xbf16, #tpu.memory_space<vmem>>, vector<2x128xbf16>
    %cst_398 = arith.constant dense<0.000000e+00> : vector<2x640xf32>
    %261 = tpu.matmul %260, %259, %cst_398 {dimension_numbers = #tpu.dot_dimension_numbers<[1], [0], [0], [1], [0, 0, 1, 1], [], []>} : vector<2x128xbf16>, vector<128x640xbf16>, vector<2x640xf32> -> vector<2x640xf32>
    %262 = arith.truncf %261 : vector<2x640xf32> to vector<2x640xbf16>
    %c0_399 = arith.constant 0 : index
    %c0_400 = arith.constant 0 : index
    %263 = vector.load %arg10[%c0_399, %c0_400] : memref<640x10xbf16, #tpu.memory_space<vmem>>, vector<640x10xbf16>
    %cst_401 = arith.constant dense<0.000000e+00> : vector<2x10xf32>
    %264 = tpu.matmul %262, %263, %cst_401 {dimension_numbers = #tpu.dot_dimension_numbers<[1], [0], [0], [1], [0, 0, 1, 1], [], []>} : vector<2x640xbf16>, vector<640x10xbf16>, vector<2x10xf32> -> vector<2x10xf32>
    %c0_402 = arith.constant 0 : index
    %c0_403 = arith.constant 0 : index
    %265 = vector.load %arg11[%c0_402, %c0_403] : memref<1x10xf32, #tpu.memory_space<vmem>>, vector<1x10xf32>
    %266 = vector.broadcast %265 : vector<1x10xf32> to vector<2x10xf32>
    %267 = arith.addf %264, %266 : vector<2x10xf32>
    %c0_404 = arith.constant 0 : index
    %c0_405 = arith.constant 0 : index
    %268 = vector.load %arg12[%c0_404, %c0_405] : memref<2x10xf32, #tpu.memory_space<vmem>>, vector<2x10xf32>
    tpu.vector_store %arg12[%c0_404, %c0_405], %267 {strides = array<i32>} : memref<2x10xf32, #tpu.memory_space<vmem>>, vector<2x10xf32>,
    return
  }
}

</mosaic_0001>

<llo_original>
// kernel: lenet_forward.1
$region0: #{lenet_forward.1}
  #allocation0 [shape = 'u32[]', space=smem, size = 0x4, offset = 0x4, fixed_abs, tag = 'smem constant byte address 0x4 - core index']
  #allocation1 [shape = 'u32[72,128]{1,0:T(1,128)}', space=vmem, size = 0x9000, scoped, tag = 'internal scratch']
  #allocation2 [shape = 'f32[4,2,10,16,12]{4,3,2,1,0:T(8,128)}', space=vmem, size = 0xa0000, scoped, tag = 'scratch operand']
  #allocation3 [shape = 'f32[2,12,16,12]{3,2,1,0:T(8,128)}', space=vmem, size = 0x30000, scoped, tag = 'scratch operand']
  #allocation4 [shape = 'f32[128,300]{1,0:T(8,128)}', space=vmem, size = 0x30000, scoped, tag = 'scratch operand']
  %s0 = inlined_call_operand.vmem [shape: bf16[512,75], index: 0, kind: input, shape index: {}]
  %s1 = inlined_call_operand.vmem [shape: bf16[75,12], index: 1, kind: input, shape index: {}]
  %s2 = inlined_call_operand.vmem [shape: f32[1,12], index: 2, kind: input, shape index: {}]
  %s3 = inlined_call_operand.vmem [shape: bf16[300,12], index: 3, kind: input, shape index: {}]
  %s4 = inlined_call_operand.vmem [shape: f32[1,12], index: 4, kind: input, shape index: {}]
  %s5 = inlined_call_operand.vmem [shape: bf16[300,12], index: 5, kind: input, shape index: {}]
  %s6 = inlined_call_operand.vmem [shape: f32[1,12], index: 6, kind: input, shape index: {}]
  %s7 = inlined_call_operand.vmem [shape: bf16[12,640], index: 7, kind: input, shape index: {}]
  %s8 = inlined_call_operand.vmem [shape: f32[128,640], index: 8, kind: input, shape index: {}]
  %s9 = inlined_call_operand.vmem [shape: bf16[2,128], index: 9, kind: input, shape index: {}]
  %s10 = inlined_call_operand.vmem [shape: bf16[640,10], index: 10, kind: input, shape index: {}]
  %s11 = inlined_call_operand.vmem [shape: f32[1,10], index: 11, kind: input, shape index: {}]
  %s12 = inlined_call_operand.hbm [shape: f32[2,10], index: 12, kind: output, shape index: {}]
  %s13 = sld [smem:[#allocation0]]
  $region58: #{lenet_forward.1} parent=0
    _
  %s15 = ssub.s32 1, %s13
  %s16 = scalar_select 0, %s15, %s13
  $region1: #{lenet_forward.1} parent=0
    #allocation5 [shape = 'u8[1024]{0}', space=vmem, size = 0x400, scoped, tag = 'output window, operand 0, single buffered']
    #allocation6 [shape = 's32[1]{0}', space=sflag, size = 0x4, scoped, tag = 'scoped memory for lenet_forward.1']
    %17 = vsyncpa [#allocation6], 0
    // Predicated region
    $region2: #{lenet_forward.1} parent=1 // pred_check
      _
    $region3: #{lenet_forward.1} parent=1 // pred_check_branch
      %19 = sbr.rel (0) target = $region5
    $region4: #{lenet_forward.1} parent=1 // pred_region
      _
    $region5: #{lenet_forward.1} parent=1 // pred_fallthru
      _
    // Predicated region
    $region6: #{lenet_forward.1} parent=1 // pred_check
      _
    $region7: #{lenet_forward.1} parent=1 // pred_check_branch
      %21 = sbr.rel (0) target = $region9
    $region8: #{lenet_forward.1} parent=1 // pred_region
      _
    $region9: #{lenet_forward.1} parent=1 // pred_fallthru
      _
    // Predicated region
    $region10: #{lenet_forward.1} parent=1 // pred_check
      _
    $region11: #{lenet_forward.1} parent=1 // pred_check_branch
      %23 = sbr.rel (0) target = $region13
    $region12: #{lenet_forward.1} parent=1 // pred_region
      _
    $region13: #{lenet_forward.1} parent=1 // pred_fallthru
      _
    // Predicated region
    $region14: #{lenet_forward.1} parent=1 // pred_check
      _
    $region15: #{lenet_forward.1} parent=1 // pred_check_branch
      %25 = sbr.rel (0) target = $region17
    $region16: #{lenet_forward.1} parent=1 // pred_region
      _
    $region17: #{lenet_forward.1} parent=1 // pred_fallthru
      _
    // Predicated region
    $region18: #{lenet_forward.1} parent=1 // pred_check
      _
    $region19: #{lenet_forward.1} parent=1 // pred_check_branch
      %27 = sbr.rel (0) target = $region21
    $region20: #{lenet_forward.1} parent=1 // pred_region
      _
    $region21: #{lenet_forward.1} parent=1 // pred_fallthru
      _
    // Predicated region
    $region22: #{lenet_forward.1} parent=1 // pred_check
      _
    $region23: #{lenet_forward.1} parent=1 // pred_check_branch
      %29 = sbr.rel (0) target = $region25
    $region24: #{lenet_forward.1} parent=1 // pred_region
      _
    $region25: #{lenet_forward.1} parent=1 // pred_fallthru
      _
    // Predicated region
    $region26: #{lenet_forward.1} parent=1 // pred_check
      _
    $region27: #{lenet_forward.1} parent=1 // pred_check_branch
      %31 = sbr.rel (0) target = $region29
    $region28: #{lenet_forward.1} parent=1 // pred_region
      _
    $region29: #{lenet_forward.1} parent=1 // pred_fallthru
      _
    // Predicated region
    $region30: #{lenet_forward.1} parent=1 // pred_check
      _
    $region31: #{lenet_forward.1} parent=1 // pred_check_branch
      %33 = sbr.rel (0) target = $region33
    $region32: #{lenet_forward.1} parent=1 // pred_region
      _
    $region33: #{lenet_forward.1} parent=1 // pred_fallthru
      _
    // Predicated region
    $region34: #{lenet_forward.1} parent=1 // pred_check
      _
    $region35: #{lenet_forward.1} parent=1 // pred_check_branch
      %35 = sbr.rel (0) target = $region37
    $region36: #{lenet_forward.1} parent=1 // pred_region
      _
    $region37: #{lenet_forward.1} parent=1 // pred_fallthru
      _
    // Predicated region
    $region38: #{lenet_forward.1} parent=1 // pred_check
      _
    $region39: #{lenet_forward.1} parent=1 // pred_check_branch
      %37 = sbr.rel (0) target = $region41
    $region40: #{lenet_forward.1} parent=1 // pred_region
      _
    $region41: #{lenet_forward.1} parent=1 // pred_fallthru
      _
    // Predicated region
    $region42: #{lenet_forward.1} parent=1 // pred_check
      _
    $region43: #{lenet_forward.1} parent=1 // pred_check_branch
      %39 = sbr.rel (0) target = $region45
    $region44: #{lenet_forward.1} parent=1 // pred_region
      _
    $region45: #{lenet_forward.1} parent=1 // pred_fallthru
      _
    // Predicated region
    $region46: #{lenet_forward.1} parent=1 // pred_check
      _
    $region47: #{lenet_forward.1} parent=1 // pred_check_branch
      %41 = sbr.rel (0) target = $region49
    $region48: #{lenet_forward.1} parent=1 // pred_region
      _
    $region49: #{lenet_forward.1} parent=1 // pred_fallthru
      _
    %v43 = vld [vmem:[%s0] sm:$0xf]
    %v44 = vld [vmem:[%s0 + $0x4] sm:$0xf]
    %v45 = vld [vmem:[%s0 + $0x8] sm:$0xf]
    %v46 = vld [vmem:[%s0 + $0xc] sm:$0xf]
    %v47 = vld [vmem:[%s0 + $0x10] sm:$0xf]
    %v48 = vld [vmem:[%s0 + $0x14] sm:$0xf]
    %v49 = vld [vmem:[%s0 + $0x18] sm:$0xf]
    %v50 = vld [vmem:[%s0 + $0x1c] sm:$0xf]
    %v51 = vld [vmem:[%s0 + $0x20] sm:$0xf]
    %v52 = vld [vmem:[%s0 + $0x24] sm:$0xf]
    %v53 = vld [vmem:[%s0 + $0x28] sm:$0xf]
    %v54 = vld [vmem:[%s0 + $0x2c] sm:$0xf]
    %v55 = vld [vmem:[%s0 + $0x30] sm:$0xf]
    %v56 = vld [vmem:[%s0 + $0x34] sm:$0xf]
    %v57 = vld [vmem:[%s0 + $0x38] sm:$0xf]
    %v58 = vld [vmem:[%s0 + $0x3c] sm:$0xf]
    %v59 = vld [vmem:[%s0 + $0x40] sm:$0xf]
    %v60 = vld [vmem:[%s0 + $0x44] sm:$0xf]
    %v61 = vld [vmem:[%s0 + $0x48] sm:$0xf]
    %v62 = vld [vmem:[%s0 + $0x4c] sm:$0xf]
    %v63 = vld [vmem:[%s0 + $0x50] sm:$0xf]
    %v64 = vld [vmem:[%s0 + $0x54] sm:$0xf]
    %v65 = vld [vmem:[%s0 + $0x58] sm:$0xf]
    %v66 = vld [vmem:[%s0 + $0x5c] sm:$0xf]
    %v67 = vld [vmem:[%s0 + $0x60] sm:$0xf]
    %v68 = vld [vmem:[%s0 + $0x64] sm:$0xf]
    %v69 = vld [vmem:[%s0 + $0x68] sm:$0xf]
    %v70 = vld [vmem:[%s0 + $0x6c] sm:$0xf]
    %v71 = vld [vmem:[%s0 + $0x70] sm:$0xf]
    %v72 = vld [vmem:[%s0 + $0x74] sm:$0xf]
    %v73 = vld [vmem:[%s0 + $0x78] sm:$0xf]
    %v74 = vld [vmem:[%s0 + $0x7c] sm:$0xf]
    %v75 = vld [vmem:[%s0 + $0x80] sm:$0xf]
    %v76 = vld [vmem:[%s0 + $0x84] sm:$0xf]
    %v77 = vld [vmem:[%s0 + $0x88] sm:$0xf]
    %v78 = vld [vmem:[%s0 + $0x8c] sm:$0xf]
    %v79 = vld [vmem:[%s0 + $0x90] sm:$0xf]
    %v80 = vld [vmem:[%s0 + $0x94] sm:$0xf]
    %v81 = vld [vmem:[%s0 + $0x98] sm:$0xf]
    %v82 = vld [vmem:[%s0 + $0x9c] sm:$0xf]
    %v83 = vld [vmem:[%s0 + $0xa0] sm:$0xf]
    %v84 = vld [vmem:[%s0 + $0xa4] sm:$0xf]
    %v85 = vld [vmem:[%s0 + $0xa8] sm:$0xf]
    %v86 = vld [vmem:[%s0 + $0xac] sm:$0xf]
    %v87 = vld [vmem:[%s0 + $0xb0] sm:$0xf]
    %v88 = vld [vmem:[%s0 + $0xb4] sm:$0xf]
    %v89 = vld [vmem:[%s0 + $0xb8] sm:$0xf]
    %v90 = vld [vmem:[%s0 + $0xbc] sm:$0xf]
    %v91 = vld [vmem:[%s0 + $0xc0] sm:$0xf]
    %v92 = vld [vmem:[%s0 + $0xc4] sm:$0xf]
    %v93 = vld [vmem:[%s0 + $0xc8] sm:$0xf]
    %v94 = vld [vmem:[%s0 + $0xcc] sm:$0xf]
    %v95 = vld [vmem:[%s0 + $0xd0] sm:$0xf]
    %v96 = vld [vmem:[%s0 + $0xd4] sm:$0xf]
    %v97 = vld [vmem:[%s0 + $0xd8] sm:$0xf]
    %v98 = vld [vmem:[%s0 + $0xdc] sm:$0xf]
    %v99 = vld [vmem:[%s0 + $0xe0] sm:$0xf]
    %v100 = vld [vmem:[%s0 + $0xe4] sm:$0xf]
    %v101 = vld [vmem:[%s0 + $0xe8] sm:$0xf]
    %v102 = vld [vmem:[%s0 + $0xec] sm:$0xf]
    %v103 = vld [vmem:[%s0 + $0xf0] sm:$0xf]
    %v104 = vld [vmem:[%s0 + $0xf4] sm:$0xf]
    %v105 = vld [vmem:[%s0 + $0xf8] sm:$0xf]
    %v106 = vld [vmem:[%s0 + $0xfc] sm:$0xf]
    %v107 = vld [vmem:[%s1] sm:$0xf]
    %v108 = vld [vmem:[%s1 + $0x4] sm:$0xf]
    %v109 = vld [vmem:[%s1 + $0x8] sm:$0xf]
    %v110 = vld [vmem:[%s1 + $0xc] sm:$0xf]
    %v111 = vld [vmem:[%s1 + $0x10] sm:$0xf]
    %v112 = vld [vmem:[%s1 + $0x14] sm:$0xf]
    %v113 = vld [vmem:[%s1 + $0x18] sm:$0xf]
    %v114 = vld [vmem:[%s1 + $0x1c] sm:$0xf]
    %v115 = vld [vmem:[%s1 + $0x20] sm:$0xf]
    %v116 = vld [vmem:[%s1 + $0x24] sm:$0x3]
    %v117 = vld [vmem:[%s2] sm:$0x1]
    %v119 = vperm.slane %v117, 0
    %v185 = vunpack.c.l.b16 %v43
    %v186 = vunpack.c.l.b16 %v44
    %v187 = vunpack.c.l.b16 %v45
    %v188 = vunpack.c.l.b16 %v46
    %v189 = vunpack.c.l.b16 %v47
    %v190 = vunpack.c.l.b16 %v48
    %v191 = vunpack.c.l.b16 %v49
    %v192 = vunpack.c.l.b16 %v50
    %v193 = vunpack.c.l.b16 %v51
    %v194 = vunpack.c.l.b16 %v52
    %v195 = vunpack.c.l.b16 %v53
    %v196 = vunpack.c.l.b16 %v54
    %v197 = vunpack.c.l.b16 %v55
    %v198 = vunpack.c.l.b16 %v56
    %v199 = vunpack.c.l.b16 %v57
    %v200 = vunpack.c.l.b16 %v58
    %v201 = vunpack.c.l.b16 %v59
    %v202 = vunpack.c.l.b16 %v60
    %v203 = vunpack.c.l.b16 %v61
    %v204 = vunpack.c.l.b16 %v62
    %v205 = vunpack.c.l.b16 %v63
    %v206 = vunpack.c.l.b16 %v64
    %v207 = vunpack.c.l.b16 %v65
    %v208 = vunpack.c.l.b16 %v66
    %v209 = vunpack.c.l.b16 %v67
    %v210 = vunpack.c.l.b16 %v68
    %v211 = vunpack.c.l.b16 %v69
    %v212 = vunpack.c.l.b16 %v70
    %v213 = vunpack.c.l.b16 %v71
    %v214 = vunpack.c.l.b16 %v72
    %v215 = vunpack.c.l.b16 %v73
    %v216 = vunpack.c.l.b16 %v74
    %v217 = vunpack.c.l.b16 %v75
    %v218 = vunpack.c.l.b16 %v76
    %v219 = vunpack.c.l.b16 %v77
    %v220 = vunpack.c.l.b16 %v78
    %v221 = vunpack.c.l.b16 %v79
    %v222 = vunpack.c.l.b16 %v80
    %v223 = vunpack.c.l.b16 %v81
    %v224 = vunpack.c.l.b16 %v82
    %v225 = vunpack.c.l.b16 %v83
    %v226 = vunpack.c.l.b16 %v84
    %v227 = vunpack.c.l.b16 %v85
    %v228 = vunpack.c.l.b16 %v86
    %v229 = vunpack.c.l.b16 %v87
    %v230 = vunpack.c.l.b16 %v88
    %v231 = vunpack.c.l.b16 %v89
    %v232 = vunpack.c.l.b16 %v90
    %v233 = vunpack.c.l.b16 %v91
    %v234 = vunpack.c.l.b16 %v92
    %v235 = vunpack.c.l.b16 %v93
    %v236 = vunpack.c.l.b16 %v94
    %v237 = vunpack.c.l.b16 %v95
    %v238 = vunpack.c.l.b16 %v96
    %v239 = vunpack.c.l.b16 %v97
    %v240 = vunpack.c.l.b16 %v98
    %v241 = vunpack.c.l.b16 %v99
    %v242 = vunpack.c.l.b16 %v100
    %v243 = vunpack.c.l.b16 %v101
    %v244 = vunpack.c.l.b16 %v102
    %v245 = vunpack.c.l.b16 %v103
    %v246 = vunpack.c.l.b16 %v104
    %v247 = vunpack.c.l.b16 %v105
    %v248 = vunpack.c.l.b16 %v106
    %v249 = vpack.c.b16 %v186, %v185
    %v250 = vpack.c.b16 %v188, %v187
    %v251 = vpack.c.b16 %v190, %v189
    %v252 = vpack.c.b16 %v192, %v191
    %v253 = vpack.c.b16 %v194, %v193
    %v254 = vpack.c.b16 %v196, %v195
    %v255 = vpack.c.b16 %v198, %v197
    %v256 = vpack.c.b16 %v200, %v199
    %v257 = vpack.c.b16 %v202, %v201
    %v258 = vpack.c.b16 %v204, %v203
    %v259 = vpack.c.b16 %v206, %v205
    %v260 = vpack.c.b16 %v208, %v207
    %v261 = vpack.c.b16 %v210, %v209
    %v262 = vpack.c.b16 %v212, %v211
    %v263 = vpack.c.b16 %v214, %v213
    %v264 = vpack.c.b16 %v216, %v215
    %v265 = vpack.c.b16 %v218, %v217
    %v266 = vpack.c.b16 %v220, %v219
    %v267 = vpack.c.b16 %v222, %v221
    %v268 = vpack.c.b16 %v224, %v223
    %v269 = vpack.c.b16 %v226, %v225
    %v270 = vpack.c.b16 %v228, %v227
    %v271 = vpack.c.b16 %v230, %v229
    %v272 = vpack.c.b16 %v232, %v231
    %v273 = vpack.c.b16 %v234, %v233
    %v274 = vpack.c.b16 %v236, %v235
    %v275 = vpack.c.b16 %v238, %v237
    %v276 = vpack.c.b16 %v240, %v239
    %v277 = vpack.c.b16 %v242, %v241
    %v278 = vpack.c.b16 %v244, %v243
    %v279 = vpack.c.b16 %v246, %v245
    %v280 = vpack.c.b16 %v248, %v247
    %v291 = vunpack.c.l.b16 %v107
    %v292 = vunpack.c.l.b16 %v108
    %v293 = vunpack.c.l.b16 %v109
    %v294 = vunpack.c.l.b16 %v110
    %v295 = vunpack.c.l.b16 %v111
    %v296 = vunpack.c.l.b16 %v112
    %v297 = vunpack.c.l.b16 %v113
    %v298 = vunpack.c.l.b16 %v114
    %v299 = vunpack.c.l.b16 %v115
    %v300 = vunpack.c.l.b16 %v116
    %v301 = vpack.c.b16 %v292, %v291
    %v302 = vpack.c.b16 %v294, %v293
    %v303 = vpack.c.b16 %v296, %v295
    %v304 = vpack.c.b16 %v298, %v297
    %v305 = vpack.c.b16 %v300, %v299
    %vm310 = vcmask 613376
    %v312 = vsel %vm310, %v249, 0
    %v315 = vsel %vm310, %v250, 0
    %v318 = vsel %vm310, %v251, 0
    %v321 = vsel %vm310, %v252, 0
    %v324 = vsel %vm310, %v253, 0
    %v327 = vsel %vm310, %v254, 0
    %v330 = vsel %vm310, %v255, 0
    %v333 = vsel %vm310, %v256, 0
    %v336 = vsel %vm310, %v257, 0
    %v339 = vsel %vm310, %v258, 0
    %v342 = vsel %vm310, %v259, 0
    %v345 = vsel %vm310, %v260, 0
    %v348 = vsel %vm310, %v261, 0
    %v351 = vsel %vm310, %v262, 0
    %v354 = vsel %vm310, %v263, 0
    %v357 = vsel %vm310, %v264, 0
    %v360 = vsel %vm310, %v265, 0
    %v363 = vsel %vm310, %v266, 0
    %v366 = vsel %vm310, %v267, 0
    %v369 = vsel %vm310, %v268, 0
    %v372 = vsel %vm310, %v269, 0
    %v375 = vsel %vm310, %v270, 0
    %v378 = vsel %vm310, %v271, 0
    %v381 = vsel %vm310, %v272, 0
    %v384 = vsel %vm310, %v273, 0
    %v387 = vsel %vm310, %v274, 0
    %v390 = vsel %vm310, %v275, 0
    %v393 = vsel %vm310, %v276, 0
    %v396 = vsel %vm310, %v277, 0
    %v399 = vsel %vm310, %v278, 0
    %v402 = vsel %vm310, %v279, 0
    %v405 = vsel %vm310, %v280, 0
    %vm407 = vcmask 1044480
    %vm408 = vcmask 1045504
    %v409 = vsel %vm407, 4294967295, 65535
    %v410 = vsel %vm408, %v409, 0
    %v412 = vand.u32 %v305, %v410
    %414 = vmatpush.bf16.msra.mxu0 0
    %415 = vmatpush.bf16.msra.mxu0 0
    %416 = vmatpush.bf16.msra.mxu0 0
    %417 = vmatpush.bf16.msra.mxu0 %v412
    %418 = vmatpush.bf16.msra.mxu0 %v304
    %419 = vmatpush.bf16.msra.mxu0 %v303
    %420 = vmatpush.bf16.msra.mxu0 %v302
    %421 = vmatpush.bf16.msra.mxu0 %v301
    %422 = vmatmul.bf16.gmra.mxu0 %v312
    %v423 = vpop.f32.mrf.mxu0
    %v424 = vadd.f32 %v119, %v423
    %v425 = vpop.f32.mrf.mxu0
    %v426 = vadd.f32 %v119, %v425
    %427 = vmatmul.bf16.gmra.mxu0 %v315
    %v428 = vpop.f32.mrf.mxu0
    %v429 = vadd.f32 %v119, %v428
    %v430 = vpop.f32.mrf.mxu0
    %v431 = vadd.f32 %v119, %v430
    %432 = vmatmul.bf16.gmra.mxu0 %v318
    %v433 = vpop.f32.mrf.mxu0
    %v434 = vadd.f32 %v119, %v433
    %v435 = vpop.f32.mrf.mxu0
    %v436 = vadd.f32 %v119, %v435
    %437 = vmatmul.bf16.gmra.mxu0 %v321
    %v438 = vpop.f32.mrf.mxu0
    %v439 = vadd.f32 %v119, %v438
    %v440 = vpop.f32.mrf.mxu0
    %v441 = vadd.f32 %v119, %v440
    %442 = vmatmul.bf16.gmra.mxu0 %v324
    %v443 = vpop.f32.mrf.mxu0
    %v444 = vadd.f32 %v119, %v443
    %v445 = vpop.f32.mrf.mxu0
    %v446 = vadd.f32 %v119, %v445
    %447 = vmatmul.bf16.gmra.mxu0 %v327
    %v448 = vpop.f32.mrf.mxu0
    %v449 = vadd.f32 %v119, %v448
    %v450 = vpop.f32.mrf.mxu0
    %v451 = vadd.f32 %v119, %v450
    %452 = vmatmul.bf16.gmra.mxu0 %v330
    %v453 = vpop.f32.mrf.mxu0
    %v454 = vadd.f32 %v119, %v453
    %v455 = vpop.f32.mrf.mxu0
    %v456 = vadd.f32 %v119, %v455
    %457 = vmatmul.bf16.gmra.mxu0 %v333
    %v458 = vpop.f32.mrf.mxu0
    %v459 = vadd.f32 %v119, %v458
    %v460 = vpop.f32.mrf.mxu0
    %v461 = vadd.f32 %v119, %v460
    %462 = vmatmul.bf16.gmra.mxu0 %v336
    %v463 = vpop.f32.mrf.mxu0
    %v464 = vadd.f32 %v119, %v463
    %v465 = vpop.f32.mrf.mxu0
    %v466 = vadd.f32 %v119, %v465
    %467 = vmatmul.bf16.gmra.mxu0 %v339
    %v468 = vpop.f32.mrf.mxu0
    %v469 = vadd.f32 %v119, %v468
    %v470 = vpop.f32.mrf.mxu0
    %v471 = vadd.f32 %v119, %v470
    %472 = vmatmul.bf16.gmra.mxu0 %v342
    %v473 = vpop.f32.mrf.mxu0
    %v474 = vadd.f32 %v119, %v473
    %v475 = vpop.f32.mrf.mxu0
    %v476 = vadd.f32 %v119, %v475
    %477 = vmatmul.bf16.gmra.mxu0 %v345
    %v478 = vpop.f32.mrf.mxu0
    %v479 = vadd.f32 %v119, %v478
    %v480 = vpop.f32.mrf.mxu0
    %v481 = vadd.f32 %v119, %v480
    %482 = vmatmul.bf16.gmra.mxu0 %v348
    %v483 = vpop.f32.mrf.mxu0
    %v484 = vadd.f32 %v119, %v483
    %v485 = vpop.f32.mrf.mxu0
    %v486 = vadd.f32 %v119, %v485
    %487 = vmatmul.bf16.gmra.mxu0 %v351
    %v488 = vpop.f32.mrf.mxu0
    %v489 = vadd.f32 %v119, %v488
    %v490 = vpop.f32.mrf.mxu0
    %v491 = vadd.f32 %v119, %v490
    %492 = vmatmul.bf16.gmra.mxu0 %v354
    %v493 = vpop.f32.mrf.mxu0
    %v494 = vadd.f32 %v119, %v493
    %v495 = vpop.f32.mrf.mxu0
    %v496 = vadd.f32 %v119, %v495
    %497 = vmatmul.bf16.gmra.mxu0 %v357
    %v498 = vpop.f32.mrf.mxu0
    %v499 = vadd.f32 %v119, %v498
    %v500 = vpop.f32.mrf.mxu0
    %v501 = vadd.f32 %v119, %v500
    %502 = vmatmul.bf16.gmra.mxu0 %v360
    %v503 = vpop.f32.mrf.mxu0
    %v504 = vadd.f32 %v119, %v503
    %v505 = vpop.f32.mrf.mxu0
    %v506 = vadd.f32 %v119, %v505
    %507 = vmatmul.bf16.gmra.mxu0 %v363
    %v508 = vpop.f32.mrf.mxu0
    %v509 = vadd.f32 %v119, %v508
    %v510 = vpop.f32.mrf.mxu0
    %v511 = vadd.f32 %v119, %v510
    %512 = vmatmul.bf16.gmra.mxu0 %v366
    %v513 = vpop.f32.mrf.mxu0
    %v514 = vadd.f32 %v119, %v513
    %v515 = vpop.f32.mrf.mxu0
    %v516 = vadd.f32 %v119, %v515
    %517 = vmatmul.bf16.gmra.mxu0 %v369
    %v518 = vpop.f32.mrf.mxu0
    %v519 = vadd.f32 %v119, %v518
    %v520 = vpop.f32.mrf.mxu0
    %v521 = vadd.f32 %v119, %v520
    %522 = vmatmul.bf16.gmra.mxu0 %v372
    %v523 = vpop.f32.mrf.mxu0
    %v524 = vadd.f32 %v119, %v523
    %v525 = vpop.f32.mrf.mxu0
    %v526 = vadd.f32 %v119, %v525
    %527 = vmatmul.bf16.gmra.mxu0 %v375
    %v528 = vpop.f32.mrf.mxu0
    %v529 = vadd.f32 %v119, %v528
    %v530 = vpop.f32.mrf.mxu0
    %v531 = vadd.f32 %v119, %v530
    %532 = vmatmul.bf16.gmra.mxu0 %v378
    %v533 = vpop.f32.mrf.mxu0
    %v534 = vadd.f32 %v119, %v533
    %v535 = vpop.f32.mrf.mxu0
    %v536 = vadd.f32 %v119, %v535
    %537 = vmatmul.bf16.gmra.mxu0 %v381
    %v538 = vpop.f32.mrf.mxu0
    %v539 = vadd.f32 %v119, %v538
    %v540 = vpop.f32.mrf.mxu0
    %v541 = vadd.f32 %v119, %v540
    %542 = vmatmul.bf16.gmra.mxu0 %v384
    %v543 = vpop.f32.mrf.mxu0
    %v544 = vadd.f32 %v119, %v543
    %v545 = vpop.f32.mrf.mxu0
    %v546 = vadd.f32 %v119, %v545
    %547 = vmatmul.bf16.gmra.mxu0 %v387
    %v548 = vpop.f32.mrf.mxu0
    %v549 = vadd.f32 %v119, %v548
    %v550 = vpop.f32.mrf.mxu0
    %v551 = vadd.f32 %v119, %v550
    %552 = vmatmul.bf16.gmra.mxu0 %v390
    %v553 = vpop.f32.mrf.mxu0
    %v554 = vadd.f32 %v119, %v553
    %v555 = vpop.f32.mrf.mxu0
    %v556 = vadd.f32 %v119, %v555
    %557 = vmatmul.bf16.gmra.mxu0 %v393
    %v558 = vpop.f32.mrf.mxu0
    %v559 = vadd.f32 %v119, %v558
    %v560 = vpop.f32.mrf.mxu0
    %v561 = vadd.f32 %v119, %v560
    %562 = vmatmul.bf16.gmra.mxu0 %v396
    %v563 = vpop.f32.mrf.mxu0
    %v564 = vadd.f32 %v119, %v563
    %v565 = vpop.f32.mrf.mxu0
    %v566 = vadd.f32 %v119, %v565
    %567 = vmatmul.bf16.gmra.mxu0 %v399
    %v568 = vpop.f32.mrf.mxu0
    %v569 = vadd.f32 %v119, %v568
    %v570 = vpop.f32.mrf.mxu0
    %v571 = vadd.f32 %v119, %v570
    %572 = vmatmul.bf16.gmra.mxu0 %v402
    %v573 = vpop.f32.mrf.mxu0
    %v574 = vadd.f32 %v119, %v573
    %v575 = vpop.f32.mrf.mxu0
    %v576 = vadd.f32 %v119, %v575
    %577 = vmatmul.bf16.gmra.mxu0 %v405
    %v578 = vpop.f32.mrf.mxu0
    %v579 = vadd.f32 %v119, %v578
    %v580 = vpop.f32.mrf.mxu0
    %v581 = vadd.f32 %v119, %v580
    %582 = vdwg.mxu0
    %v583 = vsub.f32 0.0, %v424
    %v584 = vsub.f32 0.0, %v426
    %v585 = vsub.f32 0.0, %v429
    %v586 = vsub.f32 0.0, %v431
    %v587 = vsub.f32 0.0, %v434
    %v588 = vsub.f32 0.0, %v436
    %v589 = vsub.f32 0.0, %v439
    %v590 = vsub.f32 0.0, %v441
    %v591 = vsub.f32 0.0, %v444
    %v592 = vsub.f32 0.0, %v446
    %v593 = vsub.f32 0.0, %v449
    %v594 = vsub.f32 0.0, %v451
    %v595 = vsub.f32 0.0, %v454
    %v596 = vsub.f32 0.0, %v456
    %v597 = vsub.f32 0.0, %v459
    %v598 = vsub.f32 0.0, %v461
    %v599 = vsub.f32 0.0, %v464
    %v600 = vsub.f32 0.0, %v466
    %v601 = vsub.f32 0.0, %v469
    %v602 = vsub.f32 0.0, %v471
    %v603 = vsub.f32 0.0, %v474
    %v604 = vsub.f32 0.0, %v476
    %v605 = vsub.f32 0.0, %v479
    %v606 = vsub.f32 0.0, %v481
    %v607 = vsub.f32 0.0, %v484
    %v608 = vsub.f32 0.0, %v486
    %v609 = vsub.f32 0.0, %v489
    %v610 = vsub.f32 0.0, %v491
    %v611 = vsub.f32 0.0, %v494
    %v612 = vsub.f32 0.0, %v496
    %v613 = vsub.f32 0.0, %v499
    %v614 = vsub.f32 0.0, %v501
    %v615 = vsub.f32 0.0, %v504
    %v616 = vsub.f32 0.0, %v506
    %v617 = vsub.f32 0.0, %v509
    %v618 = vsub.f32 0.0, %v511
    %v619 = vsub.f32 0.0, %v514
    %v620 = vsub.f32 0.0, %v516
    %v621 = vsub.f32 0.0, %v519
    %v622 = vsub.f32 0.0, %v521
    %v623 = vsub.f32 0.0, %v524
    %v624 = vsub.f32 0.0, %v526
    %v625 = vsub.f32 0.0, %v529
    %v626 = vsub.f32 0.0, %v531
    %v627 = vsub.f32 0.0, %v534
    %v628 = vsub.f32 0.0, %v536
    %v629 = vsub.f32 0.0, %v539
    %v630 = vsub.f32 0.0, %v541
    %v631 = vsub.f32 0.0, %v544
    %v632 = vsub.f32 0.0, %v546
    %v633 = vsub.f32 0.0, %v549
    %v634 = vsub.f32 0.0, %v551
    %v635 = vsub.f32 0.0, %v554
    %v636 = vsub.f32 0.0, %v556
    %v637 = vsub.f32 0.0, %v559
    %v638 = vsub.f32 0.0, %v561
    %v639 = vsub.f32 0.0, %v564
    %v640 = vsub.f32 0.0, %v566
    %v641 = vsub.f32 0.0, %v569
    %v642 = vsub.f32 0.0, %v571
    %v643 = vsub.f32 0.0, %v574
    %v644 = vsub.f32 0.0, %v576
    %v645 = vsub.f32 0.0, %v579
    %v646 = vsub.f32 0.0, %v581
    %v647 = vmul.f32 %v583, 1.442695
    %v648 = vpow.pop %v647
    %v649 = vmul.f32 %v584, 1.442695
    %v650 = vpow.pop %v649
    %v651 = vmul.f32 %v585, 1.442695
    %v652 = vpow.pop %v651
    %v653 = vmul.f32 %v586, 1.442695
    %v654 = vpow.pop %v653
    %v655 = vmul.f32 %v587, 1.442695
    %v656 = vpow.pop %v655
    %v657 = vmul.f32 %v588, 1.442695
    %v658 = vpow.pop %v657
    %v659 = vmul.f32 %v589, 1.442695
    %v660 = vpow.pop %v659
    %v661 = vmul.f32 %v590, 1.442695
    %v662 = vpow.pop %v661
    %v663 = vmul.f32 %v591, 1.442695
    %v664 = vpow.pop %v663
    %v665 = vmul.f32 %v592, 1.442695
    %v666 = vpow.pop %v665
    %v667 = vmul.f32 %v593, 1.442695
    %v668 = vpow.pop %v667
    %v669 = vmul.f32 %v594, 1.442695
    %v670 = vpow.pop %v669
    %v671 = vmul.f32 %v595, 1.442695
    %v672 = vpow.pop %v671
    %v673 = vmul.f32 %v596, 1.442695
    %v674 = vpow.pop %v673
    %v675 = vmul.f32 %v597, 1.442695
    %v676 = vpow.pop %v675
    %v677 = vmul.f32 %v598, 1.442695
    %v678 = vpow.pop %v677
    %v679 = vmul.f32 %v599, 1.442695
    %v680 = vpow.pop %v679
    %v681 = vmul.f32 %v600, 1.442695
    %v682 = vpow.pop %v681
    %v683 = vmul.f32 %v601, 1.442695
    %v684 = vpow.pop %v683
    %v685 = vmul.f32 %v602, 1.442695
    %v686 = vpow.pop %v685
    %v687 = vmul.f32 %v603, 1.442695
    %v688 = vpow.pop %v687
    %v689 = vmul.f32 %v604, 1.442695
    %v690 = vpow.pop %v689
    %v691 = vmul.f32 %v605, 1.442695
    %v692 = vpow.pop %v691
    %v693 = vmul.f32 %v606, 1.442695
    %v694 = vpow.pop %v693
    %v695 = vmul.f32 %v607, 1.442695
    %v696 = vpow.pop %v695
    %v697 = vmul.f32 %v608, 1.442695
    %v698 = vpow.pop %v697
    %v699 = vmul.f32 %v609, 1.442695
    %v700 = vpow.pop %v699
    %v701 = vmul.f32 %v610, 1.442695
    %v702 = vpow.pop %v701
    %v703 = vmul.f32 %v611, 1.442695
    %v704 = vpow.pop %v703
    %v705 = vmul.f32 %v612, 1.442695
    %v706 = vpow.pop %v705
    %v707 = vmul.f32 %v613, 1.442695
    %v708 = vpow.pop %v707
    %v709 = vmul.f32 %v614, 1.442695
    %v710 = vpow.pop %v709
    %v711 = vmul.f32 %v615, 1.442695
    %v712 = vpow.pop %v711
    %v713 = vmul.f32 %v616, 1.442695
    %v714 = vpow.pop %v713
    %v715 = vmul.f32 %v617, 1.442695
    %v716 = vpow.pop %v715
    %v717 = vmul.f32 %v618, 1.442695
    %v718 = vpow.pop %v717
    %v719 = vmul.f32 %v619, 1.442695
    %v720 = vpow.pop %v719
    %v721 = vmul.f32 %v620, 1.442695
    %v722 = vpow.pop %v721
    %v723 = vmul.f32 %v621, 1.442695
    %v724 = vpow.pop %v723
    %v725 = vmul.f32 %v622, 1.442695
    %v726 = vpow.pop %v725
    %v727 = vmul.f32 %v623, 1.442695
    %v728 = vpow.pop %v727
    %v729 = vmul.f32 %v624, 1.442695
    %v730 = vpow.pop %v729
    %v731 = vmul.f32 %v625, 1.442695
    %v732 = vpow.pop %v731
    %v733 = vmul.f32 %v626, 1.442695
    %v734 = vpow.pop %v733
    %v735 = vmul.f32 %v627, 1.442695
    %v736 = vpow.pop %v735
    %v737 = vmul.f32 %v628, 1.442695
    %v738 = vpow.pop %v737
    %v739 = vmul.f32 %v629, 1.442695
    %v740 = vpow.pop %v739
    %v741 = vmul.f32 %v630, 1.442695
    %v742 = vpow.pop %v741
    %v743 = vmul.f32 %v631, 1.442695
    %v744 = vpow.pop %v743
    %v745 = vmul.f32 %v632, 1.442695
    %v746 = vpow.pop %v745
    %v747 = vmul.f32 %v633, 1.442695
    %v748 = vpow.pop %v747
    %v749 = vmul.f32 %v634, 1.442695
    %v750 = vpow.pop %v749
    %v751 = vmul.f32 %v635, 1.442695
    %v752 = vpow.pop %v751
    %v753 = vmul.f32 %v636, 1.442695
    %v754 = vpow.pop %v753
    %v755 = vmul.f32 %v637, 1.442695
    %v756 = vpow.pop %v755
    %v757 = vmul.f32 %v638, 1.442695
    %v758 = vpow.pop %v757
    %v759 = vmul.f32 %v639, 1.442695
    %v760 = vpow.pop %v759
    %v761 = vmul.f32 %v640, 1.442695
    %v762 = vpow.pop %v761
    %v763 = vmul.f32 %v641, 1.442695
    %v764 = vpow.pop %v763
    %v765 = vmul.f32 %v642, 1.442695
    %v766 = vpow.pop %v765
    %v767 = vmul.f32 %v643, 1.442695
    %v768 = vpow.pop %v767
    %v769 = vmul.f32 %v644, 1.442695
    %v770 = vpow.pop %v769
    %v771 = vmul.f32 %v645, 1.442695
    %v772 = vpow.pop %v771
    %v773 = vmul.f32 %v646, 1.442695
    %v774 = vpow.pop %v773
    %v775 = vadd.f32 %v648, 1.0
    %v776 = vadd.f32 %v650, 1.0
    %v777 = vadd.f32 %v652, 1.0
    %v778 = vadd.f32 %v654, 1.0
    %v779 = vadd.f32 %v656, 1.0
    %v780 = vadd.f32 %v658, 1.0
    %v781 = vadd.f32 %v660, 1.0
    %v782 = vadd.f32 %v662, 1.0
    %v783 = vadd.f32 %v664, 1.0
    %v784 = vadd.f32 %v666, 1.0
    %v785 = vadd.f32 %v668, 1.0
    %v786 = vadd.f32 %v670, 1.0
    %v787 = vadd.f32 %v672, 1.0
    %v788 = vadd.f32 %v674, 1.0
    %v789 = vadd.f32 %v676, 1.0
    %v790 = vadd.f32 %v678, 1.0
    %v791 = vadd.f32 %v680, 1.0
    %v792 = vadd.f32 %v682, 1.0
    %v793 = vadd.f32 %v684, 1.0
    %v794 = vadd.f32 %v686, 1.0
    %v795 = vadd.f32 %v688, 1.0
    %v796 = vadd.f32 %v690, 1.0
    %v797 = vadd.f32 %v692, 1.0
    %v798 = vadd.f32 %v694, 1.0
    %v799 = vadd.f32 %v696, 1.0
    %v800 = vadd.f32 %v698, 1.0
    %v801 = vadd.f32 %v700, 1.0
    %v802 = vadd.f32 %v702, 1.0
    %v803 = vadd.f32 %v704, 1.0
    %v804 = vadd.f32 %v706, 1.0
    %v805 = vadd.f32 %v708, 1.0
    %v806 = vadd.f32 %v710, 1.0
    %v807 = vadd.f32 %v712, 1.0
    %v808 = vadd.f32 %v714, 1.0
    %v809 = vadd.f32 %v716, 1.0
    %v810 = vadd.f32 %v718, 1.0
    %v811 = vadd.f32 %v720, 1.0
    %v812 = vadd.f32 %v722, 1.0
    %v813 = vadd.f32 %v724, 1.0
    %v814 = vadd.f32 %v726, 1.0
    %v815 = vadd.f32 %v728, 1.0
    %v816 = vadd.f32 %v730, 1.0
    %v817 = vadd.f32 %v732, 1.0
    %v818 = vadd.f32 %v734, 1.0
    %v819 = vadd.f32 %v736, 1.0
    %v820 = vadd.f32 %v738, 1.0
    %v821 = vadd.f32 %v740, 1.0
    %v822 = vadd.f32 %v742, 1.0
    %v823 = vadd.f32 %v744, 1.0
    %v824 = vadd.f32 %v746, 1.0
    %v825 = vadd.f32 %v748, 1.0
    %v826 = vadd.f32 %v750, 1.0
    %v827 = vadd.f32 %v752, 1.0
    %v828 = vadd.f32 %v754, 1.0
    %v829 = vadd.f32 %v756, 1.0
    %v830 = vadd.f32 %v758, 1.0
    %v831 = vadd.f32 %v760, 1.0
    %v832 = vadd.f32 %v762, 1.0
    %v833 = vadd.f32 %v764, 1.0
    %v834 = vadd.f32 %v766, 1.0
    %v835 = vadd.f32 %v768, 1.0
    %v836 = vadd.f32 %v770, 1.0
    %v837 = vadd.f32 %v772, 1.0
    %v838 = vadd.f32 %v774, 1.0
    %v839 = vrcp.pop %v775
    %v840 = vmul.f32 %v775, %v839
    %v841 = vsub.f32 1.0, %v840
    %v842 = vmul.f32 %v839, %v841
    %v843 = vadd.f32 %v839, %v842
    %vm844 = vweird.f32 %v775
    %vm845 = vweird.f32 %v839
    %vm846 = vmor %vm844, %vm845
    %v847 = vsel %vm846, %v839, %v843
    %v848 = vand.u32 2147483647, %v775
    %vm849 = vcmp.eq.f32.partialorder %v848, 8.507059e+37
    %v850 = vand.u32 %v775, 2147483648
    %v851 = vor.u32 1.1754944e-38, %v850
    %v852 = vsel %vm849, %v851, %v847
    %v853 = vmul.f32 1.0, %v852
    %v854 = vrcp.pop %v776
    %v855 = vmul.f32 %v776, %v854
    %v856 = vsub.f32 1.0, %v855
    %v857 = vmul.f32 %v854, %v856
    %v858 = vadd.f32 %v854, %v857
    %vm859 = vweird.f32 %v776
    %vm860 = vweird.f32 %v854
    %vm861 = vmor %vm859, %vm860
    %v862 = vsel %vm861, %v854, %v858
    %v863 = vand.u32 2147483647, %v776
    %vm864 = vcmp.eq.f32.partialorder %v863, 8.507059e+37
    %v865 = vand.u32 %v776, 2147483648
    %v866 = vor.u32 1.1754944e-38, %v865
    %v867 = vsel %vm864, %v866, %v862
    %v868 = vmul.f32 1.0, %v867
    %v869 = vrcp.pop %v777
    %v870 = vmul.f32 %v777, %v869
    %v871 = vsub.f32 1.0, %v870
    %v872 = vmul.f32 %v869, %v871
    %v873 = vadd.f32 %v869, %v872
    %vm874 = vweird.f32 %v777
    %vm875 = vweird.f32 %v869
    %vm876 = vmor %vm874, %vm875
    %v877 = vsel %vm876, %v869, %v873
    %v878 = vand.u32 2147483647, %v777
    %vm879 = vcmp.eq.f32.partialorder %v878, 8.507059e+37
    %v880 = vand.u32 %v777, 2147483648
    %v881 = vor.u32 1.1754944e-38, %v880
    %v882 = vsel %vm879, %v881, %v877
    %v883 = vmul.f32 1.0, %v882
    %v884 = vrcp.pop %v778
    %v885 = vmul.f32 %v778, %v884
    %v886 = vsub.f32 1.0, %v885
    %v887 = vmul.f32 %v884, %v886
    %v888 = vadd.f32 %v884, %v887
    %vm889 = vweird.f32 %v778
    %vm890 = vweird.f32 %v884
    %vm891 = vmor %vm889, %vm890
    %v892 = vsel %vm891, %v884, %v888
    %v893 = vand.u32 2147483647, %v778
    %vm894 = vcmp.eq.f32.partialorder %v893, 8.507059e+37
    %v895 = vand.u32 %v778, 2147483648
    %v896 = vor.u32 1.1754944e-38, %v895
    %v897 = vsel %vm894, %v896, %v892
    %v898 = vmul.f32 1.0, %v897
    %v899 = vrcp.pop %v779
    %v900 = vmul.f32 %v779, %v899
    %v901 = vsub.f32 1.0, %v900
    %v902 = vmul.f32 %v899, %v901
    %v903 = vadd.f32 %v899, %v902
    %vm904 = vweird.f32 %v779
    %vm905 = vweird.f32 %v899
    %vm906 = vmor %vm904, %vm905
    %v907 = vsel %vm906, %v899, %v903
    %v908 = vand.u32 2147483647, %v779
    %vm909 = vcmp.eq.f32.partialorder %v908, 8.507059e+37
    %v910 = vand.u32 %v779, 2147483648
    %v911 = vor.u32 1.1754944e-38, %v910
    %v912 = vsel %vm909, %v911, %v907
    %v913 = vmul.f32 1.0, %v912
    %v914 = vrcp.pop %v780
    %v915 = vmul.f32 %v780, %v914
    %v916 = vsub.f32 1.0, %v915
    %v917 = vmul.f32 %v914, %v916
    %v918 = vadd.f32 %v914, %v917
    %vm919 = vweird.f32 %v780
    %vm920 = vweird.f32 %v914
    %vm921 = vmor %vm919, %vm920
    %v922 = vsel %vm921, %v914, %v918
    %v923 = vand.u32 2147483647, %v780
    %vm924 = vcmp.eq.f32.partialorder %v923, 8.507059e+37
    %v925 = vand.u32 %v780, 2147483648
    %v926 = vor.u32 1.1754944e-38, %v925
    %v927 = vsel %vm924, %v926, %v922
    %v928 = vmul.f32 1.0, %v927
    %v929 = vrcp.pop %v781
    %v930 = vmul.f32 %v781, %v929
    %v931 = vsub.f32 1.0, %v930
    %v932 = vmul.f32 %v929, %v931
    %v933 = vadd.f32 %v929, %v932
    %vm934 = vweird.f32 %v781
    %vm935 = vweird.f32 %v929
    %vm936 = vmor %vm934, %vm935
    %v937 = vsel %vm936, %v929, %v933
    %v938 = vand.u32 2147483647, %v781
    %vm939 = vcmp.eq.f32.partialorder %v938, 8.507059e+37
    %v940 = vand.u32 %v781, 2147483648
    %v941 = vor.u32 1.1754944e-38, %v940
    %v942 = vsel %vm939, %v941, %v937
    %v943 = vmul.f32 1.0, %v942
    %v944 = vrcp.pop %v782
    %v945 = vmul.f32 %v782, %v944
    %v946 = vsub.f32 1.0, %v945
    %v947 = vmul.f32 %v944, %v946
    %v948 = vadd.f32 %v944, %v947
    %vm949 = vweird.f32 %v782
    %vm950 = vweird.f32 %v944
    %vm951 = vmor %vm949, %vm950
    %v952 = vsel %vm951, %v944, %v948
    %v953 = vand.u32 2147483647, %v782
    %vm954 = vcmp.eq.f32.partialorder %v953, 8.507059e+37
    %v955 = vand.u32 %v782, 2147483648
    %v956 = vor.u32 1.1754944e-38, %v955
    %v957 = vsel %vm954, %v956, %v952
    %v958 = vmul.f32 1.0, %v957
    %v959 = vrcp.pop %v783
    %v960 = vmul.f32 %v783, %v959
    %v961 = vsub.f32 1.0, %v960
    %v962 = vmul.f32 %v959, %v961
    %v963 = vadd.f32 %v959, %v962
    %vm964 = vweird.f32 %v783
    %vm965 = vweird.f32 %v959
    %vm966 = vmor %vm964, %vm965
    %v967 = vsel %vm966, %v959, %v963
    %v968 = vand.u32 2147483647, %v783
    %vm969 = vcmp.eq.f32.partialorder %v968, 8.507059e+37
    %v970 = vand.u32 %v783, 2147483648
    %v971 = vor.u32 1.1754944e-38, %v970
    %v972 = vsel %vm969, %v971, %v967
    %v973 = vmul.f32 1.0, %v972
    %v974 = vrcp.pop %v784
    %v975 = vmul.f32 %v784, %v974
    %v976 = vsub.f32 1.0, %v975
    %v977 = vmul.f32 %v974, %v976
    %v978 = vadd.f32 %v974, %v977
    %vm979 = vweird.f32 %v784
    %vm980 = vweird.f32 %v974
    %vm981 = vmor %vm979, %vm980
    %v982 = vsel %vm981, %v974, %v978
    %v983 = vand.u32 2147483647, %v784
    %vm984 = vcmp.eq.f32.partialorder %v983, 8.507059e+37
    %v985 = vand.u32 %v784, 2147483648
    %v986 = vor.u32 1.1754944e-38, %v985
    %v987 = vsel %vm984, %v986, %v982
    %v988 = vmul.f32 1.0, %v987
    %v989 = vrcp.pop %v785
    %v990 = vmul.f32 %v785, %v989
    %v991 = vsub.f32 1.0, %v990
    %v992 = vmul.f32 %v989, %v991
    %v993 = vadd.f32 %v989, %v992
    %vm994 = vweird.f32 %v785
    %vm995 = vweird.f32 %v989
    %vm996 = vmor %vm994, %vm995
    %v997 = vsel %vm996, %v989, %v993
    %v998 = vand.u32 2147483647, %v785
    %vm999 = vcmp.eq.f32.partialorder %v998, 8.507059e+37
    %v1000 = vand.u32 %v785, 2147483648
    %v1001 = vor.u32 1.1754944e-38, %v1000
    %v1002 = vsel %vm999, %v1001, %v997
    %v1003 = vmul.f32 1.0, %v1002
    %v1004 = vrcp.pop %v786
    %v1005 = vmul.f32 %v786, %v1004
    %v1006 = vsub.f32 1.0, %v1005
    %v1007 = vmul.f32 %v1004, %v1006
    %v1008 = vadd.f32 %v1004, %v1007
    %vm1009 = vweird.f32 %v786
    %vm1010 = vweird.f32 %v1004
    %vm1011 = vmor %vm1009, %vm1010
    %v1012 = vsel %vm1011, %v1004, %v1008
    %v1013 = vand.u32 2147483647, %v786
    %vm1014 = vcmp.eq.f32.partialorder %v1013, 8.507059e+37
    %v1015 = vand.u32 %v786, 2147483648
    %v1016 = vor.u32 1.1754944e-38, %v1015
    %v1017 = vsel %vm1014, %v1016, %v1012
    %v1018 = vmul.f32 1.0, %v1017
    %v1019 = vrcp.pop %v787
    %v1020 = vmul.f32 %v787, %v1019
    %v1021 = vsub.f32 1.0, %v1020
    %v1022 = vmul.f32 %v1019, %v1021
    %v1023 = vadd.f32 %v1019, %v1022
    %vm1024 = vweird.f32 %v787
    %vm1025 = vweird.f32 %v1019
    %vm1026 = vmor %vm1024, %vm1025
    %v1027 = vsel %vm1026, %v1019, %v1023
    %v1028 = vand.u32 2147483647, %v787
    %vm1029 = vcmp.eq.f32.partialorder %v1028, 8.507059e+37
    %v1030 = vand.u32 %v787, 2147483648
    %v1031 = vor.u32 1.1754944e-38, %v1030
    %v1032 = vsel %vm1029, %v1031, %v1027
    %v1033 = vmul.f32 1.0, %v1032
    %v1034 = vrcp.pop %v788
    %v1035 = vmul.f32 %v788, %v1034
    %v1036 = vsub.f32 1.0, %v1035
    %v1037 = vmul.f32 %v1034, %v1036
    %v1038 = vadd.f32 %v1034, %v1037
    %vm1039 = vweird.f32 %v788
    %vm1040 = vweird.f32 %v1034
    %vm1041 = vmor %vm1039, %vm1040
    %v1042 = vsel %vm1041, %v1034, %v1038
    %v1043 = vand.u32 2147483647, %v788
    %vm1044 = vcmp.eq.f32.partialorder %v1043, 8.507059e+37
    %v1045 = vand.u32 %v788, 2147483648
    %v1046 = vor.u32 1.1754944e-38, %v1045
    %v1047 = vsel %vm1044, %v1046, %v1042
    %v1048 = vmul.f32 1.0, %v1047
    %v1049 = vrcp.pop %v789
    %v1050 = vmul.f32 %v789, %v1049
    %v1051 = vsub.f32 1.0, %v1050
    %v1052 = vmul.f32 %v1049, %v1051
    %v1053 = vadd.f32 %v1049, %v1052
    %vm1054 = vweird.f32 %v789
    %vm1055 = vweird.f32 %v1049
    %vm1056 = vmor %vm1054, %vm1055
    %v1057 = vsel %vm1056, %v1049, %v1053
    %v1058 = vand.u32 2147483647, %v789
    %vm1059 = vcmp.eq.f32.partialorder %v1058, 8.507059e+37
    %v1060 = vand.u32 %v789, 2147483648
    %v1061 = vor.u32 1.1754944e-38, %v1060
    %v1062 = vsel %vm1059, %v1061, %v1057
    %v1063 = vmul.f32 1.0, %v1062
    %v1064 = vrcp.pop %v790
    %v1065 = vmul.f32 %v790, %v1064
    %v1066 = vsub.f32 1.0, %v1065
    %v1067 = vmul.f32 %v1064, %v1066
    %v1068 = vadd.f32 %v1064, %v1067
    %vm1069 = vweird.f32 %v790
    %vm1070 = vweird.f32 %v1064
    %vm1071 = vmor %vm1069, %vm1070
    %v1072 = vsel %vm1071, %v1064, %v1068
    %v1073 = vand.u32 2147483647, %v790
    %vm1074 = vcmp.eq.f32.partialorder %v1073, 8.507059e+37
    %v1075 = vand.u32 %v790, 2147483648
    %v1076 = vor.u32 1.1754944e-38, %v1075
    %v1077 = vsel %vm1074, %v1076, %v1072
    %v1078 = vmul.f32 1.0, %v1077
    %v1079 = vrcp.pop %v791
    %v1080 = vmul.f32 %v791, %v1079
    %v1081 = vsub.f32 1.0, %v1080
    %v1082 = vmul.f32 %v1079, %v1081
    %v1083 = vadd.f32 %v1079, %v1082
    %vm1084 = vweird.f32 %v791
    %vm1085 = vweird.f32 %v1079
    %vm1086 = vmor %vm1084, %vm1085
    %v1087 = vsel %vm1086, %v1079, %v1083
    %v1088 = vand.u32 2147483647, %v791
    %vm1089 = vcmp.eq.f32.partialorder %v1088, 8.507059e+37
    %v1090 = vand.u32 %v791, 2147483648
    %v1091 = vor.u32 1.1754944e-38, %v1090
    %v1092 = vsel %vm1089, %v1091, %v1087
    %v1093 = vmul.f32 1.0, %v1092
    %v1094 = vrcp.pop %v792
    %v1095 = vmul.f32 %v792, %v1094
    %v1096 = vsub.f32 1.0, %v1095
    %v1097 = vmul.f32 %v1094, %v1096
    %v1098 = vadd.f32 %v1094, %v1097
    %vm1099 = vweird.f32 %v792
    %vm1100 = vweird.f32 %v1094
    %vm1101 = vmor %vm1099, %vm1100
    %v1102 = vsel %vm1101, %v1094, %v1098
    %v1103 = vand.u32 2147483647, %v792
    %vm1104 = vcmp.eq.f32.partialorder %v1103, 8.507059e+37
    %v1105 = vand.u32 %v792, 2147483648
    %v1106 = vor.u32 1.1754944e-38, %v1105
    %v1107 = vsel %vm1104, %v1106, %v1102
    %v1108 = vmul.f32 1.0, %v1107
    %v1109 = vrcp.pop %v793
    %v1110 = vmul.f32 %v793, %v1109
    %v1111 = vsub.f32 1.0, %v1110
    %v1112 = vmul.f32 %v1109, %v1111
    %v1113 = vadd.f32 %v1109, %v1112
    %vm1114 = vweird.f32 %v793
    %vm1115 = vweird.f32 %v1109
    %vm1116 = vmor %vm1114, %vm1115
    %v1117 = vsel %vm1116, %v1109, %v1113
    %v1118 = vand.u32 2147483647, %v793
    %vm1119 = vcmp.eq.f32.partialorder %v1118, 8.507059e+37
    %v1120 = vand.u32 %v793, 2147483648
    %v1121 = vor.u32 1.1754944e-38, %v1120
    %v1122 = vsel %vm1119, %v1121, %v1117
    %v1123 = vmul.f32 1.0, %v1122
    %v1124 = vrcp.pop %v794
    %v1125 = vmul.f32 %v794, %v1124
    %v1126 = vsub.f32 1.0, %v1125
    %v1127 = vmul.f32 %v1124, %v1126
    %v1128 = vadd.f32 %v1124, %v1127
    %vm1129 = vweird.f32 %v794
    %vm1130 = vweird.f32 %v1124
    %vm1131 = vmor %vm1129, %vm1130
    %v1132 = vsel %vm1131, %v1124, %v1128
    %v1133 = vand.u32 2147483647, %v794
    %vm1134 = vcmp.eq.f32.partialorder %v1133, 8.507059e+37
    %v1135 = vand.u32 %v794, 2147483648
    %v1136 = vor.u32 1.1754944e-38, %v1135
    %v1137 = vsel %vm1134, %v1136, %v1132
    %v1138 = vmul.f32 1.0, %v1137
    %v1139 = vrcp.pop %v795
    %v1140 = vmul.f32 %v795, %v1139
    %v1141 = vsub.f32 1.0, %v1140
    %v1142 = vmul.f32 %v1139, %v1141
    %v1143 = vadd.f32 %v1139, %v1142
    %vm1144 = vweird.f32 %v795
    %vm1145 = vweird.f32 %v1139
    %vm1146 = vmor %vm1144, %vm1145
    %v1147 = vsel %vm1146, %v1139, %v1143
    %v1148 = vand.u32 2147483647, %v795
    %vm1149 = vcmp.eq.f32.partialorder %v1148, 8.507059e+37
    %v1150 = vand.u32 %v795, 2147483648
    %v1151 = vor.u32 1.1754944e-38, %v1150
    %v1152 = vsel %vm1149, %v1151, %v1147
    %v1153 = vmul.f32 1.0, %v1152
    %v1154 = vrcp.pop %v796
    %v1155 = vmul.f32 %v796, %v1154
    %v1156 = vsub.f32 1.0, %v1155
    %v1157 = vmul.f32 %v1154, %v1156
    %v1158 = vadd.f32 %v1154, %v1157
    %vm1159 = vweird.f32 %v796
    %vm1160 = vweird.f32 %v1154
    %vm1161 = vmor %vm1159, %vm1160
    %v1162 = vsel %vm1161, %v1154, %v1158
    %v1163 = vand.u32 2147483647, %v796
    %vm1164 = vcmp.eq.f32.partialorder %v1163, 8.507059e+37
    %v1165 = vand.u32 %v796, 2147483648
    %v1166 = vor.u32 1.1754944e-38, %v1165
    %v1167 = vsel %vm1164, %v1166, %v1162
    %v1168 = vmul.f32 1.0, %v1167
    %v1169 = vrcp.pop %v797
    %v1170 = vmul.f32 %v797, %v1169
    %v1171 = vsub.f32 1.0, %v1170
    %v1172 = vmul.f32 %v1169, %v1171
    %v1173 = vadd.f32 %v1169, %v1172
    %vm1174 = vweird.f32 %v797
    %vm1175 = vweird.f32 %v1169
    %vm1176 = vmor %vm1174, %vm1175
    %v1177 = vsel %vm1176, %v1169, %v1173
    %v1178 = vand.u32 2147483647, %v797
    %vm1179 = vcmp.eq.f32.partialorder %v1178, 8.507059e+37
    %v1180 = vand.u32 %v797, 2147483648
    %v1181 = vor.u32 1.1754944e-38, %v1180
    %v1182 = vsel %vm1179, %v1181, %v1177
    %v1183 = vmul.f32 1.0, %v1182
    %v1184 = vrcp.pop %v798
    %v1185 = vmul.f32 %v798, %v1184
    %v1186 = vsub.f32 1.0, %v1185
    %v1187 = vmul.f32 %v1184, %v1186
    %v1188 = vadd.f32 %v1184, %v1187
    %vm1189 = vweird.f32 %v798
    %vm1190 = vweird.f32 %v1184
    %vm1191 = vmor %vm1189, %vm1190
    %v1192 = vsel %vm1191, %v1184, %v1188
    %v1193 = vand.u32 2147483647, %v798
    %vm1194 = vcmp.eq.f32.partialorder %v1193, 8.507059e+37
    %v1195 = vand.u32 %v798, 2147483648
    %v1196 = vor.u32 1.1754944e-38, %v1195
    %v1197 = vsel %vm1194, %v1196, %v1192
    %v1198 = vmul.f32 1.0, %v1197
    %v1199 = vrcp.pop %v799
    %v1200 = vmul.f32 %v799, %v1199
    %v1201 = vsub.f32 1.0, %v1200
    %v1202 = vmul.f32 %v1199, %v1201
    %v1203 = vadd.f32 %v1199, %v1202
    %vm1204 = vweird.f32 %v799
    %vm1205 = vweird.f32 %v1199
    %vm1206 = vmor %vm1204, %vm1205
    %v1207 = vsel %vm1206, %v1199, %v1203
    %v1208 = vand.u32 2147483647, %v799
    %vm1209 = vcmp.eq.f32.partialorder %v1208, 8.507059e+37
    %v1210 = vand.u32 %v799, 2147483648
    %v1211 = vor.u32 1.1754944e-38, %v1210
    %v1212 = vsel %vm1209, %v1211, %v1207
    %v1213 = vmul.f32 1.0, %v1212
    %v1214 = vrcp.pop %v800
    %v1215 = vmul.f32 %v800, %v1214
    %v1216 = vsub.f32 1.0, %v1215
    %v1217 = vmul.f32 %v1214, %v1216
    %v1218 = vadd.f32 %v1214, %v1217
    %vm1219 = vweird.f32 %v800
    %vm1220 = vweird.f32 %v1214
    %vm1221 = vmor %vm1219, %vm1220
    %v1222 = vsel %vm1221, %v1214, %v1218
    %v1223 = vand.u32 2147483647, %v800
    %vm1224 = vcmp.eq.f32.partialorder %v1223, 8.507059e+37
    %v1225 = vand.u32 %v800, 2147483648
    %v1226 = vor.u32 1.1754944e-38, %v1225
    %v1227 = vsel %vm1224, %v1226, %v1222
    %v1228 = vmul.f32 1.0, %v1227
    %v1229 = vrcp.pop %v801
    %v1230 = vmul.f32 %v801, %v1229
    %v1231 = vsub.f32 1.0, %v1230
    %v1232 = vmul.f32 %v1229, %v1231
    %v1233 = vadd.f32 %v1229, %v1232
    %vm1234 = vweird.f32 %v801
    %vm1235 = vweird.f32 %v1229
    %vm1236 = vmor %vm1234, %vm1235
    %v1237 = vsel %vm1236, %v1229, %v1233
    %v1238 = vand.u32 2147483647, %v801
    %vm1239 = vcmp.eq.f32.partialorder %v1238, 8.507059e+37
    %v1240 = vand.u32 %v801, 2147483648
    %v1241 = vor.u32 1.1754944e-38, %v1240
    %v1242 = vsel %vm1239, %v1241, %v1237
    %v1243 = vmul.f32 1.0, %v1242
    %v1244 = vrcp.pop %v802
    %v1245 = vmul.f32 %v802, %v1244
    %v1246 = vsub.f32 1.0, %v1245
    %v1247 = vmul.f32 %v1244, %v1246
    %v1248 = vadd.f32 %v1244, %v1247
    %vm1249 = vweird.f32 %v802
    %vm1250 = vweird.f32 %v1244
    %vm1251 = vmor %vm1249, %vm1250
    %v1252 = vsel %vm1251, %v1244, %v1248
    %v1253 = vand.u32 2147483647, %v802
    %vm1254 = vcmp.eq.f32.partialorder %v1253, 8.507059e+37
    %v1255 = vand.u32 %v802, 2147483648
    %v1256 = vor.u32 1.1754944e-38, %v1255
    %v1257 = vsel %vm1254, %v1256, %v1252
    %v1258 = vmul.f32 1.0, %v1257
    %v1259 = vrcp.pop %v803
    %v1260 = vmul.f32 %v803, %v1259
    %v1261 = vsub.f32 1.0, %v1260
    %v1262 = vmul.f32 %v1259, %v1261
    %v1263 = vadd.f32 %v1259, %v1262
    %vm1264 = vweird.f32 %v803
    %vm1265 = vweird.f32 %v1259
    %vm1266 = vmor %vm1264, %vm1265
    %v1267 = vsel %vm1266, %v1259, %v1263
    %v1268 = vand.u32 2147483647, %v803
    %vm1269 = vcmp.eq.f32.partialorder %v1268, 8.507059e+37
    %v1270 = vand.u32 %v803, 2147483648
    %v1271 = vor.u32 1.1754944e-38, %v1270
    %v1272 = vsel %vm1269, %v1271, %v1267
    %v1273 = vmul.f32 1.0, %v1272
    %v1274 = vrcp.pop %v804
    %v1275 = vmul.f32 %v804, %v1274
    %v1276 = vsub.f32 1.0, %v1275
    %v1277 = vmul.f32 %v1274, %v1276
    %v1278 = vadd.f32 %v1274, %v1277
    %vm1279 = vweird.f32 %v804
    %vm1280 = vweird.f32 %v1274
    %vm1281 = vmor %vm1279, %vm1280
    %v1282 = vsel %vm1281, %v1274, %v1278
    %v1283 = vand.u32 2147483647, %v804
    %vm1284 = vcmp.eq.f32.partialorder %v1283, 8.507059e+37
    %v1285 = vand.u32 %v804, 2147483648
    %v1286 = vor.u32 1.1754944e-38, %v1285
    %v1287 = vsel %vm1284, %v1286, %v1282
    %v1288 = vmul.f32 1.0, %v1287
    %v1289 = vrcp.pop %v805
    %v1290 = vmul.f32 %v805, %v1289
    %v1291 = vsub.f32 1.0, %v1290
    %v1292 = vmul.f32 %v1289, %v1291
    %v1293 = vadd.f32 %v1289, %v1292
    %vm1294 = vweird.f32 %v805
    %vm1295 = vweird.f32 %v1289
    %vm1296 = vmor %vm1294, %vm1295
    %v1297 = vsel %vm1296, %v1289, %v1293
    %v1298 = vand.u32 2147483647, %v805
    %vm1299 = vcmp.eq.f32.partialorder %v1298, 8.507059e+37
    %v1300 = vand.u32 %v805, 2147483648
    %v1301 = vor.u32 1.1754944e-38, %v1300
    %v1302 = vsel %vm1299, %v1301, %v1297
    %v1303 = vmul.f32 1.0, %v1302
    %v1304 = vrcp.pop %v806
    %v1305 = vmul.f32 %v806, %v1304
    %v1306 = vsub.f32 1.0, %v1305
    %v1307 = vmul.f32 %v1304, %v1306
    %v1308 = vadd.f32 %v1304, %v1307
    %vm1309 = vweird.f32 %v806
    %vm1310 = vweird.f32 %v1304
    %vm1311 = vmor %vm1309, %vm1310
    %v1312 = vsel %vm1311, %v1304, %v1308
    %v1313 = vand.u32 2147483647, %v806
    %vm1314 = vcmp.eq.f32.partialorder %v1313, 8.507059e+37
    %v1315 = vand.u32 %v806, 2147483648
    %v1316 = vor.u32 1.1754944e-38, %v1315
    %v1317 = vsel %vm1314, %v1316, %v1312
    %v1318 = vmul.f32 1.0, %v1317
    %v1319 = vrcp.pop %v807
    %v1320 = vmul.f32 %v807, %v1319
    %v1321 = vsub.f32 1.0, %v1320
    %v1322 = vmul.f32 %v1319, %v1321
    %v1323 = vadd.f32 %v1319, %v1322
    %vm1324 = vweird.f32 %v807
    %vm1325 = vweird.f32 %v1319
    %vm1326 = vmor %vm1324, %vm1325
    %v1327 = vsel %vm1326, %v1319, %v1323
    %v1328 = vand.u32 2147483647, %v807
    %vm1329 = vcmp.eq.f32.partialorder %v1328, 8.507059e+37
    %v1330 = vand.u32 %v807, 2147483648
    %v1331 = vor.u32 1.1754944e-38, %v1330
    %v1332 = vsel %vm1329, %v1331, %v1327
    %v1333 = vmul.f32 1.0, %v1332
    %v1334 = vrcp.pop %v808
    %v1335 = vmul.f32 %v808, %v1334
    %v1336 = vsub.f32 1.0, %v1335
    %v1337 = vmul.f32 %v1334, %v1336
    %v1338 = vadd.f32 %v1334, %v1337
    %vm1339 = vweird.f32 %v808
    %vm1340 = vweird.f32 %v1334
    %vm1341 = vmor %vm1339, %vm1340
    %v1342 = vsel %vm1341, %v1334, %v1338
    %v1343 = vand.u32 2147483647, %v808
    %vm1344 = vcmp.eq.f32.partialorder %v1343, 8.507059e+37
    %v1345 = vand.u32 %v808, 2147483648
    %v1346 = vor.u32 1.1754944e-38, %v1345
    %v1347 = vsel %vm1344, %v1346, %v1342
    %v1348 = vmul.f32 1.0, %v1347
    %v1349 = vrcp.pop %v809
    %v1350 = vmul.f32 %v809, %v1349
    %v1351 = vsub.f32 1.0, %v1350
    %v1352 = vmul.f32 %v1349, %v1351
    %v1353 = vadd.f32 %v1349, %v1352
    %vm1354 = vweird.f32 %v809
    %vm1355 = vweird.f32 %v1349
    %vm1356 = vmor %vm1354, %vm1355
    %v1357 = vsel %vm1356, %v1349, %v1353
    %v1358 = vand.u32 2147483647, %v809
    %vm1359 = vcmp.eq.f32.partialorder %v1358, 8.507059e+37
    %v1360 = vand.u32 %v809, 2147483648
    %v1361 = vor.u32 1.1754944e-38, %v1360
    %v1362 = vsel %vm1359, %v1361, %v1357
    %v1363 = vmul.f32 1.0, %v1362
    %v1364 = vrcp.pop %v810
    %v1365 = vmul.f32 %v810, %v1364
    %v1366 = vsub.f32 1.0, %v1365
    %v1367 = vmul.f32 %v1364, %v1366
    %v1368 = vadd.f32 %v1364, %v1367
    %vm1369 = vweird.f32 %v810
    %vm1370 = vweird.f32 %v1364
    %vm1371 = vmor %vm1369, %vm1370
    %v1372 = vsel %vm1371, %v1364, %v1368
    %v1373 = vand.u32 2147483647, %v810
    %vm1374 = vcmp.eq.f32.partialorder %v1373, 8.507059e+37
    %v1375 = vand.u32 %v810, 2147483648
    %v1376 = vor.u32 1.1754944e-38, %v1375
    %v1377 = vsel %vm1374, %v1376, %v1372
    %v1378 = vmul.f32 1.0, %v1377
    %v1379 = vrcp.pop %v811
    %v1380 = vmul.f32 %v811, %v1379
    %v1381 = vsub.f32 1.0, %v1380
    %v1382 = vmul.f32 %v1379, %v1381
    %v1383 = vadd.f32 %v1379, %v1382
    %vm1384 = vweird.f32 %v811
    %vm1385 = vweird.f32 %v1379
    %vm1386 = vmor %vm1384, %vm1385
    %v1387 = vsel %vm1386, %v1379, %v1383
    %v1388 = vand.u32 2147483647, %v811
    %vm1389 = vcmp.eq.f32.partialorder %v1388, 8.507059e+37
    %v1390 = vand.u32 %v811, 2147483648
    %v1391 = vor.u32 1.1754944e-38, %v1390
    %v1392 = vsel %vm1389, %v1391, %v1387
    %v1393 = vmul.f32 1.0, %v1392
    %v1394 = vrcp.pop %v812
    %v1395 = vmul.f32 %v812, %v1394
    %v1396 = vsub.f32 1.0, %v1395
    %v1397 = vmul.f32 %v1394, %v1396
    %v1398 = vadd.f32 %v1394, %v1397
    %vm1399 = vweird.f32 %v812
    %vm1400 = vweird.f32 %v1394
    %vm1401 = vmor %vm1399, %vm1400
    %v1402 = vsel %vm1401, %v1394, %v1398
    %v1403 = vand.u32 2147483647, %v812
    %vm1404 = vcmp.eq.f32.partialorder %v1403, 8.507059e+37
    %v1405 = vand.u32 %v812, 2147483648
    %v1406 = vor.u32 1.1754944e-38, %v1405
    %v1407 = vsel %vm1404, %v1406, %v1402
    %v1408 = vmul.f32 1.0, %v1407
    %v1409 = vrcp.pop %v813
    %v1410 = vmul.f32 %v813, %v1409
    %v1411 = vsub.f32 1.0, %v1410
    %v1412 = vmul.f32 %v1409, %v1411
    %v1413 = vadd.f32 %v1409, %v1412
    %vm1414 = vweird.f32 %v813
    %vm1415 = vweird.f32 %v1409
    %vm1416 = vmor %vm1414, %vm1415
    %v1417 = vsel %vm1416, %v1409, %v1413
    %v1418 = vand.u32 2147483647, %v813
    %vm1419 = vcmp.eq.f32.partialorder %v1418, 8.507059e+37
    %v1420 = vand.u32 %v813, 2147483648
    %v1421 = vor.u32 1.1754944e-38, %v1420
    %v1422 = vsel %vm1419, %v1421, %v1417
    %v1423 = vmul.f32 1.0, %v1422
    %v1424 = vrcp.pop %v814
    %v1425 = vmul.f32 %v814, %v1424
    %v1426 = vsub.f32 1.0, %v1425
    %v1427 = vmul.f32 %v1424, %v1426
    %v1428 = vadd.f32 %v1424, %v1427
    %vm1429 = vweird.f32 %v814
    %vm1430 = vweird.f32 %v1424
    %vm1431 = vmor %vm1429, %vm1430
    %v1432 = vsel %vm1431, %v1424, %v1428
    %v1433 = vand.u32 2147483647, %v814
    %vm1434 = vcmp.eq.f32.partialorder %v1433, 8.507059e+37
    %v1435 = vand.u32 %v814, 2147483648
    %v1436 = vor.u32 1.1754944e-38, %v1435
    %v1437 = vsel %vm1434, %v1436, %v1432
    %v1438 = vmul.f32 1.0, %v1437
    %v1439 = vrcp.pop %v815
    %v1440 = vmul.f32 %v815, %v1439
    %v1441 = vsub.f32 1.0, %v1440
    %v1442 = vmul.f32 %v1439, %v1441
    %v1443 = vadd.f32 %v1439, %v1442
    %vm1444 = vweird.f32 %v815
    %vm1445 = vweird.f32 %v1439
    %vm1446 = vmor %vm1444, %vm1445
    %v1447 = vsel %vm1446, %v1439, %v1443
    %v1448 = vand.u32 2147483647, %v815
    %vm1449 = vcmp.eq.f32.partialorder %v1448, 8.507059e+37
    %v1450 = vand.u32 %v815, 2147483648
    %v1451 = vor.u32 1.1754944e-38, %v1450
    %v1452 = vsel %vm1449, %v1451, %v1447
    %v1453 = vmul.f32 1.0, %v1452
    %v1454 = vrcp.pop %v816
    %v1455 = vmul.f32 %v816, %v1454
    %v1456 = vsub.f32 1.0, %v1455
    %v1457 = vmul.f32 %v1454, %v1456
    %v1458 = vadd.f32 %v1454, %v1457
    %vm1459 = vweird.f32 %v816
    %vm1460 = vweird.f32 %v1454
    %vm1461 = vmor %vm1459, %vm1460
    %v1462 = vsel %vm1461, %v1454, %v1458
    %v1463 = vand.u32 2147483647, %v816
    %vm1464 = vcmp.eq.f32.partialorder %v1463, 8.507059e+37
    %v1465 = vand.u32 %v816, 2147483648
    %v1466 = vor.u32 1.1754944e-38, %v1465
    %v1467 = vsel %vm1464, %v1466, %v1462
    %v1468 = vmul.f32 1.0, %v1467
    %v1469 = vrcp.pop %v817
    %v1470 = vmul.f32 %v817, %v1469
    %v1471 = vsub.f32 1.0, %v1470
    %v1472 = vmul.f32 %v1469, %v1471
    %v1473 = vadd.f32 %v1469, %v1472
    %vm1474 = vweird.f32 %v817
    %vm1475 = vweird.f32 %v1469
    %vm1476 = vmor %vm1474, %vm1475
    %v1477 = vsel %vm1476, %v1469, %v1473
    %v1478 = vand.u32 2147483647, %v817
    %vm1479 = vcmp.eq.f32.partialorder %v1478, 8.507059e+37
    %v1480 = vand.u32 %v817, 2147483648
    %v1481 = vor.u32 1.1754944e-38, %v1480
    %v1482 = vsel %vm1479, %v1481, %v1477
    %v1483 = vmul.f32 1.0, %v1482
    %v1484 = vrcp.pop %v818
    %v1485 = vmul.f32 %v818, %v1484
    %v1486 = vsub.f32 1.0, %v1485
    %v1487 = vmul.f32 %v1484, %v1486
    %v1488 = vadd.f32 %v1484, %v1487
    %vm1489 = vweird.f32 %v818
    %vm1490 = vweird.f32 %v1484
    %vm1491 = vmor %vm1489, %vm1490
    %v1492 = vsel %vm1491, %v1484, %v1488
    %v1493 = vand.u32 2147483647, %v818
    %vm1494 = vcmp.eq.f32.partialorder %v1493, 8.507059e+37
    %v1495 = vand.u32 %v818, 2147483648
    %v1496 = vor.u32 1.1754944e-38, %v1495
    %v1497 = vsel %vm1494, %v1496, %v1492
    %v1498 = vmul.f32 1.0, %v1497
    %v1499 = vrcp.pop %v819
    %v1500 = vmul.f32 %v819, %v1499
    %v1501 = vsub.f32 1.0, %v1500
    %v1502 = vmul.f32 %v1499, %v1501
    %v1503 = vadd.f32 %v1499, %v1502
    %vm1504 = vweird.f32 %v819
    %vm1505 = vweird.f32 %v1499
    %vm1506 = vmor %vm1504, %vm1505
    %v1507 = vsel %vm1506, %v1499, %v1503
    %v1508 = vand.u32 2147483647, %v819
    %vm1509 = vcmp.eq.f32.partialorder %v1508, 8.507059e+37
    %v1510 = vand.u32 %v819, 2147483648
    %v1511 = vor.u32 1.1754944e-38, %v1510
    %v1512 = vsel %vm1509, %v1511, %v1507
    %v1513 = vmul.f32 1.0, %v1512
    %v1514 = vrcp.pop %v820
    %v1515 = vmul.f32 %v820, %v1514
    %v1516 = vsub.f32 1.0, %v1515
    %v1517 = vmul.f32 %v1514, %v1516
    %v1518 = vadd.f32 %v1514, %v1517
    %vm1519 = vweird.f32 %v820
    %vm1520 = vweird.f32 %v1514
    %vm1521 = vmor %vm1519, %vm1520
    %v1522 = vsel %vm1521, %v1514, %v1518
    %v1523 = vand.u32 2147483647, %v820
    %vm1524 = vcmp.eq.f32.partialorder %v1523, 8.507059e+37
    %v1525 = vand.u32 %v820, 2147483648
    %v1526 = vor.u32 1.1754944e-38, %v1525
    %v1527 = vsel %vm1524, %v1526, %v1522
    %v1528 = vmul.f32 1.0, %v1527
    %v1529 = vrcp.pop %v821
    %v1530 = vmul.f32 %v821, %v1529
    %v1531 = vsub.f32 1.0, %v1530
    %v1532 = vmul.f32 %v1529, %v1531
    %v1533 = vadd.f32 %v1529, %v1532
    %vm1534 = vweird.f32 %v821
    %vm1535 = vweird.f32 %v1529
    %vm1536 = vmor %vm1534, %vm1535
    %v1537 = vsel %vm1536, %v1529, %v1533
    %v1538 = vand.u32 2147483647, %v821
    %vm1539 = vcmp.eq.f32.partialorder %v1538, 8.507059e+37
    %v1540 = vand.u32 %v821, 2147483648
    %v1541 = vor.u32 1.1754944e-38, %v1540
    %v1542 = vsel %vm1539, %v1541, %v1537
    %v1543 = vmul.f32 1.0, %v1542
    %v1544 = vrcp.pop %v822
    %v1545 = vmul.f32 %v822, %v1544
    %v1546 = vsub.f32 1.0, %v1545
    %v1547 = vmul.f32 %v1544, %v1546
    %v1548 = vadd.f32 %v1544, %v1547
    %vm1549 = vweird.f32 %v822
    %vm1550 = vweird.f32 %v1544
    %vm1551 = vmor %vm1549, %vm1550
    %v1552 = vsel %vm1551, %v1544, %v1548
    %v1553 = vand.u32 2147483647, %v822
    %vm1554 = vcmp.eq.f32.partialorder %v1553, 8.507059e+37
    %v1555 = vand.u32 %v822, 2147483648
    %v1556 = vor.u32 1.1754944e-38, %v1555
    %v1557 = vsel %vm1554, %v1556, %v1552
    %v1558 = vmul.f32 1.0, %v1557
    %v1559 = vrcp.pop %v823
    %v1560 = vmul.f32 %v823, %v1559
    %v1561 = vsub.f32 1.0, %v1560
    %v1562 = vmul.f32 %v1559, %v1561
    %v1563 = vadd.f32 %v1559, %v1562
    %vm1564 = vweird.f32 %v823
    %vm1565 = vweird.f32 %v1559
    %vm1566 = vmor %vm1564, %vm1565
    %v1567 = vsel %vm1566, %v1559, %v1563
    %v1568 = vand.u32 2147483647, %v823
    %vm1569 = vcmp.eq.f32.partialorder %v1568, 8.507059e+37
    %v1570 = vand.u32 %v823, 2147483648
    %v1571 = vor.u32 1.1754944e-38, %v1570
    %v1572 = vsel %vm1569, %v1571, %v1567
    %v1573 = vmul.f32 1.0, %v1572
    %v1574 = vrcp.pop %v824
    %v1575 = vmul.f32 %v824, %v1574
    %v1576 = vsub.f32 1.0, %v1575
    %v1577 = vmul.f32 %v1574, %v1576
    %v1578 = vadd.f32 %v1574, %v1577
    %vm1579 = vweird.f32 %v824
    %vm1580 = vweird.f32 %v1574
    %vm1581 = vmor %vm1579, %vm1580
    %v1582 = vsel %vm1581, %v1574, %v1578
    %v1583 = vand.u32 2147483647, %v824
    %vm1584 = vcmp.eq.f32.partialorder %v1583, 8.507059e+37
    %v1585 = vand.u32 %v824, 2147483648
    %v1586 = vor.u32 1.1754944e-38, %v1585
    %v1587 = vsel %vm1584, %v1586, %v1582
    %v1588 = vmul.f32 1.0, %v1587
    %v1589 = vrcp.pop %v825
    %v1590 = vmul.f32 %v825, %v1589
    %v1591 = vsub.f32 1.0, %v1590
    %v1592 = vmul.f32 %v1589, %v1591
    %v1593 = vadd.f32 %v1589, %v1592
    %vm1594 = vweird.f32 %v825
    %vm1595 = vweird.f32 %v1589
    %vm1596 = vmor %vm1594, %vm1595
    %v1597 = vsel %vm1596, %v1589, %v1593
    %v1598 = vand.u32 2147483647, %v825
    %vm1599 = vcmp.eq.f32.partialorder %v1598, 8.507059e+37
    %v1600 = vand.u32 %v825, 2147483648
    %v1601 = vor.u32 1.1754944e-38, %v1600
    %v1602 = vsel %vm1599, %v1601, %v1597
    %v1603 = vmul.f32 1.0, %v1602
    %v1604 = vrcp.pop %v826
    %v1605 = vmul.f32 %v826, %v1604
    %v1606 = vsub.f32 1.0, %v1605
    %v1607 = vmul.f32 %v1604, %v1606
    %v1608 = vadd.f32 %v1604, %v1607
    %vm1609 = vweird.f32 %v826
    %vm1610 = vweird.f32 %v1604
    %vm1611 = vmor %vm1609, %vm1610
    %v1612 = vsel %vm1611, %v1604, %v1608
    %v1613 = vand.u32 2147483647, %v826
    %vm1614 = vcmp.eq.f32.partialorder %v1613, 8.507059e+37
    %v1615 = vand.u32 %v826, 2147483648
    %v1616 = vor.u32 1.1754944e-38, %v1615
    %v1617 = vsel %vm1614, %v1616, %v1612
    %v1618 = vmul.f32 1.0, %v1617
    %v1619 = vrcp.pop %v827
    %v1620 = vmul.f32 %v827, %v1619
    %v1621 = vsub.f32 1.0, %v1620
    %v1622 = vmul.f32 %v1619, %v1621
    %v1623 = vadd.f32 %v1619, %v1622
    %vm1624 = vweird.f32 %v827
    %vm1625 = vweird.f32 %v1619
    %vm1626 = vmor %vm1624, %vm1625
    %v1627 = vsel %vm1626, %v1619, %v1623
    %v1628 = vand.u32 2147483647, %v827
    %vm1629 = vcmp.eq.f32.partialorder %v1628, 8.507059e+37
    %v1630 = vand.u32 %v827, 2147483648
    %v1631 = vor.u32 1.1754944e-38, %v1630
    %v1632 = vsel %vm1629, %v1631, %v1627
    %v1633 = vmul.f32 1.0, %v1632
    %v1634 = vrcp.pop %v828
    %v1635 = vmul.f32 %v828, %v1634
    %v1636 = vsub.f32 1.0, %v1635
    %v1637 = vmul.f32 %v1634, %v1636
    %v1638 = vadd.f32 %v1634, %v1637
    %vm1639 = vweird.f32 %v828
    %vm1640 = vweird.f32 %v1634
    %vm1641 = vmor %vm1639, %vm1640
    %v1642 = vsel %vm1641, %v1634, %v1638
    %v1643 = vand.u32 2147483647, %v828
    %vm1644 = vcmp.eq.f32.partialorder %v1643, 8.507059e+37
    %v1645 = vand.u32 %v828, 2147483648
    %v1646 = vor.u32 1.1754944e-38, %v1645
    %v1647 = vsel %vm1644, %v1646, %v1642
    %v1648 = vmul.f32 1.0, %v1647
    %v1649 = vrcp.pop %v829
    %v1650 = vmul.f32 %v829, %v1649
    %v1651 = vsub.f32 1.0, %v1650
    %v1652 = vmul.f32 %v1649, %v1651
    %v1653 = vadd.f32 %v1649, %v1652
    %vm1654 = vweird.f32 %v829
    %vm1655 = vweird.f32 %v1649
    %vm1656 = vmor %vm1654, %vm1655
    %v1657 = vsel %vm1656, %v1649, %v1653
    %v1658 = vand.u32 2147483647, %v829
    %vm1659 = vcmp.eq.f32.partialorder %v1658, 8.507059e+37
    %v1660 = vand.u32 %v829, 2147483648
    %v1661 = vor.u32 1.1754944e-38, %v1660
    %v1662 = vsel %vm1659, %v1661, %v1657
    %v1663 = vmul.f32 1.0, %v1662
    %v1664 = vrcp.pop %v830
    %v1665 = vmul.f32 %v830, %v1664
    %v1666 = vsub.f32 1.0, %v1665
    %v1667 = vmul.f32 %v1664, %v1666
    %v1668 = vadd.f32 %v1664, %v1667
    %vm1669 = vweird.f32 %v830
    %vm1670 = vweird.f32 %v1664
    %vm1671 = vmor %vm1669, %vm1670
    %v1672 = vsel %vm1671, %v1664, %v1668
    %v1673 = vand.u32 2147483647, %v830
    %vm1674 = vcmp.eq.f32.partialorder %v1673, 8.507059e+37
    %v1675 = vand.u32 %v830, 2147483648
    %v1676 = vor.u32 1.1754944e-38, %v1675
    %v1677 = vsel %vm1674, %v1676, %v1672
    %v1678 = vmul.f32 1.0, %v1677
    %v1679 = vrcp.pop %v831
    %v1680 = vmul.f32 %v831, %v1679
    %v1681 = vsub.f32 1.0, %v1680
    %v1682 = vmul.f32 %v1679, %v1681
    %v1683 = vadd.f32 %v1679, %v1682
    %vm1684 = vweird.f32 %v831
    %vm1685 = vweird.f32 %v1679
    %vm1686 = vmor %vm1684, %vm1685
    %v1687 = vsel %vm1686, %v1679, %v1683
    %v1688 = vand.u32 2147483647, %v831
    %vm1689 = vcmp.eq.f32.partialorder %v1688, 8.507059e+37
    %v1690 = vand.u32 %v831, 2147483648
    %v1691 = vor.u32 1.1754944e-38, %v1690
    %v1692 = vsel %vm1689, %v1691, %v1687
    %v1693 = vmul.f32 1.0, %v1692
    %v1694 = vrcp.pop %v832
    %v1695 = vmul.f32 %v832, %v1694
    %v1696 = vsub.f32 1.0, %v1695
    %v1697 = vmul.f32 %v1694, %v1696
    %v1698 = vadd.f32 %v1694, %v1697
    %vm1699 = vweird.f32 %v832
    %vm1700 = vweird.f32 %v1694
    %vm1701 = vmor %vm1699, %vm1700
    %v1702 = vsel %vm1701, %v1694, %v1698
    %v1703 = vand.u32 2147483647, %v832
    %vm1704 = vcmp.eq.f32.partialorder %v1703, 8.507059e+37
    %v1705 = vand.u32 %v832, 2147483648
    %v1706 = vor.u32 1.1754944e-38, %v1705
    %v1707 = vsel %vm1704, %v1706, %v1702
    %v1708 = vmul.f32 1.0, %v1707
    %v1709 = vrcp.pop %v833
    %v1710 = vmul.f32 %v833, %v1709
    %v1711 = vsub.f32 1.0, %v1710
    %v1712 = vmul.f32 %v1709, %v1711
    %v1713 = vadd.f32 %v1709, %v1712
    %vm1714 = vweird.f32 %v833
    %vm1715 = vweird.f32 %v1709
    %vm1716 = vmor %vm1714, %vm1715
    %v1717 = vsel %vm1716, %v1709, %v1713
    %v1718 = vand.u32 2147483647, %v833
    %vm1719 = vcmp.eq.f32.partialorder %v1718, 8.507059e+37
    %v1720 = vand.u32 %v833, 2147483648
    %v1721 = vor.u32 1.1754944e-38, %v1720
    %v1722 = vsel %vm1719, %v1721, %v1717
    %v1723 = vmul.f32 1.0, %v1722
    %v1724 = vrcp.pop %v834
    %v1725 = vmul.f32 %v834, %v1724
    %v1726 = vsub.f32 1.0, %v1725
    %v1727 = vmul.f32 %v1724, %v1726
    %v1728 = vadd.f32 %v1724, %v1727
    %vm1729 = vweird.f32 %v834
    %vm1730 = vweird.f32 %v1724
    %vm1731 = vmor %vm1729, %vm1730
    %v1732 = vsel %vm1731, %v1724, %v1728
    %v1733 = vand.u32 2147483647, %v834
    %vm1734 = vcmp.eq.f32.partialorder %v1733, 8.507059e+37
    %v1735 = vand.u32 %v834, 2147483648
    %v1736 = vor.u32 1.1754944e-38, %v1735
    %v1737 = vsel %vm1734, %v1736, %v1732
    %v1738 = vmul.f32 1.0, %v1737
    %v1739 = vrcp.pop %v835
    %v1740 = vmul.f32 %v835, %v1739
    %v1741 = vsub.f32 1.0, %v1740
    %v1742 = vmul.f32 %v1739, %v1741
    %v1743 = vadd.f32 %v1739, %v1742
    %vm1744 = vweird.f32 %v835
    %vm1745 = vweird.f32 %v1739
    %vm1746 = vmor %vm1744, %vm1745
    %v1747 = vsel %vm1746, %v1739, %v1743
    %v1748 = vand.u32 2147483647, %v835
    %vm1749 = vcmp.eq.f32.partialorder %v1748, 8.507059e+37
    %v1750 = vand.u32 %v835, 2147483648
    %v1751 = vor.u32 1.1754944e-38, %v1750
    %v1752 = vsel %vm1749, %v1751, %v1747
    %v1753 = vmul.f32 1.0, %v1752
    %v1754 = vrcp.pop %v836
    %v1755 = vmul.f32 %v836, %v1754
    %v1756 = vsub.f32 1.0, %v1755
    %v1757 = vmul.f32 %v1754, %v1756
    %v1758 = vadd.f32 %v1754, %v1757
    %vm1759 = vweird.f32 %v836
    %vm1760 = vweird.f32 %v1754
    %vm1761 = vmor %vm1759, %vm1760
    %v1762 = vsel %vm1761, %v1754, %v1758
    %v1763 = vand.u32 2147483647, %v836
    %vm1764 = vcmp.eq.f32.partialorder %v1763, 8.507059e+37
    %v1765 = vand.u32 %v836, 2147483648
    %v1766 = vor.u32 1.1754944e-38, %v1765
    %v1767 = vsel %vm1764, %v1766, %v1762
    %v1768 = vmul.f32 1.0, %v1767
    %v1769 = vrcp.pop %v837
    %v1770 = vmul.f32 %v837, %v1769
    %v1771 = vsub.f32 1.0, %v1770
    %v1772 = vmul.f32 %v1769, %v1771
    %v1773 = vadd.f32 %v1769, %v1772
    %vm1774 = vweird.f32 %v837
    %vm1775 = vweird.f32 %v1769
    %vm1776 = vmor %vm1774, %vm1775
    %v1777 = vsel %vm1776, %v1769, %v1773
    %v1778 = vand.u32 2147483647, %v837
    %vm1779 = vcmp.eq.f32.partialorder %v1778, 8.507059e+37
    %v1780 = vand.u32 %v837, 2147483648
    %v1781 = vor.u32 1.1754944e-38, %v1780
    %v1782 = vsel %vm1779, %v1781, %v1777
    %v1783 = vmul.f32 1.0, %v1782
    %v1784 = vrcp.pop %v838
    %v1785 = vmul.f32 %v838, %v1784
    %v1786 = vsub.f32 1.0, %v1785
    %v1787 = vmul.f32 %v1784, %v1786
    %v1788 = vadd.f32 %v1784, %v1787
    %vm1789 = vweird.f32 %v838
    %vm1790 = vweird.f32 %v1784
    %vm1791 = vmor %vm1789, %vm1790
    %v1792 = vsel %vm1791, %v1784, %v1788
    %v1793 = vand.u32 2147483647, %v838
    %vm1794 = vcmp.eq.f32.partialorder %v1793, 8.507059e+37
    %v1795 = vand.u32 %v838, 2147483648
    %v1796 = vor.u32 1.1754944e-38, %v1795
    %v1797 = vsel %vm1794, %v1796, %v1792
    %v1798 = vmul.f32 1.0, %v1797
    %vm1799 = vcmask 97280
    %1800 = vst.msk [vmem:[#allocation2] sm:$0xff] %vm1799, 0.0
    %1801 = vst.msk [vmem:[#allocation2 + $0x8] sm:$0xff] %vm1799, 0.0
    %1802 = vst.msk [vmem:[#allocation2 + $0xa0] sm:$0xff] %vm1799, 0.0
    %1803 = vst.msk [vmem:[#allocation2 + $0xa8] sm:$0xff] %vm1799, 0.0
    %1804 = vst.msk [vmem:[#allocation2 + $0x140] sm:$0xff] %vm1799, 0.0
    %1805 = vst.msk [vmem:[#allocation2 + $0x148] sm:$0xff] %vm1799, 0.0
    %1806 = vst.msk [vmem:[#allocation2 + $0x1e0] sm:$0xff] %vm1799, 0.0
    %1807 = vst.msk [vmem:[#allocation2 + $0x1e8] sm:$0xff] %vm1799, 0.0
    %1808 = vst.msk [vmem:[#allocation2 + $0x280] sm:$0xff] %vm1799, 0.0
    %1809 = vst.msk [vmem:[#allocation2 + $0x288] sm:$0xff] %vm1799, 0.0
    %1810 = vst.msk [vmem:[#allocation2 + $0x320] sm:$0xff] %vm1799, 0.0
    %1811 = vst.msk [vmem:[#allocation2 + $0x328] sm:$0xff] %vm1799, 0.0
    %1812 = vst.msk [vmem:[#allocation2 + $0x3c0] sm:$0xff] %vm1799, 0.0
    %1813 = vst.msk [vmem:[#allocation2 + $0x3c8] sm:$0xff] %vm1799, 0.0
    %1814 = vst.msk [vmem:[#allocation2 + $0x460] sm:$0xff] %vm1799, 0.0
    %1815 = vst.msk [vmem:[#allocation2 + $0x468] sm:$0xff] %vm1799, 0.0
    %s1816 = scalar_lea.vmem [#allocation2], 144
    %1817 = vst.msk [vmem:[%s1816] sm:$0xff] %vm1799, 0.0
    %1818 = vst.msk [vmem:[%s1816 + $0x8] sm:$0xff] %vm1799, 0.0
    %1819 = vst.msk [vmem:[%s1816 + $0xa0] sm:$0xff] %vm1799, 0.0
    %1820 = vst.msk [vmem:[%s1816 + $0xa8] sm:$0xff] %vm1799, 0.0
    %1821 = vst.msk [vmem:[%s1816 + $0x140] sm:$0xff] %vm1799, 0.0
    %1822 = vst.msk [vmem:[%s1816 + $0x148] sm:$0xff] %vm1799, 0.0
    %1823 = vst.msk [vmem:[%s1816 + $0x1e0] sm:$0xff] %vm1799, 0.0
    %1824 = vst.msk [vmem:[%s1816 + $0x1e8] sm:$0xff] %vm1799, 0.0
    %1825 = vst.msk [vmem:[%s1816 + $0x280] sm:$0xff] %vm1799, 0.0
    %1826 = vst.msk [vmem:[%s1816 + $0x288] sm:$0xff] %vm1799, 0.0
    %1827 = vst.msk [vmem:[%s1816 + $0x320] sm:$0xff] %vm1799, 0.0
    %1828 = vst.msk [vmem:[%s1816 + $0x328] sm:$0xff] %vm1799, 0.0
    %1829 = vst.msk [vmem:[%s1816 + $0x3c0] sm:$0xff] %vm1799, 0.0
    %1830 = vst.msk [vmem:[%s1816 + $0x3c8] sm:$0xff] %vm1799, 0.0
    %1831 = vst.msk [vmem:[%s1816 + $0x460] sm:$0xff] %vm1799, 0.0
    %1832 = vst.msk [vmem:[%s1816 + $0x468] sm:$0xff] %vm1799, 0.0
    %vm1833 = vcmask 90112
    %1834 = vst.msk [vmem:[#allocation2] sm:$0x1] %vm1833, 0.0
    %1835 = vst.msk [vmem:[#allocation2 + $0x10] sm:$0x1] %vm1833, 0.0
    %1836 = vst.msk [vmem:[#allocation2 + $0x20] sm:$0x1] %vm1833, 0.0
    %1837 = vst.msk [vmem:[#allocation2 + $0x30] sm:$0x1] %vm1833, 0.0
    %1838 = vst.msk [vmem:[#allocation2 + $0x40] sm:$0x1] %vm1833, 0.0
    %1839 = vst.msk [vmem:[#allocation2 + $0x50] sm:$0x1] %vm1833, 0.0
    %1840 = vst.msk [vmem:[#allocation2 + $0x60] sm:$0x1] %vm1833, 0.0
    %1841 = vst.msk [vmem:[#allocation2 + $0x70] sm:$0x1] %vm1833, 0.0
    %1842 = vst.msk [vmem:[#allocation2 + $0x80] sm:$0x1] %vm1833, 0.0
    %1843 = vst.msk [vmem:[#allocation2 + $0x90] sm:$0x1] %vm1833, 0.0
    %1844 = vst.msk [vmem:[#allocation2 + $0xa0] sm:$0x1] %vm1833, 0.0
    %1845 = vst.msk [vmem:[#allocation2 + $0xb0] sm:$0x1] %vm1833, 0.0
    %1846 = vst.msk [vmem:[#allocation2 + $0xc0] sm:$0x1] %vm1833, 0.0
    %1847 = vst.msk [vmem:[#allocation2 + $0xd0] sm:$0x1] %vm1833, 0.0
    %1848 = vst.msk [vmem:[#allocation2 + $0xe0] sm:$0x1] %vm1833, 0.0
    %1849 = vst.msk [vmem:[#allocation2 + $0xf0] sm:$0x1] %vm1833, 0.0
    %1850 = vst.msk [vmem:[#allocation2 + $0x100] sm:$0x1] %vm1833, 0.0
    %1851 = vst.msk [vmem:[#allocation2 + $0x110] sm:$0x1] %vm1833, 0.0
    %1852 = vst.msk [vmem:[#allocation2 + $0x120] sm:$0x1] %vm1833, 0.0
    %1853 = vst.msk [vmem:[#allocation2 + $0x130] sm:$0x1] %vm1833, 0.0
    %1854 = vst.msk [vmem:[#allocation2 + $0x140] sm:$0x1] %vm1833, 0.0
    %1855 = vst.msk [vmem:[#allocation2 + $0x150] sm:$0x1] %vm1833, 0.0
    %1856 = vst.msk [vmem:[#allocation2 + $0x160] sm:$0x1] %vm1833, 0.0
    %1857 = vst.msk [vmem:[#allocation2 + $0x170] sm:$0x1] %vm1833, 0.0
    %1858 = vst.msk [vmem:[#allocation2 + $0x180] sm:$0x1] %vm1833, 0.0
    %1859 = vst.msk [vmem:[#allocation2 + $0x190] sm:$0x1] %vm1833, 0.0
    %1860 = vst.msk [vmem:[#allocation2 + $0x1a0] sm:$0x1] %vm1833, 0.0
    %1861 = vst.msk [vmem:[#allocation2 + $0x1b0] sm:$0x1] %vm1833, 0.0
    %1862 = vst.msk [vmem:[#allocation2 + $0x1c0] sm:$0x1] %vm1833, 0.0
    %1863 = vst.msk [vmem:[#allocation2 + $0x1d0] sm:$0x1] %vm1833, 0.0
    %1864 = vst.msk [vmem:[#allocation2 + $0x1e0] sm:$0x1] %vm1833, 0.0
    %1865 = vst.msk [vmem:[#allocation2 + $0x1f0] sm:$0x1] %vm1833, 0.0
    %1866 = vst.msk [vmem:[#allocation2 + $0x200] sm:$0x1] %vm1833, 0.0
    %1867 = vst.msk [vmem:[#allocation2 + $0x210] sm:$0x1] %vm1833, 0.0
    %1868 = vst.msk [vmem:[#allocation2 + $0x220] sm:$0x1] %vm1833, 0.0
    %1869 = vst.msk [vmem:[#allocation2 + $0x230] sm:$0x1] %vm1833, 0.0
    %1870 = vst.msk [vmem:[#allocation2 + $0x240] sm:$0x1] %vm1833, 0.0
    %1871 = vst.msk [vmem:[#allocation2 + $0x250] sm:$0x1] %vm1833, 0.0
    %1872 = vst.msk [vmem:[#allocation2 + $0x260] sm:$0x1] %vm1833, 0.0
    %1873 = vst.msk [vmem:[#allocation2 + $0x270] sm:$0x1] %vm1833, 0.0
    %1874 = vst.msk [vmem:[#allocation2 + $0x280] sm:$0x1] %vm1833, 0.0
    %1875 = vst.msk [vmem:[#allocation2 + $0x290] sm:$0x1] %vm1833, 0.0
    %1876 = vst.msk [vmem:[#allocation2 + $0x2a0] sm:$0x1] %vm1833, 0.0
    %1877 = vst.msk [vmem:[#allocation2 + $0x2b0] sm:$0x1] %vm1833, 0.0
    %1878 = vst.msk [vmem:[#allocation2 + $0x2c0] sm:$0x1] %vm1833, 0.0
    %1879 = vst.msk [vmem:[#allocation2 + $0x2d0] sm:$0x1] %vm1833, 0.0
    %1880 = vst.msk [vmem:[#allocation2 + $0x2e0] sm:$0x1] %vm1833, 0.0
    %1881 = vst.msk [vmem:[#allocation2 + $0x2f0] sm:$0x1] %vm1833, 0.0
    %1882 = vst.msk [vmem:[#allocation2 + $0x300] sm:$0x1] %vm1833, 0.0
    %1883 = vst.msk [vmem:[#allocation2 + $0x310] sm:$0x1] %vm1833, 0.0
    %1884 = vst.msk [vmem:[#allocation2 + $0x320] sm:$0x1] %vm1833, 0.0
    %1885 = vst.msk [vmem:[#allocation2 + $0x330] sm:$0x1] %vm1833, 0.0
    %1886 = vst.msk [vmem:[#allocation2 + $0x340] sm:$0x1] %vm1833, 0.0
    %1887 = vst.msk [vmem:[#allocation2 + $0x350] sm:$0x1] %vm1833, 0.0
    %1888 = vst.msk [vmem:[#allocation2 + $0x360] sm:$0x1] %vm1833, 0.0
    %1889 = vst.msk [vmem:[#allocation2 + $0x370] sm:$0x1] %vm1833, 0.0
    %1890 = vst.msk [vmem:[#allocation2 + $0x380] sm:$0x1] %vm1833, 0.0
    %1891 = vst.msk [vmem:[#allocation2 + $0x390] sm:$0x1] %vm1833, 0.0
    %1892 = vst.msk [vmem:[#allocation2 + $0x3a0] sm:$0x1] %vm1833, 0.0
    %1893 = vst.msk [vmem:[#allocation2 + $0x3b0] sm:$0x1] %vm1833, 0.0
    %1894 = vst.msk [vmem:[#allocation2 + $0x3c0] sm:$0x1] %vm1833, 0.0
    %1895 = vst.msk [vmem:[#allocation2 + $0x3d0] sm:$0x1] %vm1833, 0.0
    %1896 = vst.msk [vmem:[#allocation2 + $0x3e0] sm:$0x1] %vm1833, 0.0
    %1897 = vst.msk [vmem:[#allocation2 + $0x3f0] sm:$0x1] %vm1833, 0.0
    %1898 = vst.msk [vmem:[#allocation2 + $0x400] sm:$0x1] %vm1833, 0.0
    %1899 = vst.msk [vmem:[#allocation2 + $0x410] sm:$0x1] %vm1833, 0.0
    %1900 = vst.msk [vmem:[#allocation2 + $0x420] sm:$0x1] %vm1833, 0.0
    %1901 = vst.msk [vmem:[#allocation2 + $0x430] sm:$0x1] %vm1833, 0.0
    %1902 = vst.msk [vmem:[#allocation2 + $0x440] sm:$0x1] %vm1833, 0.0
    %1903 = vst.msk [vmem:[#allocation2 + $0x450] sm:$0x1] %vm1833, 0.0
    %1904 = vst.msk [vmem:[#allocation2 + $0x460] sm:$0x1] %vm1833, 0.0
    %1905 = vst.msk [vmem:[#allocation2 + $0x470] sm:$0x1] %vm1833, 0.0
    %1906 = vst.msk [vmem:[#allocation2 + $0x480] sm:$0x1] %vm1833, 0.0
    %1907 = vst.msk [vmem:[#allocation2 + $0x490] sm:$0x1] %vm1833, 0.0
    %1908 = vst.msk [vmem:[#allocation2 + $0x4a0] sm:$0x1] %vm1833, 0.0
    %1909 = vst.msk [vmem:[#allocation2 + $0x4b0] sm:$0x1] %vm1833, 0.0
    %1910 = vst.msk [vmem:[#allocation2 + $0x4c0] sm:$0x1] %vm1833, 0.0
    %1911 = vst.msk [vmem:[#allocation2 + $0x4d0] sm:$0x1] %vm1833, 0.0
    %1912 = vst.msk [vmem:[#allocation2 + $0x4e0] sm:$0x1] %vm1833, 0.0
    %1913 = vst.msk [vmem:[#allocation2 + $0x4f0] sm:$0x1] %vm1833, 0.0
    %1914 = vst.msk [vmem:[#allocation2 + $0x9] sm:$0x1] %vm1833, 0.0
    %1915 = vst.msk [vmem:[#allocation2 + $0x19] sm:$0x1] %vm1833, 0.0
    %1916 = vst.msk [vmem:[#allocation2 + $0x29] sm:$0x1] %vm1833, 0.0
    %1917 = vst.msk [vmem:[#allocation2 + $0x39] sm:$0x1] %vm1833, 0.0
    %1918 = vst.msk [vmem:[#allocation2 + $0x49] sm:$0x1] %vm1833, 0.0
    %1919 = vst.msk [vmem:[#allocation2 + $0x59] sm:$0x1] %vm1833, 0.0
    %1920 = vst.msk [vmem:[#allocation2 + $0x69] sm:$0x1] %vm1833, 0.0
    %1921 = vst.msk [vmem:[#allocation2 + $0x79] sm:$0x1] %vm1833, 0.0
    %1922 = vst.msk [vmem:[#allocation2 + $0x89] sm:$0x1] %vm1833, 0.0
    %1923 = vst.msk [vmem:[#allocation2 + $0x99] sm:$0x1] %vm1833, 0.0
    %1924 = vst.msk [vmem:[#allocation2 + $0xa9] sm:$0x1] %vm1833, 0.0
    %1925 = vst.msk [vmem:[#allocation2 + $0xb9] sm:$0x1] %vm1833, 0.0
    %1926 = vst.msk [vmem:[#allocation2 + $0xc9] sm:$0x1] %vm1833, 0.0
    %1927 = vst.msk [vmem:[#allocation2 + $0xd9] sm:$0x1] %vm1833, 0.0
    %1928 = vst.msk [vmem:[#allocation2 + $0xe9] sm:$0x1] %vm1833, 0.0
    %1929 = vst.msk [vmem:[#allocation2 + $0xf9] sm:$0x1] %vm1833, 0.0
    %1930 = vst.msk [vmem:[#allocation2 + $0x109] sm:$0x1] %vm1833, 0.0
    %1931 = vst.msk [vmem:[#allocation2 + $0x119] sm:$0x1] %vm1833, 0.0
    %1932 = vst.msk [vmem:[#allocation2 + $0x129] sm:$0x1] %vm1833, 0.0
    %1933 = vst.msk [vmem:[#allocation2 + $0x139] sm:$0x1] %vm1833, 0.0
    %1934 = vst.msk [vmem:[#allocation2 + $0x149] sm:$0x1] %vm1833, 0.0
    %1935 = vst.msk [vmem:[#allocation2 + $0x159] sm:$0x1] %vm1833, 0.0
    %1936 = vst.msk [vmem:[#allocation2 + $0x169] sm:$0x1] %vm1833, 0.0
    %1937 = vst.msk [vmem:[#allocation2 + $0x179] sm:$0x1] %vm1833, 0.0
    %1938 = vst.msk [vmem:[#allocation2 + $0x189] sm:$0x1] %vm1833, 0.0
    %1939 = vst.msk [vmem:[#allocation2 + $0x199] sm:$0x1] %vm1833, 0.0
    %1940 = vst.msk [vmem:[#allocation2 + $0x1a9] sm:$0x1] %vm1833, 0.0
    %1941 = vst.msk [vmem:[#allocation2 + $0x1b9] sm:$0x1] %vm1833, 0.0
    %1942 = vst.msk [vmem:[#allocation2 + $0x1c9] sm:$0x1] %vm1833, 0.0
    %1943 = vst.msk [vmem:[#allocation2 + $0x1d9] sm:$0x1] %vm1833, 0.0
    %1944 = vst.msk [vmem:[#allocation2 + $0x1e9] sm:$0x1] %vm1833, 0.0
    %1945 = vst.msk [vmem:[#allocation2 + $0x1f9] sm:$0x1] %vm1833, 0.0
    %1946 = vst.msk [vmem:[#allocation2 + $0x209] sm:$0x1] %vm1833, 0.0
    %1947 = vst.msk [vmem:[#allocation2 + $0x219] sm:$0x1] %vm1833, 0.0
    %1948 = vst.msk [vmem:[#allocation2 + $0x229] sm:$0x1] %vm1833, 0.0
    %1949 = vst.msk [vmem:[#allocation2 + $0x239] sm:$0x1] %vm1833, 0.0
    %1950 = vst.msk [vmem:[#allocation2 + $0x249] sm:$0x1] %vm1833, 0.0
    %1951 = vst.msk [vmem:[#allocation2 + $0x259] sm:$0x1] %vm1833, 0.0
    %1952 = vst.msk [vmem:[#allocation2 + $0x269] sm:$0x1] %vm1833, 0.0
    %1953 = vst.msk [vmem:[#allocation2 + $0x279] sm:$0x1] %vm1833, 0.0
    %1954 = vst.msk [vmem:[#allocation2 + $0x289] sm:$0x1] %vm1833, 0.0
    %1955 = vst.msk [vmem:[#allocation2 + $0x299] sm:$0x1] %vm1833, 0.0
    %1956 = vst.msk [vmem:[#allocation2 + $0x2a9] sm:$0x1] %vm1833, 0.0
    %1957 = vst.msk [vmem:[#allocation2 + $0x2b9] sm:$0x1] %vm1833, 0.0
    %1958 = vst.msk [vmem:[#allocation2 + $0x2c9] sm:$0x1] %vm1833, 0.0
    %1959 = vst.msk [vmem:[#allocation2 + $0x2d9] sm:$0x1] %vm1833, 0.0
    %1960 = vst.msk [vmem:[#allocation2 + $0x2e9] sm:$0x1] %vm1833, 0.0
    %1961 = vst.msk [vmem:[#allocation2 + $0x2f9] sm:$0x1] %vm1833, 0.0
    %1962 = vst.msk [vmem:[#allocation2 + $0x309] sm:$0x1] %vm1833, 0.0
    %1963 = vst.msk [vmem:[#allocation2 + $0x319] sm:$0x1] %vm1833, 0.0
    %1964 = vst.msk [vmem:[#allocation2 + $0x329] sm:$0x1] %vm1833, 0.0
    %1965 = vst.msk [vmem:[#allocation2 + $0x339] sm:$0x1] %vm1833, 0.0
    %1966 = vst.msk [vmem:[#allocation2 + $0x349] sm:$0x1] %vm1833, 0.0
    %1967 = vst.msk [vmem:[#allocation2 + $0x359] sm:$0x1] %vm1833, 0.0
    %1968 = vst.msk [vmem:[#allocation2 + $0x369] sm:$0x1] %vm1833, 0.0
    %1969 = vst.msk [vmem:[#allocation2 + $0x379] sm:$0x1] %vm1833, 0.0
    %1970 = vst.msk [vmem:[#allocation2 + $0x389] sm:$0x1] %vm1833, 0.0
    %1971 = vst.msk [vmem:[#allocation2 + $0x399] sm:$0x1] %vm1833, 0.0
    %1972 = vst.msk [vmem:[#allocation2 + $0x3a9] sm:$0x1] %vm1833, 0.0
    %1973 = vst.msk [vmem:[#allocation2 + $0x3b9] sm:$0x1] %vm1833, 0.0
    %1974 = vst.msk [vmem:[#allocation2 + $0x3c9] sm:$0x1] %vm1833, 0.0
    %1975 = vst.msk [vmem:[#allocation2 + $0x3d9] sm:$0x1] %vm1833, 0.0
    %1976 = vst.msk [vmem:[#allocation2 + $0x3e9] sm:$0x1] %vm1833, 0.0
    %1977 = vst.msk [vmem:[#allocation2 + $0x3f9] sm:$0x1] %vm1833, 0.0
    %1978 = vst.msk [vmem:[#allocation2 + $0x409] sm:$0x1] %vm1833, 0.0
    %1979 = vst.msk [vmem:[#allocation2 + $0x419] sm:$0x1] %vm1833, 0.0
    %1980 = vst.msk [vmem:[#allocation2 + $0x429] sm:$0x1] %vm1833, 0.0
    %1981 = vst.msk [vmem:[#allocation2 + $0x439] sm:$0x1] %vm1833, 0.0
    %1982 = vst.msk [vmem:[#allocation2 + $0x449] sm:$0x1] %vm1833, 0.0
    %1983 = vst.msk [vmem:[#allocation2 + $0x459] sm:$0x1] %vm1833, 0.0
    %1984 = vst.msk [vmem:[#allocation2 + $0x469] sm:$0x1] %vm1833, 0.0
    %1985 = vst.msk [vmem:[#allocation2 + $0x479] sm:$0x1] %vm1833, 0.0
    %1986 = vst.msk [vmem:[#allocation2 + $0x489] sm:$0x1] %vm1833, 0.0
    %1987 = vst.msk [vmem:[#allocation2 + $0x499] sm:$0x1] %vm1833, 0.0
    %1988 = vst.msk [vmem:[#allocation2 + $0x4a9] sm:$0x1] %vm1833, 0.0
    %1989 = vst.msk [vmem:[#allocation2 + $0x4b9] sm:$0x1] %vm1833, 0.0
    %1990 = vst.msk [vmem:[#allocation2 + $0x4c9] sm:$0x1] %vm1833, 0.0
    %1991 = vst.msk [vmem:[#allocation2 + $0x4d9] sm:$0x1] %vm1833, 0.0
    %1992 = vst.msk [vmem:[#allocation2 + $0x4e9] sm:$0x1] %vm1833, 0.0
    %1993 = vst.msk [vmem:[#allocation2 + $0x4f9] sm:$0x1] %vm1833, 0.0
    %s1994 = scalar_lea.vmem [#allocation2], 16
    %1995 = vst.msk [vmem:[%s1994 + $0x1] sm:$0xff] %vm1799, %v853
    %1996 = vst.msk [vmem:[%s1994 + $0x11] sm:$0xff] %vm1799, %v868
    %1997 = vst.msk [vmem:[%s1994 + $0x21] sm:$0xff] %vm1799, %v883
    %1998 = vst.msk [vmem:[%s1994 + $0x31] sm:$0xff] %vm1799, %v898
    %1999 = vst.msk [vmem:[%s1994 + $0x41] sm:$0xff] %vm1799, %v913
    %2000 = vst.msk [vmem:[%s1994 + $0x51] sm:$0xff] %vm1799, %v928
    %2001 = vst.msk [vmem:[%s1994 + $0x61] sm:$0xff] %vm1799, %v943
    %2002 = vst.msk [vmem:[%s1994 + $0x71] sm:$0xff] %vm1799, %v958
    %2003 = vst.msk [vmem:[%s1994 + $0xa1] sm:$0xff] %vm1799, %v973
    %2004 = vst.msk [vmem:[%s1994 + $0xb1] sm:$0xff] %vm1799, %v988
    %2005 = vst.msk [vmem:[%s1994 + $0xc1] sm:$0xff] %vm1799, %v1003
    %2006 = vst.msk [vmem:[%s1994 + $0xd1] sm:$0xff] %vm1799, %v1018
    %2007 = vst.msk [vmem:[%s1994 + $0xe1] sm:$0xff] %vm1799, %v1033
    %2008 = vst.msk [vmem:[%s1994 + $0xf1] sm:$0xff] %vm1799, %v1048
    %2009 = vst.msk [vmem:[%s1994 + $0x101] sm:$0xff] %vm1799, %v1063
    %2010 = vst.msk [vmem:[%s1994 + $0x111] sm:$0xff] %vm1799, %v1078
    %s2011 = scalar_lea.vmem [#allocation2], 336
    %2012 = vst.msk [vmem:[%s2011 + $0x1] sm:$0xff] %vm1799, %v1093
    %2013 = vst.msk [vmem:[%s2011 + $0x11] sm:$0xff] %vm1799, %v1108
    %2014 = vst.msk [vmem:[%s2011 + $0x21] sm:$0xff] %vm1799, %v1123
    %2015 = vst.msk [vmem:[%s2011 + $0x31] sm:$0xff] %vm1799, %v1138
    %2016 = vst.msk [vmem:[%s2011 + $0x41] sm:$0xff] %vm1799, %v1153
    %2017 = vst.msk [vmem:[%s2011 + $0x51] sm:$0xff] %vm1799, %v1168
    %2018 = vst.msk [vmem:[%s2011 + $0x61] sm:$0xff] %vm1799, %v1183
    %2019 = vst.msk [vmem:[%s2011 + $0x71] sm:$0xff] %vm1799, %v1198
    %2020 = vst.msk [vmem:[%s2011 + $0xa1] sm:$0xff] %vm1799, %v1213
    %2021 = vst.msk [vmem:[%s2011 + $0xb1] sm:$0xff] %vm1799, %v1228
    %2022 = vst.msk [vmem:[%s2011 + $0xc1] sm:$0xff] %vm1799, %v1243
    %2023 = vst.msk [vmem:[%s2011 + $0xd1] sm:$0xff] %vm1799, %v1258
    %2024 = vst.msk [vmem:[%s2011 + $0xe1] sm:$0xff] %vm1799, %v1273
    %2025 = vst.msk [vmem:[%s2011 + $0xf1] sm:$0xff] %vm1799, %v1288
    %2026 = vst.msk [vmem:[%s2011 + $0x101] sm:$0xff] %vm1799, %v1303
    %2027 = vst.msk [vmem:[%s2011 + $0x111] sm:$0xff] %vm1799, %v1318
    %s2028 = scalar_lea.vmem [#allocation2], 656
    %2029 = vst.msk [vmem:[%s2028 + $0x1] sm:$0xff] %vm1799, %v1333
    %2030 = vst.msk [vmem:[%s2028 + $0x11] sm:$0xff] %vm1799, %v1348
    %2031 = vst.msk [vmem:[%s2028 + $0x21] sm:$0xff] %vm1799, %v1363
    %2032 = vst.msk [vmem:[%s2028 + $0x31] sm:$0xff] %vm1799, %v1378
    %2033 = vst.msk [vmem:[%s2028 + $0x41] sm:$0xff] %vm1799, %v1393
    %2034 = vst.msk [vmem:[%s2028 + $0x51] sm:$0xff] %vm1799, %v1408
    %2035 = vst.msk [vmem:[%s2028 + $0x61] sm:$0xff] %vm1799, %v1423
    %2036 = vst.msk [vmem:[%s2028 + $0x71] sm:$0xff] %vm1799, %v1438
    %2037 = vst.msk [vmem:[%s2028 + $0xa1] sm:$0xff] %vm1799, %v1453
    %2038 = vst.msk [vmem:[%s2028 + $0xb1] sm:$0xff] %vm1799, %v1468
    %2039 = vst.msk [vmem:[%s2028 + $0xc1] sm:$0xff] %vm1799, %v1483
    %2040 = vst.msk [vmem:[%s2028 + $0xd1] sm:$0xff] %vm1799, %v1498
    %2041 = vst.msk [vmem:[%s2028 + $0xe1] sm:$0xff] %vm1799, %v1513
    %2042 = vst.msk [vmem:[%s2028 + $0xf1] sm:$0xff] %vm1799, %v1528
    %2043 = vst.msk [vmem:[%s2028 + $0x101] sm:$0xff] %vm1799, %v1543
    %2044 = vst.msk [vmem:[%s2028 + $0x111] sm:$0xff] %vm1799, %v1558
    %s2045 = scalar_lea.vmem [#allocation2], 976
    %2046 = vst.msk [vmem:[%s2045 + $0x1] sm:$0xff] %vm1799, %v1573
    %2047 = vst.msk [vmem:[%s2045 + $0x11] sm:$0xff] %vm1799, %v1588
    %2048 = vst.msk [vmem:[%s2045 + $0x21] sm:$0xff] %vm1799, %v1603
    %2049 = vst.msk [vmem:[%s2045 + $0x31] sm:$0xff] %vm1799, %v1618
    %2050 = vst.msk [vmem:[%s2045 + $0x41] sm:$0xff] %vm1799, %v1633
    %2051 = vst.msk [vmem:[%s2045 + $0x51] sm:$0xff] %vm1799, %v1648
    %2052 = vst.msk [vmem:[%s2045 + $0x61] sm:$0xff] %vm1799, %v1663
    %2053 = vst.msk [vmem:[%s2045 + $0x71] sm:$0xff] %vm1799, %v1678
    %2054 = vst.msk [vmem:[%s2045 + $0xa1] sm:$0xff] %vm1799, %v1693
    %2055 = vst.msk [vmem:[%s2045 + $0xb1] sm:$0xff] %vm1799, %v1708
    %2056 = vst.msk [vmem:[%s2045 + $0xc1] sm:$0xff] %vm1799, %v1723
    %2057 = vst.msk [vmem:[%s2045 + $0xd1] sm:$0xff] %vm1799, %v1738
    %2058 = vst.msk [vmem:[%s2045 + $0xe1] sm:$0xff] %vm1799, %v1753
    %2059 = vst.msk [vmem:[%s2045 + $0xf1] sm:$0xff] %vm1799, %v1768
    %2060 = vst.msk [vmem:[%s2045 + $0x101] sm:$0xff] %vm1799, %v1783
    %2061 = vst.msk [vmem:[%s2045 + $0x111] sm:$0xff] %vm1799, %v1798
    %v2062 = vld [vmem:[#allocation2] sm:$0xff]
    %v2063 = vld [vmem:[#allocation2 + $0x10] sm:$0xff]
    %v2064 = vld [vmem:[#allocation2 + $0x20] sm:$0xff]
    %v2065 = vld [vmem:[#allocation2 + $0x30] sm:$0xff]
    %v2066 = vld [vmem:[#allocation2 + $0x40] sm:$0xff]
    %v2067 = vld [vmem:[#allocation2 + $0x50] sm:$0xff]
    %v2068 = vld [vmem:[#allocation2 + $0x60] sm:$0xff]
    %v2069 = vld [vmem:[#allocation2 + $0x70] sm:$0xff]
    %v2070 = vld [vmem:[#allocation2 + $0xa0] sm:$0xff]
    %v2071 = vld [vmem:[#allocation2 + $0xb0] sm:$0xff]
    %v2072 = vld [vmem:[#allocation2 + $0xc0] sm:$0xff]
    %v2073 = vld [vmem:[#allocation2 + $0xd0] sm:$0xff]
    %v2074 = vld [vmem:[#allocation2 + $0xe0] sm:$0xff]
    %v2075 = vld [vmem:[#allocation2 + $0xf0] sm:$0xff]
    %v2076 = vld [vmem:[#allocation2 + $0x100] sm:$0xff]
    %v2077 = vld [vmem:[#allocation2 + $0x110] sm:$0xff]
    %2078 = vst.msk [vmem:[#allocation4] sm:$0xff] %vm1799, %v2062
    %2079 = vst.msk [vmem:[#allocation4 + $0x18] sm:$0xff] %vm1799, %v2063
    %2080 = vst.msk [vmem:[#allocation4 + $0x30] sm:$0xff] %vm1799, %v2064
    %2081 = vst.msk [vmem:[#allocation4 + $0x48] sm:$0xff] %vm1799, %v2065
    %2082 = vst.msk [vmem:[#allocation4 + $0x60] sm:$0xff] %vm1799, %v2066
    %2083 = vst.msk [vmem:[#allocation4 + $0x78] sm:$0xff] %vm1799, %v2067
    %2084 = vst.msk [vmem:[#allocation4 + $0x90] sm:$0xff] %vm1799, %v2068
    %2085 = vst.msk [vmem:[#allocation4 + $0xa8] sm:$0xff] %vm1799, %v2069
    %2086 = vst.msk [vmem:[#allocation4 + $0xc0] sm:$0xff] %vm1799, %v2070
    %2087 = vst.msk [vmem:[#allocation4 + $0xd8] sm:$0xff] %vm1799, %v2071
    %2088 = vst.msk [vmem:[#allocation4 + $0xf0] sm:$0xff] %vm1799, %v2072
    %2089 = vst.msk [vmem:[#allocation4 + $0x108] sm:$0xff] %vm1799, %v2073
    %2090 = vst.msk [vmem:[#allocation4 + $0x120] sm:$0xff] %vm1799, %v2074
    %2091 = vst.msk [vmem:[#allocation4 + $0x138] sm:$0xff] %vm1799, %v2075
    %2092 = vst.msk [vmem:[#allocation4 + $0x150] sm:$0xff] %vm1799, %v2076
    %2093 = vst.msk [vmem:[#allocation4 + $0x168] sm:$0xff] %vm1799, %v2077
    %s2094 = scalar_lea.vmem [#allocation2], 320
    %v2095 = vld [vmem:[%s2094] sm:$0xff]
    %v2096 = vld [vmem:[%s2094 + $0x10] sm:$0xff]
    %v2097 = vld [vmem:[%s2094 + $0x20] sm:$0xff]
    %v2098 = vld [vmem:[%s2094 + $0x30] sm:$0xff]
    %v2099 = vld [vmem:[%s2094 + $0x40] sm:$0xff]
    %v2100 = vld [vmem:[%s2094 + $0x50] sm:$0xff]
    %v2101 = vld [vmem:[%s2094 + $0x60] sm:$0xff]
    %v2102 = vld [vmem:[%s2094 + $0x70] sm:$0xff]
    %v2103 = vld [vmem:[%s2094 + $0xa0] sm:$0xff]
    %v2104 = vld [vmem:[%s2094 + $0xb0] sm:$0xff]
    %v2105 = vld [vmem:[%s2094 + $0xc0] sm:$0xff]
    %v2106 = vld [vmem:[%s2094 + $0xd0] sm:$0xff]
    %v2107 = vld [vmem:[%s2094 + $0xe0] sm:$0xff]
    %v2108 = vld [vmem:[%s2094 + $0xf0] sm:$0xff]
    %v2109 = vld [vmem:[%s2094 + $0x100] sm:$0xff]
    %v2110 = vld [vmem:[%s2094 + $0x110] sm:$0xff]
    %2127 = vrot.lane.b32.xlu0 %v2095, 12
    %v2128 = vpop.permute.xlu0 %2127
    %2129 = vrot.lane.b32.xlu0 %v2096, 12
    %v2130 = vpop.permute.xlu0 %2129
    %2131 = vrot.lane.b32.xlu0 %v2097, 12
    %v2132 = vpop.permute.xlu0 %2131
    %2133 = vrot.lane.b32.xlu0 %v2098, 12
    %v2134 = vpop.permute.xlu0 %2133
    %2135 = vrot.lane.b32.xlu0 %v2099, 12
    %v2136 = vpop.permute.xlu0 %2135
    %2137 = vrot.lane.b32.xlu0 %v2100, 12
    %v2138 = vpop.permute.xlu0 %2137
    %2139 = vrot.lane.b32.xlu0 %v2101, 12
    %v2140 = vpop.permute.xlu0 %2139
    %2141 = vrot.lane.b32.xlu0 %v2102, 12
    %v2142 = vpop.permute.xlu0 %2141
    %2143 = vrot.lane.b32.xlu0 %v2103, 12
    %v2144 = vpop.permute.xlu0 %2143
    %2145 = vrot.lane.b32.xlu0 %v2104, 12
    %v2146 = vpop.permute.xlu0 %2145
    %2147 = vrot.lane.b32.xlu0 %v2105, 12
    %v2148 = vpop.permute.xlu0 %2147
    %2149 = vrot.lane.b32.xlu0 %v2106, 12
    %v2150 = vpop.permute.xlu0 %2149
    %2151 = vrot.lane.b32.xlu0 %v2107, 12
    %v2152 = vpop.permute.xlu0 %2151
    %2153 = vrot.lane.b32.xlu0 %v2108, 12
    %v2154 = vpop.permute.xlu0 %2153
    %2155 = vrot.lane.b32.xlu0 %v2109, 12
    %v2156 = vpop.permute.xlu0 %2155
    %2157 = vrot.lane.b32.xlu0 %v2110, 12
    %v2158 = vpop.permute.xlu0 %2157
    %vm2175 = vcmask 195680
    %2176 = vst.msk [vmem:[#allocation4] sm:$0xff] %vm2175, %v2128
    %2177 = vst.msk [vmem:[#allocation4 + $0x18] sm:$0xff] %vm2175, %v2130
    %2178 = vst.msk [vmem:[#allocation4 + $0x30] sm:$0xff] %vm2175, %v2132
    %2179 = vst.msk [vmem:[#allocation4 + $0x48] sm:$0xff] %vm2175, %v2134
    %2180 = vst.msk [vmem:[#allocation4 + $0x60] sm:$0xff] %vm2175, %v2136
    %2181 = vst.msk [vmem:[#allocation4 + $0x78] sm:$0xff] %vm2175, %v2138
    %2182 = vst.msk [vmem:[#allocation4 + $0x90] sm:$0xff] %vm2175, %v2140
    %2183 = vst.msk [vmem:[#allocation4 + $0xa8] sm:$0xff] %vm2175, %v2142
    %2184 = vst.msk [vmem:[#allocation4 + $0xc0] sm:$0xff] %vm2175, %v2144
    %2185 = vst.msk [vmem:[#allocation4 + $0xd8] sm:$0xff] %vm2175, %v2146
    %2186 = vst.msk [vmem:[#allocation4 + $0xf0] sm:$0xff] %vm2175, %v2148
    %2187 = vst.msk [vmem:[#allocation4 + $0x108] sm:$0xff] %vm2175, %v2150
    %2188 = vst.msk [vmem:[#allocation4 + $0x120] sm:$0xff] %vm2175, %v2152
    %2189 = vst.msk [vmem:[#allocation4 + $0x138] sm:$0xff] %vm2175, %v2154
    %2190 = vst.msk [vmem:[#allocation4 + $0x150] sm:$0xff] %vm2175, %v2156
    %2191 = vst.msk [vmem:[#allocation4 + $0x168] sm:$0xff] %vm2175, %v2158
    %v2192 = vld [vmem:[#allocation2 + $0x1] sm:$0xff]
    %v2193 = vld [vmem:[#allocation2 + $0x11] sm:$0xff]
    %v2194 = vld [vmem:[#allocation2 + $0x21] sm:$0xff]
    %v2195 = vld [vmem:[#allocation2 + $0x31] sm:$0xff]
    %v2196 = vld [vmem:[#allocation2 + $0x41] sm:$0xff]
    %v2197 = vld [vmem:[#allocation2 + $0x51] sm:$0xff]
    %v2198 = vld [vmem:[#allocation2 + $0x61] sm:$0xff]
    %v2199 = vld [vmem:[#allocation2 + $0x71] sm:$0xff]
    %v2200 = vld [vmem:[#allocation2 + $0xa1] sm:$0xff]
    %v2201 = vld [vmem:[#allocation2 + $0xb1] sm:$0xff]
    %v2202 = vld [vmem:[#allocation2 + $0xc1] sm:$0xff]
    %v2203 = vld [vmem:[#allocation2 + $0xd1] sm:$0xff]
    %v2204 = vld [vmem:[#allocation2 + $0xe1] sm:$0xff]
    %v2205 = vld [vmem:[#allocation2 + $0xf1] sm:$0xff]
    %v2206 = vld [vmem:[#allocation2 + $0x101] sm:$0xff]
    %v2207 = vld [vmem:[#allocation2 + $0x111] sm:$0xff]
    %2224 = vrot.lane.b32.xlu0 %v2192, 24
    %v2225 = vpop.permute.xlu0 %2224
    %2226 = vrot.lane.b32.xlu0 %v2193, 24
    %v2227 = vpop.permute.xlu0 %2226
    %2228 = vrot.lane.b32.xlu0 %v2194, 24
    %v2229 = vpop.permute.xlu0 %2228
    %2230 = vrot.lane.b32.xlu0 %v2195, 24
    %v2231 = vpop.permute.xlu0 %2230
    %2232 = vrot.lane.b32.xlu0 %v2196, 24
    %v2233 = vpop.permute.xlu0 %2232
    %2234 = vrot.lane.b32.xlu0 %v2197, 24
    %v2235 = vpop.permute.xlu0 %2234
    %2236 = vrot.lane.b32.xlu0 %v2198, 24
    %v2237 = vpop.permute.xlu0 %2236
    %2238 = vrot.lane.b32.xlu0 %v2199, 24
    %v2239 = vpop.permute.xlu0 %2238
    %2240 = vrot.lane.b32.xlu0 %v2200, 24
    %v2241 = vpop.permute.xlu0 %2240
    %2242 = vrot.lane.b32.xlu0 %v2201, 24
    %v2243 = vpop.permute.xlu0 %2242
    %2244 = vrot.lane.b32.xlu0 %v2202, 24
    %v2245 = vpop.permute.xlu0 %2244
    %2246 = vrot.lane.b32.xlu0 %v2203, 24
    %v2247 = vpop.permute.xlu0 %2246
    %2248 = vrot.lane.b32.xlu0 %v2204, 24
    %v2249 = vpop.permute.xlu0 %2248
    %2250 = vrot.lane.b32.xlu0 %v2205, 24
    %v2251 = vpop.permute.xlu0 %2250
    %2252 = vrot.lane.b32.xlu0 %v2206, 24
    %v2253 = vpop.permute.xlu0 %2252
    %2254 = vrot.lane.b32.xlu0 %v2207, 24
    %v2255 = vpop.permute.xlu0 %2254
    %vm2272 = vcmask 294080
    %2273 = vst.msk [vmem:[#allocation4] sm:$0xff] %vm2272, %v2225
    %2274 = vst.msk [vmem:[#allocation4 + $0x18] sm:$0xff] %vm2272, %v2227
    %2275 = vst.msk [vmem:[#allocation4 + $0x30] sm:$0xff] %vm2272, %v2229
    %2276 = vst.msk [vmem:[#allocation4 + $0x48] sm:$0xff] %vm2272, %v2231
    %2277 = vst.msk [vmem:[#allocation4 + $0x60] sm:$0xff] %vm2272, %v2233
    %2278 = vst.msk [vmem:[#allocation4 + $0x78] sm:$0xff] %vm2272, %v2235
    %2279 = vst.msk [vmem:[#allocation4 + $0x90] sm:$0xff] %vm2272, %v2237
    %2280 = vst.msk [vmem:[#allocation4 + $0xa8] sm:$0xff] %vm2272, %v2239
    %2281 = vst.msk [vmem:[#allocation4 + $0xc0] sm:$0xff] %vm2272, %v2241
    %2282 = vst.msk [vmem:[#allocation4 + $0xd8] sm:$0xff] %vm2272, %v2243
    %2283 = vst.msk [vmem:[#allocation4 + $0xf0] sm:$0xff] %vm2272, %v2245
    %2284 = vst.msk [vmem:[#allocation4 + $0x108] sm:$0xff] %vm2272, %v2247
    %2285 = vst.msk [vmem:[#allocation4 + $0x120] sm:$0xff] %vm2272, %v2249
    %2286 = vst.msk [vmem:[#allocation4 + $0x138] sm:$0xff] %vm2272, %v2251
    %2287 = vst.msk [vmem:[#allocation4 + $0x150] sm:$0xff] %vm2272, %v2253
    %2288 = vst.msk [vmem:[#allocation4 + $0x168] sm:$0xff] %vm2272, %v2255
    %v2289 = vld [vmem:[%s2094 + $0x1] sm:$0xff]
    %v2290 = vld [vmem:[%s2094 + $0x11] sm:$0xff]
    %v2291 = vld [vmem:[%s2094 + $0x21] sm:$0xff]
    %v2292 = vld [vmem:[%s2094 + $0x31] sm:$0xff]
    %v2293 = vld [vmem:[%s2094 + $0x41] sm:$0xff]
    %v2294 = vld [vmem:[%s2094 + $0x51] sm:$0xff]
    %v2295 = vld [vmem:[%s2094 + $0x61] sm:$0xff]
    %v2296 = vld [vmem:[%s2094 + $0x71] sm:$0xff]
    %v2297 = vld [vmem:[%s2094 + $0xa1] sm:$0xff]
    %v2298 = vld [vmem:[%s2094 + $0xb1] sm:$0xff]
    %v2299 = vld [vmem:[%s2094 + $0xc1] sm:$0xff]
    %v2300 = vld [vmem:[%s2094 + $0xd1] sm:$0xff]
    %v2301 = vld [vmem:[%s2094 + $0xe1] sm:$0xff]
    %v2302 = vld [vmem:[%s2094 + $0xf1] sm:$0xff]
    %v2303 = vld [vmem:[%s2094 + $0x101] sm:$0xff]
    %v2304 = vld [vmem:[%s2094 + $0x111] sm:$0xff]
    %2321 = vrot.lane.b32.xlu0 %v2289, 36
    %v2322 = vpop.permute.xlu0 %2321
    %2323 = vrot.lane.b32.xlu0 %v2290, 36
    %v2324 = vpop.permute.xlu0 %2323
    %2325 = vrot.lane.b32.xlu0 %v2291, 36
    %v2326 = vpop.permute.xlu0 %2325
    %2327 = vrot.lane.b32.xlu0 %v2292, 36
    %v2328 = vpop.permute.xlu0 %2327
    %2329 = vrot.lane.b32.xlu0 %v2293, 36
    %v2330 = vpop.permute.xlu0 %2329
    %2331 = vrot.lane.b32.xlu0 %v2294, 36
    %v2332 = vpop.permute.xlu0 %2331
    %2333 = vrot.lane.b32.xlu0 %v2295, 36
    %v2334 = vpop.permute.xlu0 %2333
    %2335 = vrot.lane.b32.xlu0 %v2296, 36
    %v2336 = vpop.permute.xlu0 %2335
    %2337 = vrot.lane.b32.xlu0 %v2297, 36
    %v2338 = vpop.permute.xlu0 %2337
    %2339 = vrot.lane.b32.xlu0 %v2298, 36
    %v2340 = vpop.permute.xlu0 %2339
    %2341 = vrot.lane.b32.xlu0 %v2299, 36
    %v2342 = vpop.permute.xlu0 %2341
    %2343 = vrot.lane.b32.xlu0 %v2300, 36
    %v2344 = vpop.permute.xlu0 %2343
    %2345 = vrot.lane.b32.xlu0 %v2301, 36
    %v2346 = vpop.permute.xlu0 %2345
    %2347 = vrot.lane.b32.xlu0 %v2302, 36
    %v2348 = vpop.permute.xlu0 %2347
    %2349 = vrot.lane.b32.xlu0 %v2303, 36
    %v2350 = vpop.permute.xlu0 %2349
    %2351 = vrot.lane.b32.xlu0 %v2304, 36
    %v2352 = vpop.permute.xlu0 %2351
    %vm2369 = vcmask 392480
    %2370 = vst.msk [vmem:[#allocation4] sm:$0xff] %vm2369, %v2322
    %2371 = vst.msk [vmem:[#allocation4 + $0x18] sm:$0xff] %vm2369, %v2324
    %2372 = vst.msk [vmem:[#allocation4 + $0x30] sm:$0xff] %vm2369, %v2326
    %2373 = vst.msk [vmem:[#allocation4 + $0x48] sm:$0xff] %vm2369, %v2328
    %2374 = vst.msk [vmem:[#allocation4 + $0x60] sm:$0xff] %vm2369, %v2330
    %2375 = vst.msk [vmem:[#allocation4 + $0x78] sm:$0xff] %vm2369, %v2332
    %2376 = vst.msk [vmem:[#allocation4 + $0x90] sm:$0xff] %vm2369, %v2334
    %2377 = vst.msk [vmem:[#allocation4 + $0xa8] sm:$0xff] %vm2369, %v2336
    %2378 = vst.msk [vmem:[#allocation4 + $0xc0] sm:$0xff] %vm2369, %v2338
    %2379 = vst.msk [vmem:[#allocation4 + $0xd8] sm:$0xff] %vm2369, %v2340
    %2380 = vst.msk [vmem:[#allocation4 + $0xf0] sm:$0xff] %vm2369, %v2342
    %2381 = vst.msk [vmem:[#allocation4 + $0x108] sm:$0xff] %vm2369, %v2344
    %2382 = vst.msk [vmem:[#allocation4 + $0x120] sm:$0xff] %vm2369, %v2346
    %2383 = vst.msk [vmem:[#allocation4 + $0x138] sm:$0xff] %vm2369, %v2348
    %2384 = vst.msk [vmem:[#allocation4 + $0x150] sm:$0xff] %vm2369, %v2350
    %2385 = vst.msk [vmem:[#allocation4 + $0x168] sm:$0xff] %vm2369, %v2352
    %v2386 = vld [vmem:[#allocation2 + $0x2] sm:$0xff]
    %v2387 = vld [vmem:[#allocation2 + $0x12] sm:$0xff]
    %v2388 = vld [vmem:[#allocation2 + $0x22] sm:$0xff]
    %v2389 = vld [vmem:[#allocation2 + $0x32] sm:$0xff]
    %v2390 = vld [vmem:[#allocation2 + $0x42] sm:$0xff]
    %v2391 = vld [vmem:[#allocation2 + $0x52] sm:$0xff]
    %v2392 = vld [vmem:[#allocation2 + $0x62] sm:$0xff]
    %v2393 = vld [vmem:[#allocation2 + $0x72] sm:$0xff]
    %v2394 = vld [vmem:[#allocation2 + $0xa2] sm:$0xff]
    %v2395 = vld [vmem:[#allocation2 + $0xb2] sm:$0xff]
    %v2396 = vld [vmem:[#allocation2 + $0xc2] sm:$0xff]
    %v2397 = vld [vmem:[#allocation2 + $0xd2] sm:$0xff]
    %v2398 = vld [vmem:[#allocation2 + $0xe2] sm:$0xff]
    %v2399 = vld [vmem:[#allocation2 + $0xf2] sm:$0xff]
    %v2400 = vld [vmem:[#allocation2 + $0x102] sm:$0xff]
    %v2401 = vld [vmem:[#allocation2 + $0x112] sm:$0xff]
    %2418 = vrot.lane.b32.xlu0 %v2386, 48
    %v2419 = vpop.permute.xlu0 %2418
    %2420 = vrot.lane.b32.xlu0 %v2387, 48
    %v2421 = vpop.permute.xlu0 %2420
    %2422 = vrot.lane.b32.xlu0 %v2388, 48
    %v2423 = vpop.permute.xlu0 %2422
    %2424 = vrot.lane.b32.xlu0 %v2389, 48
    %v2425 = vpop.permute.xlu0 %2424
    %2426 = vrot.lane.b32.xlu0 %v2390, 48
    %v2427 = vpop.permute.xlu0 %2426
    %2428 = vrot.lane.b32.xlu0 %v2391, 48
    %v2429 = vpop.permute.xlu0 %2428
    %2430 = vrot.lane.b32.xlu0 %v2392, 48
    %v2431 = vpop.permute.xlu0 %2430
    %2432 = vrot.lane.b32.xlu0 %v2393, 48
    %v2433 = vpop.permute.xlu0 %2432
    %2434 = vrot.lane.b32.xlu0 %v2394, 48
    %v2435 = vpop.permute.xlu0 %2434
    %2436 = vrot.lane.b32.xlu0 %v2395, 48
    %v2437 = vpop.permute.xlu0 %2436
    %2438 = vrot.lane.b32.xlu0 %v2396, 48
    %v2439 = vpop.permute.xlu0 %2438
    %2440 = vrot.lane.b32.xlu0 %v2397, 48
    %v2441 = vpop.permute.xlu0 %2440
    %2442 = vrot.lane.b32.xlu0 %v2398, 48
    %v2443 = vpop.permute.xlu0 %2442
    %2444 = vrot.lane.b32.xlu0 %v2399, 48
    %v2445 = vpop.permute.xlu0 %2444
    %2446 = vrot.lane.b32.xlu0 %v2400, 48
    %v2447 = vpop.permute.xlu0 %2446
    %2448 = vrot.lane.b32.xlu0 %v2401, 48
    %v2449 = vpop.permute.xlu0 %2448
    %vm2466 = vcmask 490880
    %2467 = vst.msk [vmem:[#allocation4] sm:$0xff] %vm2466, %v2419
    %2468 = vst.msk [vmem:[#allocation4 + $0x18] sm:$0xff] %vm2466, %v2421
    %2469 = vst.msk [vmem:[#allocation4 + $0x30] sm:$0xff] %vm2466, %v2423
    %2470 = vst.msk [vmem:[#allocation4 + $0x48] sm:$0xff] %vm2466, %v2425
    %2471 = vst.msk [vmem:[#allocation4 + $0x60] sm:$0xff] %vm2466, %v2427
    %2472 = vst.msk [vmem:[#allocation4 + $0x78] sm:$0xff] %vm2466, %v2429
    %2473 = vst.msk [vmem:[#allocation4 + $0x90] sm:$0xff] %vm2466, %v2431
    %2474 = vst.msk [vmem:[#allocation4 + $0xa8] sm:$0xff] %vm2466, %v2433
    %2475 = vst.msk [vmem:[#allocation4 + $0xc0] sm:$0xff] %vm2466, %v2435
    %2476 = vst.msk [vmem:[#allocation4 + $0xd8] sm:$0xff] %vm2466, %v2437
    %2477 = vst.msk [vmem:[#allocation4 + $0xf0] sm:$0xff] %vm2466, %v2439
    %2478 = vst.msk [vmem:[#allocation4 + $0x108] sm:$0xff] %vm2466, %v2441
    %2479 = vst.msk [vmem:[#allocation4 + $0x120] sm:$0xff] %vm2466, %v2443
    %2480 = vst.msk [vmem:[#allocation4 + $0x138] sm:$0xff] %vm2466, %v2445
    %2481 = vst.msk [vmem:[#allocation4 + $0x150] sm:$0xff] %vm2466, %v2447
    %2482 = vst.msk [vmem:[#allocation4 + $0x168] sm:$0xff] %vm2466, %v2449
    %s2483 = scalar_lea.vmem [#allocation2], 640
    %v2484 = vld [vmem:[%s2483] sm:$0xff]
    %v2485 = vld [vmem:[%s2483 + $0x10] sm:$0xff]
    %v2486 = vld [vmem:[%s2483 + $0x20] sm:$0xff]
    %v2487 = vld [vmem:[%s2483 + $0x30] sm:$0xff]
    %v2488 = vld [vmem:[%s2483 + $0x40] sm:$0xff]
    %v2489 = vld [vmem:[%s2483 + $0x50] sm:$0xff]
    %v2490 = vld [vmem:[%s2483 + $0x60] sm:$0xff]
    %v2491 = vld [vmem:[%s2483 + $0x70] sm:$0xff]
    %v2492 = vld [vmem:[%s2483 + $0xa0] sm:$0xff]
    %v2493 = vld [vmem:[%s2483 + $0xb0] sm:$0xff]
    %v2494 = vld [vmem:[%s2483 + $0xc0] sm:$0xff]
    %v2495 = vld [vmem:[%s2483 + $0xd0] sm:$0xff]
    %v2496 = vld [vmem:[%s2483 + $0xe0] sm:$0xff]
    %v2497 = vld [vmem:[%s2483 + $0xf0] sm:$0xff]
    %v2498 = vld [vmem:[%s2483 + $0x100] sm:$0xff]
    %v2499 = vld [vmem:[%s2483 + $0x110] sm:$0xff]
    %2516 = vrot.lane.b32.xlu0 %v2484, 60
    %v2517 = vpop.permute.xlu0 %2516
    %2518 = vrot.lane.b32.xlu0 %v2485, 60
    %v2519 = vpop.permute.xlu0 %2518
    %2520 = vrot.lane.b32.xlu0 %v2486, 60
    %v2521 = vpop.permute.xlu0 %2520
    %2522 = vrot.lane.b32.xlu0 %v2487, 60
    %v2523 = vpop.permute.xlu0 %2522
    %2524 = vrot.lane.b32.xlu0 %v2488, 60
    %v2525 = vpop.permute.xlu0 %2524
    %2526 = vrot.lane.b32.xlu0 %v2489, 60
    %v2527 = vpop.permute.xlu0 %2526
    %2528 = vrot.lane.b32.xlu0 %v2490, 60
    %v2529 = vpop.permute.xlu0 %2528
    %2530 = vrot.lane.b32.xlu0 %v2491, 60
    %v2531 = vpop.permute.xlu0 %2530
    %2532 = vrot.lane.b32.xlu0 %v2492, 60
    %v2533 = vpop.permute.xlu0 %2532
    %2534 = vrot.lane.b32.xlu0 %v2493, 60
    %v2535 = vpop.permute.xlu0 %2534
    %2536 = vrot.lane.b32.xlu0 %v2494, 60
    %v2537 = vpop.permute.xlu0 %2536
    %2538 = vrot.lane.b32.xlu0 %v2495, 60
    %v2539 = vpop.permute.xlu0 %2538
    %2540 = vrot.lane.b32.xlu0 %v2496, 60
    %v2541 = vpop.permute.xlu0 %2540
    %2542 = vrot.lane.b32.xlu0 %v2497, 60
    %v2543 = vpop.permute.xlu0 %2542
    %2544 = vrot.lane.b32.xlu0 %v2498, 60
    %v2545 = vpop.permute.xlu0 %2544
    %2546 = vrot.lane.b32.xlu0 %v2499, 60
    %v2547 = vpop.permute.xlu0 %2546
    %vm2564 = vcmask 589280
    %2565 = vst.msk [vmem:[#allocation4] sm:$0xff] %vm2564, %v2517
    %2566 = vst.msk [vmem:[#allocation4 + $0x18] sm:$0xff] %vm2564, %v2519
    %2567 = vst.msk [vmem:[#allocation4 + $0x30] sm:$0xff] %vm2564, %v2521
    %2568 = vst.msk [vmem:[#allocation4 + $0x48] sm:$0xff] %vm2564, %v2523
    %2569 = vst.msk [vmem:[#allocation4 + $0x60] sm:$0xff] %vm2564, %v2525
    %2570 = vst.msk [vmem:[#allocation4 + $0x78] sm:$0xff] %vm2564, %v2527
    %2571 = vst.msk [vmem:[#allocation4 + $0x90] sm:$0xff] %vm2564, %v2529
    %2572 = vst.msk [vmem:[#allocation4 + $0xa8] sm:$0xff] %vm2564, %v2531
    %2573 = vst.msk [vmem:[#allocation4 + $0xc0] sm:$0xff] %vm2564, %v2533
    %2574 = vst.msk [vmem:[#allocation4 + $0xd8] sm:$0xff] %vm2564, %v2535
    %2575 = vst.msk [vmem:[#allocation4 + $0xf0] sm:$0xff] %vm2564, %v2537
    %2576 = vst.msk [vmem:[#allocation4 + $0x108] sm:$0xff] %vm2564, %v2539
    %2577 = vst.msk [vmem:[#allocation4 + $0x120] sm:$0xff] %vm2564, %v2541
    %2578 = vst.msk [vmem:[#allocation4 + $0x138] sm:$0xff] %vm2564, %v2543
    %2579 = vst.msk [vmem:[#allocation4 + $0x150] sm:$0xff] %vm2564, %v2545
    %2580 = vst.msk [vmem:[#allocation4 + $0x168] sm:$0xff] %vm2564, %v2547
    %s2581 = scalar_lea.vmem [#allocation2], 960
    %v2582 = vld [vmem:[%s2581] sm:$0xff]
    %v2583 = vld [vmem:[%s2581 + $0x10] sm:$0xff]
    %v2584 = vld [vmem:[%s2581 + $0x20] sm:$0xff]
    %v2585 = vld [vmem:[%s2581 + $0x30] sm:$0xff]
    %v2586 = vld [vmem:[%s2581 + $0x40] sm:$0xff]
    %v2587 = vld [vmem:[%s2581 + $0x50] sm:$0xff]
    %v2588 = vld [vmem:[%s2581 + $0x60] sm:$0xff]
    %v2589 = vld [vmem:[%s2581 + $0x70] sm:$0xff]
    %v2590 = vld [vmem:[%s2581 + $0xa0] sm:$0xff]
    %v2591 = vld [vmem:[%s2581 + $0xb0] sm:$0xff]
    %v2592 = vld [vmem:[%s2581 + $0xc0] sm:$0xff]
    %v2593 = vld [vmem:[%s2581 + $0xd0] sm:$0xff]
    %v2594 = vld [vmem:[%s2581 + $0xe0] sm:$0xff]
    %v2595 = vld [vmem:[%s2581 + $0xf0] sm:$0xff]
    %v2596 = vld [vmem:[%s2581 + $0x100] sm:$0xff]
    %v2597 = vld [vmem:[%s2581 + $0x110] sm:$0xff]
    %2614 = vrot.lane.b32.xlu0 %v2582, 72
    %v2615 = vpop.permute.xlu0 %2614
    %2616 = vrot.lane.b32.xlu0 %v2583, 72
    %v2617 = vpop.permute.xlu0 %2616
    %2618 = vrot.lane.b32.xlu0 %v2584, 72
    %v2619 = vpop.permute.xlu0 %2618
    %2620 = vrot.lane.b32.xlu0 %v2585, 72
    %v2621 = vpop.permute.xlu0 %2620
    %2622 = vrot.lane.b32.xlu0 %v2586, 72
    %v2623 = vpop.permute.xlu0 %2622
    %2624 = vrot.lane.b32.xlu0 %v2587, 72
    %v2625 = vpop.permute.xlu0 %2624
    %2626 = vrot.lane.b32.xlu0 %v2588, 72
    %v2627 = vpop.permute.xlu0 %2626
    %2628 = vrot.lane.b32.xlu0 %v2589, 72
    %v2629 = vpop.permute.xlu0 %2628
    %2630 = vrot.lane.b32.xlu0 %v2590, 72
    %v2631 = vpop.permute.xlu0 %2630
    %2632 = vrot.lane.b32.xlu0 %v2591, 72
    %v2633 = vpop.permute.xlu0 %2632
    %2634 = vrot.lane.b32.xlu0 %v2592, 72
    %v2635 = vpop.permute.xlu0 %2634
    %2636 = vrot.lane.b32.xlu0 %v2593, 72
    %v2637 = vpop.permute.xlu0 %2636
    %2638 = vrot.lane.b32.xlu0 %v2594, 72
    %v2639 = vpop.permute.xlu0 %2638
    %2640 = vrot.lane.b32.xlu0 %v2595, 72
    %v2641 = vpop.permute.xlu0 %2640
    %2642 = vrot.lane.b32.xlu0 %v2596, 72
    %v2643 = vpop.permute.xlu0 %2642
    %2644 = vrot.lane.b32.xlu0 %v2597, 72
    %v2645 = vpop.permute.xlu0 %2644
    %vm2662 = vcmask 687680
    %2663 = vst.msk [vmem:[#allocation4] sm:$0xff] %vm2662, %v2615
    %2664 = vst.msk [vmem:[#allocation4 + $0x18] sm:$0xff] %vm2662, %v2617
    %2665 = vst.msk [vmem:[#allocation4 + $0x30] sm:$0xff] %vm2662, %v2619
    %2666 = vst.msk [vmem:[#allocation4 + $0x48] sm:$0xff] %vm2662, %v2621
    %2667 = vst.msk [vmem:[#allocation4 + $0x60] sm:$0xff] %vm2662, %v2623
    %2668 = vst.msk [vmem:[#allocation4 + $0x78] sm:$0xff] %vm2662, %v2625
    %2669 = vst.msk [vmem:[#allocation4 + $0x90] sm:$0xff] %vm2662, %v2627
    %2670 = vst.msk [vmem:[#allocation4 + $0xa8] sm:$0xff] %vm2662, %v2629
    %2671 = vst.msk [vmem:[#allocation4 + $0xc0] sm:$0xff] %vm2662, %v2631
    %2672 = vst.msk [vmem:[#allocation4 + $0xd8] sm:$0xff] %vm2662, %v2633
    %2673 = vst.msk [vmem:[#allocation4 + $0xf0] sm:$0xff] %vm2662, %v2635
    %2674 = vst.msk [vmem:[#allocation4 + $0x108] sm:$0xff] %vm2662, %v2637
    %2675 = vst.msk [vmem:[#allocation4 + $0x120] sm:$0xff] %vm2662, %v2639
    %2676 = vst.msk [vmem:[#allocation4 + $0x138] sm:$0xff] %vm2662, %v2641
    %2677 = vst.msk [vmem:[#allocation4 + $0x150] sm:$0xff] %vm2662, %v2643
    %2678 = vst.msk [vmem:[#allocation4 + $0x168] sm:$0xff] %vm2662, %v2645
    %v2679 = vld [vmem:[%s2483 + $0x1] sm:$0xff]
    %v2680 = vld [vmem:[%s2483 + $0x11] sm:$0xff]
    %v2681 = vld [vmem:[%s2483 + $0x21] sm:$0xff]
    %v2682 = vld [vmem:[%s2483 + $0x31] sm:$0xff]
    %v2683 = vld [vmem:[%s2483 + $0x41] sm:$0xff]
    %v2684 = vld [vmem:[%s2483 + $0x51] sm:$0xff]
    %v2685 = vld [vmem:[%s2483 + $0x61] sm:$0xff]
    %v2686 = vld [vmem:[%s2483 + $0x71] sm:$0xff]
    %v2687 = vld [vmem:[%s2483 + $0xa1] sm:$0xff]
    %v2688 = vld [vmem:[%s2483 + $0xb1] sm:$0xff]
    %v2689 = vld [vmem:[%s2483 + $0xc1] sm:$0xff]
    %v2690 = vld [vmem:[%s2483 + $0xd1] sm:$0xff]
    %v2691 = vld [vmem:[%s2483 + $0xe1] sm:$0xff]
    %v2692 = vld [vmem:[%s2483 + $0xf1] sm:$0xff]
    %v2693 = vld [vmem:[%s2483 + $0x101] sm:$0xff]
    %v2694 = vld [vmem:[%s2483 + $0x111] sm:$0xff]
    %2711 = vrot.lane.b32.xlu0 %v2679, 84
    %v2712 = vpop.permute.xlu0 %2711
    %2713 = vrot.lane.b32.xlu0 %v2680, 84
    %v2714 = vpop.permute.xlu0 %2713
    %2715 = vrot.lane.b32.xlu0 %v2681, 84
    %v2716 = vpop.permute.xlu0 %2715
    %2717 = vrot.lane.b32.xlu0 %v2682, 84
    %v2718 = vpop.permute.xlu0 %2717
    %2719 = vrot.lane.b32.xlu0 %v2683, 84
    %v2720 = vpop.permute.xlu0 %2719
    %2721 = vrot.lane.b32.xlu0 %v2684, 84
    %v2722 = vpop.permute.xlu0 %2721
    %2723 = vrot.lane.b32.xlu0 %v2685, 84
    %v2724 = vpop.permute.xlu0 %2723
    %2725 = vrot.lane.b32.xlu0 %v2686, 84
    %v2726 = vpop.permute.xlu0 %2725
    %2727 = vrot.lane.b32.xlu0 %v2687, 84
    %v2728 = vpop.permute.xlu0 %2727
    %2729 = vrot.lane.b32.xlu0 %v2688, 84
    %v2730 = vpop.permute.xlu0 %2729
    %2731 = vrot.lane.b32.xlu0 %v2689, 84
    %v2732 = vpop.permute.xlu0 %2731
    %2733 = vrot.lane.b32.xlu0 %v2690, 84
    %v2734 = vpop.permute.xlu0 %2733
    %2735 = vrot.lane.b32.xlu0 %v2691, 84
    %v2736 = vpop.permute.xlu0 %2735
    %2737 = vrot.lane.b32.xlu0 %v2692, 84
    %v2738 = vpop.permute.xlu0 %2737
    %2739 = vrot.lane.b32.xlu0 %v2693, 84
    %v2740 = vpop.permute.xlu0 %2739
    %2741 = vrot.lane.b32.xlu0 %v2694, 84
    %v2742 = vpop.permute.xlu0 %2741
    %vm2759 = vcmask 786080
    %2760 = vst.msk [vmem:[#allocation4] sm:$0xff] %vm2759, %v2712
    %2761 = vst.msk [vmem:[#allocation4 + $0x18] sm:$0xff] %vm2759, %v2714
    %2762 = vst.msk [vmem:[#allocation4 + $0x30] sm:$0xff] %vm2759, %v2716
    %2763 = vst.msk [vmem:[#allocation4 + $0x48] sm:$0xff] %vm2759, %v2718
    %2764 = vst.msk [vmem:[#allocation4 + $0x60] sm:$0xff] %vm2759, %v2720
    %2765 = vst.msk [vmem:[#allocation4 + $0x78] sm:$0xff] %vm2759, %v2722
    %2766 = vst.msk [vmem:[#allocation4 + $0x90] sm:$0xff] %vm2759, %v2724
    %2767 = vst.msk [vmem:[#allocation4 + $0xa8] sm:$0xff] %vm2759, %v2726
    %2768 = vst.msk [vmem:[#allocation4 + $0xc0] sm:$0xff] %vm2759, %v2728
    %2769 = vst.msk [vmem:[#allocation4 + $0xd8] sm:$0xff] %vm2759, %v2730
    %2770 = vst.msk [vmem:[#allocation4 + $0xf0] sm:$0xff] %vm2759, %v2732
    %2771 = vst.msk [vmem:[#allocation4 + $0x108] sm:$0xff] %vm2759, %v2734
    %2772 = vst.msk [vmem:[#allocation4 + $0x120] sm:$0xff] %vm2759, %v2736
    %2773 = vst.msk [vmem:[#allocation4 + $0x138] sm:$0xff] %vm2759, %v2738
    %2774 = vst.msk [vmem:[#allocation4 + $0x150] sm:$0xff] %vm2759, %v2740
    %2775 = vst.msk [vmem:[#allocation4 + $0x168] sm:$0xff] %vm2759, %v2742
    %v2776 = vld [vmem:[%s2581 + $0x1] sm:$0xff]
    %v2777 = vld [vmem:[%s2581 + $0x11] sm:$0xff]
    %v2778 = vld [vmem:[%s2581 + $0x21] sm:$0xff]
    %v2779 = vld [vmem:[%s2581 + $0x31] sm:$0xff]
    %v2780 = vld [vmem:[%s2581 + $0x41] sm:$0xff]
    %v2781 = vld [vmem:[%s2581 + $0x51] sm:$0xff]
    %v2782 = vld [vmem:[%s2581 + $0x61] sm:$0xff]
    %v2783 = vld [vmem:[%s2581 + $0x71] sm:$0xff]
    %v2784 = vld [vmem:[%s2581 + $0xa1] sm:$0xff]
    %v2785 = vld [vmem:[%s2581 + $0xb1] sm:$0xff]
    %v2786 = vld [vmem:[%s2581 + $0xc1] sm:$0xff]
    %v2787 = vld [vmem:[%s2581 + $0xd1] sm:$0xff]
    %v2788 = vld [vmem:[%s2581 + $0xe1] sm:$0xff]
    %v2789 = vld [vmem:[%s2581 + $0xf1] sm:$0xff]
    %v2790 = vld [vmem:[%s2581 + $0x101] sm:$0xff]
    %v2791 = vld [vmem:[%s2581 + $0x111] sm:$0xff]
    %2808 = vrot.lane.b32.xlu0 %v2776, 96
    %v2809 = vpop.permute.xlu0 %2808
    %2810 = vrot.lane.b32.xlu0 %v2777, 96
    %v2811 = vpop.permute.xlu0 %2810
    %2812 = vrot.lane.b32.xlu0 %v2778, 96
    %v2813 = vpop.permute.xlu0 %2812
    %2814 = vrot.lane.b32.xlu0 %v2779, 96
    %v2815 = vpop.permute.xlu0 %2814
    %2816 = vrot.lane.b32.xlu0 %v2780, 96
    %v2817 = vpop.permute.xlu0 %2816
    %2818 = vrot.lane.b32.xlu0 %v2781, 96
    %v2819 = vpop.permute.xlu0 %2818
    %2820 = vrot.lane.b32.xlu0 %v2782, 96
    %v2821 = vpop.permute.xlu0 %2820
    %2822 = vrot.lane.b32.xlu0 %v2783, 96
    %v2823 = vpop.permute.xlu0 %2822
    %2824 = vrot.lane.b32.xlu0 %v2784, 96
    %v2825 = vpop.permute.xlu0 %2824
    %2826 = vrot.lane.b32.xlu0 %v2785, 96
    %v2827 = vpop.permute.xlu0 %2826
    %2828 = vrot.lane.b32.xlu0 %v2786, 96
    %v2829 = vpop.permute.xlu0 %2828
    %2830 = vrot.lane.b32.xlu0 %v2787, 96
    %v2831 = vpop.permute.xlu0 %2830
    %2832 = vrot.lane.b32.xlu0 %v2788, 96
    %v2833 = vpop.permute.xlu0 %2832
    %2834 = vrot.lane.b32.xlu0 %v2789, 96
    %v2835 = vpop.permute.xlu0 %2834
    %2836 = vrot.lane.b32.xlu0 %v2790, 96
    %v2837 = vpop.permute.xlu0 %2836
    %2838 = vrot.lane.b32.xlu0 %v2791, 96
    %v2839 = vpop.permute.xlu0 %2838
    %vm2856 = vcmask 884480
    %2857 = vst.msk [vmem:[#allocation4] sm:$0xff] %vm2856, %v2809
    %2858 = vst.msk [vmem:[#allocation4 + $0x18] sm:$0xff] %vm2856, %v2811
    %2859 = vst.msk [vmem:[#allocation4 + $0x30] sm:$0xff] %vm2856, %v2813
    %2860 = vst.msk [vmem:[#allocation4 + $0x48] sm:$0xff] %vm2856, %v2815
    %2861 = vst.msk [vmem:[#allocation4 + $0x60] sm:$0xff] %vm2856, %v2817
    %2862 = vst.msk [vmem:[#allocation4 + $0x78] sm:$0xff] %vm2856, %v2819
    %2863 = vst.msk [vmem:[#allocation4 + $0x90] sm:$0xff] %vm2856, %v2821
    %2864 = vst.msk [vmem:[#allocation4 + $0xa8] sm:$0xff] %vm2856, %v2823
    %2865 = vst.msk [vmem:[#allocation4 + $0xc0] sm:$0xff] %vm2856, %v2825
    %2866 = vst.msk [vmem:[#allocation4 + $0xd8] sm:$0xff] %vm2856, %v2827
    %2867 = vst.msk [vmem:[#allocation4 + $0xf0] sm:$0xff] %vm2856, %v2829
    %2868 = vst.msk [vmem:[#allocation4 + $0x108] sm:$0xff] %vm2856, %v2831
    %2869 = vst.msk [vmem:[#allocation4 + $0x120] sm:$0xff] %vm2856, %v2833
    %2870 = vst.msk [vmem:[#allocation4 + $0x138] sm:$0xff] %vm2856, %v2835
    %2871 = vst.msk [vmem:[#allocation4 + $0x150] sm:$0xff] %vm2856, %v2837
    %2872 = vst.msk [vmem:[#allocation4 + $0x168] sm:$0xff] %vm2856, %v2839
    %v2873 = vld [vmem:[%s2483 + $0x2] sm:$0xff]
    %v2874 = vld [vmem:[%s2483 + $0x12] sm:$0xff]
    %v2875 = vld [vmem:[%s2483 + $0x22] sm:$0xff]
    %v2876 = vld [vmem:[%s2483 + $0x32] sm:$0xff]
    %v2877 = vld [vmem:[%s2483 + $0x42] sm:$0xff]
    %v2878 = vld [vmem:[%s2483 + $0x52] sm:$0xff]
    %v2879 = vld [vmem:[%s2483 + $0x62] sm:$0xff]
    %v2880 = vld [vmem:[%s2483 + $0x72] sm:$0xff]
    %v2881 = vld [vmem:[%s2483 + $0xa2] sm:$0xff]
    %v2882 = vld [vmem:[%s2483 + $0xb2] sm:$0xff]
    %v2883 = vld [vmem:[%s2483 + $0xc2] sm:$0xff]
    %v2884 = vld [vmem:[%s2483 + $0xd2] sm:$0xff]
    %v2885 = vld [vmem:[%s2483 + $0xe2] sm:$0xff]
    %v2886 = vld [vmem:[%s2483 + $0xf2] sm:$0xff]
    %v2887 = vld [vmem:[%s2483 + $0x102] sm:$0xff]
    %v2888 = vld [vmem:[%s2483 + $0x112] sm:$0xff]
    %2905 = vrot.lane.b32.xlu0 %v2873, 108
    %v2906 = vpop.permute.xlu0 %2905
    %2907 = vrot.lane.b32.xlu0 %v2874, 108
    %v2908 = vpop.permute.xlu0 %2907
    %2909 = vrot.lane.b32.xlu0 %v2875, 108
    %v2910 = vpop.permute.xlu0 %2909
    %2911 = vrot.lane.b32.xlu0 %v2876, 108
    %v2912 = vpop.permute.xlu0 %2911
    %2913 = vrot.lane.b32.xlu0 %v2877, 108
    %v2914 = vpop.permute.xlu0 %2913
    %2915 = vrot.lane.b32.xlu0 %v2878, 108
    %v2916 = vpop.permute.xlu0 %2915
    %2917 = vrot.lane.b32.xlu0 %v2879, 108
    %v2918 = vpop.permute.xlu0 %2917
    %2919 = vrot.lane.b32.xlu0 %v2880, 108
    %v2920 = vpop.permute.xlu0 %2919
    %2921 = vrot.lane.b32.xlu0 %v2881, 108
    %v2922 = vpop.permute.xlu0 %2921
    %2923 = vrot.lane.b32.xlu0 %v2882, 108
    %v2924 = vpop.permute.xlu0 %2923
    %2925 = vrot.lane.b32.xlu0 %v2883, 108
    %v2926 = vpop.permute.xlu0 %2925
    %2927 = vrot.lane.b32.xlu0 %v2884, 108
    %v2928 = vpop.permute.xlu0 %2927
    %2929 = vrot.lane.b32.xlu0 %v2885, 108
    %v2930 = vpop.permute.xlu0 %2929
    %2931 = vrot.lane.b32.xlu0 %v2886, 108
    %v2932 = vpop.permute.xlu0 %2931
    %2933 = vrot.lane.b32.xlu0 %v2887, 108
    %v2934 = vpop.permute.xlu0 %2933
    %2935 = vrot.lane.b32.xlu0 %v2888, 108
    %v2936 = vpop.permute.xlu0 %2935
    %vm2953 = vcmask 982880
    %2954 = vst.msk [vmem:[#allocation4] sm:$0xff] %vm2953, %v2906
    %2955 = vst.msk [vmem:[#allocation4 + $0x18] sm:$0xff] %vm2953, %v2908
    %2956 = vst.msk [vmem:[#allocation4 + $0x30] sm:$0xff] %vm2953, %v2910
    %2957 = vst.msk [vmem:[#allocation4 + $0x48] sm:$0xff] %vm2953, %v2912
    %2958 = vst.msk [vmem:[#allocation4 + $0x60] sm:$0xff] %vm2953, %v2914
    %2959 = vst.msk [vmem:[#allocation4 + $0x78] sm:$0xff] %vm2953, %v2916
    %2960 = vst.msk [vmem:[#allocation4 + $0x90] sm:$0xff] %vm2953, %v2918
    %2961 = vst.msk [vmem:[#allocation4 + $0xa8] sm:$0xff] %vm2953, %v2920
    %2962 = vst.msk [vmem:[#allocation4 + $0xc0] sm:$0xff] %vm2953, %v2922
    %2963 = vst.msk [vmem:[#allocation4 + $0xd8] sm:$0xff] %vm2953, %v2924
    %2964 = vst.msk [vmem:[#allocation4 + $0xf0] sm:$0xff] %vm2953, %v2926
    %2965 = vst.msk [vmem:[#allocation4 + $0x108] sm:$0xff] %vm2953, %v2928
    %2966 = vst.msk [vmem:[#allocation4 + $0x120] sm:$0xff] %vm2953, %v2930
    %2967 = vst.msk [vmem:[#allocation4 + $0x138] sm:$0xff] %vm2953, %v2932
    %2968 = vst.msk [vmem:[#allocation4 + $0x150] sm:$0xff] %vm2953, %v2934
    %2969 = vst.msk [vmem:[#allocation4 + $0x168] sm:$0xff] %vm2953, %v2936
    %v2970 = vld [vmem:[%s1994] sm:$0xff]
    %v2971 = vld [vmem:[%s1994 + $0x10] sm:$0xff]
    %v2972 = vld [vmem:[%s1994 + $0x20] sm:$0xff]
    %v2973 = vld [vmem:[%s1994 + $0x30] sm:$0xff]
    %v2974 = vld [vmem:[%s1994 + $0x40] sm:$0xff]
    %v2975 = vld [vmem:[%s1994 + $0x50] sm:$0xff]
    %v2976 = vld [vmem:[%s1994 + $0x60] sm:$0xff]
    %v2977 = vld [vmem:[%s1994 + $0x70] sm:$0xff]
    %v2978 = vld [vmem:[%s1994 + $0xa0] sm:$0xff]
    %v2979 = vld [vmem:[%s1994 + $0xb0] sm:$0xff]
    %v2980 = vld [vmem:[%s1994 + $0xc0] sm:$0xff]
    %v2981 = vld [vmem:[%s1994 + $0xd0] sm:$0xff]
    %v2982 = vld [vmem:[%s1994 + $0xe0] sm:$0xff]
    %v2983 = vld [vmem:[%s1994 + $0xf0] sm:$0xff]
    %v2984 = vld [vmem:[%s1994 + $0x100] sm:$0xff]
    %v2985 = vld [vmem:[%s1994 + $0x110] sm:$0xff]
    %3002 = vrot.lane.b32.xlu0 %v2970, 120
    %v3003 = vpop.permute.xlu0 %3002
    %3004 = vrot.lane.b32.xlu0 %v2971, 120
    %v3005 = vpop.permute.xlu0 %3004
    %3006 = vrot.lane.b32.xlu0 %v2972, 120
    %v3007 = vpop.permute.xlu0 %3006
    %3008 = vrot.lane.b32.xlu0 %v2973, 120
    %v3009 = vpop.permute.xlu0 %3008
    %3010 = vrot.lane.b32.xlu0 %v2974, 120
    %v3011 = vpop.permute.xlu0 %3010
    %3012 = vrot.lane.b32.xlu0 %v2975, 120
    %v3013 = vpop.permute.xlu0 %3012
    %3014 = vrot.lane.b32.xlu0 %v2976, 120
    %v3015 = vpop.permute.xlu0 %3014
    %3016 = vrot.lane.b32.xlu0 %v2977, 120
    %v3017 = vpop.permute.xlu0 %3016
    %3018 = vrot.lane.b32.xlu0 %v2978, 120
    %v3019 = vpop.permute.xlu0 %3018
    %3020 = vrot.lane.b32.xlu0 %v2979, 120
    %v3021 = vpop.permute.xlu0 %3020
    %3022 = vrot.lane.b32.xlu0 %v2980, 120
    %v3023 = vpop.permute.xlu0 %3022
    %3024 = vrot.lane.b32.xlu0 %v2981, 120
    %v3025 = vpop.permute.xlu0 %3024
    %3026 = vrot.lane.b32.xlu0 %v2982, 120
    %v3027 = vpop.permute.xlu0 %3026
    %3028 = vrot.lane.b32.xlu0 %v2983, 120
    %v3029 = vpop.permute.xlu0 %3028
    %3030 = vrot.lane.b32.xlu0 %v2984, 120
    %v3031 = vpop.permute.xlu0 %3030
    %3032 = vrot.lane.b32.xlu0 %v2985, 120
    %v3033 = vpop.permute.xlu0 %3032
    %vm3050 = vcmask 1048512
    %3051 = vst.msk [vmem:[#allocation4] sm:$0xff] %vm3050, %v3003
    %vm3052 = vcmask 31744
    %3053 = vst.msk [vmem:[#allocation4 + $0x8] sm:$0xff] %vm3052, %v3003
    %3054 = vst.msk [vmem:[#allocation4 + $0x18] sm:$0xff] %vm3050, %v3005
    %3055 = vst.msk [vmem:[#allocation4 + $0x20] sm:$0xff] %vm3052, %v3005
    %3056 = vst.msk [vmem:[#allocation4 + $0x30] sm:$0xff] %vm3050, %v3007
    %3057 = vst.msk [vmem:[#allocation4 + $0x38] sm:$0xff] %vm3052, %v3007
    %3058 = vst.msk [vmem:[#allocation4 + $0x48] sm:$0xff] %vm3050, %v3009
    %3059 = vst.msk [vmem:[#allocation4 + $0x50] sm:$0xff] %vm3052, %v3009
    %3060 = vst.msk [vmem:[#allocation4 + $0x60] sm:$0xff] %vm3050, %v3011
    %3061 = vst.msk [vmem:[#allocation4 + $0x68] sm:$0xff] %vm3052, %v3011
    %3062 = vst.msk [vmem:[#allocation4 + $0x78] sm:$0xff] %vm3050, %v3013
    %3063 = vst.msk [vmem:[#allocation4 + $0x80] sm:$0xff] %vm3052, %v3013
    %3064 = vst.msk [vmem:[#allocation4 + $0x90] sm:$0xff] %vm3050, %v3015
    %3065 = vst.msk [vmem:[#allocation4 + $0x98] sm:$0xff] %vm3052, %v3015
    %3066 = vst.msk [vmem:[#allocation4 + $0xa8] sm:$0xff] %vm3050, %v3017
    %3067 = vst.msk [vmem:[#allocation4 + $0xb0] sm:$0xff] %vm3052, %v3017
    %3068 = vst.msk [vmem:[#allocation4 + $0xc0] sm:$0xff] %vm3050, %v3019
    %3069 = vst.msk [vmem:[#allocation4 + $0xc8] sm:$0xff] %vm3052, %v3019
    %3070 = vst.msk [vmem:[#allocation4 + $0xd8] sm:$0xff] %vm3050, %v3021
    %3071 = vst.msk [vmem:[#allocation4 + $0xe0] sm:$0xff] %vm3052, %v3021
    %3072 = vst.msk [vmem:[#allocation4 + $0xf0] sm:$0xff] %vm3050, %v3023
    %3073 = vst.msk [vmem:[#allocation4 + $0xf8] sm:$0xff] %vm3052, %v3023
    %3074 = vst.msk [vmem:[#allocation4 + $0x108] sm:$0xff] %vm3050, %v3025
    %3075 = vst.msk [vmem:[#allocation4 + $0x110] sm:$0xff] %vm3052, %v3025
    %3076 = vst.msk [vmem:[#allocation4 + $0x120] sm:$0xff] %vm3050, %v3027
    %3077 = vst.msk [vmem:[#allocation4 + $0x128] sm:$0xff] %vm3052, %v3027
    %3078 = vst.msk [vmem:[#allocation4 + $0x138] sm:$0xff] %vm3050, %v3029
    %3079 = vst.msk [vmem:[#allocation4 + $0x140] sm:$0xff] %vm3052, %v3029
    %3080 = vst.msk [vmem:[#allocation4 + $0x150] sm:$0xff] %vm3050, %v3031
    %3081 = vst.msk [vmem:[#allocation4 + $0x158] sm:$0xff] %vm3052, %v3031
    %3082 = vst.msk [vmem:[#allocation4 + $0x168] sm:$0xff] %vm3050, %v3033
    %3083 = vst.msk [vmem:[#allocation4 + $0x170] sm:$0xff] %vm3052, %v3033
    %v3084 = vld [vmem:[%s2011] sm:$0xff]
    %v3085 = vld [vmem:[%s2011 + $0x10] sm:$0xff]
    %v3086 = vld [vmem:[%s2011 + $0x20] sm:$0xff]
    %v3087 = vld [vmem:[%s2011 + $0x30] sm:$0xff]
    %v3088 = vld [vmem:[%s2011 + $0x40] sm:$0xff]
    %v3089 = vld [vmem:[%s2011 + $0x50] sm:$0xff]
    %v3090 = vld [vmem:[%s2011 + $0x60] sm:$0xff]
    %v3091 = vld [vmem:[%s2011 + $0x70] sm:$0xff]
    %v3092 = vld [vmem:[%s2011 + $0xa0] sm:$0xff]
    %v3093 = vld [vmem:[%s2011 + $0xb0] sm:$0xff]
    %v3094 = vld [vmem:[%s2011 + $0xc0] sm:$0xff]
    %v3095 = vld [vmem:[%s2011 + $0xd0] sm:$0xff]
    %v3096 = vld [vmem:[%s2011 + $0xe0] sm:$0xff]
    %v3097 = vld [vmem:[%s2011 + $0xf0] sm:$0xff]
    %v3098 = vld [vmem:[%s2011 + $0x100] sm:$0xff]
    %v3099 = vld [vmem:[%s2011 + $0x110] sm:$0xff]
    %3116 = vrot.lane.b32.xlu0 %v3084, 4
    %v3117 = vpop.permute.xlu0 %3116
    %3118 = vrot.lane.b32.xlu0 %v3085, 4
    %v3119 = vpop.permute.xlu0 %3118
    %3120 = vrot.lane.b32.xlu0 %v3086, 4
    %v3121 = vpop.permute.xlu0 %3120
    %3122 = vrot.lane.b32.xlu0 %v3087, 4
    %v3123 = vpop.permute.xlu0 %3122
    %3124 = vrot.lane.b32.xlu0 %v3088, 4
    %v3125 = vpop.permute.xlu0 %3124
    %3126 = vrot.lane.b32.xlu0 %v3089, 4
    %v3127 = vpop.permute.xlu0 %3126
    %3128 = vrot.lane.b32.xlu0 %v3090, 4
    %v3129 = vpop.permute.xlu0 %3128
    %3130 = vrot.lane.b32.xlu0 %v3091, 4
    %v3131 = vpop.permute.xlu0 %3130
    %3132 = vrot.lane.b32.xlu0 %v3092, 4
    %v3133 = vpop.permute.xlu0 %3132
    %3134 = vrot.lane.b32.xlu0 %v3093, 4
    %v3135 = vpop.permute.xlu0 %3134
    %3136 = vrot.lane.b32.xlu0 %v3094, 4
    %v3137 = vpop.permute.xlu0 %3136
    %3138 = vrot.lane.b32.xlu0 %v3095, 4
    %v3139 = vpop.permute.xlu0 %3138
    %3140 = vrot.lane.b32.xlu0 %v3096, 4
    %v3141 = vpop.permute.xlu0 %3140
    %3142 = vrot.lane.b32.xlu0 %v3097, 4
    %v3143 = vpop.permute.xlu0 %3142
    %3144 = vrot.lane.b32.xlu0 %v3098, 4
    %v3145 = vpop.permute.xlu0 %3144
    %3146 = vrot.lane.b32.xlu0 %v3099, 4
    %v3147 = vpop.permute.xlu0 %3146
    %vm3164 = vcmask 130080
    %3165 = vst.msk [vmem:[#allocation4 + $0x8] sm:$0xff] %vm3164, %v3117
    %3166 = vst.msk [vmem:[#allocation4 + $0x20] sm:$0xff] %vm3164, %v3119
    %3167 = vst.msk [vmem:[#allocation4 + $0x38] sm:$0xff] %vm3164, %v3121
    %3168 = vst.msk [vmem:[#allocation4 + $0x50] sm:$0xff] %vm3164, %v3123
    %3169 = vst.msk [vmem:[#allocation4 + $0x68] sm:$0xff] %vm3164, %v3125
    %3170 = vst.msk [vmem:[#allocation4 + $0x80] sm:$0xff] %vm3164, %v3127
    %3171 = vst.msk [vmem:[#allocation4 + $0x98] sm:$0xff] %vm3164, %v3129
    %3172 = vst.msk [vmem:[#allocation4 + $0xb0] sm:$0xff] %vm3164, %v3131
    %3173 = vst.msk [vmem:[#allocation4 + $0xc8] sm:$0xff] %vm3164, %v3133
    %3174 = vst.msk [vmem:[#allocation4 + $0xe0] sm:$0xff] %vm3164, %v3135
    %3175 = vst.msk [vmem:[#allocation4 + $0xf8] sm:$0xff] %vm3164, %v3137
    %3176 = vst.msk [vmem:[#allocation4 + $0x110] sm:$0xff] %vm3164, %v3139
    %3177 = vst.msk [vmem:[#allocation4 + $0x128] sm:$0xff] %vm3164, %v3141
    %3178 = vst.msk [vmem:[#allocation4 + $0x140] sm:$0xff] %vm3164, %v3143
    %3179 = vst.msk [vmem:[#allocation4 + $0x158] sm:$0xff] %vm3164, %v3145
    %3180 = vst.msk [vmem:[#allocation4 + $0x170] sm:$0xff] %vm3164, %v3147
    %v3181 = vld [vmem:[%s1994 + $0x1] sm:$0xff]
    %v3182 = vld [vmem:[%s1994 + $0x11] sm:$0xff]
    %v3183 = vld [vmem:[%s1994 + $0x21] sm:$0xff]
    %v3184 = vld [vmem:[%s1994 + $0x31] sm:$0xff]
    %v3185 = vld [vmem:[%s1994 + $0x41] sm:$0xff]
    %v3186 = vld [vmem:[%s1994 + $0x51] sm:$0xff]
    %v3187 = vld [vmem:[%s1994 + $0x61] sm:$0xff]
    %v3188 = vld [vmem:[%s1994 + $0x71] sm:$0xff]
    %v3189 = vld [vmem:[%s1994 + $0xa1] sm:$0xff]
    %v3190 = vld [vmem:[%s1994 + $0xb1] sm:$0xff]
    %v3191 = vld [vmem:[%s1994 + $0xc1] sm:$0xff]
    %v3192 = vld [vmem:[%s1994 + $0xd1] sm:$0xff]
    %v3193 = vld [vmem:[%s1994 + $0xe1] sm:$0xff]
    %v3194 = vld [vmem:[%s1994 + $0xf1] sm:$0xff]
    %v3195 = vld [vmem:[%s1994 + $0x101] sm:$0xff]
    %v3196 = vld [vmem:[%s1994 + $0x111] sm:$0xff]
    %3213 = vrot.lane.b32.xlu0 %v3181, 16
    %v3214 = vpop.permute.xlu0 %3213
    %3215 = vrot.lane.b32.xlu0 %v3182, 16
    %v3216 = vpop.permute.xlu0 %3215
    %3217 = vrot.lane.b32.xlu0 %v3183, 16
    %v3218 = vpop.permute.xlu0 %3217
    %3219 = vrot.lane.b32.xlu0 %v3184, 16
    %v3220 = vpop.permute.xlu0 %3219
    %3221 = vrot.lane.b32.xlu0 %v3185, 16
    %v3222 = vpop.permute.xlu0 %3221
    %3223 = vrot.lane.b32.xlu0 %v3186, 16
    %v3224 = vpop.permute.xlu0 %3223
    %3225 = vrot.lane.b32.xlu0 %v3187, 16
    %v3226 = vpop.permute.xlu0 %3225
    %3227 = vrot.lane.b32.xlu0 %v3188, 16
    %v3228 = vpop.permute.xlu0 %3227
    %3229 = vrot.lane.b32.xlu0 %v3189, 16
    %v3230 = vpop.permute.xlu0 %3229
    %3231 = vrot.lane.b32.xlu0 %v3190, 16
    %v3232 = vpop.permute.xlu0 %3231
    %3233 = vrot.lane.b32.xlu0 %v3191, 16
    %v3234 = vpop.permute.xlu0 %3233
    %3235 = vrot.lane.b32.xlu0 %v3192, 16
    %v3236 = vpop.permute.xlu0 %3235
    %3237 = vrot.lane.b32.xlu0 %v3193, 16
    %v3238 = vpop.permute.xlu0 %3237
    %3239 = vrot.lane.b32.xlu0 %v3194, 16
    %v3240 = vpop.permute.xlu0 %3239
    %3241 = vrot.lane.b32.xlu0 %v3195, 16
    %v3242 = vpop.permute.xlu0 %3241
    %3243 = vrot.lane.b32.xlu0 %v3196, 16
    %v3244 = vpop.permute.xlu0 %3243
    %vm3261 = vcmask 228480
    %3262 = vst.msk [vmem:[#allocation4 + $0x8] sm:$0xff] %vm3261, %v3214
    %3263 = vst.msk [vmem:[#allocation4 + $0x20] sm:$0xff] %vm3261, %v3216
    %3264 = vst.msk [vmem:[#allocation4 + $0x38] sm:$0xff] %vm3261, %v3218
    %3265 = vst.msk [vmem:[#allocation4 + $0x50] sm:$0xff] %vm3261, %v3220
    %3266 = vst.msk [vmem:[#allocation4 + $0x68] sm:$0xff] %vm3261, %v3222
    %3267 = vst.msk [vmem:[#allocation4 + $0x80] sm:$0xff] %vm3261, %v3224
    %3268 = vst.msk [vmem:[#allocation4 + $0x98] sm:$0xff] %vm3261, %v3226
    %3269 = vst.msk [vmem:[#allocation4 + $0xb0] sm:$0xff] %vm3261, %v3228
    %3270 = vst.msk [vmem:[#allocation4 + $0xc8] sm:$0xff] %vm3261, %v3230
    %3271 = vst.msk [vmem:[#allocation4 + $0xe0] sm:$0xff] %vm3261, %v3232
    %3272 = vst.msk [vmem:[#allocation4 + $0xf8] sm:$0xff] %vm3261, %v3234
    %3273 = vst.msk [vmem:[#allocation4 + $0x110] sm:$0xff] %vm3261, %v3236
    %3274 = vst.msk [vmem:[#allocation4 + $0x128] sm:$0xff] %vm3261, %v3238
    %3275 = vst.msk [vmem:[#allocation4 + $0x140] sm:$0xff] %vm3261, %v3240
    %3276 = vst.msk [vmem:[#allocation4 + $0x158] sm:$0xff] %vm3261, %v3242
    %3277 = vst.msk [vmem:[#allocation4 + $0x170] sm:$0xff] %vm3261, %v3244
    %v3278 = vld [vmem:[%s2011 + $0x1] sm:$0xff]
    %v3279 = vld [vmem:[%s2011 + $0x11] sm:$0xff]
    %v3280 = vld [vmem:[%s2011 + $0x21] sm:$0xff]
    %v3281 = vld [vmem:[%s2011 + $0x31] sm:$0xff]
    %v3282 = vld [vmem:[%s2011 + $0x41] sm:$0xff]
    %v3283 = vld [vmem:[%s2011 + $0x51] sm:$0xff]
    %v3284 = vld [vmem:[%s2011 + $0x61] sm:$0xff]
    %v3285 = vld [vmem:[%s2011 + $0x71] sm:$0xff]
    %v3286 = vld [vmem:[%s2011 + $0xa1] sm:$0xff]
    %v3287 = vld [vmem:[%s2011 + $0xb1] sm:$0xff]
    %v3288 = vld [vmem:[%s2011 + $0xc1] sm:$0xff]
    %v3289 = vld [vmem:[%s2011 + $0xd1] sm:$0xff]
    %v3290 = vld [vmem:[%s2011 + $0xe1] sm:$0xff]
    %v3291 = vld [vmem:[%s2011 + $0xf1] sm:$0xff]
    %v3292 = vld [vmem:[%s2011 + $0x101] sm:$0xff]
    %v3293 = vld [vmem:[%s2011 + $0x111] sm:$0xff]
    %3310 = vrot.lane.b32.xlu0 %v3278, 28
    %v3311 = vpop.permute.xlu0 %3310
    %3312 = vrot.lane.b32.xlu0 %v3279, 28
    %v3313 = vpop.permute.xlu0 %3312
    %3314 = vrot.lane.b32.xlu0 %v3280, 28
    %v3315 = vpop.permute.xlu0 %3314
    %3316 = vrot.lane.b32.xlu0 %v3281, 28
    %v3317 = vpop.permute.xlu0 %3316
    %3318 = vrot.lane.b32.xlu0 %v3282, 28
    %v3319 = vpop.permute.xlu0 %3318
    %3320 = vrot.lane.b32.xlu0 %v3283, 28
    %v3321 = vpop.permute.xlu0 %3320
    %3322 = vrot.lane.b32.xlu0 %v3284, 28
    %v3323 = vpop.permute.xlu0 %3322
    %3324 = vrot.lane.b32.xlu0 %v3285, 28
    %v3325 = vpop.permute.xlu0 %3324
    %3326 = vrot.lane.b32.xlu0 %v3286, 28
    %v3327 = vpop.permute.xlu0 %3326
    %3328 = vrot.lane.b32.xlu0 %v3287, 28
    %v3329 = vpop.permute.xlu0 %3328
    %3330 = vrot.lane.b32.xlu0 %v3288, 28
    %v3331 = vpop.permute.xlu0 %3330
    %3332 = vrot.lane.b32.xlu0 %v3289, 28
    %v3333 = vpop.permute.xlu0 %3332
    %3334 = vrot.lane.b32.xlu0 %v3290, 28
    %v3335 = vpop.permute.xlu0 %3334
    %3336 = vrot.lane.b32.xlu0 %v3291, 28
    %v3337 = vpop.permute.xlu0 %3336
    %3338 = vrot.lane.b32.xlu0 %v3292, 28
    %v3339 = vpop.permute.xlu0 %3338
    %3340 = vrot.lane.b32.xlu0 %v3293, 28
    %v3341 = vpop.permute.xlu0 %3340
    %vm3358 = vcmask 326880
    %3359 = vst.msk [vmem:[#allocation4 + $0x8] sm:$0xff] %vm3358, %v3311
    %3360 = vst.msk [vmem:[#allocation4 + $0x20] sm:$0xff] %vm3358, %v3313
    %3361 = vst.msk [vmem:[#allocation4 + $0x38] sm:$0xff] %vm3358, %v3315
    %3362 = vst.msk [vmem:[#allocation4 + $0x50] sm:$0xff] %vm3358, %v3317
    %3363 = vst.msk [vmem:[#allocation4 + $0x68] sm:$0xff] %vm3358, %v3319
    %3364 = vst.msk [vmem:[#allocation4 + $0x80] sm:$0xff] %vm3358, %v3321
    %3365 = vst.msk [vmem:[#allocation4 + $0x98] sm:$0xff] %vm3358, %v3323
    %3366 = vst.msk [vmem:[#allocation4 + $0xb0] sm:$0xff] %vm3358, %v3325
    %3367 = vst.msk [vmem:[#allocation4 + $0xc8] sm:$0xff] %vm3358, %v3327
    %3368 = vst.msk [vmem:[#allocation4 + $0xe0] sm:$0xff] %vm3358, %v3329
    %3369 = vst.msk [vmem:[#allocation4 + $0xf8] sm:$0xff] %vm3358, %v3331
    %3370 = vst.msk [vmem:[#allocation4 + $0x110] sm:$0xff] %vm3358, %v3333
    %3371 = vst.msk [vmem:[#allocation4 + $0x128] sm:$0xff] %vm3358, %v3335
    %3372 = vst.msk [vmem:[#allocation4 + $0x140] sm:$0xff] %vm3358, %v3337
    %3373 = vst.msk [vmem:[#allocation4 + $0x158] sm:$0xff] %vm3358, %v3339
    %3374 = vst.msk [vmem:[#allocation4 + $0x170] sm:$0xff] %vm3358, %v3341
    %v3375 = vld [vmem:[%s1994 + $0x2] sm:$0xff]
    %v3376 = vld [vmem:[%s1994 + $0x12] sm:$0xff]
    %v3377 = vld [vmem:[%s1994 + $0x22] sm:$0xff]
    %v3378 = vld [vmem:[%s1994 + $0x32] sm:$0xff]
    %v3379 = vld [vmem:[%s1994 + $0x42] sm:$0xff]
    %v3380 = vld [vmem:[%s1994 + $0x52] sm:$0xff]
    %v3381 = vld [vmem:[%s1994 + $0x62] sm:$0xff]
    %v3382 = vld [vmem:[%s1994 + $0x72] sm:$0xff]
    %v3383 = vld [vmem:[%s1994 + $0xa2] sm:$0xff]
    %v3384 = vld [vmem:[%s1994 + $0xb2] sm:$0xff]
    %v3385 = vld [vmem:[%s1994 + $0xc2] sm:$0xff]
    %v3386 = vld [vmem:[%s1994 + $0xd2] sm:$0xff]
    %v3387 = vld [vmem:[%s1994 + $0xe2] sm:$0xff]
    %v3388 = vld [vmem:[%s1994 + $0xf2] sm:$0xff]
    %v3389 = vld [vmem:[%s1994 + $0x102] sm:$0xff]
    %v3390 = vld [vmem:[%s1994 + $0x112] sm:$0xff]
    %3407 = vrot.lane.b32.xlu0 %v3375, 40
    %v3408 = vpop.permute.xlu0 %3407
    %3409 = vrot.lane.b32.xlu0 %v3376, 40
    %v3410 = vpop.permute.xlu0 %3409
    %3411 = vrot.lane.b32.xlu0 %v3377, 40
    %v3412 = vpop.permute.xlu0 %3411
    %3413 = vrot.lane.b32.xlu0 %v3378, 40
    %v3414 = vpop.permute.xlu0 %3413
    %3415 = vrot.lane.b32.xlu0 %v3379, 40
    %v3416 = vpop.permute.xlu0 %3415
    %3417 = vrot.lane.b32.xlu0 %v3380, 40
    %v3418 = vpop.permute.xlu0 %3417
    %3419 = vrot.lane.b32.xlu0 %v3381, 40
    %v3420 = vpop.permute.xlu0 %3419
    %3421 = vrot.lane.b32.xlu0 %v3382, 40
    %v3422 = vpop.permute.xlu0 %3421
    %3423 = vrot.lane.b32.xlu0 %v3383, 40
    %v3424 = vpop.permute.xlu0 %3423
    %3425 = vrot.lane.b32.xlu0 %v3384, 40
    %v3426 = vpop.permute.xlu0 %3425
    %3427 = vrot.lane.b32.xlu0 %v3385, 40
    %v3428 = vpop.permute.xlu0 %3427
    %3429 = vrot.lane.b32.xlu0 %v3386, 40
    %v3430 = vpop.permute.xlu0 %3429
    %3431 = vrot.lane.b32.xlu0 %v3387, 40
    %v3432 = vpop.permute.xlu0 %3431
    %3433 = vrot.lane.b32.xlu0 %v3388, 40
    %v3434 = vpop.permute.xlu0 %3433
    %3435 = vrot.lane.b32.xlu0 %v3389, 40
    %v3436 = vpop.permute.xlu0 %3435
    %3437 = vrot.lane.b32.xlu0 %v3390, 40
    %v3438 = vpop.permute.xlu0 %3437
    %vm3455 = vcmask 425280
    %3456 = vst.msk [vmem:[#allocation4 + $0x8] sm:$0xff] %vm3455, %v3408
    %3457 = vst.msk [vmem:[#allocation4 + $0x20] sm:$0xff] %vm3455, %v3410
    %3458 = vst.msk [vmem:[#allocation4 + $0x38] sm:$0xff] %vm3455, %v3412
    %3459 = vst.msk [vmem:[#allocation4 + $0x50] sm:$0xff] %vm3455, %v3414
    %3460 = vst.msk [vmem:[#allocation4 + $0x68] sm:$0xff] %vm3455, %v3416
    %3461 = vst.msk [vmem:[#allocation4 + $0x80] sm:$0xff] %vm3455, %v3418
    %3462 = vst.msk [vmem:[#allocation4 + $0x98] sm:$0xff] %vm3455, %v3420
    %3463 = vst.msk [vmem:[#allocation4 + $0xb0] sm:$0xff] %vm3455, %v3422
    %3464 = vst.msk [vmem:[#allocation4 + $0xc8] sm:$0xff] %vm3455, %v3424
    %3465 = vst.msk [vmem:[#allocation4 + $0xe0] sm:$0xff] %vm3455, %v3426
    %3466 = vst.msk [vmem:[#allocation4 + $0xf8] sm:$0xff] %vm3455, %v3428
    %3467 = vst.msk [vmem:[#allocation4 + $0x110] sm:$0xff] %vm3455, %v3430
    %3468 = vst.msk [vmem:[#allocation4 + $0x128] sm:$0xff] %vm3455, %v3432
    %3469 = vst.msk [vmem:[#allocation4 + $0x140] sm:$0xff] %vm3455, %v3434
    %3470 = vst.msk [vmem:[#allocation4 + $0x158] sm:$0xff] %vm3455, %v3436
    %3471 = vst.msk [vmem:[#allocation4 + $0x170] sm:$0xff] %vm3455, %v3438
    %v3472 = vld [vmem:[%s2028] sm:$0xff]
    %v3473 = vld [vmem:[%s2028 + $0x10] sm:$0xff]
    %v3474 = vld [vmem:[%s2028 + $0x20] sm:$0xff]
    %v3475 = vld [vmem:[%s2028 + $0x30] sm:$0xff]
    %v3476 = vld [vmem:[%s2028 + $0x40] sm:$0xff]
    %v3477 = vld [vmem:[%s2028 + $0x50] sm:$0xff]
    %v3478 = vld [vmem:[%s2028 + $0x60] sm:$0xff]
    %v3479 = vld [vmem:[%s2028 + $0x70] sm:$0xff]
    %v3480 = vld [vmem:[%s2028 + $0xa0] sm:$0xff]
    %v3481 = vld [vmem:[%s2028 + $0xb0] sm:$0xff]
    %v3482 = vld [vmem:[%s2028 + $0xc0] sm:$0xff]
    %v3483 = vld [vmem:[%s2028 + $0xd0] sm:$0xff]
    %v3484 = vld [vmem:[%s2028 + $0xe0] sm:$0xff]
    %v3485 = vld [vmem:[%s2028 + $0xf0] sm:$0xff]
    %v3486 = vld [vmem:[%s2028 + $0x100] sm:$0xff]
    %v3487 = vld [vmem:[%s2028 + $0x110] sm:$0xff]
    %3504 = vrot.lane.b32.xlu0 %v3472, 52
    %v3505 = vpop.permute.xlu0 %3504
    %3506 = vrot.lane.b32.xlu0 %v3473, 52
    %v3507 = vpop.permute.xlu0 %3506
    %3508 = vrot.lane.b32.xlu0 %v3474, 52
    %v3509 = vpop.permute.xlu0 %3508
    %3510 = vrot.lane.b32.xlu0 %v3475, 52
    %v3511 = vpop.permute.xlu0 %3510
    %3512 = vrot.lane.b32.xlu0 %v3476, 52
    %v3513 = vpop.permute.xlu0 %3512
    %3514 = vrot.lane.b32.xlu0 %v3477, 52
    %v3515 = vpop.permute.xlu0 %3514
    %3516 = vrot.lane.b32.xlu0 %v3478, 52
    %v3517 = vpop.permute.xlu0 %3516
    %3518 = vrot.lane.b32.xlu0 %v3479, 52
    %v3519 = vpop.permute.xlu0 %3518
    %3520 = vrot.lane.b32.xlu0 %v3480, 52
    %v3521 = vpop.permute.xlu0 %3520
    %3522 = vrot.lane.b32.xlu0 %v3481, 52
    %v3523 = vpop.permute.xlu0 %3522
    %3524 = vrot.lane.b32.xlu0 %v3482, 52
    %v3525 = vpop.permute.xlu0 %3524
    %3526 = vrot.lane.b32.xlu0 %v3483, 52
    %v3527 = vpop.permute.xlu0 %3526
    %3528 = vrot.lane.b32.xlu0 %v3484, 52
    %v3529 = vpop.permute.xlu0 %3528
    %3530 = vrot.lane.b32.xlu0 %v3485, 52
    %v3531 = vpop.permute.xlu0 %3530
    %3532 = vrot.lane.b32.xlu0 %v3486, 52
    %v3533 = vpop.permute.xlu0 %3532
    %3534 = vrot.lane.b32.xlu0 %v3487, 52
    %v3535 = vpop.permute.xlu0 %3534
    %vm3552 = vcmask 523680
    %3553 = vst.msk [vmem:[#allocation4 + $0x8] sm:$0xff] %vm3552, %v3505
    %3554 = vst.msk [vmem:[#allocation4 + $0x20] sm:$0xff] %vm3552, %v3507
    %3555 = vst.msk [vmem:[#allocation4 + $0x38] sm:$0xff] %vm3552, %v3509
    %3556 = vst.msk [vmem:[#allocation4 + $0x50] sm:$0xff] %vm3552, %v3511
    %3557 = vst.msk [vmem:[#allocation4 + $0x68] sm:$0xff] %vm3552, %v3513
    %3558 = vst.msk [vmem:[#allocation4 + $0x80] sm:$0xff] %vm3552, %v3515
    %3559 = vst.msk [vmem:[#allocation4 + $0x98] sm:$0xff] %vm3552, %v3517
    %3560 = vst.msk [vmem:[#allocation4 + $0xb0] sm:$0xff] %vm3552, %v3519
    %3561 = vst.msk [vmem:[#allocation4 + $0xc8] sm:$0xff] %vm3552, %v3521
    %3562 = vst.msk [vmem:[#allocation4 + $0xe0] sm:$0xff] %vm3552, %v3523
    %3563 = vst.msk [vmem:[#allocation4 + $0xf8] sm:$0xff] %vm3552, %v3525
    %3564 = vst.msk [vmem:[#allocation4 + $0x110] sm:$0xff] %vm3552, %v3527
    %3565 = vst.msk [vmem:[#allocation4 + $0x128] sm:$0xff] %vm3552, %v3529
    %3566 = vst.msk [vmem:[#allocation4 + $0x140] sm:$0xff] %vm3552, %v3531
    %3567 = vst.msk [vmem:[#allocation4 + $0x158] sm:$0xff] %vm3552, %v3533
    %3568 = vst.msk [vmem:[#allocation4 + $0x170] sm:$0xff] %vm3552, %v3535
    %v3569 = vld [vmem:[%s2045] sm:$0xff]
    %v3570 = vld [vmem:[%s2045 + $0x10] sm:$0xff]
    %v3571 = vld [vmem:[%s2045 + $0x20] sm:$0xff]
    %v3572 = vld [vmem:[%s2045 + $0x30] sm:$0xff]
    %v3573 = vld [vmem:[%s2045 + $0x40] sm:$0xff]
    %v3574 = vld [vmem:[%s2045 + $0x50] sm:$0xff]
    %v3575 = vld [vmem:[%s2045 + $0x60] sm:$0xff]
    %v3576 = vld [vmem:[%s2045 + $0x70] sm:$0xff]
    %v3577 = vld [vmem:[%s2045 + $0xa0] sm:$0xff]
    %v3578 = vld [vmem:[%s2045 + $0xb0] sm:$0xff]
    %v3579 = vld [vmem:[%s2045 + $0xc0] sm:$0xff]
    %v3580 = vld [vmem:[%s2045 + $0xd0] sm:$0xff]
    %v3581 = vld [vmem:[%s2045 + $0xe0] sm:$0xff]
    %v3582 = vld [vmem:[%s2045 + $0xf0] sm:$0xff]
    %v3583 = vld [vmem:[%s2045 + $0x100] sm:$0xff]
    %v3584 = vld [vmem:[%s2045 + $0x110] sm:$0xff]
    %3601 = vrot.lane.b32.xlu0 %v3569, 64
    %v3602 = vpop.permute.xlu0 %3601
    %3603 = vrot.lane.b32.xlu0 %v3570, 64
    %v3604 = vpop.permute.xlu0 %3603
    %3605 = vrot.lane.b32.xlu0 %v3571, 64
    %v3606 = vpop.permute.xlu0 %3605
    %3607 = vrot.lane.b32.xlu0 %v3572, 64
    %v3608 = vpop.permute.xlu0 %3607
    %3609 = vrot.lane.b32.xlu0 %v3573, 64
    %v3610 = vpop.permute.xlu0 %3609
    %3611 = vrot.lane.b32.xlu0 %v3574, 64
    %v3612 = vpop.permute.xlu0 %3611
    %3613 = vrot.lane.b32.xlu0 %v3575, 64
    %v3614 = vpop.permute.xlu0 %3613
    %3615 = vrot.lane.b32.xlu0 %v3576, 64
    %v3616 = vpop.permute.xlu0 %3615
    %3617 = vrot.lane.b32.xlu0 %v3577, 64
    %v3618 = vpop.permute.xlu0 %3617
    %3619 = vrot.lane.b32.xlu0 %v3578, 64
    %v3620 = vpop.permute.xlu0 %3619
    %3621 = vrot.lane.b32.xlu0 %v3579, 64
    %v3622 = vpop.permute.xlu0 %3621
    %3623 = vrot.lane.b32.xlu0 %v3580, 64
    %v3624 = vpop.permute.xlu0 %3623
    %3625 = vrot.lane.b32.xlu0 %v3581, 64
    %v3626 = vpop.permute.xlu0 %3625
    %3627 = vrot.lane.b32.xlu0 %v3582, 64
    %v3628 = vpop.permute.xlu0 %3627
    %3629 = vrot.lane.b32.xlu0 %v3583, 64
    %v3630 = vpop.permute.xlu0 %3629
    %3631 = vrot.lane.b32.xlu0 %v3584, 64
    %v3632 = vpop.permute.xlu0 %3631
    %vm3649 = vcmask 622080
    %3650 = vst.msk [vmem:[#allocation4 + $0x8] sm:$0xff] %vm3649, %v3602
    %3651 = vst.msk [vmem:[#allocation4 + $0x20] sm:$0xff] %vm3649, %v3604
    %3652 = vst.msk [vmem:[#allocation4 + $0x38] sm:$0xff] %vm3649, %v3606
    %3653 = vst.msk [vmem:[#allocation4 + $0x50] sm:$0xff] %vm3649, %v3608
    %3654 = vst.msk [vmem:[#allocation4 + $0x68] sm:$0xff] %vm3649, %v3610
    %3655 = vst.msk [vmem:[#allocation4 + $0x80] sm:$0xff] %vm3649, %v3612
    %3656 = vst.msk [vmem:[#allocation4 + $0x98] sm:$0xff] %vm3649, %v3614
    %3657 = vst.msk [vmem:[#allocation4 + $0xb0] sm:$0xff] %vm3649, %v3616
    %3658 = vst.msk [vmem:[#allocation4 + $0xc8] sm:$0xff] %vm3649, %v3618
    %3659 = vst.msk [vmem:[#allocation4 + $0xe0] sm:$0xff] %vm3649, %v3620
    %3660 = vst.msk [vmem:[#allocation4 + $0xf8] sm:$0xff] %vm3649, %v3622
    %3661 = vst.msk [vmem:[#allocation4 + $0x110] sm:$0xff] %vm3649, %v3624
    %3662 = vst.msk [vmem:[#allocation4 + $0x128] sm:$0xff] %vm3649, %v3626
    %3663 = vst.msk [vmem:[#allocation4 + $0x140] sm:$0xff] %vm3649, %v3628
    %3664 = vst.msk [vmem:[#allocation4 + $0x158] sm:$0xff] %vm3649, %v3630
    %3665 = vst.msk [vmem:[#allocation4 + $0x170] sm:$0xff] %vm3649, %v3632
    %v3666 = vld [vmem:[%s2028 + $0x1] sm:$0xff]
    %v3667 = vld [vmem:[%s2028 + $0x11] sm:$0xff]
    %v3668 = vld [vmem:[%s2028 + $0x21] sm:$0xff]
    %v3669 = vld [vmem:[%s2028 + $0x31] sm:$0xff]
    %v3670 = vld [vmem:[%s2028 + $0x41] sm:$0xff]
    %v3671 = vld [vmem:[%s2028 + $0x51] sm:$0xff]
    %v3672 = vld [vmem:[%s2028 + $0x61] sm:$0xff]
    %v3673 = vld [vmem:[%s2028 + $0x71] sm:$0xff]
    %v3674 = vld [vmem:[%s2028 + $0xa1] sm:$0xff]
    %v3675 = vld [vmem:[%s2028 + $0xb1] sm:$0xff]
    %v3676 = vld [vmem:[%s2028 + $0xc1] sm:$0xff]
    %v3677 = vld [vmem:[%s2028 + $0xd1] sm:$0xff]
    %v3678 = vld [vmem:[%s2028 + $0xe1] sm:$0xff]
    %v3679 = vld [vmem:[%s2028 + $0xf1] sm:$0xff]
    %v3680 = vld [vmem:[%s2028 + $0x101] sm:$0xff]
    %v3681 = vld [vmem:[%s2028 + $0x111] sm:$0xff]
    %3698 = vrot.lane.b32.xlu0 %v3666, 76
    %v3699 = vpop.permute.xlu0 %3698
    %3700 = vrot.lane.b32.xlu0 %v3667, 76
    %v3701 = vpop.permute.xlu0 %3700
    %3702 = vrot.lane.b32.xlu0 %v3668, 76
    %v3703 = vpop.permute.xlu0 %3702
    %3704 = vrot.lane.b32.xlu0 %v3669, 76
    %v3705 = vpop.permute.xlu0 %3704
    %3706 = vrot.lane.b32.xlu0 %v3670, 76
    %v3707 = vpop.permute.xlu0 %3706
    %3708 = vrot.lane.b32.xlu0 %v3671, 76
    %v3709 = vpop.permute.xlu0 %3708
    %3710 = vrot.lane.b32.xlu0 %v3672, 76
    %v3711 = vpop.permute.xlu0 %3710
    %3712 = vrot.lane.b32.xlu0 %v3673, 76
    %v3713 = vpop.permute.xlu0 %3712
    %3714 = vrot.lane.b32.xlu0 %v3674, 76
    %v3715 = vpop.permute.xlu0 %3714
    %3716 = vrot.lane.b32.xlu0 %v3675, 76
    %v3717 = vpop.permute.xlu0 %3716
    %3718 = vrot.lane.b32.xlu0 %v3676, 76
    %v3719 = vpop.permute.xlu0 %3718
    %3720 = vrot.lane.b32.xlu0 %v3677, 76
    %v3721 = vpop.permute.xlu0 %3720
    %3722 = vrot.lane.b32.xlu0 %v3678, 76
    %v3723 = vpop.permute.xlu0 %3722
    %3724 = vrot.lane.b32.xlu0 %v3679, 76
    %v3725 = vpop.permute.xlu0 %3724
    %3726 = vrot.lane.b32.xlu0 %v3680, 76
    %v3727 = vpop.permute.xlu0 %3726
    %3728 = vrot.lane.b32.xlu0 %v3681, 76
    %v3729 = vpop.permute.xlu0 %3728
    %vm3746 = vcmask 720480
    %3747 = vst.msk [vmem:[#allocation4 + $0x8] sm:$0xff] %vm3746, %v3699
    %3748 = vst.msk [vmem:[#allocation4 + $0x20] sm:$0xff] %vm3746, %v3701
    %3749 = vst.msk [vmem:[#allocation4 + $0x38] sm:$0xff] %vm3746, %v3703
    %3750 = vst.msk [vmem:[#allocation4 + $0x50] sm:$0xff] %vm3746, %v3705
    %3751 = vst.msk [vmem:[#allocation4 + $0x68] sm:$0xff] %vm3746, %v3707
    %3752 = vst.msk [vmem:[#allocation4 + $0x80] sm:$0xff] %vm3746, %v3709
    %3753 = vst.msk [vmem:[#allocation4 + $0x98] sm:$0xff] %vm3746, %v3711
    %3754 = vst.msk [vmem:[#allocation4 + $0xb0] sm:$0xff] %vm3746, %v3713
    %3755 = vst.msk [vmem:[#allocation4 + $0xc8] sm:$0xff] %vm3746, %v3715
    %3756 = vst.msk [vmem:[#allocation4 + $0xe0] sm:$0xff] %vm3746, %v3717
    %3757 = vst.msk [vmem:[#allocation4 + $0xf8] sm:$0xff] %vm3746, %v3719
    %3758 = vst.msk [vmem:[#allocation4 + $0x110] sm:$0xff] %vm3746, %v3721
    %3759 = vst.msk [vmem:[#allocation4 + $0x128] sm:$0xff] %vm3746, %v3723
    %3760 = vst.msk [vmem:[#allocation4 + $0x140] sm:$0xff] %vm3746, %v3725
    %3761 = vst.msk [vmem:[#allocation4 + $0x158] sm:$0xff] %vm3746, %v3727
    %3762 = vst.msk [vmem:[#allocation4 + $0x170] sm:$0xff] %vm3746, %v3729
    %v3763 = vld [vmem:[%s2045 + $0x1] sm:$0xff]
    %v3764 = vld [vmem:[%s2045 + $0x11] sm:$0xff]
    %v3765 = vld [vmem:[%s2045 + $0x21] sm:$0xff]
    %v3766 = vld [vmem:[%s2045 + $0x31] sm:$0xff]
    %v3767 = vld [vmem:[%s2045 + $0x41] sm:$0xff]
    %v3768 = vld [vmem:[%s2045 + $0x51] sm:$0xff]
    %v3769 = vld [vmem:[%s2045 + $0x61] sm:$0xff]
    %v3770 = vld [vmem:[%s2045 + $0x71] sm:$0xff]
    %v3771 = vld [vmem:[%s2045 + $0xa1] sm:$0xff]
    %v3772 = vld [vmem:[%s2045 + $0xb1] sm:$0xff]
    %v3773 = vld [vmem:[%s2045 + $0xc1] sm:$0xff]
    %v3774 = vld [vmem:[%s2045 + $0xd1] sm:$0xff]
    %v3775 = vld [vmem:[%s2045 + $0xe1] sm:$0xff]
    %v3776 = vld [vmem:[%s2045 + $0xf1] sm:$0xff]
    %v3777 = vld [vmem:[%s2045 + $0x101] sm:$0xff]
    %v3778 = vld [vmem:[%s2045 + $0x111] sm:$0xff]
    %3795 = vrot.lane.b32.xlu0 %v3763, 88
    %v3796 = vpop.permute.xlu0 %3795
    %3797 = vrot.lane.b32.xlu0 %v3764, 88
    %v3798 = vpop.permute.xlu0 %3797
    %3799 = vrot.lane.b32.xlu0 %v3765, 88
    %v3800 = vpop.permute.xlu0 %3799
    %3801 = vrot.lane.b32.xlu0 %v3766, 88
    %v3802 = vpop.permute.xlu0 %3801
    %3803 = vrot.lane.b32.xlu0 %v3767, 88
    %v3804 = vpop.permute.xlu0 %3803
    %3805 = vrot.lane.b32.xlu0 %v3768, 88
    %v3806 = vpop.permute.xlu0 %3805
    %3807 = vrot.lane.b32.xlu0 %v3769, 88
    %v3808 = vpop.permute.xlu0 %3807
    %3809 = vrot.lane.b32.xlu0 %v3770, 88
    %v3810 = vpop.permute.xlu0 %3809
    %3811 = vrot.lane.b32.xlu0 %v3771, 88
    %v3812 = vpop.permute.xlu0 %3811
    %3813 = vrot.lane.b32.xlu0 %v3772, 88
    %v3814 = vpop.permute.xlu0 %3813
    %3815 = vrot.lane.b32.xlu0 %v3773, 88
    %v3816 = vpop.permute.xlu0 %3815
    %3817 = vrot.lane.b32.xlu0 %v3774, 88
    %v3818 = vpop.permute.xlu0 %3817
    %3819 = vrot.lane.b32.xlu0 %v3775, 88
    %v3820 = vpop.permute.xlu0 %3819
    %3821 = vrot.lane.b32.xlu0 %v3776, 88
    %v3822 = vpop.permute.xlu0 %3821
    %3823 = vrot.lane.b32.xlu0 %v3777, 88
    %v3824 = vpop.permute.xlu0 %3823
    %3825 = vrot.lane.b32.xlu0 %v3778, 88
    %v3826 = vpop.permute.xlu0 %3825
    %vm3843 = vcmask 818880
    %3844 = vst.msk [vmem:[#allocation4 + $0x8] sm:$0xff] %vm3843, %v3796
    %3845 = vst.msk [vmem:[#allocation4 + $0x20] sm:$0xff] %vm3843, %v3798
    %3846 = vst.msk [vmem:[#allocation4 + $0x38] sm:$0xff] %vm3843, %v3800
    %3847 = vst.msk [vmem:[#allocation4 + $0x50] sm:$0xff] %vm3843, %v3802
    %3848 = vst.msk [vmem:[#allocation4 + $0x68] sm:$0xff] %vm3843, %v3804
    %3849 = vst.msk [vmem:[#allocation4 + $0x80] sm:$0xff] %vm3843, %v3806
    %3850 = vst.msk [vmem:[#allocation4 + $0x98] sm:$0xff] %vm3843, %v3808
    %3851 = vst.msk [vmem:[#allocation4 + $0xb0] sm:$0xff] %vm3843, %v3810
    %3852 = vst.msk [vmem:[#allocation4 + $0xc8] sm:$0xff] %vm3843, %v3812
    %3853 = vst.msk [vmem:[#allocation4 + $0xe0] sm:$0xff] %vm3843, %v3814
    %3854 = vst.msk [vmem:[#allocation4 + $0xf8] sm:$0xff] %vm3843, %v3816
    %3855 = vst.msk [vmem:[#allocation4 + $0x110] sm:$0xff] %vm3843, %v3818
    %3856 = vst.msk [vmem:[#allocation4 + $0x128] sm:$0xff] %vm3843, %v3820
    %3857 = vst.msk [vmem:[#allocation4 + $0x140] sm:$0xff] %vm3843, %v3822
    %3858 = vst.msk [vmem:[#allocation4 + $0x158] sm:$0xff] %vm3843, %v3824
    %3859 = vst.msk [vmem:[#allocation4 + $0x170] sm:$0xff] %vm3843, %v3826
    %v3860 = vld [vmem:[%s2028 + $0x2] sm:$0xff]
    %v3861 = vld [vmem:[%s2028 + $0x12] sm:$0xff]
    %v3862 = vld [vmem:[%s2028 + $0x22] sm:$0xff]
    %v3863 = vld [vmem:[%s2028 + $0x32] sm:$0xff]
    %v3864 = vld [vmem:[%s2028 + $0x42] sm:$0xff]
    %v3865 = vld [vmem:[%s2028 + $0x52] sm:$0xff]
    %v3866 = vld [vmem:[%s2028 + $0x62] sm:$0xff]
    %v3867 = vld [vmem:[%s2028 + $0x72] sm:$0xff]
    %v3868 = vld [vmem:[%s2028 + $0xa2] sm:$0xff]
    %v3869 = vld [vmem:[%s2028 + $0xb2] sm:$0xff]
    %v3870 = vld [vmem:[%s2028 + $0xc2] sm:$0xff]
    %v3871 = vld [vmem:[%s2028 + $0xd2] sm:$0xff]
    %v3872 = vld [vmem:[%s2028 + $0xe2] sm:$0xff]
    %v3873 = vld [vmem:[%s2028 + $0xf2] sm:$0xff]
    %v3874 = vld [vmem:[%s2028 + $0x102] sm:$0xff]
    %v3875 = vld [vmem:[%s2028 + $0x112] sm:$0xff]
    %3892 = vrot.lane.b32.xlu0 %v3860, 100
    %v3893 = vpop.permute.xlu0 %3892
    %3894 = vrot.lane.b32.xlu0 %v3861, 100
    %v3895 = vpop.permute.xlu0 %3894
    %3896 = vrot.lane.b32.xlu0 %v3862, 100
    %v3897 = vpop.permute.xlu0 %3896
    %3898 = vrot.lane.b32.xlu0 %v3863, 100
    %v3899 = vpop.permute.xlu0 %3898
    %3900 = vrot.lane.b32.xlu0 %v3864, 100
    %v3901 = vpop.permute.xlu0 %3900
    %3902 = vrot.lane.b32.xlu0 %v3865, 100
    %v3903 = vpop.permute.xlu0 %3902
    %3904 = vrot.lane.b32.xlu0 %v3866, 100
    %v3905 = vpop.permute.xlu0 %3904
    %3906 = vrot.lane.b32.xlu0 %v3867, 100
    %v3907 = vpop.permute.xlu0 %3906
    %3908 = vrot.lane.b32.xlu0 %v3868, 100
    %v3909 = vpop.permute.xlu0 %3908
    %3910 = vrot.lane.b32.xlu0 %v3869, 100
    %v3911 = vpop.permute.xlu0 %3910
    %3912 = vrot.lane.b32.xlu0 %v3870, 100
    %v3913 = vpop.permute.xlu0 %3912
    %3914 = vrot.lane.b32.xlu0 %v3871, 100
    %v3915 = vpop.permute.xlu0 %3914
    %3916 = vrot.lane.b32.xlu0 %v3872, 100
    %v3917 = vpop.permute.xlu0 %3916
    %3918 = vrot.lane.b32.xlu0 %v3873, 100
    %v3919 = vpop.permute.xlu0 %3918
    %3920 = vrot.lane.b32.xlu0 %v3874, 100
    %v3921 = vpop.permute.xlu0 %3920
    %3922 = vrot.lane.b32.xlu0 %v3875, 100
    %v3923 = vpop.permute.xlu0 %3922
    %vm3940 = vcmask 917280
    %3941 = vst.msk [vmem:[#allocation4 + $0x8] sm:$0xff] %vm3940, %v3893
    %3942 = vst.msk [vmem:[#allocation4 + $0x20] sm:$0xff] %vm3940, %v3895
    %3943 = vst.msk [vmem:[#allocation4 + $0x38] sm:$0xff] %vm3940, %v3897
    %3944 = vst.msk [vmem:[#allocation4 + $0x50] sm:$0xff] %vm3940, %v3899
    %3945 = vst.msk [vmem:[#allocation4 + $0x68] sm:$0xff] %vm3940, %v3901
    %3946 = vst.msk [vmem:[#allocation4 + $0x80] sm:$0xff] %vm3940, %v3903
    %3947 = vst.msk [vmem:[#allocation4 + $0x98] sm:$0xff] %vm3940, %v3905
    %3948 = vst.msk [vmem:[#allocation4 + $0xb0] sm:$0xff] %vm3940, %v3907
    %3949 = vst.msk [vmem:[#allocation4 + $0xc8] sm:$0xff] %vm3940, %v3909
    %3950 = vst.msk [vmem:[#allocation4 + $0xe0] sm:$0xff] %vm3940, %v3911
    %3951 = vst.msk [vmem:[#allocation4 + $0xf8] sm:$0xff] %vm3940, %v3913
    %3952 = vst.msk [vmem:[#allocation4 + $0x110] sm:$0xff] %vm3940, %v3915
    %3953 = vst.msk [vmem:[#allocation4 + $0x128] sm:$0xff] %vm3940, %v3917
    %3954 = vst.msk [vmem:[#allocation4 + $0x140] sm:$0xff] %vm3940, %v3919
    %3955 = vst.msk [vmem:[#allocation4 + $0x158] sm:$0xff] %vm3940, %v3921
    %3956 = vst.msk [vmem:[#allocation4 + $0x170] sm:$0xff] %vm3940, %v3923
    %s3957 = scalar_lea.vmem [#allocation2], 32
    %v3958 = vld [vmem:[%s3957] sm:$0xff]
    %v3959 = vld [vmem:[%s3957 + $0x10] sm:$0xff]
    %v3960 = vld [vmem:[%s3957 + $0x20] sm:$0xff]
    %v3961 = vld [vmem:[%s3957 + $0x30] sm:$0xff]
    %v3962 = vld [vmem:[%s3957 + $0x40] sm:$0xff]
    %v3963 = vld [vmem:[%s3957 + $0x50] sm:$0xff]
    %v3964 = vld [vmem:[%s3957 + $0x60] sm:$0xff]
    %v3965 = vld [vmem:[%s3957 + $0x70] sm:$0xff]
    %v3966 = vld [vmem:[%s3957 + $0xa0] sm:$0xff]
    %v3967 = vld [vmem:[%s3957 + $0xb0] sm:$0xff]
    %v3968 = vld [vmem:[%s3957 + $0xc0] sm:$0xff]
    %v3969 = vld [vmem:[%s3957 + $0xd0] sm:$0xff]
    %v3970 = vld [vmem:[%s3957 + $0xe0] sm:$0xff]
    %v3971 = vld [vmem:[%s3957 + $0xf0] sm:$0xff]
    %v3972 = vld [vmem:[%s3957 + $0x100] sm:$0xff]
    %v3973 = vld [vmem:[%s3957 + $0x110] sm:$0xff]
    %3990 = vrot.lane.b32.xlu0 %v3958, 112
    %v3991 = vpop.permute.xlu0 %3990
    %3992 = vrot.lane.b32.xlu0 %v3959, 112
    %v3993 = vpop.permute.xlu0 %3992
    %3994 = vrot.lane.b32.xlu0 %v3960, 112
    %v3995 = vpop.permute.xlu0 %3994
    %3996 = vrot.lane.b32.xlu0 %v3961, 112
    %v3997 = vpop.permute.xlu0 %3996
    %3998 = vrot.lane.b32.xlu0 %v3962, 112
    %v3999 = vpop.permute.xlu0 %3998
    %4000 = vrot.lane.b32.xlu0 %v3963, 112
    %v4001 = vpop.permute.xlu0 %4000
    %4002 = vrot.lane.b32.xlu0 %v3964, 112
    %v4003 = vpop.permute.xlu0 %4002
    %4004 = vrot.lane.b32.xlu0 %v3965, 112
    %v4005 = vpop.permute.xlu0 %4004
    %4006 = vrot.lane.b32.xlu0 %v3966, 112
    %v4007 = vpop.permute.xlu0 %4006
    %4008 = vrot.lane.b32.xlu0 %v3967, 112
    %v4009 = vpop.permute.xlu0 %4008
    %4010 = vrot.lane.b32.xlu0 %v3968, 112
    %v4011 = vpop.permute.xlu0 %4010
    %4012 = vrot.lane.b32.xlu0 %v3969, 112
    %v4013 = vpop.permute.xlu0 %4012
    %4014 = vrot.lane.b32.xlu0 %v3970, 112
    %v4015 = vpop.permute.xlu0 %4014
    %4016 = vrot.lane.b32.xlu0 %v3971, 112
    %v4017 = vpop.permute.xlu0 %4016
    %4018 = vrot.lane.b32.xlu0 %v3972, 112
    %v4019 = vpop.permute.xlu0 %4018
    %4020 = vrot.lane.b32.xlu0 %v3973, 112
    %v4021 = vpop.permute.xlu0 %4020
    %vm4038 = vcmask 1015680
    %4039 = vst.msk [vmem:[#allocation4 + $0x8] sm:$0xff] %vm4038, %v3991
    %4040 = vst.msk [vmem:[#allocation4 + $0x20] sm:$0xff] %vm4038, %v3993
    %4041 = vst.msk [vmem:[#allocation4 + $0x38] sm:$0xff] %vm4038, %v3995
    %4042 = vst.msk [vmem:[#allocation4 + $0x50] sm:$0xff] %vm4038, %v3997
    %4043 = vst.msk [vmem:[#allocation4 + $0x68] sm:$0xff] %vm4038, %v3999
    %4044 = vst.msk [vmem:[#allocation4 + $0x80] sm:$0xff] %vm4038, %v4001
    %4045 = vst.msk [vmem:[#allocation4 + $0x98] sm:$0xff] %vm4038, %v4003
    %4046 = vst.msk [vmem:[#allocation4 + $0xb0] sm:$0xff] %vm4038, %v4005
    %4047 = vst.msk [vmem:[#allocation4 + $0xc8] sm:$0xff] %vm4038, %v4007
    %4048 = vst.msk [vmem:[#allocation4 + $0xe0] sm:$0xff] %vm4038, %v4009
    %4049 = vst.msk [vmem:[#allocation4 + $0xf8] sm:$0xff] %vm4038, %v4011
    %4050 = vst.msk [vmem:[#allocation4 + $0x110] sm:$0xff] %vm4038, %v4013
    %4051 = vst.msk [vmem:[#allocation4 + $0x128] sm:$0xff] %vm4038, %v4015
    %4052 = vst.msk [vmem:[#allocation4 + $0x140] sm:$0xff] %vm4038, %v4017
    %4053 = vst.msk [vmem:[#allocation4 + $0x158] sm:$0xff] %vm4038, %v4019
    %4054 = vst.msk [vmem:[#allocation4 + $0x170] sm:$0xff] %vm4038, %v4021
    %s4055 = scalar_lea.vmem [#allocation2], 352
    %v4056 = vld [vmem:[%s4055] sm:$0xff]
    %v4057 = vld [vmem:[%s4055 + $0x10] sm:$0xff]
    %v4058 = vld [vmem:[%s4055 + $0x20] sm:$0xff]
    %v4059 = vld [vmem:[%s4055 + $0x30] sm:$0xff]
    %v4060 = vld [vmem:[%s4055 + $0x40] sm:$0xff]
    %v4061 = vld [vmem:[%s4055 + $0x50] sm:$0xff]
    %v4062 = vld [vmem:[%s4055 + $0x60] sm:$0xff]
    %v4063 = vld [vmem:[%s4055 + $0x70] sm:$0xff]
    %v4064 = vld [vmem:[%s4055 + $0xa0] sm:$0xff]
    %v4065 = vld [vmem:[%s4055 + $0xb0] sm:$0xff]
    %v4066 = vld [vmem:[%s4055 + $0xc0] sm:$0xff]
    %v4067 = vld [vmem:[%s4055 + $0xd0] sm:$0xff]
    %v4068 = vld [vmem:[%s4055 + $0xe0] sm:$0xff]
    %v4069 = vld [vmem:[%s4055 + $0xf0] sm:$0xff]
    %v4070 = vld [vmem:[%s4055 + $0x100] sm:$0xff]
    %v4071 = vld [vmem:[%s4055 + $0x110] sm:$0xff]
    %4088 = vrot.lane.b32.xlu0 %v4056, 124
    %v4089 = vpop.permute.xlu0 %4088
    %4090 = vrot.lane.b32.xlu0 %v4057, 124
    %v4091 = vpop.permute.xlu0 %4090
    %4092 = vrot.lane.b32.xlu0 %v4058, 124
    %v4093 = vpop.permute.xlu0 %4092
    %4094 = vrot.lane.b32.xlu0 %v4059, 124
    %v4095 = vpop.permute.xlu0 %4094
    %4096 = vrot.lane.b32.xlu0 %v4060, 124
    %v4097 = vpop.permute.xlu0 %4096
    %4098 = vrot.lane.b32.xlu0 %v4061, 124
    %v4099 = vpop.permute.xlu0 %4098
    %4100 = vrot.lane.b32.xlu0 %v4062, 124
    %v4101 = vpop.permute.xlu0 %4100
    %4102 = vrot.lane.b32.xlu0 %v4063, 124
    %v4103 = vpop.permute.xlu0 %4102
    %4104 = vrot.lane.b32.xlu0 %v4064, 124
    %v4105 = vpop.permute.xlu0 %4104
    %4106 = vrot.lane.b32.xlu0 %v4065, 124
    %v4107 = vpop.permute.xlu0 %4106
    %4108 = vrot.lane.b32.xlu0 %v4066, 124
    %v4109 = vpop.permute.xlu0 %4108
    %4110 = vrot.lane.b32.xlu0 %v4067, 124
    %v4111 = vpop.permute.xlu0 %4110
    %4112 = vrot.lane.b32.xlu0 %v4068, 124
    %v4113 = vpop.permute.xlu0 %4112
    %4114 = vrot.lane.b32.xlu0 %v4069, 124
    %v4115 = vpop.permute.xlu0 %4114
    %4116 = vrot.lane.b32.xlu0 %v4070, 124
    %v4117 = vpop.permute.xlu0 %4116
    %4118 = vrot.lane.b32.xlu0 %v4071, 124
    %v4119 = vpop.permute.xlu0 %4118
    %vm4136 = vcmask 1048544
    %4137 = vst.msk [vmem:[#allocation4 + $0x8] sm:$0xff] %vm4136, %v4089
    %vm4138 = vcmask 64512
    %4139 = vst.msk [vmem:[#allocation4 + $0x10] sm:$0xff] %vm4138, %v4089
    %4140 = vst.msk [vmem:[#allocation4 + $0x20] sm:$0xff] %vm4136, %v4091
    %4141 = vst.msk [vmem:[#allocation4 + $0x28] sm:$0xff] %vm4138, %v4091
    %4142 = vst.msk [vmem:[#allocation4 + $0x38] sm:$0xff] %vm4136, %v4093
    %4143 = vst.msk [vmem:[#allocation4 + $0x40] sm:$0xff] %vm4138, %v4093
    %4144 = vst.msk [vmem:[#allocation4 + $0x50] sm:$0xff] %vm4136, %v4095
    %4145 = vst.msk [vmem:[#allocation4 + $0x58] sm:$0xff] %vm4138, %v4095
    %4146 = vst.msk [vmem:[#allocation4 + $0x68] sm:$0xff] %vm4136, %v4097
    %4147 = vst.msk [vmem:[#allocation4 + $0x70] sm:$0xff] %vm4138, %v4097
    %4148 = vst.msk [vmem:[#allocation4 + $0x80] sm:$0xff] %vm4136, %v4099
    %4149 = vst.msk [vmem:[#allocation4 + $0x88] sm:$0xff] %vm4138, %v4099
    %4150 = vst.msk [vmem:[#allocation4 + $0x98] sm:$0xff] %vm4136, %v4101
    %4151 = vst.msk [vmem:[#allocation4 + $0xa0] sm:$0xff] %vm4138, %v4101
    %4152 = vst.msk [vmem:[#allocation4 + $0xb0] sm:$0xff] %vm4136, %v4103
    %4153 = vst.msk [vmem:[#allocation4 + $0xb8] sm:$0xff] %vm4138, %v4103
    %4154 = vst.msk [vmem:[#allocation4 + $0xc8] sm:$0xff] %vm4136, %v4105
    %4155 = vst.msk [vmem:[#allocation4 + $0xd0] sm:$0xff] %vm4138, %v4105
    %4156 = vst.msk [vmem:[#allocation4 + $0xe0] sm:$0xff] %vm4136, %v4107
    %4157 = vst.msk [vmem:[#allocation4 + $0xe8] sm:$0xff] %vm4138, %v4107
    %4158 = vst.msk [vmem:[#allocation4 + $0xf8] sm:$0xff] %vm4136, %v4109
    %4159 = vst.msk [vmem:[#allocation4 + $0x100] sm:$0xff] %vm4138, %v4109
    %4160 = vst.msk [vmem:[#allocation4 + $0x110] sm:$0xff] %vm4136, %v4111
    %4161 = vst.msk [vmem:[#allocation4 + $0x118] sm:$0xff] %vm4138, %v4111
    %4162 = vst.msk [vmem:[#allocation4 + $0x128] sm:$0xff] %vm4136, %v4113
    %4163 = vst.msk [vmem:[#allocation4 + $0x130] sm:$0xff] %vm4138, %v4113
    %4164 = vst.msk [vmem:[#allocation4 + $0x140] sm:$0xff] %vm4136, %v4115
    %4165 = vst.msk [vmem:[#allocation4 + $0x148] sm:$0xff] %vm4138, %v4115
    %4166 = vst.msk [vmem:[#allocation4 + $0x158] sm:$0xff] %vm4136, %v4117
    %4167 = vst.msk [vmem:[#allocation4 + $0x160] sm:$0xff] %vm4138, %v4117
    %4168 = vst.msk [vmem:[#allocation4 + $0x170] sm:$0xff] %vm4136, %v4119
    %4169 = vst.msk [vmem:[#allocation4 + $0x178] sm:$0xff] %vm4138, %v4119
    %v4170 = vld [vmem:[%s3957 + $0x1] sm:$0xff]
    %v4171 = vld [vmem:[%s3957 + $0x11] sm:$0xff]
    %v4172 = vld [vmem:[%s3957 + $0x21] sm:$0xff]
    %v4173 = vld [vmem:[%s3957 + $0x31] sm:$0xff]
    %v4174 = vld [vmem:[%s3957 + $0x41] sm:$0xff]
    %v4175 = vld [vmem:[%s3957 + $0x51] sm:$0xff]
    %v4176 = vld [vmem:[%s3957 + $0x61] sm:$0xff]
    %v4177 = vld [vmem:[%s3957 + $0x71] sm:$0xff]
    %v4178 = vld [vmem:[%s3957 + $0xa1] sm:$0xff]
    %v4179 = vld [vmem:[%s3957 + $0xb1] sm:$0xff]
    %v4180 = vld [vmem:[%s3957 + $0xc1] sm:$0xff]
    %v4181 = vld [vmem:[%s3957 + $0xd1] sm:$0xff]
    %v4182 = vld [vmem:[%s3957 + $0xe1] sm:$0xff]
    %v4183 = vld [vmem:[%s3957 + $0xf1] sm:$0xff]
    %v4184 = vld [vmem:[%s3957 + $0x101] sm:$0xff]
    %v4185 = vld [vmem:[%s3957 + $0x111] sm:$0xff]
    %4202 = vrot.lane.b32.xlu0 %v4170, 8
    %v4203 = vpop.permute.xlu0 %4202
    %4204 = vrot.lane.b32.xlu0 %v4171, 8
    %v4205 = vpop.permute.xlu0 %4204
    %4206 = vrot.lane.b32.xlu0 %v4172, 8
    %v4207 = vpop.permute.xlu0 %4206
    %4208 = vrot.lane.b32.xlu0 %v4173, 8
    %v4209 = vpop.permute.xlu0 %4208
    %4210 = vrot.lane.b32.xlu0 %v4174, 8
    %v4211 = vpop.permute.xlu0 %4210
    %4212 = vrot.lane.b32.xlu0 %v4175, 8
    %v4213 = vpop.permute.xlu0 %4212
    %4214 = vrot.lane.b32.xlu0 %v4176, 8
    %v4215 = vpop.permute.xlu0 %4214
    %4216 = vrot.lane.b32.xlu0 %v4177, 8
    %v4217 = vpop.permute.xlu0 %4216
    %4218 = vrot.lane.b32.xlu0 %v4178, 8
    %v4219 = vpop.permute.xlu0 %4218
    %4220 = vrot.lane.b32.xlu0 %v4179, 8
    %v4221 = vpop.permute.xlu0 %4220
    %4222 = vrot.lane.b32.xlu0 %v4180, 8
    %v4223 = vpop.permute.xlu0 %4222
    %4224 = vrot.lane.b32.xlu0 %v4181, 8
    %v4225 = vpop.permute.xlu0 %4224
    %4226 = vrot.lane.b32.xlu0 %v4182, 8
    %v4227 = vpop.permute.xlu0 %4226
    %4228 = vrot.lane.b32.xlu0 %v4183, 8
    %v4229 = vpop.permute.xlu0 %4228
    %4230 = vrot.lane.b32.xlu0 %v4184, 8
    %v4231 = vpop.permute.xlu0 %4230
    %4232 = vrot.lane.b32.xlu0 %v4185, 8
    %v4233 = vpop.permute.xlu0 %4232
    %vm4250 = vcmask 162880
    %4251 = vst.msk [vmem:[#allocation4 + $0x10] sm:$0xff] %vm4250, %v4203
    %4252 = vst.msk [vmem:[#allocation4 + $0x28] sm:$0xff] %vm4250, %v4205
    %4253 = vst.msk [vmem:[#allocation4 + $0x40] sm:$0xff] %vm4250, %v4207
    %4254 = vst.msk [vmem:[#allocation4 + $0x58] sm:$0xff] %vm4250, %v4209
    %4255 = vst.msk [vmem:[#allocation4 + $0x70] sm:$0xff] %vm4250, %v4211
    %4256 = vst.msk [vmem:[#allocation4 + $0x88] sm:$0xff] %vm4250, %v4213
    %4257 = vst.msk [vmem:[#allocation4 + $0xa0] sm:$0xff] %vm4250, %v4215
    %4258 = vst.msk [vmem:[#allocation4 + $0xb8] sm:$0xff] %vm4250, %v4217
    %4259 = vst.msk [vmem:[#allocation4 + $0xd0] sm:$0xff] %vm4250, %v4219
    %4260 = vst.msk [vmem:[#allocation4 + $0xe8] sm:$0xff] %vm4250, %v4221
    %4261 = vst.msk [vmem:[#allocation4 + $0x100] sm:$0xff] %vm4250, %v4223
    %4262 = vst.msk [vmem:[#allocation4 + $0x118] sm:$0xff] %vm4250, %v4225
    %4263 = vst.msk [vmem:[#allocation4 + $0x130] sm:$0xff] %vm4250, %v4227
    %4264 = vst.msk [vmem:[#allocation4 + $0x148] sm:$0xff] %vm4250, %v4229
    %4265 = vst.msk [vmem:[#allocation4 + $0x160] sm:$0xff] %vm4250, %v4231
    %4266 = vst.msk [vmem:[#allocation4 + $0x178] sm:$0xff] %vm4250, %v4233
    %v4267 = vld [vmem:[%s4055 + $0x1] sm:$0xff]
    %v4268 = vld [vmem:[%s4055 + $0x11] sm:$0xff]
    %v4269 = vld [vmem:[%s4055 + $0x21] sm:$0xff]
    %v4270 = vld [vmem:[%s4055 + $0x31] sm:$0xff]
    %v4271 = vld [vmem:[%s4055 + $0x41] sm:$0xff]
    %v4272 = vld [vmem:[%s4055 + $0x51] sm:$0xff]
    %v4273 = vld [vmem:[%s4055 + $0x61] sm:$0xff]
    %v4274 = vld [vmem:[%s4055 + $0x71] sm:$0xff]
    %v4275 = vld [vmem:[%s4055 + $0xa1] sm:$0xff]
    %v4276 = vld [vmem:[%s4055 + $0xb1] sm:$0xff]
    %v4277 = vld [vmem:[%s4055 + $0xc1] sm:$0xff]
    %v4278 = vld [vmem:[%s4055 + $0xd1] sm:$0xff]
    %v4279 = vld [vmem:[%s4055 + $0xe1] sm:$0xff]
    %v4280 = vld [vmem:[%s4055 + $0xf1] sm:$0xff]
    %v4281 = vld [vmem:[%s4055 + $0x101] sm:$0xff]
    %v4282 = vld [vmem:[%s4055 + $0x111] sm:$0xff]
    %4299 = vrot.lane.b32.xlu0 %v4267, 20
    %v4300 = vpop.permute.xlu0 %4299
    %4301 = vrot.lane.b32.xlu0 %v4268, 20
    %v4302 = vpop.permute.xlu0 %4301
    %4303 = vrot.lane.b32.xlu0 %v4269, 20
    %v4304 = vpop.permute.xlu0 %4303
    %4305 = vrot.lane.b32.xlu0 %v4270, 20
    %v4306 = vpop.permute.xlu0 %4305
    %4307 = vrot.lane.b32.xlu0 %v4271, 20
    %v4308 = vpop.permute.xlu0 %4307
    %4309 = vrot.lane.b32.xlu0 %v4272, 20
    %v4310 = vpop.permute.xlu0 %4309
    %4311 = vrot.lane.b32.xlu0 %v4273, 20
    %v4312 = vpop.permute.xlu0 %4311
    %4313 = vrot.lane.b32.xlu0 %v4274, 20
    %v4314 = vpop.permute.xlu0 %4313
    %4315 = vrot.lane.b32.xlu0 %v4275, 20
    %v4316 = vpop.permute.xlu0 %4315
    %4317 = vrot.lane.b32.xlu0 %v4276, 20
    %v4318 = vpop.permute.xlu0 %4317
    %4319 = vrot.lane.b32.xlu0 %v4277, 20
    %v4320 = vpop.permute.xlu0 %4319
    %4321 = vrot.lane.b32.xlu0 %v4278, 20
    %v4322 = vpop.permute.xlu0 %4321
    %4323 = vrot.lane.b32.xlu0 %v4279, 20
    %v4324 = vpop.permute.xlu0 %4323
    %4325 = vrot.lane.b32.xlu0 %v4280, 20
    %v4326 = vpop.permute.xlu0 %4325
    %4327 = vrot.lane.b32.xlu0 %v4281, 20
    %v4328 = vpop.permute.xlu0 %4327
    %4329 = vrot.lane.b32.xlu0 %v4282, 20
    %v4330 = vpop.permute.xlu0 %4329
    %vm4347 = vcmask 261280
    %4348 = vst.msk [vmem:[#allocation4 + $0x10] sm:$0xff] %vm4347, %v4300
    %4349 = vst.msk [vmem:[#allocation4 + $0x28] sm:$0xff] %vm4347, %v4302
    %4350 = vst.msk [vmem:[#allocation4 + $0x40] sm:$0xff] %vm4347, %v4304
    %4351 = vst.msk [vmem:[#allocation4 + $0x58] sm:$0xff] %vm4347, %v4306
    %4352 = vst.msk [vmem:[#allocation4 + $0x70] sm:$0xff] %vm4347, %v4308
    %4353 = vst.msk [vmem:[#allocation4 + $0x88] sm:$0xff] %vm4347, %v4310
    %4354 = vst.msk [vmem:[#allocation4 + $0xa0] sm:$0xff] %vm4347, %v4312
    %4355 = vst.msk [vmem:[#allocation4 + $0xb8] sm:$0xff] %vm4347, %v4314
    %4356 = vst.msk [vmem:[#allocation4 + $0xd0] sm:$0xff] %vm4347, %v4316
    %4357 = vst.msk [vmem:[#allocation4 + $0xe8] sm:$0xff] %vm4347, %v4318
    %4358 = vst.msk [vmem:[#allocation4 + $0x100] sm:$0xff] %vm4347, %v4320
    %4359 = vst.msk [vmem:[#allocation4 + $0x118] sm:$0xff] %vm4347, %v4322
    %4360 = vst.msk [vmem:[#allocation4 + $0x130] sm:$0xff] %vm4347, %v4324
    %4361 = vst.msk [vmem:[#allocation4 + $0x148] sm:$0xff] %vm4347, %v4326
    %4362 = vst.msk [vmem:[#allocation4 + $0x160] sm:$0xff] %vm4347, %v4328
    %4363 = vst.msk [vmem:[#allocation4 + $0x178] sm:$0xff] %vm4347, %v4330
    %v4364 = vld [vmem:[%s3957 + $0x2] sm:$0xff]
    %v4365 = vld [vmem:[%s3957 + $0x12] sm:$0xff]
    %v4366 = vld [vmem:[%s3957 + $0x22] sm:$0xff]
    %v4367 = vld [vmem:[%s3957 + $0x32] sm:$0xff]
    %v4368 = vld [vmem:[%s3957 + $0x42] sm:$0xff]
    %v4369 = vld [vmem:[%s3957 + $0x52] sm:$0xff]
    %v4370 = vld [vmem:[%s3957 + $0x62] sm:$0xff]
    %v4371 = vld [vmem:[%s3957 + $0x72] sm:$0xff]
    %v4372 = vld [vmem:[%s3957 + $0xa2] sm:$0xff]
    %v4373 = vld [vmem:[%s3957 + $0xb2] sm:$0xff]
    %v4374 = vld [vmem:[%s3957 + $0xc2] sm:$0xff]
    %v4375 = vld [vmem:[%s3957 + $0xd2] sm:$0xff]
    %v4376 = vld [vmem:[%s3957 + $0xe2] sm:$0xff]
    %v4377 = vld [vmem:[%s3957 + $0xf2] sm:$0xff]
    %v4378 = vld [vmem:[%s3957 + $0x102] sm:$0xff]
    %v4379 = vld [vmem:[%s3957 + $0x112] sm:$0xff]
    %4396 = vrot.lane.b32.xlu0 %v4364, 32
    %v4397 = vpop.permute.xlu0 %4396
    %4398 = vrot.lane.b32.xlu0 %v4365, 32
    %v4399 = vpop.permute.xlu0 %4398
    %4400 = vrot.lane.b32.xlu0 %v4366, 32
    %v4401 = vpop.permute.xlu0 %4400
    %4402 = vrot.lane.b32.xlu0 %v4367, 32
    %v4403 = vpop.permute.xlu0 %4402
    %4404 = vrot.lane.b32.xlu0 %v4368, 32
    %v4405 = vpop.permute.xlu0 %4404
    %4406 = vrot.lane.b32.xlu0 %v4369, 32
    %v4407 = vpop.permute.xlu0 %4406
    %4408 = vrot.lane.b32.xlu0 %v4370, 32
    %v4409 = vpop.permute.xlu0 %4408
    %4410 = vrot.lane.b32.xlu0 %v4371, 32
    %v4411 = vpop.permute.xlu0 %4410
    %4412 = vrot.lane.b32.xlu0 %v4372, 32
    %v4413 = vpop.permute.xlu0 %4412
    %4414 = vrot.lane.b32.xlu0 %v4373, 32
    %v4415 = vpop.permute.xlu0 %4414
    %4416 = vrot.lane.b32.xlu0 %v4374, 32
    %v4417 = vpop.permute.xlu0 %4416
    %4418 = vrot.lane.b32.xlu0 %v4375, 32
    %v4419 = vpop.permute.xlu0 %4418
    %4420 = vrot.lane.b32.xlu0 %v4376, 32
    %v4421 = vpop.permute.xlu0 %4420
    %4422 = vrot.lane.b32.xlu0 %v4377, 32
    %v4423 = vpop.permute.xlu0 %4422
    %4424 = vrot.lane.b32.xlu0 %v4378, 32
    %v4425 = vpop.permute.xlu0 %4424
    %4426 = vrot.lane.b32.xlu0 %v4379, 32
    %v4427 = vpop.permute.xlu0 %4426
    %vm4444 = vcmask 359680
    %4445 = vst.msk [vmem:[#allocation4 + $0x10] sm:$0xff] %vm4444, %v4397
    %4446 = vst.msk [vmem:[#allocation4 + $0x28] sm:$0xff] %vm4444, %v4399
    %4447 = vst.msk [vmem:[#allocation4 + $0x40] sm:$0xff] %vm4444, %v4401
    %4448 = vst.msk [vmem:[#allocation4 + $0x58] sm:$0xff] %vm4444, %v4403
    %4449 = vst.msk [vmem:[#allocation4 + $0x70] sm:$0xff] %vm4444, %v4405
    %4450 = vst.msk [vmem:[#allocation4 + $0x88] sm:$0xff] %vm4444, %v4407
    %4451 = vst.msk [vmem:[#allocation4 + $0xa0] sm:$0xff] %vm4444, %v4409
    %4452 = vst.msk [vmem:[#allocation4 + $0xb8] sm:$0xff] %vm4444, %v4411
    %4453 = vst.msk [vmem:[#allocation4 + $0xd0] sm:$0xff] %vm4444, %v4413
    %4454 = vst.msk [vmem:[#allocation4 + $0xe8] sm:$0xff] %vm4444, %v4415
    %4455 = vst.msk [vmem:[#allocation4 + $0x100] sm:$0xff] %vm4444, %v4417
    %4456 = vst.msk [vmem:[#allocation4 + $0x118] sm:$0xff] %vm4444, %v4419
    %4457 = vst.msk [vmem:[#allocation4 + $0x130] sm:$0xff] %vm4444, %v4421
    %4458 = vst.msk [vmem:[#allocation4 + $0x148] sm:$0xff] %vm4444, %v4423
    %4459 = vst.msk [vmem:[#allocation4 + $0x160] sm:$0xff] %vm4444, %v4425
    %4460 = vst.msk [vmem:[#allocation4 + $0x178] sm:$0xff] %vm4444, %v4427
    %v4461 = vld [vmem:[#allocation4] sm:$0xff]
    %v4462 = vld [vmem:[#allocation4 + $0x8] sm:$0xff]
    %v4463 = vld [vmem:[#allocation4 + $0x10] sm:$0xff]
    %v4464 = vld [vmem:[#allocation4 + $0x18] sm:$0xff]
    %v4465 = vld [vmem:[#allocation4 + $0x20] sm:$0xff]
    %v4466 = vld [vmem:[#allocation4 + $0x28] sm:$0xff]
    %v4467 = vld [vmem:[#allocation4 + $0x30] sm:$0xff]
    %v4468 = vld [vmem:[#allocation4 + $0x38] sm:$0xff]
    %v4469 = vld [vmem:[#allocation4 + $0x40] sm:$0xff]
    %v4470 = vld [vmem:[#allocation4 + $0x48] sm:$0xff]
    %v4471 = vld [vmem:[#allocation4 + $0x50] sm:$0xff]
    %v4472 = vld [vmem:[#allocation4 + $0x58] sm:$0xff]
    %v4473 = vld [vmem:[#allocation4 + $0x60] sm:$0xff]
    %v4474 = vld [vmem:[#allocation4 + $0x68] sm:$0xff]
    %v4475 = vld [vmem:[#allocation4 + $0x70] sm:$0xff]
    %v4476 = vld [vmem:[#allocation4 + $0x78] sm:$0xff]
    %v4477 = vld [vmem:[#allocation4 + $0x80] sm:$0xff]
    %v4478 = vld [vmem:[#allocation4 + $0x88] sm:$0xff]
    %v4479 = vld [vmem:[#allocation4 + $0x90] sm:$0xff]
    %v4480 = vld [vmem:[#allocation4 + $0x98] sm:$0xff]
    %v4481 = vld [vmem:[#allocation4 + $0xa0] sm:$0xff]
    %v4482 = vld [vmem:[#allocation4 + $0xa8] sm:$0xff]
    %v4483 = vld [vmem:[#allocation4 + $0xb0] sm:$0xff]
    %v4484 = vld [vmem:[#allocation4 + $0xb8] sm:$0xff]
    %v4485 = vld [vmem:[#allocation4 + $0xc0] sm:$0xff]
    %v4486 = vld [vmem:[#allocation4 + $0xc8] sm:$0xff]
    %v4487 = vld [vmem:[#allocation4 + $0xd0] sm:$0xff]
    %v4488 = vld [vmem:[#allocation4 + $0xd8] sm:$0xff]
    %v4489 = vld [vmem:[#allocation4 + $0xe0] sm:$0xff]
    %v4490 = vld [vmem:[#allocation4 + $0xe8] sm:$0xff]
    %v4491 = vld [vmem:[#allocation4 + $0xf0] sm:$0xff]
    %v4492 = vld [vmem:[#allocation4 + $0xf8] sm:$0xff]
    %v4493 = vld [vmem:[#allocation4 + $0x100] sm:$0xff]
    %v4494 = vld [vmem:[#allocation4 + $0x108] sm:$0xff]
    %v4495 = vld [vmem:[#allocation4 + $0x110] sm:$0xff]
    %v4496 = vld [vmem:[#allocation4 + $0x118] sm:$0xff]
    %v4497 = vld [vmem:[#allocation4 + $0x120] sm:$0xff]
    %v4498 = vld [vmem:[#allocation4 + $0x128] sm:$0xff]
    %v4499 = vld [vmem:[#allocation4 + $0x130] sm:$0xff]
    %v4500 = vld [vmem:[#allocation4 + $0x138] sm:$0xff]
    %v4501 = vld [vmem:[#allocation4 + $0x140] sm:$0xff]
    %v4502 = vld [vmem:[#allocation4 + $0x148] sm:$0xff]
    %v4503 = vld [vmem:[#allocation4 + $0x150] sm:$0xff]
    %v4504 = vld [vmem:[#allocation4 + $0x158] sm:$0xff]
    %v4505 = vld [vmem:[#allocation4 + $0x160] sm:$0xff]
    %v4506 = vld [vmem:[#allocation4 + $0x168] sm:$0xff]
    %v4507 = vld [vmem:[#allocation4 + $0x170] sm:$0xff]
    %v4508 = vld [vmem:[#allocation4 + $0x178] sm:$0xff]
    %v4509 = vpack.c.bf16 %v4464, %v4461
    %v4510 = vpack.c.bf16 %v4465, %v4462
    %v4511 = vpack.c.bf16 %v4466, %v4463
    %v4512 = vpack.c.bf16 %v4470, %v4467
    %v4513 = vpack.c.bf16 %v4471, %v4468
    %v4514 = vpack.c.bf16 %v4472, %v4469
    %v4515 = vpack.c.bf16 %v4476, %v4473
    %v4516 = vpack.c.bf16 %v4477, %v4474
    %v4517 = vpack.c.bf16 %v4478, %v4475
    %v4518 = vpack.c.bf16 %v4482, %v4479
    %v4519 = vpack.c.bf16 %v4483, %v4480
    %v4520 = vpack.c.bf16 %v4484, %v4481
    %v4521 = vpack.c.bf16 %v4488, %v4485
    %v4522 = vpack.c.bf16 %v4489, %v4486
    %v4523 = vpack.c.bf16 %v4490, %v4487
    %v4524 = vpack.c.bf16 %v4494, %v4491
    %v4525 = vpack.c.bf16 %v4495, %v4492
    %v4526 = vpack.c.bf16 %v4496, %v4493
    %v4527 = vpack.c.bf16 %v4500, %v4497
    %v4528 = vpack.c.bf16 %v4501, %v4498
    %v4529 = vpack.c.bf16 %v4502, %v4499
    %v4530 = vpack.c.bf16 %v4506, %v4503
    %v4531 = vpack.c.bf16 %v4507, %v4504
    %v4532 = vpack.c.bf16 %v4508, %v4505
    %v4533 = vld [vmem:[%s3] sm:$0xf]
    %v4534 = vld [vmem:[%s3 + $0x4] sm:$0xf]
    %v4535 = vld [vmem:[%s3 + $0x8] sm:$0xf]
    %v4536 = vld [vmem:[%s3 + $0xc] sm:$0xf]
    %v4537 = vld [vmem:[%s3 + $0x10] sm:$0xf]
    %v4538 = vld [vmem:[%s3 + $0x14] sm:$0xf]
    %v4539 = vld [vmem:[%s3 + $0x18] sm:$0xf]
    %v4540 = vld [vmem:[%s3 + $0x1c] sm:$0xf]
    %v4541 = vld [vmem:[%s3 + $0x20] sm:$0xf]
    %v4542 = vld [vmem:[%s3 + $0x24] sm:$0xf]
    %v4543 = vld [vmem:[%s3 + $0x28] sm:$0xf]
    %v4544 = vld [vmem:[%s3 + $0x2c] sm:$0xf]
    %v4545 = vld [vmem:[%s3 + $0x30] sm:$0xf]
    %v4546 = vld [vmem:[%s3 + $0x34] sm:$0xf]
    %v4547 = vld [vmem:[%s3 + $0x38] sm:$0xf]
    %v4548 = vld [vmem:[%s3 + $0x3c] sm:$0xf]
    %v4549 = vld [vmem:[%s3 + $0x40] sm:$0xf]
    %v4550 = vld [vmem:[%s3 + $0x44] sm:$0xf]
    %v4551 = vld [vmem:[%s3 + $0x48] sm:$0xf]
    %v4552 = vld [vmem:[%s3 + $0x4c] sm:$0xf]
    %v4553 = vld [vmem:[%s3 + $0x50] sm:$0xf]
    %v4554 = vld [vmem:[%s3 + $0x54] sm:$0xf]
    %v4555 = vld [vmem:[%s3 + $0x58] sm:$0xf]
    %v4556 = vld [vmem:[%s3 + $0x5c] sm:$0xf]
    %v4557 = vld [vmem:[%s3 + $0x60] sm:$0xf]
    %v4558 = vld [vmem:[%s3 + $0x64] sm:$0xf]
    %v4559 = vld [vmem:[%s3 + $0x68] sm:$0xf]
    %v4560 = vld [vmem:[%s3 + $0x6c] sm:$0xf]
    %v4561 = vld [vmem:[%s3 + $0x70] sm:$0xf]
    %v4562 = vld [vmem:[%s3 + $0x74] sm:$0xf]
    %v4563 = vld [vmem:[%s3 + $0x78] sm:$0xf]
    %v4564 = vld [vmem:[%s3 + $0x7c] sm:$0xf]
    %v4565 = vld [vmem:[%s3 + $0x80] sm:$0xf]
    %v4566 = vld [vmem:[%s3 + $0x84] sm:$0xf]
    %v4567 = vld [vmem:[%s3 + $0x88] sm:$0xf]
    %v4568 = vld [vmem:[%s3 + $0x8c] sm:$0xf]
    %v4569 = vld [vmem:[%s3 + $0x90] sm:$0xf]
    %v4570 = vld [vmem:[%s3 + $0x94] sm:$0x3]
    %v4571 = vld [vmem:[%s4] sm:$0x1]
    %v4573 = vperm.slane %v4571, 0
    %v4613 = vunpack.c.l.b16 %v4533
    %v4614 = vunpack.c.l.b16 %v4534
    %v4615 = vunpack.c.l.b16 %v4535
    %v4616 = vunpack.c.l.b16 %v4536
    %v4617 = vunpack.c.l.b16 %v4537
    %v4618 = vunpack.c.l.b16 %v4538
    %v4619 = vunpack.c.l.b16 %v4539
    %v4620 = vunpack.c.l.b16 %v4540
    %v4621 = vunpack.c.l.b16 %v4541
    %v4622 = vunpack.c.l.b16 %v4542
    %v4623 = vunpack.c.l.b16 %v4543
    %v4624 = vunpack.c.l.b16 %v4544
    %v4625 = vunpack.c.l.b16 %v4545
    %v4626 = vunpack.c.l.b16 %v4546
    %v4627 = vunpack.c.l.b16 %v4547
    %v4628 = vunpack.c.l.b16 %v4548
    %v4629 = vunpack.c.l.b16 %v4549
    %v4630 = vunpack.c.l.b16 %v4550
    %v4631 = vunpack.c.l.b16 %v4551
    %v4632 = vunpack.c.l.b16 %v4552
    %v4633 = vunpack.c.l.b16 %v4553
    %v4634 = vunpack.c.l.b16 %v4554
    %v4635 = vunpack.c.l.b16 %v4555
    %v4636 = vunpack.c.l.b16 %v4556
    %v4637 = vunpack.c.l.b16 %v4557
    %v4638 = vunpack.c.l.b16 %v4558
    %v4639 = vunpack.c.l.b16 %v4559
    %v4640 = vunpack.c.l.b16 %v4560
    %v4641 = vunpack.c.l.b16 %v4561
    %v4642 = vunpack.c.l.b16 %v4562
    %v4643 = vunpack.c.l.b16 %v4563
    %v4644 = vunpack.c.l.b16 %v4564
    %v4645 = vunpack.c.l.b16 %v4565
    %v4646 = vunpack.c.l.b16 %v4566
    %v4647 = vunpack.c.l.b16 %v4567
    %v4648 = vunpack.c.l.b16 %v4568
    %v4649 = vunpack.c.l.b16 %v4569
    %v4650 = vunpack.c.l.b16 %v4570
    %v4651 = vpack.c.b16 %v4614, %v4613
    %v4652 = vpack.c.b16 %v4616, %v4615
    %v4653 = vpack.c.b16 %v4618, %v4617
    %v4654 = vpack.c.b16 %v4620, %v4619
    %v4655 = vpack.c.b16 %v4622, %v4621
    %v4656 = vpack.c.b16 %v4624, %v4623
    %v4657 = vpack.c.b16 %v4626, %v4625
    %v4658 = vpack.c.b16 %v4628, %v4627
    %v4659 = vpack.c.b16 %v4630, %v4629
    %v4660 = vpack.c.b16 %v4632, %v4631
    %v4661 = vpack.c.b16 %v4634, %v4633
    %v4662 = vpack.c.b16 %v4636, %v4635
    %v4663 = vpack.c.b16 %v4638, %v4637
    %v4664 = vpack.c.b16 %v4640, %v4639
    %v4665 = vpack.c.b16 %v4642, %v4641
    %v4666 = vpack.c.b16 %v4644, %v4643
    %v4667 = vpack.c.b16 %v4646, %v4645
    %v4668 = vpack.c.b16 %v4648, %v4647
    %v4669 = vpack.c.b16 %v4650, %v4649
    %vm4688 = vcmask 359424
    %v4690 = vsel %vm4688, %v4511, 0
    %v4693 = vsel %vm4688, %v4514, 0
    %v4696 = vsel %vm4688, %v4517, 0
    %v4699 = vsel %vm4688, %v4520, 0
    %v4702 = vsel %vm4688, %v4523, 0
    %v4705 = vsel %vm4688, %v4526, 0
    %v4708 = vsel %vm4688, %v4529, 0
    %v4711 = vsel %vm4688, %v4532, 0
    %v4714 = vsel %vm408, %v4669, 0
    %4716 = vmatpush.bf16.msra.mxu0 %v4658
    %4717 = vmatpush.bf16.msra.mxu0 %v4657
    %4718 = vmatpush.bf16.msra.mxu0 %v4656
    %4719 = vmatpush.bf16.msra.mxu0 %v4655
    %4720 = vmatpush.bf16.msra.mxu0 %v4654
    %4721 = vmatpush.bf16.msra.mxu0 %v4653
    %4722 = vmatpush.bf16.msra.mxu0 %v4652
    %4723 = vmatpush.bf16.msra.mxu0 %v4651
    %4724 = vmatmul.bf16.gmra.mxu0 %v4509
    %v4725 = vpop.f32.mrf.mxu0
    %v4726 = vadd.f32 %v4573, %v4725
    %v4727 = vpop.f32.mrf.mxu0
    %v4728 = vadd.f32 %v4573, %v4727
    %4729 = vmatmul.bf16.gmra.mxu0 %v4512
    %v4730 = vpop.f32.mrf.mxu0
    %v4731 = vadd.f32 %v4573, %v4730
    %v4732 = vpop.f32.mrf.mxu0
    %v4733 = vadd.f32 %v4573, %v4732
    %4734 = vmatmul.bf16.gmra.mxu0 %v4515
    %v4735 = vpop.f32.mrf.mxu0
    %v4736 = vadd.f32 %v4573, %v4735
    %v4737 = vpop.f32.mrf.mxu0
    %v4738 = vadd.f32 %v4573, %v4737
    %4739 = vmatmul.bf16.gmra.mxu0 %v4518
    %v4740 = vpop.f32.mrf.mxu0
    %v4741 = vadd.f32 %v4573, %v4740
    %v4742 = vpop.f32.mrf.mxu0
    %v4743 = vadd.f32 %v4573, %v4742
    %4744 = vmatmul.bf16.gmra.mxu0 %v4521
    %v4745 = vpop.f32.mrf.mxu0
    %v4746 = vadd.f32 %v4573, %v4745
    %v4747 = vpop.f32.mrf.mxu0
    %v4748 = vadd.f32 %v4573, %v4747
    %4749 = vmatmul.bf16.gmra.mxu0 %v4524
    %v4750 = vpop.f32.mrf.mxu0
    %v4751 = vadd.f32 %v4573, %v4750
    %v4752 = vpop.f32.mrf.mxu0
    %v4753 = vadd.f32 %v4573, %v4752
    %4754 = vmatmul.bf16.gmra.mxu0 %v4527
    %v4755 = vpop.f32.mrf.mxu0
    %v4756 = vadd.f32 %v4573, %v4755
    %v4757 = vpop.f32.mrf.mxu0
    %v4758 = vadd.f32 %v4573, %v4757
    %4759 = vmatmul.bf16.gmra.mxu0 %v4530
    %v4760 = vpop.f32.mrf.mxu0
    %v4761 = vadd.f32 %v4573, %v4760
    %v4762 = vpop.f32.mrf.mxu0
    %v4763 = vadd.f32 %v4573, %v4762
    %4764 = vdwg.mxu0
    %4765 = vmatpush.bf16.msra.mxu0 %v4666
    %4766 = vmatpush.bf16.msra.mxu0 %v4665
    %4767 = vmatpush.bf16.msra.mxu0 %v4664
    %4768 = vmatpush.bf16.msra.mxu0 %v4663
    %4769 = vmatpush.bf16.msra.mxu0 %v4662
    %4770 = vmatpush.bf16.msra.mxu0 %v4661
    %4771 = vmatpush.bf16.msra.mxu0 %v4660
    %4772 = vmatpush.bf16.msra.mxu0 %v4659
    %4773 = vmatmul.bf16.gmra.mxu0 %v4510
    %v4774 = vpop.f32.mrf.mxu0
    %v4775 = vadd.f32 %v4726, %v4774
    %v4776 = vpop.f32.mrf.mxu0
    %v4777 = vadd.f32 %v4728, %v4776
    %4778 = vmatmul.bf16.gmra.mxu0 %v4513
    %v4779 = vpop.f32.mrf.mxu0
    %v4780 = vadd.f32 %v4731, %v4779
    %v4781 = vpop.f32.mrf.mxu0
    %v4782 = vadd.f32 %v4733, %v4781
    %4783 = vmatmul.bf16.gmra.mxu0 %v4516
    %v4784 = vpop.f32.mrf.mxu0
    %v4785 = vadd.f32 %v4736, %v4784
    %v4786 = vpop.f32.mrf.mxu0
    %v4787 = vadd.f32 %v4738, %v4786
    %4788 = vmatmul.bf16.gmra.mxu0 %v4519
    %v4789 = vpop.f32.mrf.mxu0
    %v4790 = vadd.f32 %v4741, %v4789
    %v4791 = vpop.f32.mrf.mxu0
    %v4792 = vadd.f32 %v4743, %v4791
    %4793 = vmatmul.bf16.gmra.mxu0 %v4522
    %v4794 = vpop.f32.mrf.mxu0
    %v4795 = vadd.f32 %v4746, %v4794
    %v4796 = vpop.f32.mrf.mxu0
    %v4797 = vadd.f32 %v4748, %v4796
    %4798 = vmatmul.bf16.gmra.mxu0 %v4525
    %v4799 = vpop.f32.mrf.mxu0
    %v4800 = vadd.f32 %v4751, %v4799
    %v4801 = vpop.f32.mrf.mxu0
    %v4802 = vadd.f32 %v4753, %v4801
    %4803 = vmatmul.bf16.gmra.mxu0 %v4528
    %v4804 = vpop.f32.mrf.mxu0
    %v4805 = vadd.f32 %v4756, %v4804
    %v4806 = vpop.f32.mrf.mxu0
    %v4807 = vadd.f32 %v4758, %v4806
    %4808 = vmatmul.bf16.gmra.mxu0 %v4531
    %v4809 = vpop.f32.mrf.mxu0
    %v4810 = vadd.f32 %v4761, %v4809
    %v4811 = vpop.f32.mrf.mxu0
    %v4812 = vadd.f32 %v4763, %v4811
    %4813 = vdwg.mxu0
    %4814 = vmatpush.bf16.msra.mxu0 0
    %4815 = vmatpush.bf16.msra.mxu0 0
    %4816 = vmatpush.bf16.msra.mxu0 0
    %4817 = vmatpush.bf16.msra.mxu0 0
    %4818 = vmatpush.bf16.msra.mxu0 0
    %4819 = vmatpush.bf16.msra.mxu0 %v4714
    %4820 = vmatpush.bf16.msra.mxu0 %v4668
    %4821 = vmatpush.bf16.msra.mxu0 %v4667
    %4822 = vmatmul.bf16.gmra.mxu0 %v4690
    %v4823 = vpop.f32.mrf.mxu0
    %v4824 = vadd.f32 %v4775, %v4823
    %v4825 = vpop.f32.mrf.mxu0
    %v4826 = vadd.f32 %v4777, %v4825
    %4827 = vmatmul.bf16.gmra.mxu0 %v4693
    %v4828 = vpop.f32.mrf.mxu0
    %v4829 = vadd.f32 %v4780, %v4828
    %v4830 = vpop.f32.mrf.mxu0
    %v4831 = vadd.f32 %v4782, %v4830
    %4832 = vmatmul.bf16.gmra.mxu0 %v4696
    %v4833 = vpop.f32.mrf.mxu0
    %v4834 = vadd.f32 %v4785, %v4833
    %v4835 = vpop.f32.mrf.mxu0
    %v4836 = vadd.f32 %v4787, %v4835
    %4837 = vmatmul.bf16.gmra.mxu0 %v4699
    %v4838 = vpop.f32.mrf.mxu0
    %v4839 = vadd.f32 %v4790, %v4838
    %v4840 = vpop.f32.mrf.mxu0
    %v4841 = vadd.f32 %v4792, %v4840
    %4842 = vmatmul.bf16.gmra.mxu0 %v4702
    %v4843 = vpop.f32.mrf.mxu0
    %v4844 = vadd.f32 %v4795, %v4843
    %v4845 = vpop.f32.mrf.mxu0
    %v4846 = vadd.f32 %v4797, %v4845
    %4847 = vmatmul.bf16.gmra.mxu0 %v4705
    %v4848 = vpop.f32.mrf.mxu0
    %v4849 = vadd.f32 %v4800, %v4848
    %v4850 = vpop.f32.mrf.mxu0
    %v4851 = vadd.f32 %v4802, %v4850
    %4852 = vmatmul.bf16.gmra.mxu0 %v4708
    %v4853 = vpop.f32.mrf.mxu0
    %v4854 = vadd.f32 %v4805, %v4853
    %v4855 = vpop.f32.mrf.mxu0
    %v4856 = vadd.f32 %v4807, %v4855
    %4857 = vmatmul.bf16.gmra.mxu0 %v4711
    %v4858 = vpop.f32.mrf.mxu0
    %v4859 = vadd.f32 %v4810, %v4858
    %v4860 = vpop.f32.mrf.mxu0
    %v4861 = vadd.f32 %v4812, %v4860
    %4862 = vdwg.mxu0
    %v4863 = vsub.f32 0.0, %v4824
    %v4864 = vsub.f32 0.0, %v4826
    %v4865 = vsub.f32 0.0, %v4829
    %v4866 = vsub.f32 0.0, %v4831
    %v4867 = vsub.f32 0.0, %v4834
    %v4868 = vsub.f32 0.0, %v4836
    %v4869 = vsub.f32 0.0, %v4839
    %v4870 = vsub.f32 0.0, %v4841
    %v4871 = vsub.f32 0.0, %v4844
    %v4872 = vsub.f32 0.0, %v4846
    %v4873 = vsub.f32 0.0, %v4849
    %v4874 = vsub.f32 0.0, %v4851
    %v4875 = vsub.f32 0.0, %v4854
    %v4876 = vsub.f32 0.0, %v4856
    %v4877 = vsub.f32 0.0, %v4859
    %v4878 = vsub.f32 0.0, %v4861
    %v4879 = vmul.f32 %v4863, 1.442695
    %v4880 = vpow.pop %v4879
    %v4881 = vmul.f32 %v4864, 1.442695
    %v4882 = vpow.pop %v4881
    %v4883 = vmul.f32 %v4865, 1.442695
    %v4884 = vpow.pop %v4883
    %v4885 = vmul.f32 %v4866, 1.442695
    %v4886 = vpow.pop %v4885
    %v4887 = vmul.f32 %v4867, 1.442695
    %v4888 = vpow.pop %v4887
    %v4889 = vmul.f32 %v4868, 1.442695
    %v4890 = vpow.pop %v4889
    %v4891 = vmul.f32 %v4869, 1.442695
    %v4892 = vpow.pop %v4891
    %v4893 = vmul.f32 %v4870, 1.442695
    %v4894 = vpow.pop %v4893
    %v4895 = vmul.f32 %v4871, 1.442695
    %v4896 = vpow.pop %v4895
    %v4897 = vmul.f32 %v4872, 1.442695
    %v4898 = vpow.pop %v4897
    %v4899 = vmul.f32 %v4873, 1.442695
    %v4900 = vpow.pop %v4899
    %v4901 = vmul.f32 %v4874, 1.442695
    %v4902 = vpow.pop %v4901
    %v4903 = vmul.f32 %v4875, 1.442695
    %v4904 = vpow.pop %v4903
    %v4905 = vmul.f32 %v4876, 1.442695
    %v4906 = vpow.pop %v4905
    %v4907 = vmul.f32 %v4877, 1.442695
    %v4908 = vpow.pop %v4907
    %v4909 = vmul.f32 %v4878, 1.442695
    %v4910 = vpow.pop %v4909
    %v4911 = vadd.f32 %v4880, 1.0
    %v4912 = vadd.f32 %v4882, 1.0
    %v4913 = vadd.f32 %v4884, 1.0
    %v4914 = vadd.f32 %v4886, 1.0
    %v4915 = vadd.f32 %v4888, 1.0
    %v4916 = vadd.f32 %v4890, 1.0
    %v4917 = vadd.f32 %v4892, 1.0
    %v4918 = vadd.f32 %v4894, 1.0
    %v4919 = vadd.f32 %v4896, 1.0
    %v4920 = vadd.f32 %v4898, 1.0
    %v4921 = vadd.f32 %v4900, 1.0
    %v4922 = vadd.f32 %v4902, 1.0
    %v4923 = vadd.f32 %v4904, 1.0
    %v4924 = vadd.f32 %v4906, 1.0
    %v4925 = vadd.f32 %v4908, 1.0
    %v4926 = vadd.f32 %v4910, 1.0
    %v4927 = vrcp.pop %v4911
    %v4928 = vmul.f32 %v4911, %v4927
    %v4929 = vsub.f32 1.0, %v4928
    %v4930 = vmul.f32 %v4927, %v4929
    %v4931 = vadd.f32 %v4927, %v4930
    %vm4932 = vweird.f32 %v4911
    %vm4933 = vweird.f32 %v4927
    %vm4934 = vmor %vm4932, %vm4933
    %v4935 = vsel %vm4934, %v4927, %v4931
    %v4936 = vand.u32 2147483647, %v4911
    %vm4937 = vcmp.eq.f32.partialorder %v4936, 8.507059e+37
    %v4938 = vand.u32 %v4911, 2147483648
    %v4939 = vor.u32 1.1754944e-38, %v4938
    %v4940 = vsel %vm4937, %v4939, %v4935
    %v4941 = vmul.f32 1.0, %v4940
    %v4942 = vrcp.pop %v4912
    %v4943 = vmul.f32 %v4912, %v4942
    %v4944 = vsub.f32 1.0, %v4943
    %v4945 = vmul.f32 %v4942, %v4944
    %v4946 = vadd.f32 %v4942, %v4945
    %vm4947 = vweird.f32 %v4912
    %vm4948 = vweird.f32 %v4942
    %vm4949 = vmor %vm4947, %vm4948
    %v4950 = vsel %vm4949, %v4942, %v4946
    %v4951 = vand.u32 2147483647, %v4912
    %vm4952 = vcmp.eq.f32.partialorder %v4951, 8.507059e+37
    %v4953 = vand.u32 %v4912, 2147483648
    %v4954 = vor.u32 1.1754944e-38, %v4953
    %v4955 = vsel %vm4952, %v4954, %v4950
    %v4956 = vmul.f32 1.0, %v4955
    %v4957 = vrcp.pop %v4913
    %v4958 = vmul.f32 %v4913, %v4957
    %v4959 = vsub.f32 1.0, %v4958
    %v4960 = vmul.f32 %v4957, %v4959
    %v4961 = vadd.f32 %v4957, %v4960
    %vm4962 = vweird.f32 %v4913
    %vm4963 = vweird.f32 %v4957
    %vm4964 = vmor %vm4962, %vm4963
    %v4965 = vsel %vm4964, %v4957, %v4961
    %v4966 = vand.u32 2147483647, %v4913
    %vm4967 = vcmp.eq.f32.partialorder %v4966, 8.507059e+37
    %v4968 = vand.u32 %v4913, 2147483648
    %v4969 = vor.u32 1.1754944e-38, %v4968
    %v4970 = vsel %vm4967, %v4969, %v4965
    %v4971 = vmul.f32 1.0, %v4970
    %v4972 = vrcp.pop %v4914
    %v4973 = vmul.f32 %v4914, %v4972
    %v4974 = vsub.f32 1.0, %v4973
    %v4975 = vmul.f32 %v4972, %v4974
    %v4976 = vadd.f32 %v4972, %v4975
    %vm4977 = vweird.f32 %v4914
    %vm4978 = vweird.f32 %v4972
    %vm4979 = vmor %vm4977, %vm4978
    %v4980 = vsel %vm4979, %v4972, %v4976
    %v4981 = vand.u32 2147483647, %v4914
    %vm4982 = vcmp.eq.f32.partialorder %v4981, 8.507059e+37
    %v4983 = vand.u32 %v4914, 2147483648
    %v4984 = vor.u32 1.1754944e-38, %v4983
    %v4985 = vsel %vm4982, %v4984, %v4980
    %v4986 = vmul.f32 1.0, %v4985
    %v4987 = vrcp.pop %v4915
    %v4988 = vmul.f32 %v4915, %v4987
    %v4989 = vsub.f32 1.0, %v4988
    %v4990 = vmul.f32 %v4987, %v4989
    %v4991 = vadd.f32 %v4987, %v4990
    %vm4992 = vweird.f32 %v4915
    %vm4993 = vweird.f32 %v4987
    %vm4994 = vmor %vm4992, %vm4993
    %v4995 = vsel %vm4994, %v4987, %v4991
    %v4996 = vand.u32 2147483647, %v4915
    %vm4997 = vcmp.eq.f32.partialorder %v4996, 8.507059e+37
    %v4998 = vand.u32 %v4915, 2147483648
    %v4999 = vor.u32 1.1754944e-38, %v4998
    %v5000 = vsel %vm4997, %v4999, %v4995
    %v5001 = vmul.f32 1.0, %v5000
    %v5002 = vrcp.pop %v4916
    %v5003 = vmul.f32 %v4916, %v5002
    %v5004 = vsub.f32 1.0, %v5003
    %v5005 = vmul.f32 %v5002, %v5004
    %v5006 = vadd.f32 %v5002, %v5005
    %vm5007 = vweird.f32 %v4916
    %vm5008 = vweird.f32 %v5002
    %vm5009 = vmor %vm5007, %vm5008
    %v5010 = vsel %vm5009, %v5002, %v5006
    %v5011 = vand.u32 2147483647, %v4916
    %vm5012 = vcmp.eq.f32.partialorder %v5011, 8.507059e+37
    %v5013 = vand.u32 %v4916, 2147483648
    %v5014 = vor.u32 1.1754944e-38, %v5013
    %v5015 = vsel %vm5012, %v5014, %v5010
    %v5016 = vmul.f32 1.0, %v5015
    %v5017 = vrcp.pop %v4917
    %v5018 = vmul.f32 %v4917, %v5017
    %v5019 = vsub.f32 1.0, %v5018
    %v5020 = vmul.f32 %v5017, %v5019
    %v5021 = vadd.f32 %v5017, %v5020
    %vm5022 = vweird.f32 %v4917
    %vm5023 = vweird.f32 %v5017
    %vm5024 = vmor %vm5022, %vm5023
    %v5025 = vsel %vm5024, %v5017, %v5021
    %v5026 = vand.u32 2147483647, %v4917
    %vm5027 = vcmp.eq.f32.partialorder %v5026, 8.507059e+37
    %v5028 = vand.u32 %v4917, 2147483648
    %v5029 = vor.u32 1.1754944e-38, %v5028
    %v5030 = vsel %vm5027, %v5029, %v5025
    %v5031 = vmul.f32 1.0, %v5030
    %v5032 = vrcp.pop %v4918
    %v5033 = vmul.f32 %v4918, %v5032
    %v5034 = vsub.f32 1.0, %v5033
    %v5035 = vmul.f32 %v5032, %v5034
    %v5036 = vadd.f32 %v5032, %v5035
    %vm5037 = vweird.f32 %v4918
    %vm5038 = vweird.f32 %v5032
    %vm5039 = vmor %vm5037, %vm5038
    %v5040 = vsel %vm5039, %v5032, %v5036
    %v5041 = vand.u32 2147483647, %v4918
    %vm5042 = vcmp.eq.f32.partialorder %v5041, 8.507059e+37
    %v5043 = vand.u32 %v4918, 2147483648
    %v5044 = vor.u32 1.1754944e-38, %v5043
    %v5045 = vsel %vm5042, %v5044, %v5040
    %v5046 = vmul.f32 1.0, %v5045
    %v5047 = vrcp.pop %v4919
    %v5048 = vmul.f32 %v4919, %v5047
    %v5049 = vsub.f32 1.0, %v5048
    %v5050 = vmul.f32 %v5047, %v5049
    %v5051 = vadd.f32 %v5047, %v5050
    %vm5052 = vweird.f32 %v4919
    %vm5053 = vweird.f32 %v5047
    %vm5054 = vmor %vm5052, %vm5053
    %v5055 = vsel %vm5054, %v5047, %v5051
    %v5056 = vand.u32 2147483647, %v4919
    %vm5057 = vcmp.eq.f32.partialorder %v5056, 8.507059e+37
    %v5058 = vand.u32 %v4919, 2147483648
    %v5059 = vor.u32 1.1754944e-38, %v5058
    %v5060 = vsel %vm5057, %v5059, %v5055
    %v5061 = vmul.f32 1.0, %v5060
    %v5062 = vrcp.pop %v4920
    %v5063 = vmul.f32 %v4920, %v5062
    %v5064 = vsub.f32 1.0, %v5063
    %v5065 = vmul.f32 %v5062, %v5064
    %v5066 = vadd.f32 %v5062, %v5065
    %vm5067 = vweird.f32 %v4920
    %vm5068 = vweird.f32 %v5062
    %vm5069 = vmor %vm5067, %vm5068
    %v5070 = vsel %vm5069, %v5062, %v5066
    %v5071 = vand.u32 2147483647, %v4920
    %vm5072 = vcmp.eq.f32.partialorder %v5071, 8.507059e+37
    %v5073 = vand.u32 %v4920, 2147483648
    %v5074 = vor.u32 1.1754944e-38, %v5073
    %v5075 = vsel %vm5072, %v5074, %v5070
    %v5076 = vmul.f32 1.0, %v5075
    %v5077 = vrcp.pop %v4921
    %v5078 = vmul.f32 %v4921, %v5077
    %v5079 = vsub.f32 1.0, %v5078
    %v5080 = vmul.f32 %v5077, %v5079
    %v5081 = vadd.f32 %v5077, %v5080
    %vm5082 = vweird.f32 %v4921
    %vm5083 = vweird.f32 %v5077
    %vm5084 = vmor %vm5082, %vm5083
    %v5085 = vsel %vm5084, %v5077, %v5081
    %v5086 = vand.u32 2147483647, %v4921
    %vm5087 = vcmp.eq.f32.partialorder %v5086, 8.507059e+37
    %v5088 = vand.u32 %v4921, 2147483648
    %v5089 = vor.u32 1.1754944e-38, %v5088
    %v5090 = vsel %vm5087, %v5089, %v5085
    %v5091 = vmul.f32 1.0, %v5090
    %v5092 = vrcp.pop %v4922
    %v5093 = vmul.f32 %v4922, %v5092
    %v5094 = vsub.f32 1.0, %v5093
    %v5095 = vmul.f32 %v5092, %v5094
    %v5096 = vadd.f32 %v5092, %v5095
    %vm5097 = vweird.f32 %v4922
    %vm5098 = vweird.f32 %v5092
    %vm5099 = vmor %vm5097, %vm5098
    %v5100 = vsel %vm5099, %v5092, %v5096
    %v5101 = vand.u32 2147483647, %v4922
    %vm5102 = vcmp.eq.f32.partialorder %v5101, 8.507059e+37
    %v5103 = vand.u32 %v4922, 2147483648
    %v5104 = vor.u32 1.1754944e-38, %v5103
    %v5105 = vsel %vm5102, %v5104, %v5100
    %v5106 = vmul.f32 1.0, %v5105
    %v5107 = vrcp.pop %v4923
    %v5108 = vmul.f32 %v4923, %v5107
    %v5109 = vsub.f32 1.0, %v5108
    %v5110 = vmul.f32 %v5107, %v5109
    %v5111 = vadd.f32 %v5107, %v5110
    %vm5112 = vweird.f32 %v4923
    %vm5113 = vweird.f32 %v5107
    %vm5114 = vmor %vm5112, %vm5113
    %v5115 = vsel %vm5114, %v5107, %v5111
    %v5116 = vand.u32 2147483647, %v4923
    %vm5117 = vcmp.eq.f32.partialorder %v5116, 8.507059e+37
    %v5118 = vand.u32 %v4923, 2147483648
    %v5119 = vor.u32 1.1754944e-38, %v5118
    %v5120 = vsel %vm5117, %v5119, %v5115
    %v5121 = vmul.f32 1.0, %v5120
    %v5122 = vrcp.pop %v4924
    %v5123 = vmul.f32 %v4924, %v5122
    %v5124 = vsub.f32 1.0, %v5123
    %v5125 = vmul.f32 %v5122, %v5124
    %v5126 = vadd.f32 %v5122, %v5125
    %vm5127 = vweird.f32 %v4924
    %vm5128 = vweird.f32 %v5122
    %vm5129 = vmor %vm5127, %vm5128
    %v5130 = vsel %vm5129, %v5122, %v5126
    %v5131 = vand.u32 2147483647, %v4924
    %vm5132 = vcmp.eq.f32.partialorder %v5131, 8.507059e+37
    %v5133 = vand.u32 %v4924, 2147483648
    %v5134 = vor.u32 1.1754944e-38, %v5133
    %v5135 = vsel %vm5132, %v5134, %v5130
    %v5136 = vmul.f32 1.0, %v5135
    %v5137 = vrcp.pop %v4925
    %v5138 = vmul.f32 %v4925, %v5137
    %v5139 = vsub.f32 1.0, %v5138
    %v5140 = vmul.f32 %v5137, %v5139
    %v5141 = vadd.f32 %v5137, %v5140
    %vm5142 = vweird.f32 %v4925
    %vm5143 = vweird.f32 %v5137
    %vm5144 = vmor %vm5142, %vm5143
    %v5145 = vsel %vm5144, %v5137, %v5141
    %v5146 = vand.u32 2147483647, %v4925
    %vm5147 = vcmp.eq.f32.partialorder %v5146, 8.507059e+37
    %v5148 = vand.u32 %v4925, 2147483648
    %v5149 = vor.u32 1.1754944e-38, %v5148
    %v5150 = vsel %vm5147, %v5149, %v5145
    %v5151 = vmul.f32 1.0, %v5150
    %v5152 = vrcp.pop %v4926
    %v5153 = vmul.f32 %v4926, %v5152
    %v5154 = vsub.f32 1.0, %v5153
    %v5155 = vmul.f32 %v5152, %v5154
    %v5156 = vadd.f32 %v5152, %v5155
    %vm5157 = vweird.f32 %v4926
    %vm5158 = vweird.f32 %v5152
    %vm5159 = vmor %vm5157, %vm5158
    %v5160 = vsel %vm5159, %v5152, %v5156
    %v5161 = vand.u32 2147483647, %v4926
    %vm5162 = vcmp.eq.f32.partialorder %v5161, 8.507059e+37
    %v5163 = vand.u32 %v4926, 2147483648
    %v5164 = vor.u32 1.1754944e-38, %v5163
    %v5165 = vsel %vm5162, %v5164, %v5160
    %v5166 = vmul.f32 1.0, %v5165
    %5167 = vst.msk [vmem:[#allocation3] sm:$0xff] %vm1799, 0.0
    %5168 = vst.msk [vmem:[#allocation3 + $0x8] sm:$0xff] %vm1799, 0.0
    %5169 = vst.msk [vmem:[#allocation3 + $0x10] sm:$0xff] %vm1799, 0.0
    %5170 = vst.msk [vmem:[#allocation3 + $0x18] sm:$0xff] %vm1799, 0.0
    %5171 = vst.msk [vmem:[#allocation3 + $0xc0] sm:$0xff] %vm1799, 0.0
    %5172 = vst.msk [vmem:[#allocation3 + $0xc8] sm:$0xff] %vm1799, 0.0
    %5173 = vst.msk [vmem:[#allocation3 + $0xd0] sm:$0xff] %vm1799, 0.0
    %5174 = vst.msk [vmem:[#allocation3 + $0xd8] sm:$0xff] %vm1799, 0.0
    %s5175 = scalar_lea.vmem [#allocation3], 160
    %5176 = vst.msk [vmem:[%s5175] sm:$0xff] %vm1799, 0.0
    %5177 = vst.msk [vmem:[%s5175 + $0x8] sm:$0xff] %vm1799, 0.0
    %5178 = vst.msk [vmem:[%s5175 + $0x10] sm:$0xff] %vm1799, 0.0
    %5179 = vst.msk [vmem:[%s5175 + $0x18] sm:$0xff] %vm1799, 0.0
    %5180 = vst.msk [vmem:[%s5175 + $0xc0] sm:$0xff] %vm1799, 0.0
    %5181 = vst.msk [vmem:[%s5175 + $0xc8] sm:$0xff] %vm1799, 0.0
    %5182 = vst.msk [vmem:[%s5175 + $0xd0] sm:$0xff] %vm1799, 0.0
    %5183 = vst.msk [vmem:[%s5175 + $0xd8] sm:$0xff] %vm1799, 0.0
    %vm5184 = vcmask 91136
    %5185 = vst.msk [vmem:[#allocation3] sm:$0x3] %vm5184, 0.0
    %5186 = vst.msk [vmem:[#allocation3 + $0x10] sm:$0x3] %vm5184, 0.0
    %5187 = vst.msk [vmem:[#allocation3 + $0x20] sm:$0x3] %vm5184, 0.0
    %5188 = vst.msk [vmem:[#allocation3 + $0x30] sm:$0x3] %vm5184, 0.0
    %5189 = vst.msk [vmem:[#allocation3 + $0x40] sm:$0x3] %vm5184, 0.0
    %5190 = vst.msk [vmem:[#allocation3 + $0x50] sm:$0x3] %vm5184, 0.0
    %5191 = vst.msk [vmem:[#allocation3 + $0x60] sm:$0x3] %vm5184, 0.0
    %5192 = vst.msk [vmem:[#allocation3 + $0x70] sm:$0x3] %vm5184, 0.0
    %5193 = vst.msk [vmem:[#allocation3 + $0x80] sm:$0x3] %vm5184, 0.0
    %5194 = vst.msk [vmem:[#allocation3 + $0x90] sm:$0x3] %vm5184, 0.0
    %5195 = vst.msk [vmem:[#allocation3 + $0xa0] sm:$0x3] %vm5184, 0.0
    %5196 = vst.msk [vmem:[#allocation3 + $0xb0] sm:$0x3] %vm5184, 0.0
    %5197 = vst.msk [vmem:[#allocation3 + $0xc0] sm:$0x3] %vm5184, 0.0
    %5198 = vst.msk [vmem:[#allocation3 + $0xd0] sm:$0x3] %vm5184, 0.0
    %5199 = vst.msk [vmem:[#allocation3 + $0xe0] sm:$0x3] %vm5184, 0.0
    %5200 = vst.msk [vmem:[#allocation3 + $0xf0] sm:$0x3] %vm5184, 0.0
    %5201 = vst.msk [vmem:[#allocation3 + $0x100] sm:$0x3] %vm5184, 0.0
    %5202 = vst.msk [vmem:[#allocation3 + $0x110] sm:$0x3] %vm5184, 0.0
    %5203 = vst.msk [vmem:[#allocation3 + $0x120] sm:$0x3] %vm5184, 0.0
    %5204 = vst.msk [vmem:[#allocation3 + $0x130] sm:$0x3] %vm5184, 0.0
    %5205 = vst.msk [vmem:[#allocation3 + $0x140] sm:$0x3] %vm5184, 0.0
    %5206 = vst.msk [vmem:[#allocation3 + $0x150] sm:$0x3] %vm5184, 0.0
    %5207 = vst.msk [vmem:[#allocation3 + $0x160] sm:$0x3] %vm5184, 0.0
    %5208 = vst.msk [vmem:[#allocation3 + $0x170] sm:$0x3] %vm5184, 0.0
    %5209 = vst.msk [vmem:[#allocation3 + $0xa] sm:$0x3] %vm5184, 0.0
    %5210 = vst.msk [vmem:[#allocation3 + $0x1a] sm:$0x3] %vm5184, 0.0
    %5211 = vst.msk [vmem:[#allocation3 + $0x2a] sm:$0x3] %vm5184, 0.0
    %5212 = vst.msk [vmem:[#allocation3 + $0x3a] sm:$0x3] %vm5184, 0.0
    %5213 = vst.msk [vmem:[#allocation3 + $0x4a] sm:$0x3] %vm5184, 0.0
    %5214 = vst.msk [vmem:[#allocation3 + $0x5a] sm:$0x3] %vm5184, 0.0
    %5215 = vst.msk [vmem:[#allocation3 + $0x6a] sm:$0x3] %vm5184, 0.0
    %5216 = vst.msk [vmem:[#allocation3 + $0x7a] sm:$0x3] %vm5184, 0.0
    %5217 = vst.msk [vmem:[#allocation3 + $0x8a] sm:$0x3] %vm5184, 0.0
    %5218 = vst.msk [vmem:[#allocation3 + $0x9a] sm:$0x3] %vm5184, 0.0
    %5219 = vst.msk [vmem:[#allocation3 + $0xaa] sm:$0x3] %vm5184, 0.0
    %5220 = vst.msk [vmem:[#allocation3 + $0xba] sm:$0x3] %vm5184, 0.0
    %5221 = vst.msk [vmem:[#allocation3 + $0xca] sm:$0x3] %vm5184, 0.0
    %5222 = vst.msk [vmem:[#allocation3 + $0xda] sm:$0x3] %vm5184, 0.0
    %5223 = vst.msk [vmem:[#allocation3 + $0xea] sm:$0x3] %vm5184, 0.0
    %5224 = vst.msk [vmem:[#allocation3 + $0xfa] sm:$0x3] %vm5184, 0.0
    %5225 = vst.msk [vmem:[#allocation3 + $0x10a] sm:$0x3] %vm5184, 0.0
    %5226 = vst.msk [vmem:[#allocation3 + $0x11a] sm:$0x3] %vm5184, 0.0
    %5227 = vst.msk [vmem:[#allocation3 + $0x12a] sm:$0x3] %vm5184, 0.0
    %5228 = vst.msk [vmem:[#allocation3 + $0x13a] sm:$0x3] %vm5184, 0.0
    %5229 = vst.msk [vmem:[#allocation3 + $0x14a] sm:$0x3] %vm5184, 0.0
    %5230 = vst.msk [vmem:[#allocation3 + $0x15a] sm:$0x3] %vm5184, 0.0
    %5231 = vst.msk [vmem:[#allocation3 + $0x16a] sm:$0x3] %vm5184, 0.0
    %5232 = vst.msk [vmem:[#allocation3 + $0x17a] sm:$0x3] %vm5184, 0.0
    %s5233 = scalar_lea.vmem [#allocation3], 32
    %5234 = vst.msk [vmem:[%s5233 + $0x2] sm:$0xff] %vm1799, %v4941
    %5235 = vst.msk [vmem:[%s5233 + $0x12] sm:$0xff] %vm1799, %v4956
    %5236 = vst.msk [vmem:[%s5233 + $0x22] sm:$0xff] %vm1799, %v4971
    %5237 = vst.msk [vmem:[%s5233 + $0x32] sm:$0xff] %vm1799, %v4986
    %5238 = vst.msk [vmem:[%s5233 + $0x42] sm:$0xff] %vm1799, %v5001
    %5239 = vst.msk [vmem:[%s5233 + $0x52] sm:$0xff] %vm1799, %v5016
    %5240 = vst.msk [vmem:[%s5233 + $0x62] sm:$0xff] %vm1799, %v5031
    %5241 = vst.msk [vmem:[%s5233 + $0x72] sm:$0xff] %vm1799, %v5046
    %5242 = vst.msk [vmem:[%s5233 + $0xc2] sm:$0xff] %vm1799, %v5061
    %5243 = vst.msk [vmem:[%s5233 + $0xd2] sm:$0xff] %vm1799, %v5076
    %5244 = vst.msk [vmem:[%s5233 + $0xe2] sm:$0xff] %vm1799, %v5091
    %5245 = vst.msk [vmem:[%s5233 + $0xf2] sm:$0xff] %vm1799, %v5106
    %5246 = vst.msk [vmem:[%s5233 + $0x102] sm:$0xff] %vm1799, %v5121
    %5247 = vst.msk [vmem:[%s5233 + $0x112] sm:$0xff] %vm1799, %v5136
    %5248 = vst.msk [vmem:[%s5233 + $0x122] sm:$0xff] %vm1799, %v5151
    %5249 = vst.msk [vmem:[%s5233 + $0x132] sm:$0xff] %vm1799, %v5166
    %v5250 = vld [vmem:[#allocation3] sm:$0xff]
    %v5251 = vld [vmem:[#allocation3 + $0x10] sm:$0xff]
    %v5252 = vld [vmem:[#allocation3 + $0x20] sm:$0xff]
    %v5253 = vld [vmem:[#allocation3 + $0x30] sm:$0xff]
    %v5254 = vld [vmem:[#allocation3 + $0x40] sm:$0xff]
    %v5255 = vld [vmem:[#allocation3 + $0x50] sm:$0xff]
    %v5256 = vld [vmem:[#allocation3 + $0x60] sm:$0xff]
    %v5257 = vld [vmem:[#allocation3 + $0x70] sm:$0xff]
    %v5258 = vld [vmem:[#allocation3 + $0xc0] sm:$0xff]
    %v5259 = vld [vmem:[#allocation3 + $0xd0] sm:$0xff]
    %v5260 = vld [vmem:[#allocation3 + $0xe0] sm:$0xff]
    %v5261 = vld [vmem:[#allocation3 + $0xf0] sm:$0xff]
    %v5262 = vld [vmem:[#allocation3 + $0x100] sm:$0xff]
    %v5263 = vld [vmem:[#allocation3 + $0x110] sm:$0xff]
    %v5264 = vld [vmem:[#allocation3 + $0x120] sm:$0xff]
    %v5265 = vld [vmem:[#allocation3 + $0x130] sm:$0xff]
    %5266 = vst.msk [vmem:[#allocation4] sm:$0xff] %vm1799, %v5250
    %5267 = vst.msk [vmem:[#allocation4 + $0x18] sm:$0xff] %vm1799, %v5251
    %5268 = vst.msk [vmem:[#allocation4 + $0x30] sm:$0xff] %vm1799, %v5252
    %5269 = vst.msk [vmem:[#allocation4 + $0x48] sm:$0xff] %vm1799, %v5253
    %5270 = vst.msk [vmem:[#allocation4 + $0x60] sm:$0xff] %vm1799, %v5254
    %5271 = vst.msk [vmem:[#allocation4 + $0x78] sm:$0xff] %vm1799, %v5255
    %5272 = vst.msk [vmem:[#allocation4 + $0x90] sm:$0xff] %vm1799, %v5256
    %5273 = vst.msk [vmem:[#allocation4 + $0xa8] sm:$0xff] %vm1799, %v5257
    %5274 = vst.msk [vmem:[#allocation4 + $0xc0] sm:$0xff] %vm1799, %v5258
    %5275 = vst.msk [vmem:[#allocation4 + $0xd8] sm:$0xff] %vm1799, %v5259
    %5276 = vst.msk [vmem:[#allocation4 + $0xf0] sm:$0xff] %vm1799, %v5260
    %5277 = vst.msk [vmem:[#allocation4 + $0x108] sm:$0xff] %vm1799, %v5261
    %5278 = vst.msk [vmem:[#allocation4 + $0x120] sm:$0xff] %vm1799, %v5262
    %5279 = vst.msk [vmem:[#allocation4 + $0x138] sm:$0xff] %vm1799, %v5263
    %5280 = vst.msk [vmem:[#allocation4 + $0x150] sm:$0xff] %vm1799, %v5264
    %5281 = vst.msk [vmem:[#allocation4 + $0x168] sm:$0xff] %vm1799, %v5265
    %v5282 = vld [vmem:[#allocation3 + $0x1] sm:$0xff]
    %v5283 = vld [vmem:[#allocation3 + $0x11] sm:$0xff]
    %v5284 = vld [vmem:[#allocation3 + $0x21] sm:$0xff]
    %v5285 = vld [vmem:[#allocation3 + $0x31] sm:$0xff]
    %v5286 = vld [vmem:[#allocation3 + $0x41] sm:$0xff]
    %v5287 = vld [vmem:[#allocation3 + $0x51] sm:$0xff]
    %v5288 = vld [vmem:[#allocation3 + $0x61] sm:$0xff]
    %v5289 = vld [vmem:[#allocation3 + $0x71] sm:$0xff]
    %v5290 = vld [vmem:[#allocation3 + $0xc1] sm:$0xff]
    %v5291 = vld [vmem:[#allocation3 + $0xd1] sm:$0xff]
    %v5292 = vld [vmem:[#allocation3 + $0xe1] sm:$0xff]
    %v5293 = vld [vmem:[#allocation3 + $0xf1] sm:$0xff]
    %v5294 = vld [vmem:[#allocation3 + $0x101] sm:$0xff]
    %v5295 = vld [vmem:[#allocation3 + $0x111] sm:$0xff]
    %v5296 = vld [vmem:[#allocation3 + $0x121] sm:$0xff]
    %v5297 = vld [vmem:[#allocation3 + $0x131] sm:$0xff]
    %5314 = vrot.lane.b32.xlu0 %v5282, 12
    %v5315 = vpop.permute.xlu0 %5314
    %5316 = vrot.lane.b32.xlu0 %v5283, 12
    %v5317 = vpop.permute.xlu0 %5316
    %5318 = vrot.lane.b32.xlu0 %v5284, 12
    %v5319 = vpop.permute.xlu0 %5318
    %5320 = vrot.lane.b32.xlu0 %v5285, 12
    %v5321 = vpop.permute.xlu0 %5320
    %5322 = vrot.lane.b32.xlu0 %v5286, 12
    %v5323 = vpop.permute.xlu0 %5322
    %5324 = vrot.lane.b32.xlu0 %v5287, 12
    %v5325 = vpop.permute.xlu0 %5324
    %5326 = vrot.lane.b32.xlu0 %v5288, 12
    %v5327 = vpop.permute.xlu0 %5326
    %5328 = vrot.lane.b32.xlu0 %v5289, 12
    %v5329 = vpop.permute.xlu0 %5328
    %5330 = vrot.lane.b32.xlu0 %v5290, 12
    %v5331 = vpop.permute.xlu0 %5330
    %5332 = vrot.lane.b32.xlu0 %v5291, 12
    %v5333 = vpop.permute.xlu0 %5332
    %5334 = vrot.lane.b32.xlu0 %v5292, 12
    %v5335 = vpop.permute.xlu0 %5334
    %5336 = vrot.lane.b32.xlu0 %v5293, 12
    %v5337 = vpop.permute.xlu0 %5336
    %5338 = vrot.lane.b32.xlu0 %v5294, 12
    %v5339 = vpop.permute.xlu0 %5338
    %5340 = vrot.lane.b32.xlu0 %v5295, 12
    %v5341 = vpop.permute.xlu0 %5340
    %5342 = vrot.lane.b32.xlu0 %v5296, 12
    %v5343 = vpop.permute.xlu0 %5342
    %5344 = vrot.lane.b32.xlu0 %v5297, 12
    %v5345 = vpop.permute.xlu0 %5344
    %5362 = vst.msk [vmem:[#allocation4] sm:$0xff] %vm2175, %v5315
    %5363 = vst.msk [vmem:[#allocation4 + $0x18] sm:$0xff] %vm2175, %v5317
    %5364 = vst.msk [vmem:[#allocation4 + $0x30] sm:$0xff] %vm2175, %v5319
    %5365 = vst.msk [vmem:[#allocation4 + $0x48] sm:$0xff] %vm2175, %v5321
    %5366 = vst.msk [vmem:[#allocation4 + $0x60] sm:$0xff] %vm2175, %v5323
    %5367 = vst.msk [vmem:[#allocation4 + $0x78] sm:$0xff] %vm2175, %v5325
    %5368 = vst.msk [vmem:[#allocation4 + $0x90] sm:$0xff] %vm2175, %v5327
    %5369 = vst.msk [vmem:[#allocation4 + $0xa8] sm:$0xff] %vm2175, %v5329
    %5370 = vst.msk [vmem:[#allocation4 + $0xc0] sm:$0xff] %vm2175, %v5331
    %5371 = vst.msk [vmem:[#allocation4 + $0xd8] sm:$0xff] %vm2175, %v5333
    %5372 = vst.msk [vmem:[#allocation4 + $0xf0] sm:$0xff] %vm2175, %v5335
    %5373 = vst.msk [vmem:[#allocation4 + $0x108] sm:$0xff] %vm2175, %v5337
    %5374 = vst.msk [vmem:[#allocation4 + $0x120] sm:$0xff] %vm2175, %v5339
    %5375 = vst.msk [vmem:[#allocation4 + $0x138] sm:$0xff] %vm2175, %v5341
    %5376 = vst.msk [vmem:[#allocation4 + $0x150] sm:$0xff] %vm2175, %v5343
    %5377 = vst.msk [vmem:[#allocation4 + $0x168] sm:$0xff] %vm2175, %v5345
    %v5378 = vld [vmem:[#allocation3 + $0x2] sm:$0xff]
    %v5379 = vld [vmem:[#allocation3 + $0x12] sm:$0xff]
    %v5380 = vld [vmem:[#allocation3 + $0x22] sm:$0xff]
    %v5381 = vld [vmem:[#allocation3 + $0x32] sm:$0xff]
    %v5382 = vld [vmem:[#allocation3 + $0x42] sm:$0xff]
    %v5383 = vld [vmem:[#allocation3 + $0x52] sm:$0xff]
    %v5384 = vld [vmem:[#allocation3 + $0x62] sm:$0xff]
    %v5385 = vld [vmem:[#allocation3 + $0x72] sm:$0xff]
    %v5386 = vld [vmem:[#allocation3 + $0xc2] sm:$0xff]
    %v5387 = vld [vmem:[#allocation3 + $0xd2] sm:$0xff]
    %v5388 = vld [vmem:[#allocation3 + $0xe2] sm:$0xff]
    %v5389 = vld [vmem:[#allocation3 + $0xf2] sm:$0xff]
    %v5390 = vld [vmem:[#allocation3 + $0x102] sm:$0xff]
    %v5391 = vld [vmem:[#allocation3 + $0x112] sm:$0xff]
    %v5392 = vld [vmem:[#allocation3 + $0x122] sm:$0xff]
    %v5393 = vld [vmem:[#allocation3 + $0x132] sm:$0xff]
    %5410 = vrot.lane.b32.xlu0 %v5378, 24
    %v5411 = vpop.permute.xlu0 %5410
    %5412 = vrot.lane.b32.xlu0 %v5379, 24
    %v5413 = vpop.permute.xlu0 %5412
    %5414 = vrot.lane.b32.xlu0 %v5380, 24
    %v5415 = vpop.permute.xlu0 %5414
    %5416 = vrot.lane.b32.xlu0 %v5381, 24
    %v5417 = vpop.permute.xlu0 %5416
    %5418 = vrot.lane.b32.xlu0 %v5382, 24
    %v5419 = vpop.permute.xlu0 %5418
    %5420 = vrot.lane.b32.xlu0 %v5383, 24
    %v5421 = vpop.permute.xlu0 %5420
    %5422 = vrot.lane.b32.xlu0 %v5384, 24
    %v5423 = vpop.permute.xlu0 %5422
    %5424 = vrot.lane.b32.xlu0 %v5385, 24
    %v5425 = vpop.permute.xlu0 %5424
    %5426 = vrot.lane.b32.xlu0 %v5386, 24
    %v5427 = vpop.permute.xlu0 %5426
    %5428 = vrot.lane.b32.xlu0 %v5387, 24
    %v5429 = vpop.permute.xlu0 %5428
    %5430 = vrot.lane.b32.xlu0 %v5388, 24
    %v5431 = vpop.permute.xlu0 %5430
    %5432 = vrot.lane.b32.xlu0 %v5389, 24
    %v5433 = vpop.permute.xlu0 %5432
    %5434 = vrot.lane.b32.xlu0 %v5390, 24
    %v5435 = vpop.permute.xlu0 %5434
    %5436 = vrot.lane.b32.xlu0 %v5391, 24
    %v5437 = vpop.permute.xlu0 %5436
    %5438 = vrot.lane.b32.xlu0 %v5392, 24
    %v5439 = vpop.permute.xlu0 %5438
    %5440 = vrot.lane.b32.xlu0 %v5393, 24
    %v5441 = vpop.permute.xlu0 %5440
    %5458 = vst.msk [vmem:[#allocation4] sm:$0xff] %vm2272, %v5411
    %5459 = vst.msk [vmem:[#allocation4 + $0x18] sm:$0xff] %vm2272, %v5413
    %5460 = vst.msk [vmem:[#allocation4 + $0x30] sm:$0xff] %vm2272, %v5415
    %5461 = vst.msk [vmem:[#allocation4 + $0x48] sm:$0xff] %vm2272, %v5417
    %5462 = vst.msk [vmem:[#allocation4 + $0x60] sm:$0xff] %vm2272, %v5419
    %5463 = vst.msk [vmem:[#allocation4 + $0x78] sm:$0xff] %vm2272, %v5421
    %5464 = vst.msk [vmem:[#allocation4 + $0x90] sm:$0xff] %vm2272, %v5423
    %5465 = vst.msk [vmem:[#allocation4 + $0xa8] sm:$0xff] %vm2272, %v5425
    %5466 = vst.msk [vmem:[#allocation4 + $0xc0] sm:$0xff] %vm2272, %v5427
    %5467 = vst.msk [vmem:[#allocation4 + $0xd8] sm:$0xff] %vm2272, %v5429
    %5468 = vst.msk [vmem:[#allocation4 + $0xf0] sm:$0xff] %vm2272, %v5431
    %5469 = vst.msk [vmem:[#allocation4 + $0x108] sm:$0xff] %vm2272, %v5433
    %5470 = vst.msk [vmem:[#allocation4 + $0x120] sm:$0xff] %vm2272, %v5435
    %5471 = vst.msk [vmem:[#allocation4 + $0x138] sm:$0xff] %vm2272, %v5437
    %5472 = vst.msk [vmem:[#allocation4 + $0x150] sm:$0xff] %vm2272, %v5439
    %5473 = vst.msk [vmem:[#allocation4 + $0x168] sm:$0xff] %vm2272, %v5441
    %v5474 = vld [vmem:[#allocation3 + $0x3] sm:$0xff]
    %v5475 = vld [vmem:[#allocation3 + $0x13] sm:$0xff]
    %v5476 = vld [vmem:[#allocation3 + $0x23] sm:$0xff]
    %v5477 = vld [vmem:[#allocation3 + $0x33] sm:$0xff]
    %v5478 = vld [vmem:[#allocation3 + $0x43] sm:$0xff]
    %v5479 = vld [vmem:[#allocation3 + $0x53] sm:$0xff]
    %v5480 = vld [vmem:[#allocation3 + $0x63] sm:$0xff]
    %v5481 = vld [vmem:[#allocation3 + $0x73] sm:$0xff]
    %v5482 = vld [vmem:[#allocation3 + $0xc3] sm:$0xff]
    %v5483 = vld [vmem:[#allocation3 + $0xd3] sm:$0xff]
    %v5484 = vld [vmem:[#allocation3 + $0xe3] sm:$0xff]
    %v5485 = vld [vmem:[#allocation3 + $0xf3] sm:$0xff]
    %v5486 = vld [vmem:[#allocation3 + $0x103] sm:$0xff]
    %v5487 = vld [vmem:[#allocation3 + $0x113] sm:$0xff]
    %v5488 = vld [vmem:[#allocation3 + $0x123] sm:$0xff]
    %v5489 = vld [vmem:[#allocation3 + $0x133] sm:$0xff]
    %5506 = vrot.lane.b32.xlu0 %v5474, 36
    %v5507 = vpop.permute.xlu0 %5506
    %5508 = vrot.lane.b32.xlu0 %v5475, 36
    %v5509 = vpop.permute.xlu0 %5508
    %5510 = vrot.lane.b32.xlu0 %v5476, 36
    %v5511 = vpop.permute.xlu0 %5510
    %5512 = vrot.lane.b32.xlu0 %v5477, 36
    %v5513 = vpop.permute.xlu0 %5512
    %5514 = vrot.lane.b32.xlu0 %v5478, 36
    %v5515 = vpop.permute.xlu0 %5514
    %5516 = vrot.lane.b32.xlu0 %v5479, 36
    %v5517 = vpop.permute.xlu0 %5516
    %5518 = vrot.lane.b32.xlu0 %v5480, 36
    %v5519 = vpop.permute.xlu0 %5518
    %5520 = vrot.lane.b32.xlu0 %v5481, 36
    %v5521 = vpop.permute.xlu0 %5520
    %5522 = vrot.lane.b32.xlu0 %v5482, 36
    %v5523 = vpop.permute.xlu0 %5522
    %5524 = vrot.lane.b32.xlu0 %v5483, 36
    %v5525 = vpop.permute.xlu0 %5524
    %5526 = vrot.lane.b32.xlu0 %v5484, 36
    %v5527 = vpop.permute.xlu0 %5526
    %5528 = vrot.lane.b32.xlu0 %v5485, 36
    %v5529 = vpop.permute.xlu0 %5528
    %5530 = vrot.lane.b32.xlu0 %v5486, 36
    %v5531 = vpop.permute.xlu0 %5530
    %5532 = vrot.lane.b32.xlu0 %v5487, 36
    %v5533 = vpop.permute.xlu0 %5532
    %5534 = vrot.lane.b32.xlu0 %v5488, 36
    %v5535 = vpop.permute.xlu0 %5534
    %5536 = vrot.lane.b32.xlu0 %v5489, 36
    %v5537 = vpop.permute.xlu0 %5536
    %5554 = vst.msk [vmem:[#allocation4] sm:$0xff] %vm2369, %v5507
    %5555 = vst.msk [vmem:[#allocation4 + $0x18] sm:$0xff] %vm2369, %v5509
    %5556 = vst.msk [vmem:[#allocation4 + $0x30] sm:$0xff] %vm2369, %v5511
    %5557 = vst.msk [vmem:[#allocation4 + $0x48] sm:$0xff] %vm2369, %v5513
    %5558 = vst.msk [vmem:[#allocation4 + $0x60] sm:$0xff] %vm2369, %v5515
    %5559 = vst.msk [vmem:[#allocation4 + $0x78] sm:$0xff] %vm2369, %v5517
    %5560 = vst.msk [vmem:[#allocation4 + $0x90] sm:$0xff] %vm2369, %v5519
    %5561 = vst.msk [vmem:[#allocation4 + $0xa8] sm:$0xff] %vm2369, %v5521
    %5562 = vst.msk [vmem:[#allocation4 + $0xc0] sm:$0xff] %vm2369, %v5523
    %5563 = vst.msk [vmem:[#allocation4 + $0xd8] sm:$0xff] %vm2369, %v5525
    %5564 = vst.msk [vmem:[#allocation4 + $0xf0] sm:$0xff] %vm2369, %v5527
    %5565 = vst.msk [vmem:[#allocation4 + $0x108] sm:$0xff] %vm2369, %v5529
    %5566 = vst.msk [vmem:[#allocation4 + $0x120] sm:$0xff] %vm2369, %v5531
    %5567 = vst.msk [vmem:[#allocation4 + $0x138] sm:$0xff] %vm2369, %v5533
    %5568 = vst.msk [vmem:[#allocation4 + $0x150] sm:$0xff] %vm2369, %v5535
    %5569 = vst.msk [vmem:[#allocation4 + $0x168] sm:$0xff] %vm2369, %v5537
    %v5570 = vld [vmem:[#allocation3 + $0x4] sm:$0xff]
    %v5571 = vld [vmem:[#allocation3 + $0x14] sm:$0xff]
    %v5572 = vld [vmem:[#allocation3 + $0x24] sm:$0xff]
    %v5573 = vld [vmem:[#allocation3 + $0x34] sm:$0xff]
    %v5574 = vld [vmem:[#allocation3 + $0x44] sm:$0xff]
    %v5575 = vld [vmem:[#allocation3 + $0x54] sm:$0xff]
    %v5576 = vld [vmem:[#allocation3 + $0x64] sm:$0xff]
    %v5577 = vld [vmem:[#allocation3 + $0x74] sm:$0xff]
    %v5578 = vld [vmem:[#allocation3 + $0xc4] sm:$0xff]
    %v5579 = vld [vmem:[#allocation3 + $0xd4] sm:$0xff]
    %v5580 = vld [vmem:[#allocation3 + $0xe4] sm:$0xff]
    %v5581 = vld [vmem:[#allocation3 + $0xf4] sm:$0xff]
    %v5582 = vld [vmem:[#allocation3 + $0x104] sm:$0xff]
    %v5583 = vld [vmem:[#allocation3 + $0x114] sm:$0xff]
    %v5584 = vld [vmem:[#allocation3 + $0x124] sm:$0xff]
    %v5585 = vld [vmem:[#allocation3 + $0x134] sm:$0xff]
    %5602 = vrot.lane.b32.xlu0 %v5570, 48
    %v5603 = vpop.permute.xlu0 %5602
    %5604 = vrot.lane.b32.xlu0 %v5571, 48
    %v5605 = vpop.permute.xlu0 %5604
    %5606 = vrot.lane.b32.xlu0 %v5572, 48
    %v5607 = vpop.permute.xlu0 %5606
    %5608 = vrot.lane.b32.xlu0 %v5573, 48
    %v5609 = vpop.permute.xlu0 %5608
    %5610 = vrot.lane.b32.xlu0 %v5574, 48
    %v5611 = vpop.permute.xlu0 %5610
    %5612 = vrot.lane.b32.xlu0 %v5575, 48
    %v5613 = vpop.permute.xlu0 %5612
    %5614 = vrot.lane.b32.xlu0 %v5576, 48
    %v5615 = vpop.permute.xlu0 %5614
    %5616 = vrot.lane.b32.xlu0 %v5577, 48
    %v5617 = vpop.permute.xlu0 %5616
    %5618 = vrot.lane.b32.xlu0 %v5578, 48
    %v5619 = vpop.permute.xlu0 %5618
    %5620 = vrot.lane.b32.xlu0 %v5579, 48
    %v5621 = vpop.permute.xlu0 %5620
    %5622 = vrot.lane.b32.xlu0 %v5580, 48
    %v5623 = vpop.permute.xlu0 %5622
    %5624 = vrot.lane.b32.xlu0 %v5581, 48
    %v5625 = vpop.permute.xlu0 %5624
    %5626 = vrot.lane.b32.xlu0 %v5582, 48
    %v5627 = vpop.permute.xlu0 %5626
    %5628 = vrot.lane.b32.xlu0 %v5583, 48
    %v5629 = vpop.permute.xlu0 %5628
    %5630 = vrot.lane.b32.xlu0 %v5584, 48
    %v5631 = vpop.permute.xlu0 %5630
    %5632 = vrot.lane.b32.xlu0 %v5585, 48
    %v5633 = vpop.permute.xlu0 %5632
    %5650 = vst.msk [vmem:[#allocation4] sm:$0xff] %vm2466, %v5603
    %5651 = vst.msk [vmem:[#allocation4 + $0x18] sm:$0xff] %vm2466, %v5605
    %5652 = vst.msk [vmem:[#allocation4 + $0x30] sm:$0xff] %vm2466, %v5607
    %5653 = vst.msk [vmem:[#allocation4 + $0x48] sm:$0xff] %vm2466, %v5609
    %5654 = vst.msk [vmem:[#allocation4 + $0x60] sm:$0xff] %vm2466, %v5611
    %5655 = vst.msk [vmem:[#allocation4 + $0x78] sm:$0xff] %vm2466, %v5613
    %5656 = vst.msk [vmem:[#allocation4 + $0x90] sm:$0xff] %vm2466, %v5615
    %5657 = vst.msk [vmem:[#allocation4 + $0xa8] sm:$0xff] %vm2466, %v5617
    %5658 = vst.msk [vmem:[#allocation4 + $0xc0] sm:$0xff] %vm2466, %v5619
    %5659 = vst.msk [vmem:[#allocation4 + $0xd8] sm:$0xff] %vm2466, %v5621
    %5660 = vst.msk [vmem:[#allocation4 + $0xf0] sm:$0xff] %vm2466, %v5623
    %5661 = vst.msk [vmem:[#allocation4 + $0x108] sm:$0xff] %vm2466, %v5625
    %5662 = vst.msk [vmem:[#allocation4 + $0x120] sm:$0xff] %vm2466, %v5627
    %5663 = vst.msk [vmem:[#allocation4 + $0x138] sm:$0xff] %vm2466, %v5629
    %5664 = vst.msk [vmem:[#allocation4 + $0x150] sm:$0xff] %vm2466, %v5631
    %5665 = vst.msk [vmem:[#allocation4 + $0x168] sm:$0xff] %vm2466, %v5633
    %s5666 = scalar_lea.vmem [#allocation3], 16
    %v5667 = vld [vmem:[%s5666] sm:$0xff]
    %v5668 = vld [vmem:[%s5666 + $0x10] sm:$0xff]
    %v5669 = vld [vmem:[%s5666 + $0x20] sm:$0xff]
    %v5670 = vld [vmem:[%s5666 + $0x30] sm:$0xff]
    %v5671 = vld [vmem:[%s5666 + $0x40] sm:$0xff]
    %v5672 = vld [vmem:[%s5666 + $0x50] sm:$0xff]
    %v5673 = vld [vmem:[%s5666 + $0x60] sm:$0xff]
    %v5674 = vld [vmem:[%s5666 + $0x70] sm:$0xff]
    %v5675 = vld [vmem:[%s5666 + $0xc0] sm:$0xff]
    %v5676 = vld [vmem:[%s5666 + $0xd0] sm:$0xff]
    %v5677 = vld [vmem:[%s5666 + $0xe0] sm:$0xff]
    %v5678 = vld [vmem:[%s5666 + $0xf0] sm:$0xff]
    %v5679 = vld [vmem:[%s5666 + $0x100] sm:$0xff]
    %v5680 = vld [vmem:[%s5666 + $0x110] sm:$0xff]
    %v5681 = vld [vmem:[%s5666 + $0x120] sm:$0xff]
    %v5682 = vld [vmem:[%s5666 + $0x130] sm:$0xff]
    %5699 = vrot.lane.b32.xlu0 %v5667, 60
    %v5700 = vpop.permute.xlu0 %5699
    %5701 = vrot.lane.b32.xlu0 %v5668, 60
    %v5702 = vpop.permute.xlu0 %5701
    %5703 = vrot.lane.b32.xlu0 %v5669, 60
    %v5704 = vpop.permute.xlu0 %5703
    %5705 = vrot.lane.b32.xlu0 %v5670, 60
    %v5706 = vpop.permute.xlu0 %5705
    %5707 = vrot.lane.b32.xlu0 %v5671, 60
    %v5708 = vpop.permute.xlu0 %5707
    %5709 = vrot.lane.b32.xlu0 %v5672, 60
    %v5710 = vpop.permute.xlu0 %5709
    %5711 = vrot.lane.b32.xlu0 %v5673, 60
    %v5712 = vpop.permute.xlu0 %5711
    %5713 = vrot.lane.b32.xlu0 %v5674, 60
    %v5714 = vpop.permute.xlu0 %5713
    %5715 = vrot.lane.b32.xlu0 %v5675, 60
    %v5716 = vpop.permute.xlu0 %5715
    %5717 = vrot.lane.b32.xlu0 %v5676, 60
    %v5718 = vpop.permute.xlu0 %5717
    %5719 = vrot.lane.b32.xlu0 %v5677, 60
    %v5720 = vpop.permute.xlu0 %5719
    %5721 = vrot.lane.b32.xlu0 %v5678, 60
    %v5722 = vpop.permute.xlu0 %5721
    %5723 = vrot.lane.b32.xlu0 %v5679, 60
    %v5724 = vpop.permute.xlu0 %5723
    %5725 = vrot.lane.b32.xlu0 %v5680, 60
    %v5726 = vpop.permute.xlu0 %5725
    %5727 = vrot.lane.b32.xlu0 %v5681, 60
    %v5728 = vpop.permute.xlu0 %5727
    %5729 = vrot.lane.b32.xlu0 %v5682, 60
    %v5730 = vpop.permute.xlu0 %5729
    %5747 = vst.msk [vmem:[#allocation4] sm:$0xff] %vm2564, %v5700
    %5748 = vst.msk [vmem:[#allocation4 + $0x18] sm:$0xff] %vm2564, %v5702
    %5749 = vst.msk [vmem:[#allocation4 + $0x30] sm:$0xff] %vm2564, %v5704
    %5750 = vst.msk [vmem:[#allocation4 + $0x48] sm:$0xff] %vm2564, %v5706
    %5751 = vst.msk [vmem:[#allocation4 + $0x60] sm:$0xff] %vm2564, %v5708
    %5752 = vst.msk [vmem:[#allocation4 + $0x78] sm:$0xff] %vm2564, %v5710
    %5753 = vst.msk [vmem:[#allocation4 + $0x90] sm:$0xff] %vm2564, %v5712
    %5754 = vst.msk [vmem:[#allocation4 + $0xa8] sm:$0xff] %vm2564, %v5714
    %5755 = vst.msk [vmem:[#allocation4 + $0xc0] sm:$0xff] %vm2564, %v5716
    %5756 = vst.msk [vmem:[#allocation4 + $0xd8] sm:$0xff] %vm2564, %v5718
    %5757 = vst.msk [vmem:[#allocation4 + $0xf0] sm:$0xff] %vm2564, %v5720
    %5758 = vst.msk [vmem:[#allocation4 + $0x108] sm:$0xff] %vm2564, %v5722
    %5759 = vst.msk [vmem:[#allocation4 + $0x120] sm:$0xff] %vm2564, %v5724
    %5760 = vst.msk [vmem:[#allocation4 + $0x138] sm:$0xff] %vm2564, %v5726
    %5761 = vst.msk [vmem:[#allocation4 + $0x150] sm:$0xff] %vm2564, %v5728
    %5762 = vst.msk [vmem:[#allocation4 + $0x168] sm:$0xff] %vm2564, %v5730
    %v5763 = vld [vmem:[%s5666 + $0x1] sm:$0xff]
    %v5764 = vld [vmem:[%s5666 + $0x11] sm:$0xff]
    %v5765 = vld [vmem:[%s5666 + $0x21] sm:$0xff]
    %v5766 = vld [vmem:[%s5666 + $0x31] sm:$0xff]
    %v5767 = vld [vmem:[%s5666 + $0x41] sm:$0xff]
    %v5768 = vld [vmem:[%s5666 + $0x51] sm:$0xff]
    %v5769 = vld [vmem:[%s5666 + $0x61] sm:$0xff]
    %v5770 = vld [vmem:[%s5666 + $0x71] sm:$0xff]
    %v5771 = vld [vmem:[%s5666 + $0xc1] sm:$0xff]
    %v5772 = vld [vmem:[%s5666 + $0xd1] sm:$0xff]
    %v5773 = vld [vmem:[%s5666 + $0xe1] sm:$0xff]
    %v5774 = vld [vmem:[%s5666 + $0xf1] sm:$0xff]
    %v5775 = vld [vmem:[%s5666 + $0x101] sm:$0xff]
    %v5776 = vld [vmem:[%s5666 + $0x111] sm:$0xff]
    %v5777 = vld [vmem:[%s5666 + $0x121] sm:$0xff]
    %v5778 = vld [vmem:[%s5666 + $0x131] sm:$0xff]
    %5795 = vrot.lane.b32.xlu0 %v5763, 72
    %v5796 = vpop.permute.xlu0 %5795
    %5797 = vrot.lane.b32.xlu0 %v5764, 72
    %v5798 = vpop.permute.xlu0 %5797
    %5799 = vrot.lane.b32.xlu0 %v5765, 72
    %v5800 = vpop.permute.xlu0 %5799
    %5801 = vrot.lane.b32.xlu0 %v5766, 72
    %v5802 = vpop.permute.xlu0 %5801
    %5803 = vrot.lane.b32.xlu0 %v5767, 72
    %v5804 = vpop.permute.xlu0 %5803
    %5805 = vrot.lane.b32.xlu0 %v5768, 72
    %v5806 = vpop.permute.xlu0 %5805
    %5807 = vrot.lane.b32.xlu0 %v5769, 72
    %v5808 = vpop.permute.xlu0 %5807
    %5809 = vrot.lane.b32.xlu0 %v5770, 72
    %v5810 = vpop.permute.xlu0 %5809
    %5811 = vrot.lane.b32.xlu0 %v5771, 72
    %v5812 = vpop.permute.xlu0 %5811
    %5813 = vrot.lane.b32.xlu0 %v5772, 72
    %v5814 = vpop.permute.xlu0 %5813
    %5815 = vrot.lane.b32.xlu0 %v5773, 72
    %v5816 = vpop.permute.xlu0 %5815
    %5817 = vrot.lane.b32.xlu0 %v5774, 72
    %v5818 = vpop.permute.xlu0 %5817
    %5819 = vrot.lane.b32.xlu0 %v5775, 72
    %v5820 = vpop.permute.xlu0 %5819
    %5821 = vrot.lane.b32.xlu0 %v5776, 72
    %v5822 = vpop.permute.xlu0 %5821
    %5823 = vrot.lane.b32.xlu0 %v5777, 72
    %v5824 = vpop.permute.xlu0 %5823
    %5825 = vrot.lane.b32.xlu0 %v5778, 72
    %v5826 = vpop.permute.xlu0 %5825
    %5843 = vst.msk [vmem:[#allocation4] sm:$0xff] %vm2662, %v5796
    %5844 = vst.msk [vmem:[#allocation4 + $0x18] sm:$0xff] %vm2662, %v5798
    %5845 = vst.msk [vmem:[#allocation4 + $0x30] sm:$0xff] %vm2662, %v5800
    %5846 = vst.msk [vmem:[#allocation4 + $0x48] sm:$0xff] %vm2662, %v5802
    %5847 = vst.msk [vmem:[#allocation4 + $0x60] sm:$0xff] %vm2662, %v5804
    %5848 = vst.msk [vmem:[#allocation4 + $0x78] sm:$0xff] %vm2662, %v5806
    %5849 = vst.msk [vmem:[#allocation4 + $0x90] sm:$0xff] %vm2662, %v5808
    %5850 = vst.msk [vmem:[#allocation4 + $0xa8] sm:$0xff] %vm2662, %v5810
    %5851 = vst.msk [vmem:[#allocation4 + $0xc0] sm:$0xff] %vm2662, %v5812
    %5852 = vst.msk [vmem:[#allocation4 + $0xd8] sm:$0xff] %vm2662, %v5814
    %5853 = vst.msk [vmem:[#allocation4 + $0xf0] sm:$0xff] %vm2662, %v5816
    %5854 = vst.msk [vmem:[#allocation4 + $0x108] sm:$0xff] %vm2662, %v5818
    %5855 = vst.msk [vmem:[#allocation4 + $0x120] sm:$0xff] %vm2662, %v5820
    %5856 = vst.msk [vmem:[#allocation4 + $0x138] sm:$0xff] %vm2662, %v5822
    %5857 = vst.msk [vmem:[#allocation4 + $0x150] sm:$0xff] %vm2662, %v5824
    %5858 = vst.msk [vmem:[#allocation4 + $0x168] sm:$0xff] %vm2662, %v5826
    %v5859 = vld [vmem:[%s5666 + $0x2] sm:$0xff]
    %v5860 = vld [vmem:[%s5666 + $0x12] sm:$0xff]
    %v5861 = vld [vmem:[%s5666 + $0x22] sm:$0xff]
    %v5862 = vld [vmem:[%s5666 + $0x32] sm:$0xff]
    %v5863 = vld [vmem:[%s5666 + $0x42] sm:$0xff]
    %v5864 = vld [vmem:[%s5666 + $0x52] sm:$0xff]
    %v5865 = vld [vmem:[%s5666 + $0x62] sm:$0xff]
    %v5866 = vld [vmem:[%s5666 + $0x72] sm:$0xff]
    %v5867 = vld [vmem:[%s5666 + $0xc2] sm:$0xff]
    %v5868 = vld [vmem:[%s5666 + $0xd2] sm:$0xff]
    %v5869 = vld [vmem:[%s5666 + $0xe2] sm:$0xff]
    %v5870 = vld [vmem:[%s5666 + $0xf2] sm:$0xff]
    %v5871 = vld [vmem:[%s5666 + $0x102] sm:$0xff]
    %v5872 = vld [vmem:[%s5666 + $0x112] sm:$0xff]
    %v5873 = vld [vmem:[%s5666 + $0x122] sm:$0xff]
    %v5874 = vld [vmem:[%s5666 + $0x132] sm:$0xff]
    %5891 = vrot.lane.b32.xlu0 %v5859, 84
    %v5892 = vpop.permute.xlu0 %5891
    %5893 = vrot.lane.b32.xlu0 %v5860, 84
    %v5894 = vpop.permute.xlu0 %5893
    %5895 = vrot.lane.b32.xlu0 %v5861, 84
    %v5896 = vpop.permute.xlu0 %5895
    %5897 = vrot.lane.b32.xlu0 %v5862, 84
    %v5898 = vpop.permute.xlu0 %5897
    %5899 = vrot.lane.b32.xlu0 %v5863, 84
    %v5900 = vpop.permute.xlu0 %5899
    %5901 = vrot.lane.b32.xlu0 %v5864, 84
    %v5902 = vpop.permute.xlu0 %5901
    %5903 = vrot.lane.b32.xlu0 %v5865, 84
    %v5904 = vpop.permute.xlu0 %5903
    %5905 = vrot.lane.b32.xlu0 %v5866, 84
    %v5906 = vpop.permute.xlu0 %5905
    %5907 = vrot.lane.b32.xlu0 %v5867, 84
    %v5908 = vpop.permute.xlu0 %5907
    %5909 = vrot.lane.b32.xlu0 %v5868, 84
    %v5910 = vpop.permute.xlu0 %5909
    %5911 = vrot.lane.b32.xlu0 %v5869, 84
    %v5912 = vpop.permute.xlu0 %5911
    %5913 = vrot.lane.b32.xlu0 %v5870, 84
    %v5914 = vpop.permute.xlu0 %5913
    %5915 = vrot.lane.b32.xlu0 %v5871, 84
    %v5916 = vpop.permute.xlu0 %5915
    %5917 = vrot.lane.b32.xlu0 %v5872, 84
    %v5918 = vpop.permute.xlu0 %5917
    %5919 = vrot.lane.b32.xlu0 %v5873, 84
    %v5920 = vpop.permute.xlu0 %5919
    %5921 = vrot.lane.b32.xlu0 %v5874, 84
    %v5922 = vpop.permute.xlu0 %5921
    %5939 = vst.msk [vmem:[#allocation4] sm:$0xff] %vm2759, %v5892
    %5940 = vst.msk [vmem:[#allocation4 + $0x18] sm:$0xff] %vm2759, %v5894
    %5941 = vst.msk [vmem:[#allocation4 + $0x30] sm:$0xff] %vm2759, %v5896
    %5942 = vst.msk [vmem:[#allocation4 + $0x48] sm:$0xff] %vm2759, %v5898
    %5943 = vst.msk [vmem:[#allocation4 + $0x60] sm:$0xff] %vm2759, %v5900
    %5944 = vst.msk [vmem:[#allocation4 + $0x78] sm:$0xff] %vm2759, %v5902
    %5945 = vst.msk [vmem:[#allocation4 + $0x90] sm:$0xff] %vm2759, %v5904
    %5946 = vst.msk [vmem:[#allocation4 + $0xa8] sm:$0xff] %vm2759, %v5906
    %5947 = vst.msk [vmem:[#allocation4 + $0xc0] sm:$0xff] %vm2759, %v5908
    %5948 = vst.msk [vmem:[#allocation4 + $0xd8] sm:$0xff] %vm2759, %v5910
    %5949 = vst.msk [vmem:[#allocation4 + $0xf0] sm:$0xff] %vm2759, %v5912
    %5950 = vst.msk [vmem:[#allocation4 + $0x108] sm:$0xff] %vm2759, %v5914
    %5951 = vst.msk [vmem:[#allocation4 + $0x120] sm:$0xff] %vm2759, %v5916
    %5952 = vst.msk [vmem:[#allocation4 + $0x138] sm:$0xff] %vm2759, %v5918
    %5953 = vst.msk [vmem:[#allocation4 + $0x150] sm:$0xff] %vm2759, %v5920
    %5954 = vst.msk [vmem:[#allocation4 + $0x168] sm:$0xff] %vm2759, %v5922
    %v5955 = vld [vmem:[%s5666 + $0x3] sm:$0xff]
    %v5956 = vld [vmem:[%s5666 + $0x13] sm:$0xff]
    %v5957 = vld [vmem:[%s5666 + $0x23] sm:$0xff]
    %v5958 = vld [vmem:[%s5666 + $0x33] sm:$0xff]
    %v5959 = vld [vmem:[%s5666 + $0x43] sm:$0xff]
    %v5960 = vld [vmem:[%s5666 + $0x53] sm:$0xff]
    %v5961 = vld [vmem:[%s5666 + $0x63] sm:$0xff]
    %v5962 = vld [vmem:[%s5666 + $0x73] sm:$0xff]
    %v5963 = vld [vmem:[%s5666 + $0xc3] sm:$0xff]
    %v5964 = vld [vmem:[%s5666 + $0xd3] sm:$0xff]
    %v5965 = vld [vmem:[%s5666 + $0xe3] sm:$0xff]
    %v5966 = vld [vmem:[%s5666 + $0xf3] sm:$0xff]
    %v5967 = vld [vmem:[%s5666 + $0x103] sm:$0xff]
    %v5968 = vld [vmem:[%s5666 + $0x113] sm:$0xff]
    %v5969 = vld [vmem:[%s5666 + $0x123] sm:$0xff]
    %v5970 = vld [vmem:[%s5666 + $0x133] sm:$0xff]
    %5987 = vrot.lane.b32.xlu0 %v5955, 96
    %v5988 = vpop.permute.xlu0 %5987
    %5989 = vrot.lane.b32.xlu0 %v5956, 96
    %v5990 = vpop.permute.xlu0 %5989
    %5991 = vrot.lane.b32.xlu0 %v5957, 96
    %v5992 = vpop.permute.xlu0 %5991
    %5993 = vrot.lane.b32.xlu0 %v5958, 96
    %v5994 = vpop.permute.xlu0 %5993
    %5995 = vrot.lane.b32.xlu0 %v5959, 96
    %v5996 = vpop.permute.xlu0 %5995
    %5997 = vrot.lane.b32.xlu0 %v5960, 96
    %v5998 = vpop.permute.xlu0 %5997
    %5999 = vrot.lane.b32.xlu0 %v5961, 96
    %v6000 = vpop.permute.xlu0 %5999
    %6001 = vrot.lane.b32.xlu0 %v5962, 96
    %v6002 = vpop.permute.xlu0 %6001
    %6003 = vrot.lane.b32.xlu0 %v5963, 96
    %v6004 = vpop.permute.xlu0 %6003
    %6005 = vrot.lane.b32.xlu0 %v5964, 96
    %v6006 = vpop.permute.xlu0 %6005
    %6007 = vrot.lane.b32.xlu0 %v5965, 96
    %v6008 = vpop.permute.xlu0 %6007
    %6009 = vrot.lane.b32.xlu0 %v5966, 96
    %v6010 = vpop.permute.xlu0 %6009
    %6011 = vrot.lane.b32.xlu0 %v5967, 96
    %v6012 = vpop.permute.xlu0 %6011
    %6013 = vrot.lane.b32.xlu0 %v5968, 96
    %v6014 = vpop.permute.xlu0 %6013
    %6015 = vrot.lane.b32.xlu0 %v5969, 96
    %v6016 = vpop.permute.xlu0 %6015
    %6017 = vrot.lane.b32.xlu0 %v5970, 96
    %v6018 = vpop.permute.xlu0 %6017
    %6035 = vst.msk [vmem:[#allocation4] sm:$0xff] %vm2856, %v5988
    %6036 = vst.msk [vmem:[#allocation4 + $0x18] sm:$0xff] %vm2856, %v5990
    %6037 = vst.msk [vmem:[#allocation4 + $0x30] sm:$0xff] %vm2856, %v5992
    %6038 = vst.msk [vmem:[#allocation4 + $0x48] sm:$0xff] %vm2856, %v5994
    %6039 = vst.msk [vmem:[#allocation4 + $0x60] sm:$0xff] %vm2856, %v5996
    %6040 = vst.msk [vmem:[#allocation4 + $0x78] sm:$0xff] %vm2856, %v5998
    %6041 = vst.msk [vmem:[#allocation4 + $0x90] sm:$0xff] %vm2856, %v6000
    %6042 = vst.msk [vmem:[#allocation4 + $0xa8] sm:$0xff] %vm2856, %v6002
    %6043 = vst.msk [vmem:[#allocation4 + $0xc0] sm:$0xff] %vm2856, %v6004
    %6044 = vst.msk [vmem:[#allocation4 + $0xd8] sm:$0xff] %vm2856, %v6006
    %6045 = vst.msk [vmem:[#allocation4 + $0xf0] sm:$0xff] %vm2856, %v6008
    %6046 = vst.msk [vmem:[#allocation4 + $0x108] sm:$0xff] %vm2856, %v6010
    %6047 = vst.msk [vmem:[#allocation4 + $0x120] sm:$0xff] %vm2856, %v6012
    %6048 = vst.msk [vmem:[#allocation4 + $0x138] sm:$0xff] %vm2856, %v6014
    %6049 = vst.msk [vmem:[#allocation4 + $0x150] sm:$0xff] %vm2856, %v6016
    %6050 = vst.msk [vmem:[#allocation4 + $0x168] sm:$0xff] %vm2856, %v6018
    %v6051 = vld [vmem:[%s5666 + $0x4] sm:$0xff]
    %v6052 = vld [vmem:[%s5666 + $0x14] sm:$0xff]
    %v6053 = vld [vmem:[%s5666 + $0x24] sm:$0xff]
    %v6054 = vld [vmem:[%s5666 + $0x34] sm:$0xff]
    %v6055 = vld [vmem:[%s5666 + $0x44] sm:$0xff]
    %v6056 = vld [vmem:[%s5666 + $0x54] sm:$0xff]
    %v6057 = vld [vmem:[%s5666 + $0x64] sm:$0xff]
    %v6058 = vld [vmem:[%s5666 + $0x74] sm:$0xff]
    %v6059 = vld [vmem:[%s5666 + $0xc4] sm:$0xff]
    %v6060 = vld [vmem:[%s5666 + $0xd4] sm:$0xff]
    %v6061 = vld [vmem:[%s5666 + $0xe4] sm:$0xff]
    %v6062 = vld [vmem:[%s5666 + $0xf4] sm:$0xff]
    %v6063 = vld [vmem:[%s5666 + $0x104] sm:$0xff]
    %v6064 = vld [vmem:[%s5666 + $0x114] sm:$0xff]
    %v6065 = vld [vmem:[%s5666 + $0x124] sm:$0xff]
    %v6066 = vld [vmem:[%s5666 + $0x134] sm:$0xff]
    %6083 = vrot.lane.b32.xlu0 %v6051, 108
    %v6084 = vpop.permute.xlu0 %6083
    %6085 = vrot.lane.b32.xlu0 %v6052, 108
    %v6086 = vpop.permute.xlu0 %6085
    %6087 = vrot.lane.b32.xlu0 %v6053, 108
    %v6088 = vpop.permute.xlu0 %6087
    %6089 = vrot.lane.b32.xlu0 %v6054, 108
    %v6090 = vpop.permute.xlu0 %6089
    %6091 = vrot.lane.b32.xlu0 %v6055, 108
    %v6092 = vpop.permute.xlu0 %6091
    %6093 = vrot.lane.b32.xlu0 %v6056, 108
    %v6094 = vpop.permute.xlu0 %6093
    %6095 = vrot.lane.b32.xlu0 %v6057, 108
    %v6096 = vpop.permute.xlu0 %6095
    %6097 = vrot.lane.b32.xlu0 %v6058, 108
    %v6098 = vpop.permute.xlu0 %6097
    %6099 = vrot.lane.b32.xlu0 %v6059, 108
    %v6100 = vpop.permute.xlu0 %6099
    %6101 = vrot.lane.b32.xlu0 %v6060, 108
    %v6102 = vpop.permute.xlu0 %6101
    %6103 = vrot.lane.b32.xlu0 %v6061, 108
    %v6104 = vpop.permute.xlu0 %6103
    %6105 = vrot.lane.b32.xlu0 %v6062, 108
    %v6106 = vpop.permute.xlu0 %6105
    %6107 = vrot.lane.b32.xlu0 %v6063, 108
    %v6108 = vpop.permute.xlu0 %6107
    %6109 = vrot.lane.b32.xlu0 %v6064, 108
    %v6110 = vpop.permute.xlu0 %6109
    %6111 = vrot.lane.b32.xlu0 %v6065, 108
    %v6112 = vpop.permute.xlu0 %6111
    %6113 = vrot.lane.b32.xlu0 %v6066, 108
    %v6114 = vpop.permute.xlu0 %6113
    %6131 = vst.msk [vmem:[#allocation4] sm:$0xff] %vm2953, %v6084
    %6132 = vst.msk [vmem:[#allocation4 + $0x18] sm:$0xff] %vm2953, %v6086
    %6133 = vst.msk [vmem:[#allocation4 + $0x30] sm:$0xff] %vm2953, %v6088
    %6134 = vst.msk [vmem:[#allocation4 + $0x48] sm:$0xff] %vm2953, %v6090
    %6135 = vst.msk [vmem:[#allocation4 + $0x60] sm:$0xff] %vm2953, %v6092
    %6136 = vst.msk [vmem:[#allocation4 + $0x78] sm:$0xff] %vm2953, %v6094
    %6137 = vst.msk [vmem:[#allocation4 + $0x90] sm:$0xff] %vm2953, %v6096
    %6138 = vst.msk [vmem:[#allocation4 + $0xa8] sm:$0xff] %vm2953, %v6098
    %6139 = vst.msk [vmem:[#allocation4 + $0xc0] sm:$0xff] %vm2953, %v6100
    %6140 = vst.msk [vmem:[#allocation4 + $0xd8] sm:$0xff] %vm2953, %v6102
    %6141 = vst.msk [vmem:[#allocation4 + $0xf0] sm:$0xff] %vm2953, %v6104
    %6142 = vst.msk [vmem:[#allocation4 + $0x108] sm:$0xff] %vm2953, %v6106
    %6143 = vst.msk [vmem:[#allocation4 + $0x120] sm:$0xff] %vm2953, %v6108
    %6144 = vst.msk [vmem:[#allocation4 + $0x138] sm:$0xff] %vm2953, %v6110
    %6145 = vst.msk [vmem:[#allocation4 + $0x150] sm:$0xff] %vm2953, %v6112
    %6146 = vst.msk [vmem:[#allocation4 + $0x168] sm:$0xff] %vm2953, %v6114
    %v6147 = vld [vmem:[%s5233] sm:$0xff]
    %v6148 = vld [vmem:[%s5233 + $0x10] sm:$0xff]
    %v6149 = vld [vmem:[%s5233 + $0x20] sm:$0xff]
    %v6150 = vld [vmem:[%s5233 + $0x30] sm:$0xff]
    %v6151 = vld [vmem:[%s5233 + $0x40] sm:$0xff]
    %v6152 = vld [vmem:[%s5233 + $0x50] sm:$0xff]
    %v6153 = vld [vmem:[%s5233 + $0x60] sm:$0xff]
    %v6154 = vld [vmem:[%s5233 + $0x70] sm:$0xff]
    %v6155 = vld [vmem:[%s5233 + $0xc0] sm:$0xff]
    %v6156 = vld [vmem:[%s5233 + $0xd0] sm:$0xff]
    %v6157 = vld [vmem:[%s5233 + $0xe0] sm:$0xff]
    %v6158 = vld [vmem:[%s5233 + $0xf0] sm:$0xff]
    %v6159 = vld [vmem:[%s5233 + $0x100] sm:$0xff]
    %v6160 = vld [vmem:[%s5233 + $0x110] sm:$0xff]
    %v6161 = vld [vmem:[%s5233 + $0x120] sm:$0xff]
    %v6162 = vld [vmem:[%s5233 + $0x130] sm:$0xff]
    %6179 = vrot.lane.b32.xlu0 %v6147, 120
    %v6180 = vpop.permute.xlu0 %6179
    %6181 = vrot.lane.b32.xlu0 %v6148, 120
    %v6182 = vpop.permute.xlu0 %6181
    %6183 = vrot.lane.b32.xlu0 %v6149, 120
    %v6184 = vpop.permute.xlu0 %6183
    %6185 = vrot.lane.b32.xlu0 %v6150, 120
    %v6186 = vpop.permute.xlu0 %6185
    %6187 = vrot.lane.b32.xlu0 %v6151, 120
    %v6188 = vpop.permute.xlu0 %6187
    %6189 = vrot.lane.b32.xlu0 %v6152, 120
    %v6190 = vpop.permute.xlu0 %6189
    %6191 = vrot.lane.b32.xlu0 %v6153, 120
    %v6192 = vpop.permute.xlu0 %6191
    %6193 = vrot.lane.b32.xlu0 %v6154, 120
    %v6194 = vpop.permute.xlu0 %6193
    %6195 = vrot.lane.b32.xlu0 %v6155, 120
    %v6196 = vpop.permute.xlu0 %6195
    %6197 = vrot.lane.b32.xlu0 %v6156, 120
    %v6198 = vpop.permute.xlu0 %6197
    %6199 = vrot.lane.b32.xlu0 %v6157, 120
    %v6200 = vpop.permute.xlu0 %6199
    %6201 = vrot.lane.b32.xlu0 %v6158, 120
    %v6202 = vpop.permute.xlu0 %6201
    %6203 = vrot.lane.b32.xlu0 %v6159, 120
    %v6204 = vpop.permute.xlu0 %6203
    %6205 = vrot.lane.b32.xlu0 %v6160, 120
    %v6206 = vpop.permute.xlu0 %6205
    %6207 = vrot.lane.b32.xlu0 %v6161, 120
    %v6208 = vpop.permute.xlu0 %6207
    %6209 = vrot.lane.b32.xlu0 %v6162, 120
    %v6210 = vpop.permute.xlu0 %6209
    %6227 = vst.msk [vmem:[#allocation4] sm:$0xff] %vm3050, %v6180
    %6228 = vst.msk [vmem:[#allocation4 + $0x8] sm:$0xff] %vm3052, %v6180
    %6229 = vst.msk [vmem:[#allocation4 + $0x18] sm:$0xff] %vm3050, %v6182
    %6230 = vst.msk [vmem:[#allocation4 + $0x20] sm:$0xff] %vm3052, %v6182
    %6231 = vst.msk [vmem:[#allocation4 + $0x30] sm:$0xff] %vm3050, %v6184
    %6232 = vst.msk [vmem:[#allocation4 + $0x38] sm:$0xff] %vm3052, %v6184
    %6233 = vst.msk [vmem:[#allocation4 + $0x48] sm:$0xff] %vm3050, %v6186
    %6234 = vst.msk [vmem:[#allocation4 + $0x50] sm:$0xff] %vm3052, %v6186
    %6235 = vst.msk [vmem:[#allocation4 + $0x60] sm:$0xff] %vm3050, %v6188
    %6236 = vst.msk [vmem:[#allocation4 + $0x68] sm:$0xff] %vm3052, %v6188
    %6237 = vst.msk [vmem:[#allocation4 + $0x78] sm:$0xff] %vm3050, %v6190
    %6238 = vst.msk [vmem:[#allocation4 + $0x80] sm:$0xff] %vm3052, %v6190
    %6239 = vst.msk [vmem:[#allocation4 + $0x90] sm:$0xff] %vm3050, %v6192
    %6240 = vst.msk [vmem:[#allocation4 + $0x98] sm:$0xff] %vm3052, %v6192
    %6241 = vst.msk [vmem:[#allocation4 + $0xa8] sm:$0xff] %vm3050, %v6194
    %6242 = vst.msk [vmem:[#allocation4 + $0xb0] sm:$0xff] %vm3052, %v6194
    %6243 = vst.msk [vmem:[#allocation4 + $0xc0] sm:$0xff] %vm3050, %v6196
    %6244 = vst.msk [vmem:[#allocation4 + $0xc8] sm:$0xff] %vm3052, %v6196
    %6245 = vst.msk [vmem:[#allocation4 + $0xd8] sm:$0xff] %vm3050, %v6198
    %6246 = vst.msk [vmem:[#allocation4 + $0xe0] sm:$0xff] %vm3052, %v6198
    %6247 = vst.msk [vmem:[#allocation4 + $0xf0] sm:$0xff] %vm3050, %v6200
    %6248 = vst.msk [vmem:[#allocation4 + $0xf8] sm:$0xff] %vm3052, %v6200
    %6249 = vst.msk [vmem:[#allocation4 + $0x108] sm:$0xff] %vm3050, %v6202
    %6250 = vst.msk [vmem:[#allocation4 + $0x110] sm:$0xff] %vm3052, %v6202
    %6251 = vst.msk [vmem:[#allocation4 + $0x120] sm:$0xff] %vm3050, %v6204
    %6252 = vst.msk [vmem:[#allocation4 + $0x128] sm:$0xff] %vm3052, %v6204
    %6253 = vst.msk [vmem:[#allocation4 + $0x138] sm:$0xff] %vm3050, %v6206
    %6254 = vst.msk [vmem:[#allocation4 + $0x140] sm:$0xff] %vm3052, %v6206
    %6255 = vst.msk [vmem:[#allocation4 + $0x150] sm:$0xff] %vm3050, %v6208
    %6256 = vst.msk [vmem:[#allocation4 + $0x158] sm:$0xff] %vm3052, %v6208
    %6257 = vst.msk [vmem:[#allocation4 + $0x168] sm:$0xff] %vm3050, %v6210
    %6258 = vst.msk [vmem:[#allocation4 + $0x170] sm:$0xff] %vm3052, %v6210
    %v6259 = vld [vmem:[%s5233 + $0x1] sm:$0xff]
    %v6260 = vld [vmem:[%s5233 + $0x11] sm:$0xff]
    %v6261 = vld [vmem:[%s5233 + $0x21] sm:$0xff]
    %v6262 = vld [vmem:[%s5233 + $0x31] sm:$0xff]
    %v6263 = vld [vmem:[%s5233 + $0x41] sm:$0xff]
    %v6264 = vld [vmem:[%s5233 + $0x51] sm:$0xff]
    %v6265 = vld [vmem:[%s5233 + $0x61] sm:$0xff]
    %v6266 = vld [vmem:[%s5233 + $0x71] sm:$0xff]
    %v6267 = vld [vmem:[%s5233 + $0xc1] sm:$0xff]
    %v6268 = vld [vmem:[%s5233 + $0xd1] sm:$0xff]
    %v6269 = vld [vmem:[%s5233 + $0xe1] sm:$0xff]
    %v6270 = vld [vmem:[%s5233 + $0xf1] sm:$0xff]
    %v6271 = vld [vmem:[%s5233 + $0x101] sm:$0xff]
    %v6272 = vld [vmem:[%s5233 + $0x111] sm:$0xff]
    %v6273 = vld [vmem:[%s5233 + $0x121] sm:$0xff]
    %v6274 = vld [vmem:[%s5233 + $0x131] sm:$0xff]
    %6291 = vrot.lane.b32.xlu0 %v6259, 4
    %v6292 = vpop.permute.xlu0 %6291
    %6293 = vrot.lane.b32.xlu0 %v6260, 4
    %v6294 = vpop.permute.xlu0 %6293
    %6295 = vrot.lane.b32.xlu0 %v6261, 4
    %v6296 = vpop.permute.xlu0 %6295
    %6297 = vrot.lane.b32.xlu0 %v6262, 4
    %v6298 = vpop.permute.xlu0 %6297
    %6299 = vrot.lane.b32.xlu0 %v6263, 4
    %v6300 = vpop.permute.xlu0 %6299
    %6301 = vrot.lane.b32.xlu0 %v6264, 4
    %v6302 = vpop.permute.xlu0 %6301
    %6303 = vrot.lane.b32.xlu0 %v6265, 4
    %v6304 = vpop.permute.xlu0 %6303
    %6305 = vrot.lane.b32.xlu0 %v6266, 4
    %v6306 = vpop.permute.xlu0 %6305
    %6307 = vrot.lane.b32.xlu0 %v6267, 4
    %v6308 = vpop.permute.xlu0 %6307
    %6309 = vrot.lane.b32.xlu0 %v6268, 4
    %v6310 = vpop.permute.xlu0 %6309
    %6311 = vrot.lane.b32.xlu0 %v6269, 4
    %v6312 = vpop.permute.xlu0 %6311
    %6313 = vrot.lane.b32.xlu0 %v6270, 4
    %v6314 = vpop.permute.xlu0 %6313
    %6315 = vrot.lane.b32.xlu0 %v6271, 4
    %v6316 = vpop.permute.xlu0 %6315
    %6317 = vrot.lane.b32.xlu0 %v6272, 4
    %v6318 = vpop.permute.xlu0 %6317
    %6319 = vrot.lane.b32.xlu0 %v6273, 4
    %v6320 = vpop.permute.xlu0 %6319
    %6321 = vrot.lane.b32.xlu0 %v6274, 4
    %v6322 = vpop.permute.xlu0 %6321
    %6339 = vst.msk [vmem:[#allocation4 + $0x8] sm:$0xff] %vm3164, %v6292
    %6340 = vst.msk [vmem:[#allocation4 + $0x20] sm:$0xff] %vm3164, %v6294
    %6341 = vst.msk [vmem:[#allocation4 + $0x38] sm:$0xff] %vm3164, %v6296
    %6342 = vst.msk [vmem:[#allocation4 + $0x50] sm:$0xff] %vm3164, %v6298
    %6343 = vst.msk [vmem:[#allocation4 + $0x68] sm:$0xff] %vm3164, %v6300
    %6344 = vst.msk [vmem:[#allocation4 + $0x80] sm:$0xff] %vm3164, %v6302
    %6345 = vst.msk [vmem:[#allocation4 + $0x98] sm:$0xff] %vm3164, %v6304
    %6346 = vst.msk [vmem:[#allocation4 + $0xb0] sm:$0xff] %vm3164, %v6306
    %6347 = vst.msk [vmem:[#allocation4 + $0xc8] sm:$0xff] %vm3164, %v6308
    %6348 = vst.msk [vmem:[#allocation4 + $0xe0] sm:$0xff] %vm3164, %v6310
    %6349 = vst.msk [vmem:[#allocation4 + $0xf8] sm:$0xff] %vm3164, %v6312
    %6350 = vst.msk [vmem:[#allocation4 + $0x110] sm:$0xff] %vm3164, %v6314
    %6351 = vst.msk [vmem:[#allocation4 + $0x128] sm:$0xff] %vm3164, %v6316
    %6352 = vst.msk [vmem:[#allocation4 + $0x140] sm:$0xff] %vm3164, %v6318
    %6353 = vst.msk [vmem:[#allocation4 + $0x158] sm:$0xff] %vm3164, %v6320
    %6354 = vst.msk [vmem:[#allocation4 + $0x170] sm:$0xff] %vm3164, %v6322
    %v6355 = vld [vmem:[%s5233 + $0x2] sm:$0xff]
    %v6356 = vld [vmem:[%s5233 + $0x12] sm:$0xff]
    %v6357 = vld [vmem:[%s5233 + $0x22] sm:$0xff]
    %v6358 = vld [vmem:[%s5233 + $0x32] sm:$0xff]
    %v6359 = vld [vmem:[%s5233 + $0x42] sm:$0xff]
    %v6360 = vld [vmem:[%s5233 + $0x52] sm:$0xff]
    %v6361 = vld [vmem:[%s5233 + $0x62] sm:$0xff]
    %v6362 = vld [vmem:[%s5233 + $0x72] sm:$0xff]
    %v6363 = vld [vmem:[%s5233 + $0xc2] sm:$0xff]
    %v6364 = vld [vmem:[%s5233 + $0xd2] sm:$0xff]
    %v6365 = vld [vmem:[%s5233 + $0xe2] sm:$0xff]
    %v6366 = vld [vmem:[%s5233 + $0xf2] sm:$0xff]
    %v6367 = vld [vmem:[%s5233 + $0x102] sm:$0xff]
    %v6368 = vld [vmem:[%s5233 + $0x112] sm:$0xff]
    %v6369 = vld [vmem:[%s5233 + $0x122] sm:$0xff]
    %v6370 = vld [vmem:[%s5233 + $0x132] sm:$0xff]
    %6387 = vrot.lane.b32.xlu0 %v6355, 16
    %v6388 = vpop.permute.xlu0 %6387
    %6389 = vrot.lane.b32.xlu0 %v6356, 16
    %v6390 = vpop.permute.xlu0 %6389
    %6391 = vrot.lane.b32.xlu0 %v6357, 16
    %v6392 = vpop.permute.xlu0 %6391
    %6393 = vrot.lane.b32.xlu0 %v6358, 16
    %v6394 = vpop.permute.xlu0 %6393
    %6395 = vrot.lane.b32.xlu0 %v6359, 16
    %v6396 = vpop.permute.xlu0 %6395
    %6397 = vrot.lane.b32.xlu0 %v6360, 16
    %v6398 = vpop.permute.xlu0 %6397
    %6399 = vrot.lane.b32.xlu0 %v6361, 16
    %v6400 = vpop.permute.xlu0 %6399
    %6401 = vrot.lane.b32.xlu0 %v6362, 16
    %v6402 = vpop.permute.xlu0 %6401
    %6403 = vrot.lane.b32.xlu0 %v6363, 16
    %v6404 = vpop.permute.xlu0 %6403
    %6405 = vrot.lane.b32.xlu0 %v6364, 16
    %v6406 = vpop.permute.xlu0 %6405
    %6407 = vrot.lane.b32.xlu0 %v6365, 16
    %v6408 = vpop.permute.xlu0 %6407
    %6409 = vrot.lane.b32.xlu0 %v6366, 16
    %v6410 = vpop.permute.xlu0 %6409
    %6411 = vrot.lane.b32.xlu0 %v6367, 16
    %v6412 = vpop.permute.xlu0 %6411
    %6413 = vrot.lane.b32.xlu0 %v6368, 16
    %v6414 = vpop.permute.xlu0 %6413
    %6415 = vrot.lane.b32.xlu0 %v6369, 16
    %v6416 = vpop.permute.xlu0 %6415
    %6417 = vrot.lane.b32.xlu0 %v6370, 16
    %v6418 = vpop.permute.xlu0 %6417
    %6435 = vst.msk [vmem:[#allocation4 + $0x8] sm:$0xff] %vm3261, %v6388
    %6436 = vst.msk [vmem:[#allocation4 + $0x20] sm:$0xff] %vm3261, %v6390
    %6437 = vst.msk [vmem:[#allocation4 + $0x38] sm:$0xff] %vm3261, %v6392
    %6438 = vst.msk [vmem:[#allocation4 + $0x50] sm:$0xff] %vm3261, %v6394
    %6439 = vst.msk [vmem:[#allocation4 + $0x68] sm:$0xff] %vm3261, %v6396
    %6440 = vst.msk [vmem:[#allocation4 + $0x80] sm:$0xff] %vm3261, %v6398
    %6441 = vst.msk [vmem:[#allocation4 + $0x98] sm:$0xff] %vm3261, %v6400
    %6442 = vst.msk [vmem:[#allocation4 + $0xb0] sm:$0xff] %vm3261, %v6402
    %6443 = vst.msk [vmem:[#allocation4 + $0xc8] sm:$0xff] %vm3261, %v6404
    %6444 = vst.msk [vmem:[#allocation4 + $0xe0] sm:$0xff] %vm3261, %v6406
    %6445 = vst.msk [vmem:[#allocation4 + $0xf8] sm:$0xff] %vm3261, %v6408
    %6446 = vst.msk [vmem:[#allocation4 + $0x110] sm:$0xff] %vm3261, %v6410
    %6447 = vst.msk [vmem:[#allocation4 + $0x128] sm:$0xff] %vm3261, %v6412
    %6448 = vst.msk [vmem:[#allocation4 + $0x140] sm:$0xff] %vm3261, %v6414
    %6449 = vst.msk [vmem:[#allocation4 + $0x158] sm:$0xff] %vm3261, %v6416
    %6450 = vst.msk [vmem:[#allocation4 + $0x170] sm:$0xff] %vm3261, %v6418
    %v6451 = vld [vmem:[%s5233 + $0x3] sm:$0xff]
    %v6452 = vld [vmem:[%s5233 + $0x13] sm:$0xff]
    %v6453 = vld [vmem:[%s5233 + $0x23] sm:$0xff]
    %v6454 = vld [vmem:[%s5233 + $0x33] sm:$0xff]
    %v6455 = vld [vmem:[%s5233 + $0x43] sm:$0xff]
    %v6456 = vld [vmem:[%s5233 + $0x53] sm:$0xff]
    %v6457 = vld [vmem:[%s5233 + $0x63] sm:$0xff]
    %v6458 = vld [vmem:[%s5233 + $0x73] sm:$0xff]
    %v6459 = vld [vmem:[%s5233 + $0xc3] sm:$0xff]
    %v6460 = vld [vmem:[%s5233 + $0xd3] sm:$0xff]
    %v6461 = vld [vmem:[%s5233 + $0xe3] sm:$0xff]
    %v6462 = vld [vmem:[%s5233 + $0xf3] sm:$0xff]
    %v6463 = vld [vmem:[%s5233 + $0x103] sm:$0xff]
    %v6464 = vld [vmem:[%s5233 + $0x113] sm:$0xff]
    %v6465 = vld [vmem:[%s5233 + $0x123] sm:$0xff]
    %v6466 = vld [vmem:[%s5233 + $0x133] sm:$0xff]
    %6483 = vrot.lane.b32.xlu0 %v6451, 28
    %v6484 = vpop.permute.xlu0 %6483
    %6485 = vrot.lane.b32.xlu0 %v6452, 28
    %v6486 = vpop.permute.xlu0 %6485
    %6487 = vrot.lane.b32.xlu0 %v6453, 28
    %v6488 = vpop.permute.xlu0 %6487
    %6489 = vrot.lane.b32.xlu0 %v6454, 28
    %v6490 = vpop.permute.xlu0 %6489
    %6491 = vrot.lane.b32.xlu0 %v6455, 28
    %v6492 = vpop.permute.xlu0 %6491
    %6493 = vrot.lane.b32.xlu0 %v6456, 28
    %v6494 = vpop.permute.xlu0 %6493
    %6495 = vrot.lane.b32.xlu0 %v6457, 28
    %v6496 = vpop.permute.xlu0 %6495
    %6497 = vrot.lane.b32.xlu0 %v6458, 28
    %v6498 = vpop.permute.xlu0 %6497
    %6499 = vrot.lane.b32.xlu0 %v6459, 28
    %v6500 = vpop.permute.xlu0 %6499
    %6501 = vrot.lane.b32.xlu0 %v6460, 28
    %v6502 = vpop.permute.xlu0 %6501
    %6503 = vrot.lane.b32.xlu0 %v6461, 28
    %v6504 = vpop.permute.xlu0 %6503
    %6505 = vrot.lane.b32.xlu0 %v6462, 28
    %v6506 = vpop.permute.xlu0 %6505
    %6507 = vrot.lane.b32.xlu0 %v6463, 28
    %v6508 = vpop.permute.xlu0 %6507
    %6509 = vrot.lane.b32.xlu0 %v6464, 28
    %v6510 = vpop.permute.xlu0 %6509
    %6511 = vrot.lane.b32.xlu0 %v6465, 28
    %v6512 = vpop.permute.xlu0 %6511
    %6513 = vrot.lane.b32.xlu0 %v6466, 28
    %v6514 = vpop.permute.xlu0 %6513
    %6531 = vst.msk [vmem:[#allocation4 + $0x8] sm:$0xff] %vm3358, %v6484
    %6532 = vst.msk [vmem:[#allocation4 + $0x20] sm:$0xff] %vm3358, %v6486
    %6533 = vst.msk [vmem:[#allocation4 + $0x38] sm:$0xff] %vm3358, %v6488
    %6534 = vst.msk [vmem:[#allocation4 + $0x50] sm:$0xff] %vm3358, %v6490
    %6535 = vst.msk [vmem:[#allocation4 + $0x68] sm:$0xff] %vm3358, %v6492
    %6536 = vst.msk [vmem:[#allocation4 + $0x80] sm:$0xff] %vm3358, %v6494
    %6537 = vst.msk [vmem:[#allocation4 + $0x98] sm:$0xff] %vm3358, %v6496
    %6538 = vst.msk [vmem:[#allocation4 + $0xb0] sm:$0xff] %vm3358, %v6498
    %6539 = vst.msk [vmem:[#allocation4 + $0xc8] sm:$0xff] %vm3358, %v6500
    %6540 = vst.msk [vmem:[#allocation4 + $0xe0] sm:$0xff] %vm3358, %v6502
    %6541 = vst.msk [vmem:[#allocation4 + $0xf8] sm:$0xff] %vm3358, %v6504
    %6542 = vst.msk [vmem:[#allocation4 + $0x110] sm:$0xff] %vm3358, %v6506
    %6543 = vst.msk [vmem:[#allocation4 + $0x128] sm:$0xff] %vm3358, %v6508
    %6544 = vst.msk [vmem:[#allocation4 + $0x140] sm:$0xff] %vm3358, %v6510
    %6545 = vst.msk [vmem:[#allocation4 + $0x158] sm:$0xff] %vm3358, %v6512
    %6546 = vst.msk [vmem:[#allocation4 + $0x170] sm:$0xff] %vm3358, %v6514
    %v6547 = vld [vmem:[%s5233 + $0x4] sm:$0xff]
    %v6548 = vld [vmem:[%s5233 + $0x14] sm:$0xff]
    %v6549 = vld [vmem:[%s5233 + $0x24] sm:$0xff]
    %v6550 = vld [vmem:[%s5233 + $0x34] sm:$0xff]
    %v6551 = vld [vmem:[%s5233 + $0x44] sm:$0xff]
    %v6552 = vld [vmem:[%s5233 + $0x54] sm:$0xff]
    %v6553 = vld [vmem:[%s5233 + $0x64] sm:$0xff]
    %v6554 = vld [vmem:[%s5233 + $0x74] sm:$0xff]
    %v6555 = vld [vmem:[%s5233 + $0xc4] sm:$0xff]
    %v6556 = vld [vmem:[%s5233 + $0xd4] sm:$0xff]
    %v6557 = vld [vmem:[%s5233 + $0xe4] sm:$0xff]
    %v6558 = vld [vmem:[%s5233 + $0xf4] sm:$0xff]
    %v6559 = vld [vmem:[%s5233 + $0x104] sm:$0xff]
    %v6560 = vld [vmem:[%s5233 + $0x114] sm:$0xff]
    %v6561 = vld [vmem:[%s5233 + $0x124] sm:$0xff]
    %v6562 = vld [vmem:[%s5233 + $0x134] sm:$0xff]
    %6579 = vrot.lane.b32.xlu0 %v6547, 40
    %v6580 = vpop.permute.xlu0 %6579
    %6581 = vrot.lane.b32.xlu0 %v6548, 40
    %v6582 = vpop.permute.xlu0 %6581
    %6583 = vrot.lane.b32.xlu0 %v6549, 40
    %v6584 = vpop.permute.xlu0 %6583
    %6585 = vrot.lane.b32.xlu0 %v6550, 40
    %v6586 = vpop.permute.xlu0 %6585
    %6587 = vrot.lane.b32.xlu0 %v6551, 40
    %v6588 = vpop.permute.xlu0 %6587
    %6589 = vrot.lane.b32.xlu0 %v6552, 40
    %v6590 = vpop.permute.xlu0 %6589
    %6591 = vrot.lane.b32.xlu0 %v6553, 40
    %v6592 = vpop.permute.xlu0 %6591
    %6593 = vrot.lane.b32.xlu0 %v6554, 40
    %v6594 = vpop.permute.xlu0 %6593
    %6595 = vrot.lane.b32.xlu0 %v6555, 40
    %v6596 = vpop.permute.xlu0 %6595
    %6597 = vrot.lane.b32.xlu0 %v6556, 40
    %v6598 = vpop.permute.xlu0 %6597
    %6599 = vrot.lane.b32.xlu0 %v6557, 40
    %v6600 = vpop.permute.xlu0 %6599
    %6601 = vrot.lane.b32.xlu0 %v6558, 40
    %v6602 = vpop.permute.xlu0 %6601
    %6603 = vrot.lane.b32.xlu0 %v6559, 40
    %v6604 = vpop.permute.xlu0 %6603
    %6605 = vrot.lane.b32.xlu0 %v6560, 40
    %v6606 = vpop.permute.xlu0 %6605
    %6607 = vrot.lane.b32.xlu0 %v6561, 40
    %v6608 = vpop.permute.xlu0 %6607
    %6609 = vrot.lane.b32.xlu0 %v6562, 40
    %v6610 = vpop.permute.xlu0 %6609
    %6627 = vst.msk [vmem:[#allocation4 + $0x8] sm:$0xff] %vm3455, %v6580
    %6628 = vst.msk [vmem:[#allocation4 + $0x20] sm:$0xff] %vm3455, %v6582
    %6629 = vst.msk [vmem:[#allocation4 + $0x38] sm:$0xff] %vm3455, %v6584
    %6630 = vst.msk [vmem:[#allocation4 + $0x50] sm:$0xff] %vm3455, %v6586
    %6631 = vst.msk [vmem:[#allocation4 + $0x68] sm:$0xff] %vm3455, %v6588
    %6632 = vst.msk [vmem:[#allocation4 + $0x80] sm:$0xff] %vm3455, %v6590
    %6633 = vst.msk [vmem:[#allocation4 + $0x98] sm:$0xff] %vm3455, %v6592
    %6634 = vst.msk [vmem:[#allocation4 + $0xb0] sm:$0xff] %vm3455, %v6594
    %6635 = vst.msk [vmem:[#allocation4 + $0xc8] sm:$0xff] %vm3455, %v6596
    %6636 = vst.msk [vmem:[#allocation4 + $0xe0] sm:$0xff] %vm3455, %v6598
    %6637 = vst.msk [vmem:[#allocation4 + $0xf8] sm:$0xff] %vm3455, %v6600
    %6638 = vst.msk [vmem:[#allocation4 + $0x110] sm:$0xff] %vm3455, %v6602
    %6639 = vst.msk [vmem:[#allocation4 + $0x128] sm:$0xff] %vm3455, %v6604
    %6640 = vst.msk [vmem:[#allocation4 + $0x140] sm:$0xff] %vm3455, %v6606
    %6641 = vst.msk [vmem:[#allocation4 + $0x158] sm:$0xff] %vm3455, %v6608
    %6642 = vst.msk [vmem:[#allocation4 + $0x170] sm:$0xff] %vm3455, %v6610
    %s6643 = scalar_lea.vmem [#allocation3], 48
    %v6644 = vld [vmem:[%s6643] sm:$0xff]
    %v6645 = vld [vmem:[%s6643 + $0x10] sm:$0xff]
    %v6646 = vld [vmem:[%s6643 + $0x20] sm:$0xff]
    %v6647 = vld [vmem:[%s6643 + $0x30] sm:$0xff]
    %v6648 = vld [vmem:[%s6643 + $0x40] sm:$0xff]
    %v6649 = vld [vmem:[%s6643 + $0x50] sm:$0xff]
    %v6650 = vld [vmem:[%s6643 + $0x60] sm:$0xff]
    %v6651 = vld [vmem:[%s6643 + $0x70] sm:$0xff]
    %v6652 = vld [vmem:[%s6643 + $0xc0] sm:$0xff]
    %v6653 = vld [vmem:[%s6643 + $0xd0] sm:$0xff]
    %v6654 = vld [vmem:[%s6643 + $0xe0] sm:$0xff]
    %v6655 = vld [vmem:[%s6643 + $0xf0] sm:$0xff]
    %v6656 = vld [vmem:[%s6643 + $0x100] sm:$0xff]
    %v6657 = vld [vmem:[%s6643 + $0x110] sm:$0xff]
    %v6658 = vld [vmem:[%s6643 + $0x120] sm:$0xff]
    %v6659 = vld [vmem:[%s6643 + $0x130] sm:$0xff]
    %6676 = vrot.lane.b32.xlu0 %v6644, 52
    %v6677 = vpop.permute.xlu0 %6676
    %6678 = vrot.lane.b32.xlu0 %v6645, 52
    %v6679 = vpop.permute.xlu0 %6678
    %6680 = vrot.lane.b32.xlu0 %v6646, 52
    %v6681 = vpop.permute.xlu0 %6680
    %6682 = vrot.lane.b32.xlu0 %v6647, 52
    %v6683 = vpop.permute.xlu0 %6682
    %6684 = vrot.lane.b32.xlu0 %v6648, 52
    %v6685 = vpop.permute.xlu0 %6684
    %6686 = vrot.lane.b32.xlu0 %v6649, 52
    %v6687 = vpop.permute.xlu0 %6686
    %6688 = vrot.lane.b32.xlu0 %v6650, 52
    %v6689 = vpop.permute.xlu0 %6688
    %6690 = vrot.lane.b32.xlu0 %v6651, 52
    %v6691 = vpop.permute.xlu0 %6690
    %6692 = vrot.lane.b32.xlu0 %v6652, 52
    %v6693 = vpop.permute.xlu0 %6692
    %6694 = vrot.lane.b32.xlu0 %v6653, 52
    %v6695 = vpop.permute.xlu0 %6694
    %6696 = vrot.lane.b32.xlu0 %v6654, 52
    %v6697 = vpop.permute.xlu0 %6696
    %6698 = vrot.lane.b32.xlu0 %v6655, 52
    %v6699 = vpop.permute.xlu0 %6698
    %6700 = vrot.lane.b32.xlu0 %v6656, 52
    %v6701 = vpop.permute.xlu0 %6700
    %6702 = vrot.lane.b32.xlu0 %v6657, 52
    %v6703 = vpop.permute.xlu0 %6702
    %6704 = vrot.lane.b32.xlu0 %v6658, 52
    %v6705 = vpop.permute.xlu0 %6704
    %6706 = vrot.lane.b32.xlu0 %v6659, 52
    %v6707 = vpop.permute.xlu0 %6706
    %6724 = vst.msk [vmem:[#allocation4 + $0x8] sm:$0xff] %vm3552, %v6677
    %6725 = vst.msk [vmem:[#allocation4 + $0x20] sm:$0xff] %vm3552, %v6679
    %6726 = vst.msk [vmem:[#allocation4 + $0x38] sm:$0xff] %vm3552, %v6681
    %6727 = vst.msk [vmem:[#allocation4 + $0x50] sm:$0xff] %vm3552, %v6683
    %6728 = vst.msk [vmem:[#allocation4 + $0x68] sm:$0xff] %vm3552, %v6685
    %6729 = vst.msk [vmem:[#allocation4 + $0x80] sm:$0xff] %vm3552, %v6687
    %6730 = vst.msk [vmem:[#allocation4 + $0x98] sm:$0xff] %vm3552, %v6689
    %6731 = vst.msk [vmem:[#allocation4 + $0xb0] sm:$0xff] %vm3552, %v6691
    %6732 = vst.msk [vmem:[#allocation4 + $0xc8] sm:$0xff] %vm3552, %v6693
    %6733 = vst.msk [vmem:[#allocation4 + $0xe0] sm:$0xff] %vm3552, %v6695
    %6734 = vst.msk [vmem:[#allocation4 + $0xf8] sm:$0xff] %vm3552, %v6697
    %6735 = vst.msk [vmem:[#allocation4 + $0x110] sm:$0xff] %vm3552, %v6699
    %6736 = vst.msk [vmem:[#allocation4 + $0x128] sm:$0xff] %vm3552, %v6701
    %6737 = vst.msk [vmem:[#allocation4 + $0x140] sm:$0xff] %vm3552, %v6703
    %6738 = vst.msk [vmem:[#allocation4 + $0x158] sm:$0xff] %vm3552, %v6705
    %6739 = vst.msk [vmem:[#allocation4 + $0x170] sm:$0xff] %vm3552, %v6707
    %v6740 = vld [vmem:[%s6643 + $0x1] sm:$0xff]
    %v6741 = vld [vmem:[%s6643 + $0x11] sm:$0xff]
    %v6742 = vld [vmem:[%s6643 + $0x21] sm:$0xff]
    %v6743 = vld [vmem:[%s6643 + $0x31] sm:$0xff]
    %v6744 = vld [vmem:[%s6643 + $0x41] sm:$0xff]
    %v6745 = vld [vmem:[%s6643 + $0x51] sm:$0xff]
    %v6746 = vld [vmem:[%s6643 + $0x61] sm:$0xff]
    %v6747 = vld [vmem:[%s6643 + $0x71] sm:$0xff]
    %v6748 = vld [vmem:[%s6643 + $0xc1] sm:$0xff]
    %v6749 = vld [vmem:[%s6643 + $0xd1] sm:$0xff]
    %v6750 = vld [vmem:[%s6643 + $0xe1] sm:$0xff]
    %v6751 = vld [vmem:[%s6643 + $0xf1] sm:$0xff]
    %v6752 = vld [vmem:[%s6643 + $0x101] sm:$0xff]
    %v6753 = vld [vmem:[%s6643 + $0x111] sm:$0xff]
    %v6754 = vld [vmem:[%s6643 + $0x121] sm:$0xff]
    %v6755 = vld [vmem:[%s6643 + $0x131] sm:$0xff]
    %6772 = vrot.lane.b32.xlu0 %v6740, 64
    %v6773 = vpop.permute.xlu0 %6772
    %6774 = vrot.lane.b32.xlu0 %v6741, 64
    %v6775 = vpop.permute.xlu0 %6774
    %6776 = vrot.lane.b32.xlu0 %v6742, 64
    %v6777 = vpop.permute.xlu0 %6776
    %6778 = vrot.lane.b32.xlu0 %v6743, 64
    %v6779 = vpop.permute.xlu0 %6778
    %6780 = vrot.lane.b32.xlu0 %v6744, 64
    %v6781 = vpop.permute.xlu0 %6780
    %6782 = vrot.lane.b32.xlu0 %v6745, 64
    %v6783 = vpop.permute.xlu0 %6782
    %6784 = vrot.lane.b32.xlu0 %v6746, 64
    %v6785 = vpop.permute.xlu0 %6784
    %6786 = vrot.lane.b32.xlu0 %v6747, 64
    %v6787 = vpop.permute.xlu0 %6786
    %6788 = vrot.lane.b32.xlu0 %v6748, 64
    %v6789 = vpop.permute.xlu0 %6788
    %6790 = vrot.lane.b32.xlu0 %v6749, 64
    %v6791 = vpop.permute.xlu0 %6790
    %6792 = vrot.lane.b32.xlu0 %v6750, 64
    %v6793 = vpop.permute.xlu0 %6792
    %6794 = vrot.lane.b32.xlu0 %v6751, 64
    %v6795 = vpop.permute.xlu0 %6794
    %6796 = vrot.lane.b32.xlu0 %v6752, 64
    %v6797 = vpop.permute.xlu0 %6796
    %6798 = vrot.lane.b32.xlu0 %v6753, 64
    %v6799 = vpop.permute.xlu0 %6798
    %6800 = vrot.lane.b32.xlu0 %v6754, 64
    %v6801 = vpop.permute.xlu0 %6800
    %6802 = vrot.lane.b32.xlu0 %v6755, 64
    %v6803 = vpop.permute.xlu0 %6802
    %6820 = vst.msk [vmem:[#allocation4 + $0x8] sm:$0xff] %vm3649, %v6773
    %6821 = vst.msk [vmem:[#allocation4 + $0x20] sm:$0xff] %vm3649, %v6775
    %6822 = vst.msk [vmem:[#allocation4 + $0x38] sm:$0xff] %vm3649, %v6777
    %6823 = vst.msk [vmem:[#allocation4 + $0x50] sm:$0xff] %vm3649, %v6779
    %6824 = vst.msk [vmem:[#allocation4 + $0x68] sm:$0xff] %vm3649, %v6781
    %6825 = vst.msk [vmem:[#allocation4 + $0x80] sm:$0xff] %vm3649, %v6783
    %6826 = vst.msk [vmem:[#allocation4 + $0x98] sm:$0xff] %vm3649, %v6785
    %6827 = vst.msk [vmem:[#allocation4 + $0xb0] sm:$0xff] %vm3649, %v6787
    %6828 = vst.msk [vmem:[#allocation4 + $0xc8] sm:$0xff] %vm3649, %v6789
    %6829 = vst.msk [vmem:[#allocation4 + $0xe0] sm:$0xff] %vm3649, %v6791
    %6830 = vst.msk [vmem:[#allocation4 + $0xf8] sm:$0xff] %vm3649, %v6793
    %6831 = vst.msk [vmem:[#allocation4 + $0x110] sm:$0xff] %vm3649, %v6795
    %6832 = vst.msk [vmem:[#allocation4 + $0x128] sm:$0xff] %vm3649, %v6797
    %6833 = vst.msk [vmem:[#allocation4 + $0x140] sm:$0xff] %vm3649, %v6799
    %6834 = vst.msk [vmem:[#allocation4 + $0x158] sm:$0xff] %vm3649, %v6801
    %6835 = vst.msk [vmem:[#allocation4 + $0x170] sm:$0xff] %vm3649, %v6803
    %v6836 = vld [vmem:[%s6643 + $0x2] sm:$0xff]
    %v6837 = vld [vmem:[%s6643 + $0x12] sm:$0xff]
    %v6838 = vld [vmem:[%s6643 + $0x22] sm:$0xff]
    %v6839 = vld [vmem:[%s6643 + $0x32] sm:$0xff]
    %v6840 = vld [vmem:[%s6643 + $0x42] sm:$0xff]
    %v6841 = vld [vmem:[%s6643 + $0x52] sm:$0xff]
    %v6842 = vld [vmem:[%s6643 + $0x62] sm:$0xff]
    %v6843 = vld [vmem:[%s6643 + $0x72] sm:$0xff]
    %v6844 = vld [vmem:[%s6643 + $0xc2] sm:$0xff]
    %v6845 = vld [vmem:[%s6643 + $0xd2] sm:$0xff]
    %v6846 = vld [vmem:[%s6643 + $0xe2] sm:$0xff]
    %v6847 = vld [vmem:[%s6643 + $0xf2] sm:$0xff]
    %v6848 = vld [vmem:[%s6643 + $0x102] sm:$0xff]
    %v6849 = vld [vmem:[%s6643 + $0x112] sm:$0xff]
    %v6850 = vld [vmem:[%s6643 + $0x122] sm:$0xff]
    %v6851 = vld [vmem:[%s6643 + $0x132] sm:$0xff]
    %6868 = vrot.lane.b32.xlu0 %v6836, 76
    %v6869 = vpop.permute.xlu0 %6868
    %6870 = vrot.lane.b32.xlu0 %v6837, 76
    %v6871 = vpop.permute.xlu0 %6870
    %6872 = vrot.lane.b32.xlu0 %v6838, 76
    %v6873 = vpop.permute.xlu0 %6872
    %6874 = vrot.lane.b32.xlu0 %v6839, 76
    %v6875 = vpop.permute.xlu0 %6874
    %6876 = vrot.lane.b32.xlu0 %v6840, 76
    %v6877 = vpop.permute.xlu0 %6876
    %6878 = vrot.lane.b32.xlu0 %v6841, 76
    %v6879 = vpop.permute.xlu0 %6878
    %6880 = vrot.lane.b32.xlu0 %v6842, 76
    %v6881 = vpop.permute.xlu0 %6880
    %6882 = vrot.lane.b32.xlu0 %v6843, 76
    %v6883 = vpop.permute.xlu0 %6882
    %6884 = vrot.lane.b32.xlu0 %v6844, 76
    %v6885 = vpop.permute.xlu0 %6884
    %6886 = vrot.lane.b32.xlu0 %v6845, 76
    %v6887 = vpop.permute.xlu0 %6886
    %6888 = vrot.lane.b32.xlu0 %v6846, 76
    %v6889 = vpop.permute.xlu0 %6888
    %6890 = vrot.lane.b32.xlu0 %v6847, 76
    %v6891 = vpop.permute.xlu0 %6890
    %6892 = vrot.lane.b32.xlu0 %v6848, 76
    %v6893 = vpop.permute.xlu0 %6892
    %6894 = vrot.lane.b32.xlu0 %v6849, 76
    %v6895 = vpop.permute.xlu0 %6894
    %6896 = vrot.lane.b32.xlu0 %v6850, 76
    %v6897 = vpop.permute.xlu0 %6896
    %6898 = vrot.lane.b32.xlu0 %v6851, 76
    %v6899 = vpop.permute.xlu0 %6898
    %6916 = vst.msk [vmem:[#allocation4 + $0x8] sm:$0xff] %vm3746, %v6869
    %6917 = vst.msk [vmem:[#allocation4 + $0x20] sm:$0xff] %vm3746, %v6871
    %6918 = vst.msk [vmem:[#allocation4 + $0x38] sm:$0xff] %vm3746, %v6873
    %6919 = vst.msk [vmem:[#allocation4 + $0x50] sm:$0xff] %vm3746, %v6875
    %6920 = vst.msk [vmem:[#allocation4 + $0x68] sm:$0xff] %vm3746, %v6877
    %6921 = vst.msk [vmem:[#allocation4 + $0x80] sm:$0xff] %vm3746, %v6879
    %6922 = vst.msk [vmem:[#allocation4 + $0x98] sm:$0xff] %vm3746, %v6881
    %6923 = vst.msk [vmem:[#allocation4 + $0xb0] sm:$0xff] %vm3746, %v6883
    %6924 = vst.msk [vmem:[#allocation4 + $0xc8] sm:$0xff] %vm3746, %v6885
    %6925 = vst.msk [vmem:[#allocation4 + $0xe0] sm:$0xff] %vm3746, %v6887
    %6926 = vst.msk [vmem:[#allocation4 + $0xf8] sm:$0xff] %vm3746, %v6889
    %6927 = vst.msk [vmem:[#allocation4 + $0x110] sm:$0xff] %vm3746, %v6891
    %6928 = vst.msk [vmem:[#allocation4 + $0x128] sm:$0xff] %vm3746, %v6893
    %6929 = vst.msk [vmem:[#allocation4 + $0x140] sm:$0xff] %vm3746, %v6895
    %6930 = vst.msk [vmem:[#allocation4 + $0x158] sm:$0xff] %vm3746, %v6897
    %6931 = vst.msk [vmem:[#allocation4 + $0x170] sm:$0xff] %vm3746, %v6899
    %v6932 = vld [vmem:[%s6643 + $0x3] sm:$0xff]
    %v6933 = vld [vmem:[%s6643 + $0x13] sm:$0xff]
    %v6934 = vld [vmem:[%s6643 + $0x23] sm:$0xff]
    %v6935 = vld [vmem:[%s6643 + $0x33] sm:$0xff]
    %v6936 = vld [vmem:[%s6643 + $0x43] sm:$0xff]
    %v6937 = vld [vmem:[%s6643 + $0x53] sm:$0xff]
    %v6938 = vld [vmem:[%s6643 + $0x63] sm:$0xff]
    %v6939 = vld [vmem:[%s6643 + $0x73] sm:$0xff]
    %v6940 = vld [vmem:[%s6643 + $0xc3] sm:$0xff]
    %v6941 = vld [vmem:[%s6643 + $0xd3] sm:$0xff]
    %v6942 = vld [vmem:[%s6643 + $0xe3] sm:$0xff]
    %v6943 = vld [vmem:[%s6643 + $0xf3] sm:$0xff]
    %v6944 = vld [vmem:[%s6643 + $0x103] sm:$0xff]
    %v6945 = vld [vmem:[%s6643 + $0x113] sm:$0xff]
    %v6946 = vld [vmem:[%s6643 + $0x123] sm:$0xff]
    %v6947 = vld [vmem:[%s6643 + $0x133] sm:$0xff]
    %6964 = vrot.lane.b32.xlu0 %v6932, 88
    %v6965 = vpop.permute.xlu0 %6964
    %6966 = vrot.lane.b32.xlu0 %v6933, 88
    %v6967 = vpop.permute.xlu0 %6966
    %6968 = vrot.lane.b32.xlu0 %v6934, 88
    %v6969 = vpop.permute.xlu0 %6968
    %6970 = vrot.lane.b32.xlu0 %v6935, 88
    %v6971 = vpop.permute.xlu0 %6970
    %6972 = vrot.lane.b32.xlu0 %v6936, 88
    %v6973 = vpop.permute.xlu0 %6972
    %6974 = vrot.lane.b32.xlu0 %v6937, 88
    %v6975 = vpop.permute.xlu0 %6974
    %6976 = vrot.lane.b32.xlu0 %v6938, 88
    %v6977 = vpop.permute.xlu0 %6976
    %6978 = vrot.lane.b32.xlu0 %v6939, 88
    %v6979 = vpop.permute.xlu0 %6978
    %6980 = vrot.lane.b32.xlu0 %v6940, 88
    %v6981 = vpop.permute.xlu0 %6980
    %6982 = vrot.lane.b32.xlu0 %v6941, 88
    %v6983 = vpop.permute.xlu0 %6982
    %6984 = vrot.lane.b32.xlu0 %v6942, 88
    %v6985 = vpop.permute.xlu0 %6984
    %6986 = vrot.lane.b32.xlu0 %v6943, 88
    %v6987 = vpop.permute.xlu0 %6986
    %6988 = vrot.lane.b32.xlu0 %v6944, 88
    %v6989 = vpop.permute.xlu0 %6988
    %6990 = vrot.lane.b32.xlu0 %v6945, 88
    %v6991 = vpop.permute.xlu0 %6990
    %6992 = vrot.lane.b32.xlu0 %v6946, 88
    %v6993 = vpop.permute.xlu0 %6992
    %6994 = vrot.lane.b32.xlu0 %v6947, 88
    %v6995 = vpop.permute.xlu0 %6994
    %7012 = vst.msk [vmem:[#allocation4 + $0x8] sm:$0xff] %vm3843, %v6965
    %7013 = vst.msk [vmem:[#allocation4 + $0x20] sm:$0xff] %vm3843, %v6967
    %7014 = vst.msk [vmem:[#allocation4 + $0x38] sm:$0xff] %vm3843, %v6969
    %7015 = vst.msk [vmem:[#allocation4 + $0x50] sm:$0xff] %vm3843, %v6971
    %7016 = vst.msk [vmem:[#allocation4 + $0x68] sm:$0xff] %vm3843, %v6973
    %7017 = vst.msk [vmem:[#allocation4 + $0x80] sm:$0xff] %vm3843, %v6975
    %7018 = vst.msk [vmem:[#allocation4 + $0x98] sm:$0xff] %vm3843, %v6977
    %7019 = vst.msk [vmem:[#allocation4 + $0xb0] sm:$0xff] %vm3843, %v6979
    %7020 = vst.msk [vmem:[#allocation4 + $0xc8] sm:$0xff] %vm3843, %v6981
    %7021 = vst.msk [vmem:[#allocation4 + $0xe0] sm:$0xff] %vm3843, %v6983
    %7022 = vst.msk [vmem:[#allocation4 + $0xf8] sm:$0xff] %vm3843, %v6985
    %7023 = vst.msk [vmem:[#allocation4 + $0x110] sm:$0xff] %vm3843, %v6987
    %7024 = vst.msk [vmem:[#allocation4 + $0x128] sm:$0xff] %vm3843, %v6989
    %7025 = vst.msk [vmem:[#allocation4 + $0x140] sm:$0xff] %vm3843, %v6991
    %7026 = vst.msk [vmem:[#allocation4 + $0x158] sm:$0xff] %vm3843, %v6993
    %7027 = vst.msk [vmem:[#allocation4 + $0x170] sm:$0xff] %vm3843, %v6995
    %v7028 = vld [vmem:[%s6643 + $0x4] sm:$0xff]
    %v7029 = vld [vmem:[%s6643 + $0x14] sm:$0xff]
    %v7030 = vld [vmem:[%s6643 + $0x24] sm:$0xff]
    %v7031 = vld [vmem:[%s6643 + $0x34] sm:$0xff]
    %v7032 = vld [vmem:[%s6643 + $0x44] sm:$0xff]
    %v7033 = vld [vmem:[%s6643 + $0x54] sm:$0xff]
    %v7034 = vld [vmem:[%s6643 + $0x64] sm:$0xff]
    %v7035 = vld [vmem:[%s6643 + $0x74] sm:$0xff]
    %v7036 = vld [vmem:[%s6643 + $0xc4] sm:$0xff]
    %v7037 = vld [vmem:[%s6643 + $0xd4] sm:$0xff]
    %v7038 = vld [vmem:[%s6643 + $0xe4] sm:$0xff]
    %v7039 = vld [vmem:[%s6643 + $0xf4] sm:$0xff]
    %v7040 = vld [vmem:[%s6643 + $0x104] sm:$0xff]
    %v7041 = vld [vmem:[%s6643 + $0x114] sm:$0xff]
    %v7042 = vld [vmem:[%s6643 + $0x124] sm:$0xff]
    %v7043 = vld [vmem:[%s6643 + $0x134] sm:$0xff]
    %7060 = vrot.lane.b32.xlu0 %v7028, 100
    %v7061 = vpop.permute.xlu0 %7060
    %7062 = vrot.lane.b32.xlu0 %v7029, 100
    %v7063 = vpop.permute.xlu0 %7062
    %7064 = vrot.lane.b32.xlu0 %v7030, 100
    %v7065 = vpop.permute.xlu0 %7064
    %7066 = vrot.lane.b32.xlu0 %v7031, 100
    %v7067 = vpop.permute.xlu0 %7066
    %7068 = vrot.lane.b32.xlu0 %v7032, 100
    %v7069 = vpop.permute.xlu0 %7068
    %7070 = vrot.lane.b32.xlu0 %v7033, 100
    %v7071 = vpop.permute.xlu0 %7070
    %7072 = vrot.lane.b32.xlu0 %v7034, 100
    %v7073 = vpop.permute.xlu0 %7072
    %7074 = vrot.lane.b32.xlu0 %v7035, 100
    %v7075 = vpop.permute.xlu0 %7074
    %7076 = vrot.lane.b32.xlu0 %v7036, 100
    %v7077 = vpop.permute.xlu0 %7076
    %7078 = vrot.lane.b32.xlu0 %v7037, 100
    %v7079 = vpop.permute.xlu0 %7078
    %7080 = vrot.lane.b32.xlu0 %v7038, 100
    %v7081 = vpop.permute.xlu0 %7080
    %7082 = vrot.lane.b32.xlu0 %v7039, 100
    %v7083 = vpop.permute.xlu0 %7082
    %7084 = vrot.lane.b32.xlu0 %v7040, 100
    %v7085 = vpop.permute.xlu0 %7084
    %7086 = vrot.lane.b32.xlu0 %v7041, 100
    %v7087 = vpop.permute.xlu0 %7086
    %7088 = vrot.lane.b32.xlu0 %v7042, 100
    %v7089 = vpop.permute.xlu0 %7088
    %7090 = vrot.lane.b32.xlu0 %v7043, 100
    %v7091 = vpop.permute.xlu0 %7090
    %7108 = vst.msk [vmem:[#allocation4 + $0x8] sm:$0xff] %vm3940, %v7061
    %7109 = vst.msk [vmem:[#allocation4 + $0x20] sm:$0xff] %vm3940, %v7063
    %7110 = vst.msk [vmem:[#allocation4 + $0x38] sm:$0xff] %vm3940, %v7065
    %7111 = vst.msk [vmem:[#allocation4 + $0x50] sm:$0xff] %vm3940, %v7067
    %7112 = vst.msk [vmem:[#allocation4 + $0x68] sm:$0xff] %vm3940, %v7069
    %7113 = vst.msk [vmem:[#allocation4 + $0x80] sm:$0xff] %vm3940, %v7071
    %7114 = vst.msk [vmem:[#allocation4 + $0x98] sm:$0xff] %vm3940, %v7073
    %7115 = vst.msk [vmem:[#allocation4 + $0xb0] sm:$0xff] %vm3940, %v7075
    %7116 = vst.msk [vmem:[#allocation4 + $0xc8] sm:$0xff] %vm3940, %v7077
    %7117 = vst.msk [vmem:[#allocation4 + $0xe0] sm:$0xff] %vm3940, %v7079
    %7118 = vst.msk [vmem:[#allocation4 + $0xf8] sm:$0xff] %vm3940, %v7081
    %7119 = vst.msk [vmem:[#allocation4 + $0x110] sm:$0xff] %vm3940, %v7083
    %7120 = vst.msk [vmem:[#allocation4 + $0x128] sm:$0xff] %vm3940, %v7085
    %7121 = vst.msk [vmem:[#allocation4 + $0x140] sm:$0xff] %vm3940, %v7087
    %7122 = vst.msk [vmem:[#allocation4 + $0x158] sm:$0xff] %vm3940, %v7089
    %7123 = vst.msk [vmem:[#allocation4 + $0x170] sm:$0xff] %vm3940, %v7091
    %s7124 = scalar_lea.vmem [#allocation3], 64
    %v7125 = vld [vmem:[%s7124] sm:$0xff]
    %v7126 = vld [vmem:[%s7124 + $0x10] sm:$0xff]
    %v7127 = vld [vmem:[%s7124 + $0x20] sm:$0xff]
    %v7128 = vld [vmem:[%s7124 + $0x30] sm:$0xff]
    %v7129 = vld [vmem:[%s7124 + $0x40] sm:$0xff]
    %v7130 = vld [vmem:[%s7124 + $0x50] sm:$0xff]
    %v7131 = vld [vmem:[%s7124 + $0x60] sm:$0xff]
    %v7132 = vld [vmem:[%s7124 + $0x70] sm:$0xff]
    %v7133 = vld [vmem:[%s7124 + $0xc0] sm:$0xff]
    %v7134 = vld [vmem:[%s7124 + $0xd0] sm:$0xff]
    %v7135 = vld [vmem:[%s7124 + $0xe0] sm:$0xff]
    %v7136 = vld [vmem:[%s7124 + $0xf0] sm:$0xff]
    %v7137 = vld [vmem:[%s7124 + $0x100] sm:$0xff]
    %v7138 = vld [vmem:[%s7124 + $0x110] sm:$0xff]
    %v7139 = vld [vmem:[%s7124 + $0x120] sm:$0xff]
    %v7140 = vld [vmem:[%s7124 + $0x130] sm:$0xff]
    %7157 = vrot.lane.b32.xlu0 %v7125, 112
    %v7158 = vpop.permute.xlu0 %7157
    %7159 = vrot.lane.b32.xlu0 %v7126, 112
    %v7160 = vpop.permute.xlu0 %7159
    %7161 = vrot.lane.b32.xlu0 %v7127, 112
    %v7162 = vpop.permute.xlu0 %7161
    %7163 = vrot.lane.b32.xlu0 %v7128, 112
    %v7164 = vpop.permute.xlu0 %7163
    %7165 = vrot.lane.b32.xlu0 %v7129, 112
    %v7166 = vpop.permute.xlu0 %7165
    %7167 = vrot.lane.b32.xlu0 %v7130, 112
    %v7168 = vpop.permute.xlu0 %7167
    %7169 = vrot.lane.b32.xlu0 %v7131, 112
    %v7170 = vpop.permute.xlu0 %7169
    %7171 = vrot.lane.b32.xlu0 %v7132, 112
    %v7172 = vpop.permute.xlu0 %7171
    %7173 = vrot.lane.b32.xlu0 %v7133, 112
    %v7174 = vpop.permute.xlu0 %7173
    %7175 = vrot.lane.b32.xlu0 %v7134, 112
    %v7176 = vpop.permute.xlu0 %7175
    %7177 = vrot.lane.b32.xlu0 %v7135, 112
    %v7178 = vpop.permute.xlu0 %7177
    %7179 = vrot.lane.b32.xlu0 %v7136, 112
    %v7180 = vpop.permute.xlu0 %7179
    %7181 = vrot.lane.b32.xlu0 %v7137, 112
    %v7182 = vpop.permute.xlu0 %7181
    %7183 = vrot.lane.b32.xlu0 %v7138, 112
    %v7184 = vpop.permute.xlu0 %7183
    %7185 = vrot.lane.b32.xlu0 %v7139, 112
    %v7186 = vpop.permute.xlu0 %7185
    %7187 = vrot.lane.b32.xlu0 %v7140, 112
    %v7188 = vpop.permute.xlu0 %7187
    %7205 = vst.msk [vmem:[#allocation4 + $0x8] sm:$0xff] %vm4038, %v7158
    %7206 = vst.msk [vmem:[#allocation4 + $0x20] sm:$0xff] %vm4038, %v7160
    %7207 = vst.msk [vmem:[#allocation4 + $0x38] sm:$0xff] %vm4038, %v7162
    %7208 = vst.msk [vmem:[#allocation4 + $0x50] sm:$0xff] %vm4038, %v7164
    %7209 = vst.msk [vmem:[#allocation4 + $0x68] sm:$0xff] %vm4038, %v7166
    %7210 = vst.msk [vmem:[#allocation4 + $0x80] sm:$0xff] %vm4038, %v7168
    %7211 = vst.msk [vmem:[#allocation4 + $0x98] sm:$0xff] %vm4038, %v7170
    %7212 = vst.msk [vmem:[#allocation4 + $0xb0] sm:$0xff] %vm4038, %v7172
    %7213 = vst.msk [vmem:[#allocation4 + $0xc8] sm:$0xff] %vm4038, %v7174
    %7214 = vst.msk [vmem:[#allocation4 + $0xe0] sm:$0xff] %vm4038, %v7176
    %7215 = vst.msk [vmem:[#allocation4 + $0xf8] sm:$0xff] %vm4038, %v7178
    %7216 = vst.msk [vmem:[#allocation4 + $0x110] sm:$0xff] %vm4038, %v7180
    %7217 = vst.msk [vmem:[#allocation4 + $0x128] sm:$0xff] %vm4038, %v7182
    %7218 = vst.msk [vmem:[#allocation4 + $0x140] sm:$0xff] %vm4038, %v7184
    %7219 = vst.msk [vmem:[#allocation4 + $0x158] sm:$0xff] %vm4038, %v7186
    %7220 = vst.msk [vmem:[#allocation4 + $0x170] sm:$0xff] %vm4038, %v7188
    %v7221 = vld [vmem:[%s7124 + $0x1] sm:$0xff]
    %v7222 = vld [vmem:[%s7124 + $0x11] sm:$0xff]
    %v7223 = vld [vmem:[%s7124 + $0x21] sm:$0xff]
    %v7224 = vld [vmem:[%s7124 + $0x31] sm:$0xff]
    %v7225 = vld [vmem:[%s7124 + $0x41] sm:$0xff]
    %v7226 = vld [vmem:[%s7124 + $0x51] sm:$0xff]
    %v7227 = vld [vmem:[%s7124 + $0x61] sm:$0xff]
    %v7228 = vld [vmem:[%s7124 + $0x71] sm:$0xff]
    %v7229 = vld [vmem:[%s7124 + $0xc1] sm:$0xff]
    %v7230 = vld [vmem:[%s7124 + $0xd1] sm:$0xff]
    %v7231 = vld [vmem:[%s7124 + $0xe1] sm:$0xff]
    %v7232 = vld [vmem:[%s7124 + $0xf1] sm:$0xff]
    %v7233 = vld [vmem:[%s7124 + $0x101] sm:$0xff]
    %v7234 = vld [vmem:[%s7124 + $0x111] sm:$0xff]
    %v7235 = vld [vmem:[%s7124 + $0x121] sm:$0xff]
    %v7236 = vld [vmem:[%s7124 + $0x131] sm:$0xff]
    %7253 = vrot.lane.b32.xlu0 %v7221, 124
    %v7254 = vpop.permute.xlu0 %7253
    %7255 = vrot.lane.b32.xlu0 %v7222, 124
    %v7256 = vpop.permute.xlu0 %7255
    %7257 = vrot.lane.b32.xlu0 %v7223, 124
    %v7258 = vpop.permute.xlu0 %7257
    %7259 = vrot.lane.b32.xlu0 %v7224, 124
    %v7260 = vpop.permute.xlu0 %7259
    %7261 = vrot.lane.b32.xlu0 %v7225, 124
    %v7262 = vpop.permute.xlu0 %7261
    %7263 = vrot.lane.b32.xlu0 %v7226, 124
    %v7264 = vpop.permute.xlu0 %7263
    %7265 = vrot.lane.b32.xlu0 %v7227, 124
    %v7266 = vpop.permute.xlu0 %7265
    %7267 = vrot.lane.b32.xlu0 %v7228, 124
    %v7268 = vpop.permute.xlu0 %7267
    %7269 = vrot.lane.b32.xlu0 %v7229, 124
    %v7270 = vpop.permute.xlu0 %7269
    %7271 = vrot.lane.b32.xlu0 %v7230, 124
    %v7272 = vpop.permute.xlu0 %7271
    %7273 = vrot.lane.b32.xlu0 %v7231, 124
    %v7274 = vpop.permute.xlu0 %7273
    %7275 = vrot.lane.b32.xlu0 %v7232, 124
    %v7276 = vpop.permute.xlu0 %7275
    %7277 = vrot.lane.b32.xlu0 %v7233, 124
    %v7278 = vpop.permute.xlu0 %7277
    %7279 = vrot.lane.b32.xlu0 %v7234, 124
    %v7280 = vpop.permute.xlu0 %7279
    %7281 = vrot.lane.b32.xlu0 %v7235, 124
    %v7282 = vpop.permute.xlu0 %7281
    %7283 = vrot.lane.b32.xlu0 %v7236, 124
    %v7284 = vpop.permute.xlu0 %7283
    %7301 = vst.msk [vmem:[#allocation4 + $0x8] sm:$0xff] %vm4136, %v7254
    %7302 = vst.msk [vmem:[#allocation4 + $0x10] sm:$0xff] %vm4138, %v7254
    %7303 = vst.msk [vmem:[#allocation4 + $0x20] sm:$0xff] %vm4136, %v7256
    %7304 = vst.msk [vmem:[#allocation4 + $0x28] sm:$0xff] %vm4138, %v7256
    %7305 = vst.msk [vmem:[#allocation4 + $0x38] sm:$0xff] %vm4136, %v7258
    %7306 = vst.msk [vmem:[#allocation4 + $0x40] sm:$0xff] %vm4138, %v7258
    %7307 = vst.msk [vmem:[#allocation4 + $0x50] sm:$0xff] %vm4136, %v7260
    %7308 = vst.msk [vmem:[#allocation4 + $0x58] sm:$0xff] %vm4138, %v7260
    %7309 = vst.msk [vmem:[#allocation4 + $0x68] sm:$0xff] %vm4136, %v7262
    %7310 = vst.msk [vmem:[#allocation4 + $0x70] sm:$0xff] %vm4138, %v7262
    %7311 = vst.msk [vmem:[#allocation4 + $0x80] sm:$0xff] %vm4136, %v7264
    %7312 = vst.msk [vmem:[#allocation4 + $0x88] sm:$0xff] %vm4138, %v7264
    %7313 = vst.msk [vmem:[#allocation4 + $0x98] sm:$0xff] %vm4136, %v7266
    %7314 = vst.msk [vmem:[#allocation4 + $0xa0] sm:$0xff] %vm4138, %v7266
    %7315 = vst.msk [vmem:[#allocation4 + $0xb0] sm:$0xff] %vm4136, %v7268
    %7316 = vst.msk [vmem:[#allocation4 + $0xb8] sm:$0xff] %vm4138, %v7268
    %7317 = vst.msk [vmem:[#allocation4 + $0xc8] sm:$0xff] %vm4136, %v7270
    %7318 = vst.msk [vmem:[#allocation4 + $0xd0] sm:$0xff] %vm4138, %v7270
    %7319 = vst.msk [vmem:[#allocation4 + $0xe0] sm:$0xff] %vm4136, %v7272
    %7320 = vst.msk [vmem:[#allocation4 + $0xe8] sm:$0xff] %vm4138, %v7272
    %7321 = vst.msk [vmem:[#allocation4 + $0xf8] sm:$0xff] %vm4136, %v7274
    %7322 = vst.msk [vmem:[#allocation4 + $0x100] sm:$0xff] %vm4138, %v7274
    %7323 = vst.msk [vmem:[#allocation4 + $0x110] sm:$0xff] %vm4136, %v7276
    %7324 = vst.msk [vmem:[#allocation4 + $0x118] sm:$0xff] %vm4138, %v7276
    %7325 = vst.msk [vmem:[#allocation4 + $0x128] sm:$0xff] %vm4136, %v7278
    %7326 = vst.msk [vmem:[#allocation4 + $0x130] sm:$0xff] %vm4138, %v7278
    %7327 = vst.msk [vmem:[#allocation4 + $0x140] sm:$0xff] %vm4136, %v7280
    %7328 = vst.msk [vmem:[#allocation4 + $0x148] sm:$0xff] %vm4138, %v7280
    %7329 = vst.msk [vmem:[#allocation4 + $0x158] sm:$0xff] %vm4136, %v7282
    %7330 = vst.msk [vmem:[#allocation4 + $0x160] sm:$0xff] %vm4138, %v7282
    %7331 = vst.msk [vmem:[#allocation4 + $0x170] sm:$0xff] %vm4136, %v7284
    %7332 = vst.msk [vmem:[#allocation4 + $0x178] sm:$0xff] %vm4138, %v7284
    %v7333 = vld [vmem:[%s7124 + $0x2] sm:$0xff]
    %v7334 = vld [vmem:[%s7124 + $0x12] sm:$0xff]
    %v7335 = vld [vmem:[%s7124 + $0x22] sm:$0xff]
    %v7336 = vld [vmem:[%s7124 + $0x32] sm:$0xff]
    %v7337 = vld [vmem:[%s7124 + $0x42] sm:$0xff]
    %v7338 = vld [vmem:[%s7124 + $0x52] sm:$0xff]
    %v7339 = vld [vmem:[%s7124 + $0x62] sm:$0xff]
    %v7340 = vld [vmem:[%s7124 + $0x72] sm:$0xff]
    %v7341 = vld [vmem:[%s7124 + $0xc2] sm:$0xff]
    %v7342 = vld [vmem:[%s7124 + $0xd2] sm:$0xff]
    %v7343 = vld [vmem:[%s7124 + $0xe2] sm:$0xff]
    %v7344 = vld [vmem:[%s7124 + $0xf2] sm:$0xff]
    %v7345 = vld [vmem:[%s7124 + $0x102] sm:$0xff]
    %v7346 = vld [vmem:[%s7124 + $0x112] sm:$0xff]
    %v7347 = vld [vmem:[%s7124 + $0x122] sm:$0xff]
    %v7348 = vld [vmem:[%s7124 + $0x132] sm:$0xff]
    %7365 = vrot.lane.b32.xlu0 %v7333, 8
    %v7366 = vpop.permute.xlu0 %7365
    %7367 = vrot.lane.b32.xlu0 %v7334, 8
    %v7368 = vpop.permute.xlu0 %7367
    %7369 = vrot.lane.b32.xlu0 %v7335, 8
    %v7370 = vpop.permute.xlu0 %7369
    %7371 = vrot.lane.b32.xlu0 %v7336, 8
    %v7372 = vpop.permute.xlu0 %7371
    %7373 = vrot.lane.b32.xlu0 %v7337, 8
    %v7374 = vpop.permute.xlu0 %7373
    %7375 = vrot.lane.b32.xlu0 %v7338, 8
    %v7376 = vpop.permute.xlu0 %7375
    %7377 = vrot.lane.b32.xlu0 %v7339, 8
    %v7378 = vpop.permute.xlu0 %7377
    %7379 = vrot.lane.b32.xlu0 %v7340, 8
    %v7380 = vpop.permute.xlu0 %7379
    %7381 = vrot.lane.b32.xlu0 %v7341, 8
    %v7382 = vpop.permute.xlu0 %7381
    %7383 = vrot.lane.b32.xlu0 %v7342, 8
    %v7384 = vpop.permute.xlu0 %7383
    %7385 = vrot.lane.b32.xlu0 %v7343, 8
    %v7386 = vpop.permute.xlu0 %7385
    %7387 = vrot.lane.b32.xlu0 %v7344, 8
    %v7388 = vpop.permute.xlu0 %7387
    %7389 = vrot.lane.b32.xlu0 %v7345, 8
    %v7390 = vpop.permute.xlu0 %7389
    %7391 = vrot.lane.b32.xlu0 %v7346, 8
    %v7392 = vpop.permute.xlu0 %7391
    %7393 = vrot.lane.b32.xlu0 %v7347, 8
    %v7394 = vpop.permute.xlu0 %7393
    %7395 = vrot.lane.b32.xlu0 %v7348, 8
    %v7396 = vpop.permute.xlu0 %7395
    %7413 = vst.msk [vmem:[#allocation4 + $0x10] sm:$0xff] %vm4250, %v7366
    %7414 = vst.msk [vmem:[#allocation4 + $0x28] sm:$0xff] %vm4250, %v7368
    %7415 = vst.msk [vmem:[#allocation4 + $0x40] sm:$0xff] %vm4250, %v7370
    %7416 = vst.msk [vmem:[#allocation4 + $0x58] sm:$0xff] %vm4250, %v7372
    %7417 = vst.msk [vmem:[#allocation4 + $0x70] sm:$0xff] %vm4250, %v7374
    %7418 = vst.msk [vmem:[#allocation4 + $0x88] sm:$0xff] %vm4250, %v7376
    %7419 = vst.msk [vmem:[#allocation4 + $0xa0] sm:$0xff] %vm4250, %v7378
    %7420 = vst.msk [vmem:[#allocation4 + $0xb8] sm:$0xff] %vm4250, %v7380
    %7421 = vst.msk [vmem:[#allocation4 + $0xd0] sm:$0xff] %vm4250, %v7382
    %7422 = vst.msk [vmem:[#allocation4 + $0xe8] sm:$0xff] %vm4250, %v7384
    %7423 = vst.msk [vmem:[#allocation4 + $0x100] sm:$0xff] %vm4250, %v7386
    %7424 = vst.msk [vmem:[#allocation4 + $0x118] sm:$0xff] %vm4250, %v7388
    %7425 = vst.msk [vmem:[#allocation4 + $0x130] sm:$0xff] %vm4250, %v7390
    %7426 = vst.msk [vmem:[#allocation4 + $0x148] sm:$0xff] %vm4250, %v7392
    %7427 = vst.msk [vmem:[#allocation4 + $0x160] sm:$0xff] %vm4250, %v7394
    %7428 = vst.msk [vmem:[#allocation4 + $0x178] sm:$0xff] %vm4250, %v7396
    %v7429 = vld [vmem:[%s7124 + $0x3] sm:$0xff]
    %v7430 = vld [vmem:[%s7124 + $0x13] sm:$0xff]
    %v7431 = vld [vmem:[%s7124 + $0x23] sm:$0xff]
    %v7432 = vld [vmem:[%s7124 + $0x33] sm:$0xff]
    %v7433 = vld [vmem:[%s7124 + $0x43] sm:$0xff]
    %v7434 = vld [vmem:[%s7124 + $0x53] sm:$0xff]
    %v7435 = vld [vmem:[%s7124 + $0x63] sm:$0xff]
    %v7436 = vld [vmem:[%s7124 + $0x73] sm:$0xff]
    %v7437 = vld [vmem:[%s7124 + $0xc3] sm:$0xff]
    %v7438 = vld [vmem:[%s7124 + $0xd3] sm:$0xff]
    %v7439 = vld [vmem:[%s7124 + $0xe3] sm:$0xff]
    %v7440 = vld [vmem:[%s7124 + $0xf3] sm:$0xff]
    %v7441 = vld [vmem:[%s7124 + $0x103] sm:$0xff]
    %v7442 = vld [vmem:[%s7124 + $0x113] sm:$0xff]
    %v7443 = vld [vmem:[%s7124 + $0x123] sm:$0xff]
    %v7444 = vld [vmem:[%s7124 + $0x133] sm:$0xff]
    %7461 = vrot.lane.b32.xlu0 %v7429, 20
    %v7462 = vpop.permute.xlu0 %7461
    %7463 = vrot.lane.b32.xlu0 %v7430, 20
    %v7464 = vpop.permute.xlu0 %7463
    %7465 = vrot.lane.b32.xlu0 %v7431, 20
    %v7466 = vpop.permute.xlu0 %7465
    %7467 = vrot.lane.b32.xlu0 %v7432, 20
    %v7468 = vpop.permute.xlu0 %7467
    %7469 = vrot.lane.b32.xlu0 %v7433, 20
    %v7470 = vpop.permute.xlu0 %7469
    %7471 = vrot.lane.b32.xlu0 %v7434, 20
    %v7472 = vpop.permute.xlu0 %7471
    %7473 = vrot.lane.b32.xlu0 %v7435, 20
    %v7474 = vpop.permute.xlu0 %7473
    %7475 = vrot.lane.b32.xlu0 %v7436, 20
    %v7476 = vpop.permute.xlu0 %7475
    %7477 = vrot.lane.b32.xlu0 %v7437, 20
    %v7478 = vpop.permute.xlu0 %7477
    %7479 = vrot.lane.b32.xlu0 %v7438, 20
    %v7480 = vpop.permute.xlu0 %7479
    %7481 = vrot.lane.b32.xlu0 %v7439, 20
    %v7482 = vpop.permute.xlu0 %7481
    %7483 = vrot.lane.b32.xlu0 %v7440, 20
    %v7484 = vpop.permute.xlu0 %7483
    %7485 = vrot.lane.b32.xlu0 %v7441, 20
    %v7486 = vpop.permute.xlu0 %7485
    %7487 = vrot.lane.b32.xlu0 %v7442, 20
    %v7488 = vpop.permute.xlu0 %7487
    %7489 = vrot.lane.b32.xlu0 %v7443, 20
    %v7490 = vpop.permute.xlu0 %7489
    %7491 = vrot.lane.b32.xlu0 %v7444, 20
    %v7492 = vpop.permute.xlu0 %7491
    %7509 = vst.msk [vmem:[#allocation4 + $0x10] sm:$0xff] %vm4347, %v7462
    %7510 = vst.msk [vmem:[#allocation4 + $0x28] sm:$0xff] %vm4347, %v7464
    %7511 = vst.msk [vmem:[#allocation4 + $0x40] sm:$0xff] %vm4347, %v7466
    %7512 = vst.msk [vmem:[#allocation4 + $0x58] sm:$0xff] %vm4347, %v7468
    %7513 = vst.msk [vmem:[#allocation4 + $0x70] sm:$0xff] %vm4347, %v7470
    %7514 = vst.msk [vmem:[#allocation4 + $0x88] sm:$0xff] %vm4347, %v7472
    %7515 = vst.msk [vmem:[#allocation4 + $0xa0] sm:$0xff] %vm4347, %v7474
    %7516 = vst.msk [vmem:[#allocation4 + $0xb8] sm:$0xff] %vm4347, %v7476
    %7517 = vst.msk [vmem:[#allocation4 + $0xd0] sm:$0xff] %vm4347, %v7478
    %7518 = vst.msk [vmem:[#allocation4 + $0xe8] sm:$0xff] %vm4347, %v7480
    %7519 = vst.msk [vmem:[#allocation4 + $0x100] sm:$0xff] %vm4347, %v7482
    %7520 = vst.msk [vmem:[#allocation4 + $0x118] sm:$0xff] %vm4347, %v7484
    %7521 = vst.msk [vmem:[#allocation4 + $0x130] sm:$0xff] %vm4347, %v7486
    %7522 = vst.msk [vmem:[#allocation4 + $0x148] sm:$0xff] %vm4347, %v7488
    %7523 = vst.msk [vmem:[#allocation4 + $0x160] sm:$0xff] %vm4347, %v7490
    %7524 = vst.msk [vmem:[#allocation4 + $0x178] sm:$0xff] %vm4347, %v7492
    %v7525 = vld [vmem:[%s7124 + $0x4] sm:$0xff]
    %v7526 = vld [vmem:[%s7124 + $0x14] sm:$0xff]
    %v7527 = vld [vmem:[%s7124 + $0x24] sm:$0xff]
    %v7528 = vld [vmem:[%s7124 + $0x34] sm:$0xff]
    %v7529 = vld [vmem:[%s7124 + $0x44] sm:$0xff]
    %v7530 = vld [vmem:[%s7124 + $0x54] sm:$0xff]
    %v7531 = vld [vmem:[%s7124 + $0x64] sm:$0xff]
    %v7532 = vld [vmem:[%s7124 + $0x74] sm:$0xff]
    %v7533 = vld [vmem:[%s7124 + $0xc4] sm:$0xff]
    %v7534 = vld [vmem:[%s7124 + $0xd4] sm:$0xff]
    %v7535 = vld [vmem:[%s7124 + $0xe4] sm:$0xff]
    %v7536 = vld [vmem:[%s7124 + $0xf4] sm:$0xff]
    %v7537 = vld [vmem:[%s7124 + $0x104] sm:$0xff]
    %v7538 = vld [vmem:[%s7124 + $0x114] sm:$0xff]
    %v7539 = vld [vmem:[%s7124 + $0x124] sm:$0xff]
    %v7540 = vld [vmem:[%s7124 + $0x134] sm:$0xff]
    %7557 = vrot.lane.b32.xlu0 %v7525, 32
    %v7558 = vpop.permute.xlu0 %7557
    %7559 = vrot.lane.b32.xlu0 %v7526, 32
    %v7560 = vpop.permute.xlu0 %7559
    %7561 = vrot.lane.b32.xlu0 %v7527, 32
    %v7562 = vpop.permute.xlu0 %7561
    %7563 = vrot.lane.b32.xlu0 %v7528, 32
    %v7564 = vpop.permute.xlu0 %7563
    %7565 = vrot.lane.b32.xlu0 %v7529, 32
    %v7566 = vpop.permute.xlu0 %7565
    %7567 = vrot.lane.b32.xlu0 %v7530, 32
    %v7568 = vpop.permute.xlu0 %7567
    %7569 = vrot.lane.b32.xlu0 %v7531, 32
    %v7570 = vpop.permute.xlu0 %7569
    %7571 = vrot.lane.b32.xlu0 %v7532, 32
    %v7572 = vpop.permute.xlu0 %7571
    %7573 = vrot.lane.b32.xlu0 %v7533, 32
    %v7574 = vpop.permute.xlu0 %7573
    %7575 = vrot.lane.b32.xlu0 %v7534, 32
    %v7576 = vpop.permute.xlu0 %7575
    %7577 = vrot.lane.b32.xlu0 %v7535, 32
    %v7578 = vpop.permute.xlu0 %7577
    %7579 = vrot.lane.b32.xlu0 %v7536, 32
    %v7580 = vpop.permute.xlu0 %7579
    %7581 = vrot.lane.b32.xlu0 %v7537, 32
    %v7582 = vpop.permute.xlu0 %7581
    %7583 = vrot.lane.b32.xlu0 %v7538, 32
    %v7584 = vpop.permute.xlu0 %7583
    %7585 = vrot.lane.b32.xlu0 %v7539, 32
    %v7586 = vpop.permute.xlu0 %7585
    %7587 = vrot.lane.b32.xlu0 %v7540, 32
    %v7588 = vpop.permute.xlu0 %7587
    %7605 = vst.msk [vmem:[#allocation4 + $0x10] sm:$0xff] %vm4444, %v7558
    %7606 = vst.msk [vmem:[#allocation4 + $0x28] sm:$0xff] %vm4444, %v7560
    %7607 = vst.msk [vmem:[#allocation4 + $0x40] sm:$0xff] %vm4444, %v7562
    %7608 = vst.msk [vmem:[#allocation4 + $0x58] sm:$0xff] %vm4444, %v7564
    %7609 = vst.msk [vmem:[#allocation4 + $0x70] sm:$0xff] %vm4444, %v7566
    %7610 = vst.msk [vmem:[#allocation4 + $0x88] sm:$0xff] %vm4444, %v7568
    %7611 = vst.msk [vmem:[#allocation4 + $0xa0] sm:$0xff] %vm4444, %v7570
    %7612 = vst.msk [vmem:[#allocation4 + $0xb8] sm:$0xff] %vm4444, %v7572
    %7613 = vst.msk [vmem:[#allocation4 + $0xd0] sm:$0xff] %vm4444, %v7574
    %7614 = vst.msk [vmem:[#allocation4 + $0xe8] sm:$0xff] %vm4444, %v7576
    %7615 = vst.msk [vmem:[#allocation4 + $0x100] sm:$0xff] %vm4444, %v7578
    %7616 = vst.msk [vmem:[#allocation4 + $0x118] sm:$0xff] %vm4444, %v7580
    %7617 = vst.msk [vmem:[#allocation4 + $0x130] sm:$0xff] %vm4444, %v7582
    %7618 = vst.msk [vmem:[#allocation4 + $0x148] sm:$0xff] %vm4444, %v7584
    %7619 = vst.msk [vmem:[#allocation4 + $0x160] sm:$0xff] %vm4444, %v7586
    %7620 = vst.msk [vmem:[#allocation4 + $0x178] sm:$0xff] %vm4444, %v7588
    %v7621 = vld [vmem:[#allocation4] sm:$0xff]
    %v7622 = vld [vmem:[#allocation4 + $0x8] sm:$0xff]
    %v7623 = vld [vmem:[#allocation4 + $0x10] sm:$0xff]
    %v7624 = vld [vmem:[#allocation4 + $0x18] sm:$0xff]
    %v7625 = vld [vmem:[#allocation4 + $0x20] sm:$0xff]
    %v7626 = vld [vmem:[#allocation4 + $0x28] sm:$0xff]
    %v7627 = vld [vmem:[#allocation4 + $0x30] sm:$0xff]
    %v7628 = vld [vmem:[#allocation4 + $0x38] sm:$0xff]
    %v7629 = vld [vmem:[#allocation4 + $0x40] sm:$0xff]
    %v7630 = vld [vmem:[#allocation4 + $0x48] sm:$0xff]
    %v7631 = vld [vmem:[#allocation4 + $0x50] sm:$0xff]
    %v7632 = vld [vmem:[#allocation4 + $0x58] sm:$0xff]
    %v7633 = vld [vmem:[#allocation4 + $0x60] sm:$0xff]
    %v7634 = vld [vmem:[#allocation4 + $0x68] sm:$0xff]
    %v7635 = vld [vmem:[#allocation4 + $0x70] sm:$0xff]
    %v7636 = vld [vmem:[#allocation4 + $0x78] sm:$0xff]
    %v7637 = vld [vmem:[#allocation4 + $0x80] sm:$0xff]
    %v7638 = vld [vmem:[#allocation4 + $0x88] sm:$0xff]
    %v7639 = vld [vmem:[#allocation4 + $0x90] sm:$0xff]
    %v7640 = vld [vmem:[#allocation4 + $0x98] sm:$0xff]
    %v7641 = vld [vmem:[#allocation4 + $0xa0] sm:$0xff]
    %v7642 = vld [vmem:[#allocation4 + $0xa8] sm:$0xff]
    %v7643 = vld [vmem:[#allocation4 + $0xb0] sm:$0xff]
    %v7644 = vld [vmem:[#allocation4 + $0xb8] sm:$0xff]
    %v7645 = vld [vmem:[#allocation4 + $0xc0] sm:$0xff]
    %v7646 = vld [vmem:[#allocation4 + $0xc8] sm:$0xff]
    %v7647 = vld [vmem:[#allocation4 + $0xd0] sm:$0xff]
    %v7648 = vld [vmem:[#allocation4 + $0xd8] sm:$0xff]
    %v7649 = vld [vmem:[#allocation4 + $0xe0] sm:$0xff]
    %v7650 = vld [vmem:[#allocation4 + $0xe8] sm:$0xff]
    %v7651 = vld [vmem:[#allocation4 + $0xf0] sm:$0xff]
    %v7652 = vld [vmem:[#allocation4 + $0xf8] sm:$0xff]
    %v7653 = vld [vmem:[#allocation4 + $0x100] sm:$0xff]
    %v7654 = vld [vmem:[#allocation4 + $0x108] sm:$0xff]
    %v7655 = vld [vmem:[#allocation4 + $0x110] sm:$0xff]
    %v7656 = vld [vmem:[#allocation4 + $0x118] sm:$0xff]
    %v7657 = vld [vmem:[#allocation4 + $0x120] sm:$0xff]
    %v7658 = vld [vmem:[#allocation4 + $0x128] sm:$0xff]
    %v7659 = vld [vmem:[#allocation4 + $0x130] sm:$0xff]
    %v7660 = vld [vmem:[#allocation4 + $0x138] sm:$0xff]
    %v7661 = vld [vmem:[#allocation4 + $0x140] sm:$0xff]
    %v7662 = vld [vmem:[#allocation4 + $0x148] sm:$0xff]
    %v7663 = vld [vmem:[#allocation4 + $0x150] sm:$0xff]
    %v7664 = vld [vmem:[#allocation4 + $0x158] sm:$0xff]
    %v7665 = vld [vmem:[#allocation4 + $0x160] sm:$0xff]
    %v7666 = vld [vmem:[#allocation4 + $0x168] sm:$0xff]
    %v7667 = vld [vmem:[#allocation4 + $0x170] sm:$0xff]
    %v7668 = vld [vmem:[#allocation4 + $0x178] sm:$0xff]
    %v7669 = vpack.c.bf16 %v7624, %v7621
    %v7670 = vpack.c.bf16 %v7625, %v7622
    %v7671 = vpack.c.bf16 %v7626, %v7623
    %v7672 = vpack.c.bf16 %v7630, %v7627
    %v7673 = vpack.c.bf16 %v7631, %v7628
    %v7674 = vpack.c.bf16 %v7632, %v7629
    %v7675 = vpack.c.bf16 %v7636, %v7633
    %v7676 = vpack.c.bf16 %v7637, %v7634
    %v7677 = vpack.c.bf16 %v7638, %v7635
    %v7678 = vpack.c.bf16 %v7642, %v7639
    %v7679 = vpack.c.bf16 %v7643, %v7640
    %v7680 = vpack.c.bf16 %v7644, %v7641
    %v7681 = vpack.c.bf16 %v7648, %v7645
    %v7682 = vpack.c.bf16 %v7649, %v7646
    %v7683 = vpack.c.bf16 %v7650, %v7647
    %v7684 = vpack.c.bf16 %v7654, %v7651
    %v7685 = vpack.c.bf16 %v7655, %v7652
    %v7686 = vpack.c.bf16 %v7656, %v7653
    %v7687 = vpack.c.bf16 %v7660, %v7657
    %v7688 = vpack.c.bf16 %v7661, %v7658
    %v7689 = vpack.c.bf16 %v7662, %v7659
    %v7690 = vpack.c.bf16 %v7666, %v7663
    %v7691 = vpack.c.bf16 %v7667, %v7664
    %v7692 = vpack.c.bf16 %v7668, %v7665
    %v7693 = vld [vmem:[%s5] sm:$0xf]
    %v7694 = vld [vmem:[%s5 + $0x4] sm:$0xf]
    %v7695 = vld [vmem:[%s5 + $0x8] sm:$0xf]
    %v7696 = vld [vmem:[%s5 + $0xc] sm:$0xf]
    %v7697 = vld [vmem:[%s5 + $0x10] sm:$0xf]
    %v7698 = vld [vmem:[%s5 + $0x14] sm:$0xf]
    %v7699 = vld [vmem:[%s5 + $0x18] sm:$0xf]
    %v7700 = vld [vmem:[%s5 + $0x1c] sm:$0xf]
    %v7701 = vld [vmem:[%s5 + $0x20] sm:$0xf]
    %v7702 = vld [vmem:[%s5 + $0x24] sm:$0xf]
    %v7703 = vld [vmem:[%s5 + $0x28] sm:$0xf]
    %v7704 = vld [vmem:[%s5 + $0x2c] sm:$0xf]
    %v7705 = vld [vmem:[%s5 + $0x30] sm:$0xf]
    %v7706 = vld [vmem:[%s5 + $0x34] sm:$0xf]
    %v7707 = vld [vmem:[%s5 + $0x38] sm:$0xf]
    %v7708 = vld [vmem:[%s5 + $0x3c] sm:$0xf]
    %v7709 = vld [vmem:[%s5 + $0x40] sm:$0xf]
    %v7710 = vld [vmem:[%s5 + $0x44] sm:$0xf]
    %v7711 = vld [vmem:[%s5 + $0x48] sm:$0xf]
    %v7712 = vld [vmem:[%s5 + $0x4c] sm:$0xf]
    %v7713 = vld [vmem:[%s5 + $0x50] sm:$0xf]
    %v7714 = vld [vmem:[%s5 + $0x54] sm:$0xf]
    %v7715 = vld [vmem:[%s5 + $0x58] sm:$0xf]
    %v7716 = vld [vmem:[%s5 + $0x5c] sm:$0xf]
    %v7717 = vld [vmem:[%s5 + $0x60] sm:$0xf]
    %v7718 = vld [vmem:[%s5 + $0x64] sm:$0xf]
    %v7719 = vld [vmem:[%s5 + $0x68] sm:$0xf]
    %v7720 = vld [vmem:[%s5 + $0x6c] sm:$0xf]
    %v7721 = vld [vmem:[%s5 + $0x70] sm:$0xf]
    %v7722 = vld [vmem:[%s5 + $0x74] sm:$0xf]
    %v7723 = vld [vmem:[%s5 + $0x78] sm:$0xf]
    %v7724 = vld [vmem:[%s5 + $0x7c] sm:$0xf]
    %v7725 = vld [vmem:[%s5 + $0x80] sm:$0xf]
    %v7726 = vld [vmem:[%s5 + $0x84] sm:$0xf]
    %v7727 = vld [vmem:[%s5 + $0x88] sm:$0xf]
    %v7728 = vld [vmem:[%s5 + $0x8c] sm:$0xf]
    %v7729 = vld [vmem:[%s5 + $0x90] sm:$0xf]
    %v7730 = vld [vmem:[%s5 + $0x94] sm:$0x3]
    %v7731 = vld [vmem:[%s6] sm:$0x1]
    %v7733 = vperm.slane %v7731, 0
    %v7773 = vunpack.c.l.b16 %v7693
    %v7774 = vunpack.c.l.b16 %v7694
    %v7775 = vunpack.c.l.b16 %v7695
    %v7776 = vunpack.c.l.b16 %v7696
    %v7777 = vunpack.c.l.b16 %v7697
    %v7778 = vunpack.c.l.b16 %v7698
    %v7779 = vunpack.c.l.b16 %v7699
    %v7780 = vunpack.c.l.b16 %v7700
    %v7781 = vunpack.c.l.b16 %v7701
    %v7782 = vunpack.c.l.b16 %v7702
    %v7783 = vunpack.c.l.b16 %v7703
    %v7784 = vunpack.c.l.b16 %v7704
    %v7785 = vunpack.c.l.b16 %v7705
    %v7786 = vunpack.c.l.b16 %v7706
    %v7787 = vunpack.c.l.b16 %v7707
    %v7788 = vunpack.c.l.b16 %v7708
    %v7789 = vunpack.c.l.b16 %v7709
    %v7790 = vunpack.c.l.b16 %v7710
    %v7791 = vunpack.c.l.b16 %v7711
    %v7792 = vunpack.c.l.b16 %v7712
    %v7793 = vunpack.c.l.b16 %v7713
    %v7794 = vunpack.c.l.b16 %v7714
    %v7795 = vunpack.c.l.b16 %v7715
    %v7796 = vunpack.c.l.b16 %v7716
    %v7797 = vunpack.c.l.b16 %v7717
    %v7798 = vunpack.c.l.b16 %v7718
    %v7799 = vunpack.c.l.b16 %v7719
    %v7800 = vunpack.c.l.b16 %v7720
    %v7801 = vunpack.c.l.b16 %v7721
    %v7802 = vunpack.c.l.b16 %v7722
    %v7803 = vunpack.c.l.b16 %v7723
    %v7804 = vunpack.c.l.b16 %v7724
    %v7805 = vunpack.c.l.b16 %v7725
    %v7806 = vunpack.c.l.b16 %v7726
    %v7807 = vunpack.c.l.b16 %v7727
    %v7808 = vunpack.c.l.b16 %v7728
    %v7809 = vunpack.c.l.b16 %v7729
    %v7810 = vunpack.c.l.b16 %v7730
    %v7811 = vpack.c.b16 %v7774, %v7773
    %v7812 = vpack.c.b16 %v7776, %v7775
    %v7813 = vpack.c.b16 %v7778, %v7777
    %v7814 = vpack.c.b16 %v7780, %v7779
    %v7815 = vpack.c.b16 %v7782, %v7781
    %v7816 = vpack.c.b16 %v7784, %v7783
    %v7817 = vpack.c.b16 %v7786, %v7785
    %v7818 = vpack.c.b16 %v7788, %v7787
    %v7819 = vpack.c.b16 %v7790, %v7789
    %v7820 = vpack.c.b16 %v7792, %v7791
    %v7821 = vpack.c.b16 %v7794, %v7793
    %v7822 = vpack.c.b16 %v7796, %v7795
    %v7823 = vpack.c.b16 %v7798, %v7797
    %v7824 = vpack.c.b16 %v7800, %v7799
    %v7825 = vpack.c.b16 %v7802, %v7801
    %v7826 = vpack.c.b16 %v7804, %v7803
    %v7827 = vpack.c.b16 %v7806, %v7805
    %v7828 = vpack.c.b16 %v7808, %v7807
    %v7829 = vpack.c.b16 %v7810, %v7809
    %v7849 = vsel %vm4688, %v7671, 0
    %v7852 = vsel %vm4688, %v7674, 0
    %v7855 = vsel %vm4688, %v7677, 0
    %v7858 = vsel %vm4688, %v7680, 0
    %v7861 = vsel %vm4688, %v7683, 0
    %v7864 = vsel %vm4688, %v7686, 0
    %v7867 = vsel %vm4688, %v7689, 0
    %v7870 = vsel %vm4688, %v7692, 0
    %v7873 = vsel %vm408, %v7829, 0
    %7875 = vmatpush.bf16.msra.mxu0 %v7818
    %7876 = vmatpush.bf16.msra.mxu0 %v7817
    %7877 = vmatpush.bf16.msra.mxu0 %v7816
    %7878 = vmatpush.bf16.msra.mxu0 %v7815
    %7879 = vmatpush.bf16.msra.mxu0 %v7814
    %7880 = vmatpush.bf16.msra.mxu0 %v7813
    %7881 = vmatpush.bf16.msra.mxu0 %v7812
    %7882 = vmatpush.bf16.msra.mxu0 %v7811
    %7883 = vmatmul.bf16.gmra.mxu0 %v7669
    %v7884 = vpop.f32.mrf.mxu0
    %v7885 = vadd.f32 %v7733, %v7884
    %v7886 = vpop.f32.mrf.mxu0
    %v7887 = vadd.f32 %v7733, %v7886
    %7888 = vmatmul.bf16.gmra.mxu0 %v7672
    %v7889 = vpop.f32.mrf.mxu0
    %v7890 = vadd.f32 %v7733, %v7889
    %v7891 = vpop.f32.mrf.mxu0
    %v7892 = vadd.f32 %v7733, %v7891
    %7893 = vmatmul.bf16.gmra.mxu0 %v7675
    %v7894 = vpop.f32.mrf.mxu0
    %v7895 = vadd.f32 %v7733, %v7894
    %v7896 = vpop.f32.mrf.mxu0
    %v7897 = vadd.f32 %v7733, %v7896
    %7898 = vmatmul.bf16.gmra.mxu0 %v7678
    %v7899 = vpop.f32.mrf.mxu0
    %v7900 = vadd.f32 %v7733, %v7899
    %v7901 = vpop.f32.mrf.mxu0
    %v7902 = vadd.f32 %v7733, %v7901
    %7903 = vmatmul.bf16.gmra.mxu0 %v7681
    %v7904 = vpop.f32.mrf.mxu0
    %v7905 = vadd.f32 %v7733, %v7904
    %v7906 = vpop.f32.mrf.mxu0
    %v7907 = vadd.f32 %v7733, %v7906
    %7908 = vmatmul.bf16.gmra.mxu0 %v7684
    %v7909 = vpop.f32.mrf.mxu0
    %v7910 = vadd.f32 %v7733, %v7909
    %v7911 = vpop.f32.mrf.mxu0
    %v7912 = vadd.f32 %v7733, %v7911
    %7913 = vmatmul.bf16.gmra.mxu0 %v7687
    %v7914 = vpop.f32.mrf.mxu0
    %v7915 = vadd.f32 %v7733, %v7914
    %v7916 = vpop.f32.mrf.mxu0
    %v7917 = vadd.f32 %v7733, %v7916
    %7918 = vmatmul.bf16.gmra.mxu0 %v7690
    %v7919 = vpop.f32.mrf.mxu0
    %v7920 = vadd.f32 %v7733, %v7919
    %v7921 = vpop.f32.mrf.mxu0
    %v7922 = vadd.f32 %v7733, %v7921
    %7923 = vdwg.mxu0
    %7924 = vmatpush.bf16.msra.mxu0 %v7826
    %7925 = vmatpush.bf16.msra.mxu0 %v7825
    %7926 = vmatpush.bf16.msra.mxu0 %v7824
    %7927 = vmatpush.bf16.msra.mxu0 %v7823
    %7928 = vmatpush.bf16.msra.mxu0 %v7822
    %7929 = vmatpush.bf16.msra.mxu0 %v7821
    %7930 = vmatpush.bf16.msra.mxu0 %v7820
    %7931 = vmatpush.bf16.msra.mxu0 %v7819
    %7932 = vmatmul.bf16.gmra.mxu0 %v7670
    %v7933 = vpop.f32.mrf.mxu0
    %v7934 = vadd.f32 %v7885, %v7933
    %v7935 = vpop.f32.mrf.mxu0
    %v7936 = vadd.f32 %v7887, %v7935
    %7937 = vmatmul.bf16.gmra.mxu0 %v7673
    %v7938 = vpop.f32.mrf.mxu0
    %v7939 = vadd.f32 %v7890, %v7938
    %v7940 = vpop.f32.mrf.mxu0
    %v7941 = vadd.f32 %v7892, %v7940
    %7942 = vmatmul.bf16.gmra.mxu0 %v7676
    %v7943 = vpop.f32.mrf.mxu0
    %v7944 = vadd.f32 %v7895, %v7943
    %v7945 = vpop.f32.mrf.mxu0
    %v7946 = vadd.f32 %v7897, %v7945
    %7947 = vmatmul.bf16.gmra.mxu0 %v7679
    %v7948 = vpop.f32.mrf.mxu0
    %v7949 = vadd.f32 %v7900, %v7948
    %v7950 = vpop.f32.mrf.mxu0
    %v7951 = vadd.f32 %v7902, %v7950
    %7952 = vmatmul.bf16.gmra.mxu0 %v7682
    %v7953 = vpop.f32.mrf.mxu0
    %v7954 = vadd.f32 %v7905, %v7953
    %v7955 = vpop.f32.mrf.mxu0
    %v7956 = vadd.f32 %v7907, %v7955
    %7957 = vmatmul.bf16.gmra.mxu0 %v7685
    %v7958 = vpop.f32.mrf.mxu0
    %v7959 = vadd.f32 %v7910, %v7958
    %v7960 = vpop.f32.mrf.mxu0
    %v7961 = vadd.f32 %v7912, %v7960
    %7962 = vmatmul.bf16.gmra.mxu0 %v7688
    %v7963 = vpop.f32.mrf.mxu0
    %v7964 = vadd.f32 %v7915, %v7963
    %v7965 = vpop.f32.mrf.mxu0
    %v7966 = vadd.f32 %v7917, %v7965
    %7967 = vmatmul.bf16.gmra.mxu0 %v7691
    %v7968 = vpop.f32.mrf.mxu0
    %v7969 = vadd.f32 %v7920, %v7968
    %v7970 = vpop.f32.mrf.mxu0
    %v7971 = vadd.f32 %v7922, %v7970
    %7972 = vdwg.mxu0
    %7973 = vmatpush.bf16.msra.mxu0 0
    %7974 = vmatpush.bf16.msra.mxu0 0
    %7975 = vmatpush.bf16.msra.mxu0 0
    %7976 = vmatpush.bf16.msra.mxu0 0
    %7977 = vmatpush.bf16.msra.mxu0 0
    %7978 = vmatpush.bf16.msra.mxu0 %v7873
    %7979 = vmatpush.bf16.msra.mxu0 %v7828
    %7980 = vmatpush.bf16.msra.mxu0 %v7827
    %7981 = vmatmul.bf16.gmra.mxu0 %v7849
    %v7982 = vpop.f32.mrf.mxu0
    %v7983 = vadd.f32 %v7934, %v7982
    %v7984 = vpop.f32.mrf.mxu0
    %v7985 = vadd.f32 %v7936, %v7984
    %7986 = vmatmul.bf16.gmra.mxu0 %v7852
    %v7987 = vpop.f32.mrf.mxu0
    %v7988 = vadd.f32 %v7939, %v7987
    %v7989 = vpop.f32.mrf.mxu0
    %v7990 = vadd.f32 %v7941, %v7989
    %7991 = vmatmul.bf16.gmra.mxu0 %v7855
    %v7992 = vpop.f32.mrf.mxu0
    %v7993 = vadd.f32 %v7944, %v7992
    %v7994 = vpop.f32.mrf.mxu0
    %v7995 = vadd.f32 %v7946, %v7994
    %7996 = vmatmul.bf16.gmra.mxu0 %v7858
    %v7997 = vpop.f32.mrf.mxu0
    %v7998 = vadd.f32 %v7949, %v7997
    %v7999 = vpop.f32.mrf.mxu0
    %v8000 = vadd.f32 %v7951, %v7999
    %8001 = vmatmul.bf16.gmra.mxu0 %v7861
    %v8002 = vpop.f32.mrf.mxu0
    %v8003 = vadd.f32 %v7954, %v8002
    %v8004 = vpop.f32.mrf.mxu0
    %v8005 = vadd.f32 %v7956, %v8004
    %8006 = vmatmul.bf16.gmra.mxu0 %v7864
    %v8007 = vpop.f32.mrf.mxu0
    %v8008 = vadd.f32 %v7959, %v8007
    %v8009 = vpop.f32.mrf.mxu0
    %v8010 = vadd.f32 %v7961, %v8009
    %8011 = vmatmul.bf16.gmra.mxu0 %v7867
    %v8012 = vpop.f32.mrf.mxu0
    %v8013 = vadd.f32 %v7964, %v8012
    %v8014 = vpop.f32.mrf.mxu0
    %v8015 = vadd.f32 %v7966, %v8014
    %8016 = vmatmul.bf16.gmra.mxu0 %v7870
    %v8017 = vpop.f32.mrf.mxu0
    %v8018 = vadd.f32 %v7969, %v8017
    %v8019 = vpop.f32.mrf.mxu0
    %v8020 = vadd.f32 %v7971, %v8019
    %8021 = vdwg.mxu0
    %v8022 = vsub.f32 0.0, %v7983
    %v8023 = vsub.f32 0.0, %v7985
    %v8024 = vsub.f32 0.0, %v7988
    %v8025 = vsub.f32 0.0, %v7990
    %v8026 = vsub.f32 0.0, %v7993
    %v8027 = vsub.f32 0.0, %v7995
    %v8028 = vsub.f32 0.0, %v7998
    %v8029 = vsub.f32 0.0, %v8000
    %v8030 = vsub.f32 0.0, %v8003
    %v8031 = vsub.f32 0.0, %v8005
    %v8032 = vsub.f32 0.0, %v8008
    %v8033 = vsub.f32 0.0, %v8010
    %v8034 = vsub.f32 0.0, %v8013
    %v8035 = vsub.f32 0.0, %v8015
    %v8036 = vsub.f32 0.0, %v8018
    %v8037 = vsub.f32 0.0, %v8020
    %v8038 = vmul.f32 %v8022, 1.442695
    %v8039 = vpow.pop %v8038
    %v8040 = vmul.f32 %v8023, 1.442695
    %v8041 = vpow.pop %v8040
    %v8042 = vmul.f32 %v8024, 1.442695
    %v8043 = vpow.pop %v8042
    %v8044 = vmul.f32 %v8025, 1.442695
    %v8045 = vpow.pop %v8044
    %v8046 = vmul.f32 %v8026, 1.442695
    %v8047 = vpow.pop %v8046
    %v8048 = vmul.f32 %v8027, 1.442695
    %v8049 = vpow.pop %v8048
    %v8050 = vmul.f32 %v8028, 1.442695
    %v8051 = vpow.pop %v8050
    %v8052 = vmul.f32 %v8029, 1.442695
    %v8053 = vpow.pop %v8052
    %v8054 = vmul.f32 %v8030, 1.442695
    %v8055 = vpow.pop %v8054
    %v8056 = vmul.f32 %v8031, 1.442695
    %v8057 = vpow.pop %v8056
    %v8058 = vmul.f32 %v8032, 1.442695
    %v8059 = vpow.pop %v8058
    %v8060 = vmul.f32 %v8033, 1.442695
    %v8061 = vpow.pop %v8060
    %v8062 = vmul.f32 %v8034, 1.442695
    %v8063 = vpow.pop %v8062
    %v8064 = vmul.f32 %v8035, 1.442695
    %v8065 = vpow.pop %v8064
    %v8066 = vmul.f32 %v8036, 1.442695
    %v8067 = vpow.pop %v8066
    %v8068 = vmul.f32 %v8037, 1.442695
    %v8069 = vpow.pop %v8068
    %v8070 = vadd.f32 %v8039, 1.0
    %v8071 = vadd.f32 %v8041, 1.0
    %v8072 = vadd.f32 %v8043, 1.0
    %v8073 = vadd.f32 %v8045, 1.0
    %v8074 = vadd.f32 %v8047, 1.0
    %v8075 = vadd.f32 %v8049, 1.0
    %v8076 = vadd.f32 %v8051, 1.0
    %v8077 = vadd.f32 %v8053, 1.0
    %v8078 = vadd.f32 %v8055, 1.0
    %v8079 = vadd.f32 %v8057, 1.0
    %v8080 = vadd.f32 %v8059, 1.0
    %v8081 = vadd.f32 %v8061, 1.0
    %v8082 = vadd.f32 %v8063, 1.0
    %v8083 = vadd.f32 %v8065, 1.0
    %v8084 = vadd.f32 %v8067, 1.0
    %v8085 = vadd.f32 %v8069, 1.0
    %v8086 = vrcp.pop %v8070
    %v8087 = vmul.f32 %v8070, %v8086
    %v8088 = vsub.f32 1.0, %v8087
    %v8089 = vmul.f32 %v8086, %v8088
    %v8090 = vadd.f32 %v8086, %v8089
    %vm8091 = vweird.f32 %v8070
    %vm8092 = vweird.f32 %v8086
    %vm8093 = vmor %vm8091, %vm8092
    %v8094 = vsel %vm8093, %v8086, %v8090
    %v8095 = vand.u32 2147483647, %v8070
    %vm8096 = vcmp.eq.f32.partialorder %v8095, 8.507059e+37
    %v8097 = vand.u32 %v8070, 2147483648
    %v8098 = vor.u32 1.1754944e-38, %v8097
    %v8099 = vsel %vm8096, %v8098, %v8094
    %v8100 = vmul.f32 1.0, %v8099
    %v8101 = vrcp.pop %v8071
    %v8102 = vmul.f32 %v8071, %v8101
    %v8103 = vsub.f32 1.0, %v8102
    %v8104 = vmul.f32 %v8101, %v8103
    %v8105 = vadd.f32 %v8101, %v8104
    %vm8106 = vweird.f32 %v8071
    %vm8107 = vweird.f32 %v8101
    %vm8108 = vmor %vm8106, %vm8107
    %v8109 = vsel %vm8108, %v8101, %v8105
    %v8110 = vand.u32 2147483647, %v8071
    %vm8111 = vcmp.eq.f32.partialorder %v8110, 8.507059e+37
    %v8112 = vand.u32 %v8071, 2147483648
    %v8113 = vor.u32 1.1754944e-38, %v8112
    %v8114 = vsel %vm8111, %v8113, %v8109
    %v8115 = vmul.f32 1.0, %v8114
    %v8116 = vrcp.pop %v8072
    %v8117 = vmul.f32 %v8072, %v8116
    %v8118 = vsub.f32 1.0, %v8117
    %v8119 = vmul.f32 %v8116, %v8118
    %v8120 = vadd.f32 %v8116, %v8119
    %vm8121 = vweird.f32 %v8072
    %vm8122 = vweird.f32 %v8116
    %vm8123 = vmor %vm8121, %vm8122
    %v8124 = vsel %vm8123, %v8116, %v8120
    %v8125 = vand.u32 2147483647, %v8072
    %vm8126 = vcmp.eq.f32.partialorder %v8125, 8.507059e+37
    %v8127 = vand.u32 %v8072, 2147483648
    %v8128 = vor.u32 1.1754944e-38, %v8127
    %v8129 = vsel %vm8126, %v8128, %v8124
    %v8130 = vmul.f32 1.0, %v8129
    %v8131 = vrcp.pop %v8073
    %v8132 = vmul.f32 %v8073, %v8131
    %v8133 = vsub.f32 1.0, %v8132
    %v8134 = vmul.f32 %v8131, %v8133
    %v8135 = vadd.f32 %v8131, %v8134
    %vm8136 = vweird.f32 %v8073
    %vm8137 = vweird.f32 %v8131
    %vm8138 = vmor %vm8136, %vm8137
    %v8139 = vsel %vm8138, %v8131, %v8135
    %v8140 = vand.u32 2147483647, %v8073
    %vm8141 = vcmp.eq.f32.partialorder %v8140, 8.507059e+37
    %v8142 = vand.u32 %v8073, 2147483648
    %v8143 = vor.u32 1.1754944e-38, %v8142
    %v8144 = vsel %vm8141, %v8143, %v8139
    %v8145 = vmul.f32 1.0, %v8144
    %v8146 = vrcp.pop %v8074
    %v8147 = vmul.f32 %v8074, %v8146
    %v8148 = vsub.f32 1.0, %v8147
    %v8149 = vmul.f32 %v8146, %v8148
    %v8150 = vadd.f32 %v8146, %v8149
    %vm8151 = vweird.f32 %v8074
    %vm8152 = vweird.f32 %v8146
    %vm8153 = vmor %vm8151, %vm8152
    %v8154 = vsel %vm8153, %v8146, %v8150
    %v8155 = vand.u32 2147483647, %v8074
    %vm8156 = vcmp.eq.f32.partialorder %v8155, 8.507059e+37
    %v8157 = vand.u32 %v8074, 2147483648
    %v8158 = vor.u32 1.1754944e-38, %v8157
    %v8159 = vsel %vm8156, %v8158, %v8154
    %v8160 = vmul.f32 1.0, %v8159
    %v8161 = vrcp.pop %v8075
    %v8162 = vmul.f32 %v8075, %v8161
    %v8163 = vsub.f32 1.0, %v8162
    %v8164 = vmul.f32 %v8161, %v8163
    %v8165 = vadd.f32 %v8161, %v8164
    %vm8166 = vweird.f32 %v8075
    %vm8167 = vweird.f32 %v8161
    %vm8168 = vmor %vm8166, %vm8167
    %v8169 = vsel %vm8168, %v8161, %v8165
    %v8170 = vand.u32 2147483647, %v8075
    %vm8171 = vcmp.eq.f32.partialorder %v8170, 8.507059e+37
    %v8172 = vand.u32 %v8075, 2147483648
    %v8173 = vor.u32 1.1754944e-38, %v8172
    %v8174 = vsel %vm8171, %v8173, %v8169
    %v8175 = vmul.f32 1.0, %v8174
    %v8176 = vrcp.pop %v8076
    %v8177 = vmul.f32 %v8076, %v8176
    %v8178 = vsub.f32 1.0, %v8177
    %v8179 = vmul.f32 %v8176, %v8178
    %v8180 = vadd.f32 %v8176, %v8179
    %vm8181 = vweird.f32 %v8076
    %vm8182 = vweird.f32 %v8176
    %vm8183 = vmor %vm8181, %vm8182
    %v8184 = vsel %vm8183, %v8176, %v8180
    %v8185 = vand.u32 2147483647, %v8076
    %vm8186 = vcmp.eq.f32.partialorder %v8185, 8.507059e+37
    %v8187 = vand.u32 %v8076, 2147483648
    %v8188 = vor.u32 1.1754944e-38, %v8187
    %v8189 = vsel %vm8186, %v8188, %v8184
    %v8190 = vmul.f32 1.0, %v8189
    %v8191 = vrcp.pop %v8077
    %v8192 = vmul.f32 %v8077, %v8191
    %v8193 = vsub.f32 1.0, %v8192
    %v8194 = vmul.f32 %v8191, %v8193
    %v8195 = vadd.f32 %v8191, %v8194
    %vm8196 = vweird.f32 %v8077
    %vm8197 = vweird.f32 %v8191
    %vm8198 = vmor %vm8196, %vm8197
    %v8199 = vsel %vm8198, %v8191, %v8195
    %v8200 = vand.u32 2147483647, %v8077
    %vm8201 = vcmp.eq.f32.partialorder %v8200, 8.507059e+37
    %v8202 = vand.u32 %v8077, 2147483648
    %v8203 = vor.u32 1.1754944e-38, %v8202
    %v8204 = vsel %vm8201, %v8203, %v8199
    %v8205 = vmul.f32 1.0, %v8204
    %v8206 = vrcp.pop %v8078
    %v8207 = vmul.f32 %v8078, %v8206
    %v8208 = vsub.f32 1.0, %v8207
    %v8209 = vmul.f32 %v8206, %v8208
    %v8210 = vadd.f32 %v8206, %v8209
    %vm8211 = vweird.f32 %v8078
    %vm8212 = vweird.f32 %v8206
    %vm8213 = vmor %vm8211, %vm8212
    %v8214 = vsel %vm8213, %v8206, %v8210
    %v8215 = vand.u32 2147483647, %v8078
    %vm8216 = vcmp.eq.f32.partialorder %v8215, 8.507059e+37
    %v8217 = vand.u32 %v8078, 2147483648
    %v8218 = vor.u32 1.1754944e-38, %v8217
    %v8219 = vsel %vm8216, %v8218, %v8214
    %v8220 = vmul.f32 1.0, %v8219
    %v8221 = vrcp.pop %v8079
    %v8222 = vmul.f32 %v8079, %v8221
    %v8223 = vsub.f32 1.0, %v8222
    %v8224 = vmul.f32 %v8221, %v8223
    %v8225 = vadd.f32 %v8221, %v8224
    %vm8226 = vweird.f32 %v8079
    %vm8227 = vweird.f32 %v8221
    %vm8228 = vmor %vm8226, %vm8227
    %v8229 = vsel %vm8228, %v8221, %v8225
    %v8230 = vand.u32 2147483647, %v8079
    %vm8231 = vcmp.eq.f32.partialorder %v8230, 8.507059e+37
    %v8232 = vand.u32 %v8079, 2147483648
    %v8233 = vor.u32 1.1754944e-38, %v8232
    %v8234 = vsel %vm8231, %v8233, %v8229
    %v8235 = vmul.f32 1.0, %v8234
    %v8236 = vrcp.pop %v8080
    %v8237 = vmul.f32 %v8080, %v8236
    %v8238 = vsub.f32 1.0, %v8237
    %v8239 = vmul.f32 %v8236, %v8238
    %v8240 = vadd.f32 %v8236, %v8239
    %vm8241 = vweird.f32 %v8080
    %vm8242 = vweird.f32 %v8236
    %vm8243 = vmor %vm8241, %vm8242
    %v8244 = vsel %vm8243, %v8236, %v8240
    %v8245 = vand.u32 2147483647, %v8080
    %vm8246 = vcmp.eq.f32.partialorder %v8245, 8.507059e+37
    %v8247 = vand.u32 %v8080, 2147483648
    %v8248 = vor.u32 1.1754944e-38, %v8247
    %v8249 = vsel %vm8246, %v8248, %v8244
    %v8250 = vmul.f32 1.0, %v8249
    %v8251 = vrcp.pop %v8081
    %v8252 = vmul.f32 %v8081, %v8251
    %v8253 = vsub.f32 1.0, %v8252
    %v8254 = vmul.f32 %v8251, %v8253
    %v8255 = vadd.f32 %v8251, %v8254
    %vm8256 = vweird.f32 %v8081
    %vm8257 = vweird.f32 %v8251
    %vm8258 = vmor %vm8256, %vm8257
    %v8259 = vsel %vm8258, %v8251, %v8255
    %v8260 = vand.u32 2147483647, %v8081
    %vm8261 = vcmp.eq.f32.partialorder %v8260, 8.507059e+37
    %v8262 = vand.u32 %v8081, 2147483648
    %v8263 = vor.u32 1.1754944e-38, %v8262
    %v8264 = vsel %vm8261, %v8263, %v8259
    %v8265 = vmul.f32 1.0, %v8264
    %v8266 = vrcp.pop %v8082
    %v8267 = vmul.f32 %v8082, %v8266
    %v8268 = vsub.f32 1.0, %v8267
    %v8269 = vmul.f32 %v8266, %v8268
    %v8270 = vadd.f32 %v8266, %v8269
    %vm8271 = vweird.f32 %v8082
    %vm8272 = vweird.f32 %v8266
    %vm8273 = vmor %vm8271, %vm8272
    %v8274 = vsel %vm8273, %v8266, %v8270
    %v8275 = vand.u32 2147483647, %v8082
    %vm8276 = vcmp.eq.f32.partialorder %v8275, 8.507059e+37
    %v8277 = vand.u32 %v8082, 2147483648
    %v8278 = vor.u32 1.1754944e-38, %v8277
    %v8279 = vsel %vm8276, %v8278, %v8274
    %v8280 = vmul.f32 1.0, %v8279
    %v8281 = vrcp.pop %v8083
    %v8282 = vmul.f32 %v8083, %v8281
    %v8283 = vsub.f32 1.0, %v8282
    %v8284 = vmul.f32 %v8281, %v8283
    %v8285 = vadd.f32 %v8281, %v8284
    %vm8286 = vweird.f32 %v8083
    %vm8287 = vweird.f32 %v8281
    %vm8288 = vmor %vm8286, %vm8287
    %v8289 = vsel %vm8288, %v8281, %v8285
    %v8290 = vand.u32 2147483647, %v8083
    %vm8291 = vcmp.eq.f32.partialorder %v8290, 8.507059e+37
    %v8292 = vand.u32 %v8083, 2147483648
    %v8293 = vor.u32 1.1754944e-38, %v8292
    %v8294 = vsel %vm8291, %v8293, %v8289
    %v8295 = vmul.f32 1.0, %v8294
    %v8296 = vrcp.pop %v8084
    %v8297 = vmul.f32 %v8084, %v8296
    %v8298 = vsub.f32 1.0, %v8297
    %v8299 = vmul.f32 %v8296, %v8298
    %v8300 = vadd.f32 %v8296, %v8299
    %vm8301 = vweird.f32 %v8084
    %vm8302 = vweird.f32 %v8296
    %vm8303 = vmor %vm8301, %vm8302
    %v8304 = vsel %vm8303, %v8296, %v8300
    %v8305 = vand.u32 2147483647, %v8084
    %vm8306 = vcmp.eq.f32.partialorder %v8305, 8.507059e+37
    %v8307 = vand.u32 %v8084, 2147483648
    %v8308 = vor.u32 1.1754944e-38, %v8307
    %v8309 = vsel %vm8306, %v8308, %v8304
    %v8310 = vmul.f32 1.0, %v8309
    %v8311 = vrcp.pop %v8085
    %v8312 = vmul.f32 %v8085, %v8311
    %v8313 = vsub.f32 1.0, %v8312
    %v8314 = vmul.f32 %v8311, %v8313
    %v8315 = vadd.f32 %v8311, %v8314
    %vm8316 = vweird.f32 %v8085
    %vm8317 = vweird.f32 %v8311
    %vm8318 = vmor %vm8316, %vm8317
    %v8319 = vsel %vm8318, %v8311, %v8315
    %v8320 = vand.u32 2147483647, %v8085
    %vm8321 = vcmp.eq.f32.partialorder %v8320, 8.507059e+37
    %v8322 = vand.u32 %v8085, 2147483648
    %v8323 = vor.u32 1.1754944e-38, %v8322
    %v8324 = vsel %vm8321, %v8323, %v8319
    %v8325 = vmul.f32 1.0, %v8324
    %v8326 = vpack.c.bf16 %v8115, %v8100
    %v8327 = vpack.c.bf16 %v8145, %v8130
    %v8328 = vpack.c.bf16 %v8175, %v8160
    %v8329 = vpack.c.bf16 %v8205, %v8190
    %v8330 = vpack.c.bf16 %v8235, %v8220
    %v8331 = vpack.c.bf16 %v8265, %v8250
    %v8332 = vpack.c.bf16 %v8295, %v8280
    %v8333 = vpack.c.bf16 %v8325, %v8310
    %v8334 = vld [vmem:[%s7] sm:$0xff]
    %v8335 = vld [vmem:[%s7 + $0x8] sm:$0xff]
    %v8336 = vld [vmem:[%s7 + $0x10] sm:$0xf]
    %v8337 = vld [vmem:[%s7 + $0x14] sm:$0x33]
    %v8338 = vld [vmem:[%s7 + $0x1c] sm:$0x33]
    %v8339 = vld [vmem:[%s7 + $0x24] sm:$0x3]
    %v8346 = vunpack.c.l.b16 %v8334
    %v8347 = vunpack.c.h.b16 %v8334
    %v8348 = vunpack.c.l.b16 %v8335
    %v8349 = vunpack.c.h.b16 %v8335
    %v8350 = vunpack.c.l.b16 %v8336
    %v8351 = vunpack.c.l.b16 %v8337
    %v8352 = vunpack.c.h.b16 %v8337
    %v8353 = vunpack.c.l.b16 %v8338
    %v8354 = vunpack.c.h.b16 %v8338
    %v8355 = vunpack.c.l.b16 %v8339
    %v8356 = vpack.c.b16 %v8351, %v8346
    %v8357 = vpack.c.b16 %v8352, %v8347
    %v8358 = vpack.c.b16 %v8353, %v8348
    %v8359 = vpack.c.b16 %v8354, %v8349
    %v8360 = vpack.c.b16 %v8355, %v8350
    %v8362 = vsel %vm1799, %v8326, 0
    %v8365 = vsel %vm1799, %v8327, 0
    %v8368 = vsel %vm1799, %v8328, 0
    %v8371 = vsel %vm1799, %v8329, 0
    %v8374 = vsel %vm1799, %v8330, 0
    %v8377 = vsel %vm1799, %v8331, 0
    %v8380 = vsel %vm1799, %v8332, 0
    %v8383 = vsel %vm1799, %v8333, 0
    %v8386 = vsel %vm408, %v8356, 0
    %v8389 = vsel %vm408, %v8357, 0
    %v8392 = vsel %vm408, %v8358, 0
    %v8395 = vsel %vm408, %v8359, 0
    %v8398 = vsel %vm408, %v8360, 0
    %8400 = vmatpush.bf16.msra.mxu0 0
    %8401 = vmatpush.bf16.msra.mxu0 0
    %8402 = vmatpush.bf16.msra.mxu0 0
    %8403 = vmatpush.bf16.msra.mxu0 0
    %8404 = vmatpush.bf16.msra.mxu0 0
    %8405 = vmatpush.bf16.msra.mxu0 0
    %8406 = vmatpush.bf16.msra.mxu0 0
    %8407 = vmatpush.bf16.msra.mxu0 %v8386
    %8408 = vmatmul.bf16.gmra.mxu0 %v8362
    %v8409 = vpop.f32.mrf.mxu0
    %v8410 = vadd.f32 0.0, %v8409
    %v8411 = vpop.f32.mrf.mxu0
    %v8412 = vadd.f32 0.0, %v8411
    %8413 = vmatmul.bf16.gmra.mxu0 %v8365
    %v8414 = vpop.f32.mrf.mxu0
    %v8415 = vadd.f32 0.0, %v8414
    %v8416 = vpop.f32.mrf.mxu0
    %v8417 = vadd.f32 0.0, %v8416
    %8418 = vmatmul.bf16.gmra.mxu0 %v8368
    %v8419 = vpop.f32.mrf.mxu0
    %v8420 = vadd.f32 0.0, %v8419
    %v8421 = vpop.f32.mrf.mxu0
    %v8422 = vadd.f32 0.0, %v8421
    %8423 = vmatmul.bf16.gmra.mxu0 %v8371
    %v8424 = vpop.f32.mrf.mxu0
    %v8425 = vadd.f32 0.0, %v8424
    %v8426 = vpop.f32.mrf.mxu0
    %v8427 = vadd.f32 0.0, %v8426
    %8428 = vmatmul.bf16.gmra.mxu0 %v8374
    %v8429 = vpop.f32.mrf.mxu0
    %v8430 = vadd.f32 0.0, %v8429
    %v8431 = vpop.f32.mrf.mxu0
    %v8432 = vadd.f32 0.0, %v8431
    %8433 = vmatmul.bf16.gmra.mxu0 %v8377
    %v8434 = vpop.f32.mrf.mxu0
    %v8435 = vadd.f32 0.0, %v8434
    %v8436 = vpop.f32.mrf.mxu0
    %v8437 = vadd.f32 0.0, %v8436
    %8438 = vmatmul.bf16.gmra.mxu0 %v8380
    %v8439 = vpop.f32.mrf.mxu0
    %v8440 = vadd.f32 0.0, %v8439
    %v8441 = vpop.f32.mrf.mxu0
    %v8442 = vadd.f32 0.0, %v8441
    %8443 = vmatmul.bf16.gmra.mxu0 %v8383
    %v8444 = vpop.f32.mrf.mxu0
    %v8445 = vadd.f32 0.0, %v8444
    %v8446 = vpop.f32.mrf.mxu0
    %v8447 = vadd.f32 0.0, %v8446
    %8448 = vdwg.mxu0
    %8449 = vmatpush.bf16.msra.mxu0 0
    %8450 = vmatpush.bf16.msra.mxu0 0
    %8451 = vmatpush.bf16.msra.mxu0 0
    %8452 = vmatpush.bf16.msra.mxu0 0
    %8453 = vmatpush.bf16.msra.mxu0 0
    %8454 = vmatpush.bf16.msra.mxu0 0
    %8455 = vmatpush.bf16.msra.mxu0 0
    %8456 = vmatpush.bf16.msra.mxu0 %v8389
    %8457 = vmatmul.bf16.gmra.mxu0 %v8362
    %v8458 = vpop.f32.mrf.mxu0
    %v8459 = vadd.f32 0.0, %v8458
    %v8460 = vpop.f32.mrf.mxu0
    %v8461 = vadd.f32 0.0, %v8460
    %8462 = vmatmul.bf16.gmra.mxu0 %v8365
    %v8463 = vpop.f32.mrf.mxu0
    %v8464 = vadd.f32 0.0, %v8463
    %v8465 = vpop.f32.mrf.mxu0
    %v8466 = vadd.f32 0.0, %v8465
    %8467 = vmatmul.bf16.gmra.mxu0 %v8368
    %v8468 = vpop.f32.mrf.mxu0
    %v8469 = vadd.f32 0.0, %v8468
    %v8470 = vpop.f32.mrf.mxu0
    %v8471 = vadd.f32 0.0, %v8470
    %8472 = vmatmul.bf16.gmra.mxu0 %v8371
    %v8473 = vpop.f32.mrf.mxu0
    %v8474 = vadd.f32 0.0, %v8473
    %v8475 = vpop.f32.mrf.mxu0
    %v8476 = vadd.f32 0.0, %v8475
    %8477 = vmatmul.bf16.gmra.mxu0 %v8374
    %v8478 = vpop.f32.mrf.mxu0
    %v8479 = vadd.f32 0.0, %v8478
    %v8480 = vpop.f32.mrf.mxu0
    %v8481 = vadd.f32 0.0, %v8480
    %8482 = vmatmul.bf16.gmra.mxu0 %v8377
    %v8483 = vpop.f32.mrf.mxu0
    %v8484 = vadd.f32 0.0, %v8483
    %v8485 = vpop.f32.mrf.mxu0
    %v8486 = vadd.f32 0.0, %v8485
    %8487 = vmatmul.bf16.gmra.mxu0 %v8380
    %v8488 = vpop.f32.mrf.mxu0
    %v8489 = vadd.f32 0.0, %v8488
    %v8490 = vpop.f32.mrf.mxu0
    %v8491 = vadd.f32 0.0, %v8490
    %8492 = vmatmul.bf16.gmra.mxu0 %v8383
    %v8493 = vpop.f32.mrf.mxu0
    %v8494 = vadd.f32 0.0, %v8493
    %v8495 = vpop.f32.mrf.mxu0
    %v8496 = vadd.f32 0.0, %v8495
    %8497 = vdwg.mxu0
    %8498 = vmatpush.bf16.msra.mxu0 0
    %8499 = vmatpush.bf16.msra.mxu0 0
    %8500 = vmatpush.bf16.msra.mxu0 0
    %8501 = vmatpush.bf16.msra.mxu0 0
    %8502 = vmatpush.bf16.msra.mxu0 0
    %8503 = vmatpush.bf16.msra.mxu0 0
    %8504 = vmatpush.bf16.msra.mxu0 0
    %8505 = vmatpush.bf16.msra.mxu0 %v8392
    %8506 = vmatmul.bf16.gmra.mxu0 %v8362
    %v8507 = vpop.f32.mrf.mxu0
    %v8508 = vadd.f32 0.0, %v8507
    %v8509 = vpop.f32.mrf.mxu0
    %v8510 = vadd.f32 0.0, %v8509
    %8511 = vmatmul.bf16.gmra.mxu0 %v8365
    %v8512 = vpop.f32.mrf.mxu0
    %v8513 = vadd.f32 0.0, %v8512
    %v8514 = vpop.f32.mrf.mxu0
    %v8515 = vadd.f32 0.0, %v8514
    %8516 = vmatmul.bf16.gmra.mxu0 %v8368
    %v8517 = vpop.f32.mrf.mxu0
    %v8518 = vadd.f32 0.0, %v8517
    %v8519 = vpop.f32.mrf.mxu0
    %v8520 = vadd.f32 0.0, %v8519
    %8521 = vmatmul.bf16.gmra.mxu0 %v8371
    %v8522 = vpop.f32.mrf.mxu0
    %v8523 = vadd.f32 0.0, %v8522
    %v8524 = vpop.f32.mrf.mxu0
    %v8525 = vadd.f32 0.0, %v8524
    %8526 = vmatmul.bf16.gmra.mxu0 %v8374
    %v8527 = vpop.f32.mrf.mxu0
    %v8528 = vadd.f32 0.0, %v8527
    %v8529 = vpop.f32.mrf.mxu0
    %v8530 = vadd.f32 0.0, %v8529
    %8531 = vmatmul.bf16.gmra.mxu0 %v8377
    %v8532 = vpop.f32.mrf.mxu0
    %v8533 = vadd.f32 0.0, %v8532
    %v8534 = vpop.f32.mrf.mxu0
    %v8535 = vadd.f32 0.0, %v8534
    %8536 = vmatmul.bf16.gmra.mxu0 %v8380
    %v8537 = vpop.f32.mrf.mxu0
    %v8538 = vadd.f32 0.0, %v8537
    %v8539 = vpop.f32.mrf.mxu0
    %v8540 = vadd.f32 0.0, %v8539
    %8541 = vmatmul.bf16.gmra.mxu0 %v8383
    %v8542 = vpop.f32.mrf.mxu0
    %v8543 = vadd.f32 0.0, %v8542
    %v8544 = vpop.f32.mrf.mxu0
    %v8545 = vadd.f32 0.0, %v8544
    %8546 = vdwg.mxu0
    %8547 = vmatpush.bf16.msra.mxu0 0
    %8548 = vmatpush.bf16.msra.mxu0 0
    %8549 = vmatpush.bf16.msra.mxu0 0
    %8550 = vmatpush.bf16.msra.mxu0 0
    %8551 = vmatpush.bf16.msra.mxu0 0
    %8552 = vmatpush.bf16.msra.mxu0 0
    %8553 = vmatpush.bf16.msra.mxu0 0
    %8554 = vmatpush.bf16.msra.mxu0 %v8395
    %8555 = vmatmul.bf16.gmra.mxu0 %v8362
    %v8556 = vpop.f32.mrf.mxu0
    %v8557 = vadd.f32 0.0, %v8556
    %v8558 = vpop.f32.mrf.mxu0
    %v8559 = vadd.f32 0.0, %v8558
    %8560 = vmatmul.bf16.gmra.mxu0 %v8365
    %v8561 = vpop.f32.mrf.mxu0
    %v8562 = vadd.f32 0.0, %v8561
    %v8563 = vpop.f32.mrf.mxu0
    %v8564 = vadd.f32 0.0, %v8563
    %8565 = vmatmul.bf16.gmra.mxu0 %v8368
    %v8566 = vpop.f32.mrf.mxu0
    %v8567 = vadd.f32 0.0, %v8566
    %v8568 = vpop.f32.mrf.mxu0
    %v8569 = vadd.f32 0.0, %v8568
    %8570 = vmatmul.bf16.gmra.mxu0 %v8371
    %v8571 = vpop.f32.mrf.mxu0
    %v8572 = vadd.f32 0.0, %v8571
    %v8573 = vpop.f32.mrf.mxu0
    %v8574 = vadd.f32 0.0, %v8573
    %8575 = vmatmul.bf16.gmra.mxu0 %v8374
    %v8576 = vpop.f32.mrf.mxu0
    %v8577 = vadd.f32 0.0, %v8576
    %v8578 = vpop.f32.mrf.mxu0
    %v8579 = vadd.f32 0.0, %v8578
    %8580 = vmatmul.bf16.gmra.mxu0 %v8377
    %v8581 = vpop.f32.mrf.mxu0
    %v8582 = vadd.f32 0.0, %v8581
    %v8583 = vpop.f32.mrf.mxu0
    %v8584 = vadd.f32 0.0, %v8583
    %8585 = vmatmul.bf16.gmra.mxu0 %v8380
    %v8586 = vpop.f32.mrf.mxu0
    %v8587 = vadd.f32 0.0, %v8586
    %v8588 = vpop.f32.mrf.mxu0
    %v8589 = vadd.f32 0.0, %v8588
    %8590 = vmatmul.bf16.gmra.mxu0 %v8383
    %v8591 = vpop.f32.mrf.mxu0
    %v8592 = vadd.f32 0.0, %v8591
    %v8593 = vpop.f32.mrf.mxu0
    %v8594 = vadd.f32 0.0, %v8593
    %8595 = vdwg.mxu0
    %8596 = vmatpush.bf16.msra.mxu0 0
    %8597 = vmatpush.bf16.msra.mxu0 0
    %8598 = vmatpush.bf16.msra.mxu0 0
    %8599 = vmatpush.bf16.msra.mxu0 0
    %8600 = vmatpush.bf16.msra.mxu0 0
    %8601 = vmatpush.bf16.msra.mxu0 0
    %8602 = vmatpush.bf16.msra.mxu0 0
    %8603 = vmatpush.bf16.msra.mxu0 %v8398
    %8604 = vmatmul.bf16.gmra.mxu0 %v8362
    %v8605 = vpop.f32.mrf.mxu0
    %v8606 = vadd.f32 0.0, %v8605
    %v8607 = vpop.f32.mrf.mxu0
    %v8608 = vadd.f32 0.0, %v8607
    %8609 = vmatmul.bf16.gmra.mxu0 %v8365
    %v8610 = vpop.f32.mrf.mxu0
    %v8611 = vadd.f32 0.0, %v8610
    %v8612 = vpop.f32.mrf.mxu0
    %v8613 = vadd.f32 0.0, %v8612
    %8614 = vmatmul.bf16.gmra.mxu0 %v8368
    %v8615 = vpop.f32.mrf.mxu0
    %v8616 = vadd.f32 0.0, %v8615
    %v8617 = vpop.f32.mrf.mxu0
    %v8618 = vadd.f32 0.0, %v8617
    %8619 = vmatmul.bf16.gmra.mxu0 %v8371
    %v8620 = vpop.f32.mrf.mxu0
    %v8621 = vadd.f32 0.0, %v8620
    %v8622 = vpop.f32.mrf.mxu0
    %v8623 = vadd.f32 0.0, %v8622
    %8624 = vmatmul.bf16.gmra.mxu0 %v8374
    %v8625 = vpop.f32.mrf.mxu0
    %v8626 = vadd.f32 0.0, %v8625
    %v8627 = vpop.f32.mrf.mxu0
    %v8628 = vadd.f32 0.0, %v8627
    %8629 = vmatmul.bf16.gmra.mxu0 %v8377
    %v8630 = vpop.f32.mrf.mxu0
    %v8631 = vadd.f32 0.0, %v8630
    %v8632 = vpop.f32.mrf.mxu0
    %v8633 = vadd.f32 0.0, %v8632
    %8634 = vmatmul.bf16.gmra.mxu0 %v8380
    %v8635 = vpop.f32.mrf.mxu0
    %v8636 = vadd.f32 0.0, %v8635
    %v8637 = vpop.f32.mrf.mxu0
    %v8638 = vadd.f32 0.0, %v8637
    %8639 = vmatmul.bf16.gmra.mxu0 %v8383
    %v8640 = vpop.f32.mrf.mxu0
    %v8641 = vadd.f32 0.0, %v8640
    %v8642 = vpop.f32.mrf.mxu0
    %v8643 = vadd.f32 0.0, %v8642
    %8644 = vdwg.mxu0
    %v8645 = vld [vmem:[%s8] sm:$0xff]
    %v8646 = vld [vmem:[%s8 + $0x8] sm:$0xff]
    %v8647 = vld [vmem:[%s8 + $0x10] sm:$0xff]
    %v8648 = vld [vmem:[%s8 + $0x18] sm:$0xff]
    %v8649 = vld [vmem:[%s8 + $0x20] sm:$0xff]
    %v8650 = vld [vmem:[%s8 + $0x28] sm:$0xff]
    %v8651 = vld [vmem:[%s8 + $0x30] sm:$0xff]
    %v8652 = vld [vmem:[%s8 + $0x38] sm:$0xff]
    %v8653 = vld [vmem:[%s8 + $0x40] sm:$0xff]
    %v8654 = vld [vmem:[%s8 + $0x48] sm:$0xff]
    %v8655 = vld [vmem:[%s8 + $0x50] sm:$0xff]
    %v8656 = vld [vmem:[%s8 + $0x58] sm:$0xff]
    %v8657 = vld [vmem:[%s8 + $0x60] sm:$0xff]
    %v8658 = vld [vmem:[%s8 + $0x68] sm:$0xff]
    %v8659 = vld [vmem:[%s8 + $0x70] sm:$0xff]
    %v8660 = vld [vmem:[%s8 + $0x78] sm:$0xff]
    %v8661 = vld [vmem:[%s8 + $0x80] sm:$0xff]
    %v8662 = vld [vmem:[%s8 + $0x88] sm:$0xff]
    %v8663 = vld [vmem:[%s8 + $0x90] sm:$0xff]
    %v8664 = vld [vmem:[%s8 + $0x98] sm:$0xff]
    %v8665 = vld [vmem:[%s8 + $0xa0] sm:$0xff]
    %v8666 = vld [vmem:[%s8 + $0xa8] sm:$0xff]
    %v8667 = vld [vmem:[%s8 + $0xb0] sm:$0xff]
    %v8668 = vld [vmem:[%s8 + $0xb8] sm:$0xff]
    %v8669 = vld [vmem:[%s8 + $0xc0] sm:$0xff]
    %v8670 = vld [vmem:[%s8 + $0xc8] sm:$0xff]
    %v8671 = vld [vmem:[%s8 + $0xd0] sm:$0xff]
    %v8672 = vld [vmem:[%s8 + $0xd8] sm:$0xff]
    %v8673 = vld [vmem:[%s8 + $0xe0] sm:$0xff]
    %v8674 = vld [vmem:[%s8 + $0xe8] sm:$0xff]
    %v8675 = vld [vmem:[%s8 + $0xf0] sm:$0xff]
    %v8676 = vld [vmem:[%s8 + $0xf8] sm:$0xff]
    %v8677 = vld [vmem:[%s8 + $0x100] sm:$0xff]
    %v8678 = vld [vmem:[%s8 + $0x108] sm:$0xff]
    %v8679 = vld [vmem:[%s8 + $0x110] sm:$0xff]
    %v8680 = vld [vmem:[%s8 + $0x118] sm:$0xff]
    %v8681 = vld [vmem:[%s8 + $0x120] sm:$0xff]
    %v8682 = vld [vmem:[%s8 + $0x128] sm:$0xff]
    %v8683 = vld [vmem:[%s8 + $0x130] sm:$0xff]
    %v8684 = vld [vmem:[%s8 + $0x138] sm:$0xff]
    %v8685 = vld [vmem:[%s8 + $0x140] sm:$0xff]
    %v8686 = vld [vmem:[%s8 + $0x148] sm:$0xff]
    %v8687 = vld [vmem:[%s8 + $0x150] sm:$0xff]
    %v8688 = vld [vmem:[%s8 + $0x158] sm:$0xff]
    %v8689 = vld [vmem:[%s8 + $0x160] sm:$0xff]
    %v8690 = vld [vmem:[%s8 + $0x168] sm:$0xff]
    %v8691 = vld [vmem:[%s8 + $0x170] sm:$0xff]
    %v8692 = vld [vmem:[%s8 + $0x178] sm:$0xff]
    %v8693 = vld [vmem:[%s8 + $0x180] sm:$0xff]
    %v8694 = vld [vmem:[%s8 + $0x188] sm:$0xff]
    %v8695 = vld [vmem:[%s8 + $0x190] sm:$0xff]
    %v8696 = vld [vmem:[%s8 + $0x198] sm:$0xff]
    %v8697 = vld [vmem:[%s8 + $0x1a0] sm:$0xff]
    %v8698 = vld [vmem:[%s8 + $0x1a8] sm:$0xff]
    %v8699 = vld [vmem:[%s8 + $0x1b0] sm:$0xff]
    %v8700 = vld [vmem:[%s8 + $0x1b8] sm:$0xff]
    %v8701 = vld [vmem:[%s8 + $0x1c0] sm:$0xff]
    %v8702 = vld [vmem:[%s8 + $0x1c8] sm:$0xff]
    %v8703 = vld [vmem:[%s8 + $0x1d0] sm:$0xff]
    %v8704 = vld [vmem:[%s8 + $0x1d8] sm:$0xff]
    %v8705 = vld [vmem:[%s8 + $0x1e0] sm:$0xff]
    %v8706 = vld [vmem:[%s8 + $0x1e8] sm:$0xff]
    %v8707 = vld [vmem:[%s8 + $0x1f0] sm:$0xff]
    %v8708 = vld [vmem:[%s8 + $0x1f8] sm:$0xff]
    %v8709 = vld [vmem:[%s8 + $0x200] sm:$0xff]
    %v8710 = vld [vmem:[%s8 + $0x208] sm:$0xff]
    %v8711 = vld [vmem:[%s8 + $0x210] sm:$0xff]
    %v8712 = vld [vmem:[%s8 + $0x218] sm:$0xff]
    %v8713 = vld [vmem:[%s8 + $0x220] sm:$0xff]
    %v8714 = vld [vmem:[%s8 + $0x228] sm:$0xff]
    %v8715 = vld [vmem:[%s8 + $0x230] sm:$0xff]
    %v8716 = vld [vmem:[%s8 + $0x238] sm:$0xff]
    %v8717 = vld [vmem:[%s8 + $0x240] sm:$0xff]
    %v8718 = vld [vmem:[%s8 + $0x248] sm:$0xff]
    %v8719 = vld [vmem:[%s8 + $0x250] sm:$0xff]
    %v8720 = vld [vmem:[%s8 + $0x258] sm:$0xff]
    %v8721 = vld [vmem:[%s8 + $0x260] sm:$0xff]
    %v8722 = vld [vmem:[%s8 + $0x268] sm:$0xff]
    %v8723 = vld [vmem:[%s8 + $0x270] sm:$0xff]
    %v8724 = vld [vmem:[%s8 + $0x278] sm:$0xff]
    %v8725 = vmul.f32 %v8410, %v8645
    %v8726 = vmul.f32 %v8459, %v8646
    %v8727 = vmul.f32 %v8508, %v8647
    %v8728 = vmul.f32 %v8557, %v8648
    %v8729 = vmul.f32 %v8606, %v8649
    %v8730 = vmul.f32 %v8412, %v8650
    %v8731 = vmul.f32 %v8461, %v8651
    %v8732 = vmul.f32 %v8510, %v8652
    %v8733 = vmul.f32 %v8559, %v8653
    %v8734 = vmul.f32 %v8608, %v8654
    %v8735 = vmul.f32 %v8415, %v8655
    %v8736 = vmul.f32 %v8464, %v8656
    %v8737 = vmul.f32 %v8513, %v8657
    %v8738 = vmul.f32 %v8562, %v8658
    %v8739 = vmul.f32 %v8611, %v8659
    %v8740 = vmul.f32 %v8417, %v8660
    %v8741 = vmul.f32 %v8466, %v8661
    %v8742 = vmul.f32 %v8515, %v8662
    %v8743 = vmul.f32 %v8564, %v8663
    %v8744 = vmul.f32 %v8613, %v8664
    %v8745 = vmul.f32 %v8420, %v8665
    %v8746 = vmul.f32 %v8469, %v8666
    %v8747 = vmul.f32 %v8518, %v8667
    %v8748 = vmul.f32 %v8567, %v8668
    %v8749 = vmul.f32 %v8616, %v8669
    %v8750 = vmul.f32 %v8422, %v8670
    %v8751 = vmul.f32 %v8471, %v8671
    %v8752 = vmul.f32 %v8520, %v8672
    %v8753 = vmul.f32 %v8569, %v8673
    %v8754 = vmul.f32 %v8618, %v8674
    %v8755 = vmul.f32 %v8425, %v8675
    %v8756 = vmul.f32 %v8474, %v8676
    %v8757 = vmul.f32 %v8523, %v8677
    %v8758 = vmul.f32 %v8572, %v8678
    %v8759 = vmul.f32 %v8621, %v8679
    %v8760 = vmul.f32 %v8427, %v8680
    %v8761 = vmul.f32 %v8476, %v8681
    %v8762 = vmul.f32 %v8525, %v8682
    %v8763 = vmul.f32 %v8574, %v8683
    %v8764 = vmul.f32 %v8623, %v8684
    %v8765 = vmul.f32 %v8430, %v8685
    %v8766 = vmul.f32 %v8479, %v8686
    %v8767 = vmul.f32 %v8528, %v8687
    %v8768 = vmul.f32 %v8577, %v8688
    %v8769 = vmul.f32 %v8626, %v8689
    %v8770 = vmul.f32 %v8432, %v8690
    %v8771 = vmul.f32 %v8481, %v8691
    %v8772 = vmul.f32 %v8530, %v8692
    %v8773 = vmul.f32 %v8579, %v8693
    %v8774 = vmul.f32 %v8628, %v8694
    %v8775 = vmul.f32 %v8435, %v8695
    %v8776 = vmul.f32 %v8484, %v8696
    %v8777 = vmul.f32 %v8533, %v8697
    %v8778 = vmul.f32 %v8582, %v8698
    %v8779 = vmul.f32 %v8631, %v8699
    %v8780 = vmul.f32 %v8437, %v8700
    %v8781 = vmul.f32 %v8486, %v8701
    %v8782 = vmul.f32 %v8535, %v8702
    %v8783 = vmul.f32 %v8584, %v8703
    %v8784 = vmul.f32 %v8633, %v8704
    %v8785 = vmul.f32 %v8440, %v8705
    %v8786 = vmul.f32 %v8489, %v8706
    %v8787 = vmul.f32 %v8538, %v8707
    %v8788 = vmul.f32 %v8587, %v8708
    %v8789 = vmul.f32 %v8636, %v8709
    %v8790 = vmul.f32 %v8442, %v8710
    %v8791 = vmul.f32 %v8491, %v8711
    %v8792 = vmul.f32 %v8540, %v8712
    %v8793 = vmul.f32 %v8589, %v8713
    %v8794 = vmul.f32 %v8638, %v8714
    %v8795 = vmul.f32 %v8445, %v8715
    %v8796 = vmul.f32 %v8494, %v8716
    %v8797 = vmul.f32 %v8543, %v8717
    %v8798 = vmul.f32 %v8592, %v8718
    %v8799 = vmul.f32 %v8641, %v8719
    %v8800 = vmul.f32 %v8447, %v8720
    %v8801 = vmul.f32 %v8496, %v8721
    %v8802 = vmul.f32 %v8545, %v8722
    %v8803 = vmul.f32 %v8594, %v8723
    %v8804 = vmul.f32 %v8643, %v8724
    %v8805 = vpack.c.bf16 %v8730, %v8725
    %v8806 = vpack.c.bf16 %v8731, %v8726
    %v8807 = vpack.c.bf16 %v8732, %v8727
    %v8808 = vpack.c.bf16 %v8733, %v8728
    %v8809 = vpack.c.bf16 %v8734, %v8729
    %v8810 = vpack.c.bf16 %v8740, %v8735
    %v8811 = vpack.c.bf16 %v8741, %v8736
    %v8812 = vpack.c.bf16 %v8742, %v8737
    %v8813 = vpack.c.bf16 %v8743, %v8738
    %v8814 = vpack.c.bf16 %v8744, %v8739
    %v8815 = vpack.c.bf16 %v8750, %v8745
    %v8816 = vpack.c.bf16 %v8751, %v8746
    %v8817 = vpack.c.bf16 %v8752, %v8747
    %v8818 = vpack.c.bf16 %v8753, %v8748
    %v8819 = vpack.c.bf16 %v8754, %v8749
    %v8820 = vpack.c.bf16 %v8760, %v8755
    %v8821 = vpack.c.bf16 %v8761, %v8756
    %v8822 = vpack.c.bf16 %v8762, %v8757
    %v8823 = vpack.c.bf16 %v8763, %v8758
    %v8824 = vpack.c.bf16 %v8764, %v8759
    %v8825 = vpack.c.bf16 %v8770, %v8765
    %v8826 = vpack.c.bf16 %v8771, %v8766
    %v8827 = vpack.c.bf16 %v8772, %v8767
    %v8828 = vpack.c.bf16 %v8773, %v8768
    %v8829 = vpack.c.bf16 %v8774, %v8769
    %v8830 = vpack.c.bf16 %v8780, %v8775
    %v8831 = vpack.c.bf16 %v8781, %v8776
    %v8832 = vpack.c.bf16 %v8782, %v8777
    %v8833 = vpack.c.bf16 %v8783, %v8778
    %v8834 = vpack.c.bf16 %v8784, %v8779
    %v8835 = vpack.c.bf16 %v8790, %v8785
    %v8836 = vpack.c.bf16 %v8791, %v8786
    %v8837 = vpack.c.bf16 %v8792, %v8787
    %v8838 = vpack.c.bf16 %v8793, %v8788
    %v8839 = vpack.c.bf16 %v8794, %v8789
    %v8840 = vpack.c.bf16 %v8800, %v8795
    %v8841 = vpack.c.bf16 %v8801, %v8796
    %v8842 = vpack.c.bf16 %v8802, %v8797
    %v8843 = vpack.c.bf16 %v8803, %v8798
    %v8844 = vpack.c.bf16 %v8804, %v8799
    %v8845 = vld [vmem:[%s9] sm:$0x1]
    %8846 = vmatpush.bf16.msra.mxu0 %v8840
    %8847 = vmatpush.bf16.msra.mxu0 %v8835
    %8848 = vmatpush.bf16.msra.mxu0 %v8830
    %8849 = vmatpush.bf16.msra.mxu0 %v8825
    %8850 = vmatpush.bf16.msra.mxu0 %v8820
    %8851 = vmatpush.bf16.msra.mxu0 %v8815
    %8852 = vmatpush.bf16.msra.mxu0 %v8810
    %8853 = vmatpush.bf16.msra.mxu0 %v8805
    %8854 = vmatmul.bf16.gmra.mxu0 %v8845
    %v8855 = vpop.f32.mrf.mxu0
    %v8856 = vadd.f32 0.0, %v8855
    %v8857 = vpop.f32.mrf.mxu0
    %8858 = vdwg.mxu0
    %8859 = vmatpush.bf16.msra.mxu0 %v8841
    %8860 = vmatpush.bf16.msra.mxu0 %v8836
    %8861 = vmatpush.bf16.msra.mxu0 %v8831
    %8862 = vmatpush.bf16.msra.mxu0 %v8826
    %8863 = vmatpush.bf16.msra.mxu0 %v8821
    %8864 = vmatpush.bf16.msra.mxu0 %v8816
    %8865 = vmatpush.bf16.msra.mxu0 %v8811
    %8866 = vmatpush.bf16.msra.mxu0 %v8806
    %8867 = vmatmul.bf16.gmra.mxu0 %v8845
    %v8868 = vpop.f32.mrf.mxu0
    %v8869 = vadd.f32 0.0, %v8868
    %v8870 = vpop.f32.mrf.mxu0
    %8871 = vdwg.mxu0
    %8872 = vmatpush.bf16.msra.mxu0 %v8842
    %8873 = vmatpush.bf16.msra.mxu0 %v8837
    %8874 = vmatpush.bf16.msra.mxu0 %v8832
    %8875 = vmatpush.bf16.msra.mxu0 %v8827
    %8876 = vmatpush.bf16.msra.mxu0 %v8822
    %8877 = vmatpush.bf16.msra.mxu0 %v8817
    %8878 = vmatpush.bf16.msra.mxu0 %v8812
    %8879 = vmatpush.bf16.msra.mxu0 %v8807
    %8880 = vmatmul.bf16.gmra.mxu0 %v8845
    %v8881 = vpop.f32.mrf.mxu0
    %v8882 = vadd.f32 0.0, %v8881
    %v8883 = vpop.f32.mrf.mxu0
    %8884 = vdwg.mxu0
    %8885 = vmatpush.bf16.msra.mxu0 %v8843
    %8886 = vmatpush.bf16.msra.mxu0 %v8838
    %8887 = vmatpush.bf16.msra.mxu0 %v8833
    %8888 = vmatpush.bf16.msra.mxu0 %v8828
    %8889 = vmatpush.bf16.msra.mxu0 %v8823
    %8890 = vmatpush.bf16.msra.mxu0 %v8818
    %8891 = vmatpush.bf16.msra.mxu0 %v8813
    %8892 = vmatpush.bf16.msra.mxu0 %v8808
    %8893 = vmatmul.bf16.gmra.mxu0 %v8845
    %v8894 = vpop.f32.mrf.mxu0
    %v8895 = vadd.f32 0.0, %v8894
    %v8896 = vpop.f32.mrf.mxu0
    %8897 = vdwg.mxu0
    %8898 = vmatpush.bf16.msra.mxu0 %v8844
    %8899 = vmatpush.bf16.msra.mxu0 %v8839
    %8900 = vmatpush.bf16.msra.mxu0 %v8834
    %8901 = vmatpush.bf16.msra.mxu0 %v8829
    %8902 = vmatpush.bf16.msra.mxu0 %v8824
    %8903 = vmatpush.bf16.msra.mxu0 %v8819
    %8904 = vmatpush.bf16.msra.mxu0 %v8814
    %8905 = vmatpush.bf16.msra.mxu0 %v8809
    %8906 = vmatmul.bf16.gmra.mxu0 %v8845
    %v8907 = vpop.f32.mrf.mxu0
    %v8908 = vadd.f32 0.0, %v8907
    %v8909 = vpop.f32.mrf.mxu0
    %8910 = vdwg.mxu0
    %v8911 = vpack.c.bf16 %v8856, %v8856
    %v8912 = vpack.c.bf16 %v8869, %v8869
    %v8913 = vpack.c.bf16 %v8882, %v8882
    %v8914 = vpack.c.bf16 %v8895, %v8895
    %v8915 = vpack.c.bf16 %v8908, %v8908
    %v8916 = vld [vmem:[%s10] sm:$0xf]
    %v8917 = vld [vmem:[%s10 + $0x4] sm:$0xf]
    %v8918 = vld [vmem:[%s10 + $0x8] sm:$0xf]
    %v8919 = vld [vmem:[%s10 + $0xc] sm:$0xf]
    %v8920 = vld [vmem:[%s10 + $0x10] sm:$0xf]
    %v8921 = vld [vmem:[%s10 + $0x14] sm:$0xf]
    %v8922 = vld [vmem:[%s10 + $0x18] sm:$0xf]
    %v8923 = vld [vmem:[%s10 + $0x1c] sm:$0xf]
    %v8924 = vld [vmem:[%s10 + $0x20] sm:$0xf]
    %v8925 = vld [vmem:[%s10 + $0x24] sm:$0xf]
    %v8926 = vld [vmem:[%s10 + $0x28] sm:$0xf]
    %v8927 = vld [vmem:[%s10 + $0x2c] sm:$0xf]
    %v8928 = vld [vmem:[%s10 + $0x30] sm:$0xf]
    %v8929 = vld [vmem:[%s10 + $0x34] sm:$0xf]
    %v8930 = vld [vmem:[%s10 + $0x38] sm:$0xf]
    %v8931 = vld [vmem:[%s10 + $0x3c] sm:$0xf]
    %v8932 = vld [vmem:[%s10 + $0x40] sm:$0xf]
    %v8933 = vld [vmem:[%s10 + $0x44] sm:$0xf]
    %v8934 = vld [vmem:[%s10 + $0x48] sm:$0xf]
    %v8935 = vld [vmem:[%s10 + $0x4c] sm:$0xf]
    %v8936 = vld [vmem:[%s10 + $0x50] sm:$0xf]
    %v8937 = vld [vmem:[%s10 + $0x54] sm:$0xf]
    %v8938 = vld [vmem:[%s10 + $0x58] sm:$0xf]
    %v8939 = vld [vmem:[%s10 + $0x5c] sm:$0xf]
    %v8940 = vld [vmem:[%s10 + $0x60] sm:$0xf]
    %v8941 = vld [vmem:[%s10 + $0x64] sm:$0xf]
    %v8942 = vld [vmem:[%s10 + $0x68] sm:$0xf]
    %v8943 = vld [vmem:[%s10 + $0x6c] sm:$0xf]
    %v8944 = vld [vmem:[%s10 + $0x70] sm:$0xf]
    %v8945 = vld [vmem:[%s10 + $0x74] sm:$0xf]
    %v8946 = vld [vmem:[%s10 + $0x78] sm:$0xf]
    %v8947 = vld [vmem:[%s10 + $0x7c] sm:$0xf]
    %v8948 = vld [vmem:[%s10 + $0x80] sm:$0xf]
    %v8949 = vld [vmem:[%s10 + $0x84] sm:$0xf]
    %v8950 = vld [vmem:[%s10 + $0x88] sm:$0xf]
    %v8951 = vld [vmem:[%s10 + $0x8c] sm:$0xf]
    %v8952 = vld [vmem:[%s10 + $0x90] sm:$0xf]
    %v8953 = vld [vmem:[%s10 + $0x94] sm:$0xf]
    %v8954 = vld [vmem:[%s10 + $0x98] sm:$0xf]
    %v8955 = vld [vmem:[%s10 + $0x9c] sm:$0xf]
    %v8956 = vld [vmem:[%s10 + $0xa0] sm:$0xf]
    %v8957 = vld [vmem:[%s10 + $0xa4] sm:$0xf]
    %v8958 = vld [vmem:[%s10 + $0xa8] sm:$0xf]
    %v8959 = vld [vmem:[%s10 + $0xac] sm:$0xf]
    %v8960 = vld [vmem:[%s10 + $0xb0] sm:$0xf]
    %v8961 = vld [vmem:[%s10 + $0xb4] sm:$0xf]
    %v8962 = vld [vmem:[%s10 + $0xb8] sm:$0xf]
    %v8963 = vld [vmem:[%s10 + $0xbc] sm:$0xf]
    %v8964 = vld [vmem:[%s10 + $0xc0] sm:$0xf]
    %v8965 = vld [vmem:[%s10 + $0xc4] sm:$0xf]
    %v8966 = vld [vmem:[%s10 + $0xc8] sm:$0xf]
    %v8967 = vld [vmem:[%s10 + $0xcc] sm:$0xf]
    %v8968 = vld [vmem:[%s10 + $0xd0] sm:$0xf]
    %v8969 = vld [vmem:[%s10 + $0xd4] sm:$0xf]
    %v8970 = vld [vmem:[%s10 + $0xd8] sm:$0xf]
    %v8971 = vld [vmem:[%s10 + $0xdc] sm:$0xf]
    %v8972 = vld [vmem:[%s10 + $0xe0] sm:$0xf]
    %v8973 = vld [vmem:[%s10 + $0xe4] sm:$0xf]
    %v8974 = vld [vmem:[%s10 + $0xe8] sm:$0xf]
    %v8975 = vld [vmem:[%s10 + $0xec] sm:$0xf]
    %v8976 = vld [vmem:[%s10 + $0xf0] sm:$0xf]
    %v8977 = vld [vmem:[%s10 + $0xf4] sm:$0xf]
    %v8978 = vld [vmem:[%s10 + $0xf8] sm:$0xf]
    %v8979 = vld [vmem:[%s10 + $0xfc] sm:$0xf]
    %v8980 = vld [vmem:[%s10 + $0x100] sm:$0xf]
    %v8981 = vld [vmem:[%s10 + $0x104] sm:$0xf]
    %v8982 = vld [vmem:[%s10 + $0x108] sm:$0xf]
    %v8983 = vld [vmem:[%s10 + $0x10c] sm:$0xf]
    %v8984 = vld [vmem:[%s10 + $0x110] sm:$0xf]
    %v8985 = vld [vmem:[%s10 + $0x114] sm:$0xf]
    %v8986 = vld [vmem:[%s10 + $0x118] sm:$0xf]
    %v8987 = vld [vmem:[%s10 + $0x11c] sm:$0xf]
    %v8988 = vld [vmem:[%s10 + $0x120] sm:$0xf]
    %v8989 = vld [vmem:[%s10 + $0x124] sm:$0xf]
    %v8990 = vld [vmem:[%s10 + $0x128] sm:$0xf]
    %v8991 = vld [vmem:[%s10 + $0x12c] sm:$0xf]
    %v8992 = vld [vmem:[%s10 + $0x130] sm:$0xf]
    %v8993 = vld [vmem:[%s10 + $0x134] sm:$0xf]
    %v8994 = vld [vmem:[%s10 + $0x138] sm:$0xf]
    %v8995 = vld [vmem:[%s10 + $0x13c] sm:$0xf]
    %v8996 = vld [vmem:[%s11] sm:$0x1]
    %v8998 = vperm.slane %v8996, 0
    %v9080 = vunpack.c.l.b16 %v8916
    %v9081 = vunpack.c.l.b16 %v8917
    %v9082 = vunpack.c.l.b16 %v8918
    %v9083 = vunpack.c.l.b16 %v8919
    %v9084 = vunpack.c.l.b16 %v8920
    %v9085 = vunpack.c.l.b16 %v8921
    %v9086 = vunpack.c.l.b16 %v8922
    %v9087 = vunpack.c.l.b16 %v8923
    %v9088 = vunpack.c.l.b16 %v8924
    %v9089 = vunpack.c.l.b16 %v8925
    %v9090 = vunpack.c.l.b16 %v8926
    %v9091 = vunpack.c.l.b16 %v8927
    %v9092 = vunpack.c.l.b16 %v8928
    %v9093 = vunpack.c.l.b16 %v8929
    %v9094 = vunpack.c.l.b16 %v8930
    %v9095 = vunpack.c.l.b16 %v8931
    %v9096 = vunpack.c.l.b16 %v8932
    %v9097 = vunpack.c.l.b16 %v8933
    %v9098 = vunpack.c.l.b16 %v8934
    %v9099 = vunpack.c.l.b16 %v8935
    %v9100 = vunpack.c.l.b16 %v8936
    %v9101 = vunpack.c.l.b16 %v8937
    %v9102 = vunpack.c.l.b16 %v8938
    %v9103 = vunpack.c.l.b16 %v8939
    %v9104 = vunpack.c.l.b16 %v8940
    %v9105 = vunpack.c.l.b16 %v8941
    %v9106 = vunpack.c.l.b16 %v8942
    %v9107 = vunpack.c.l.b16 %v8943
    %v9108 = vunpack.c.l.b16 %v8944
    %v9109 = vunpack.c.l.b16 %v8945
    %v9110 = vunpack.c.l.b16 %v8946
    %v9111 = vunpack.c.l.b16 %v8947
    %v9112 = vunpack.c.l.b16 %v8948
    %v9113 = vunpack.c.l.b16 %v8949
    %v9114 = vunpack.c.l.b16 %v8950
    %v9115 = vunpack.c.l.b16 %v8951
    %v9116 = vunpack.c.l.b16 %v8952
    %v9117 = vunpack.c.l.b16 %v8953
    %v9118 = vunpack.c.l.b16 %v8954
    %v9119 = vunpack.c.l.b16 %v8955
    %v9120 = vunpack.c.l.b16 %v8956
    %v9121 = vunpack.c.l.b16 %v8957
    %v9122 = vunpack.c.l.b16 %v8958
    %v9123 = vunpack.c.l.b16 %v8959
    %v9124 = vunpack.c.l.b16 %v8960
    %v9125 = vunpack.c.l.b16 %v8961
    %v9126 = vunpack.c.l.b16 %v8962
    %v9127 = vunpack.c.l.b16 %v8963
    %v9128 = vunpack.c.l.b16 %v8964
    %v9129 = vunpack.c.l.b16 %v8965
    %v9130 = vunpack.c.l.b16 %v8966
    %v9131 = vunpack.c.l.b16 %v8967
    %v9132 = vunpack.c.l.b16 %v8968
    %v9133 = vunpack.c.l.b16 %v8969
    %v9134 = vunpack.c.l.b16 %v8970
    %v9135 = vunpack.c.l.b16 %v8971
    %v9136 = vunpack.c.l.b16 %v8972
    %v9137 = vunpack.c.l.b16 %v8973
    %v9138 = vunpack.c.l.b16 %v8974
    %v9139 = vunpack.c.l.b16 %v8975
    %v9140 = vunpack.c.l.b16 %v8976
    %v9141 = vunpack.c.l.b16 %v8977
    %v9142 = vunpack.c.l.b16 %v8978
    %v9143 = vunpack.c.l.b16 %v8979
    %v9144 = vunpack.c.l.b16 %v8980
    %v9145 = vunpack.c.l.b16 %v8981
    %v9146 = vunpack.c.l.b16 %v8982
    %v9147 = vunpack.c.l.b16 %v8983
    %v9148 = vunpack.c.l.b16 %v8984
    %v9149 = vunpack.c.l.b16 %v8985
    %v9150 = vunpack.c.l.b16 %v8986
    %v9151 = vunpack.c.l.b16 %v8987
    %v9152 = vunpack.c.l.b16 %v8988
    %v9153 = vunpack.c.l.b16 %v8989
    %v9154 = vunpack.c.l.b16 %v8990
    %v9155 = vunpack.c.l.b16 %v8991
    %v9156 = vunpack.c.l.b16 %v8992
    %v9157 = vunpack.c.l.b16 %v8993
    %v9158 = vunpack.c.l.b16 %v8994
    %v9159 = vunpack.c.l.b16 %v8995
    %v9160 = vpack.c.b16 %v9081, %v9080
    %v9161 = vpack.c.b16 %v9083, %v9082
    %v9162 = vpack.c.b16 %v9085, %v9084
    %v9163 = vpack.c.b16 %v9087, %v9086
    %v9164 = vpack.c.b16 %v9089, %v9088
    %v9165 = vpack.c.b16 %v9091, %v9090
    %v9166 = vpack.c.b16 %v9093, %v9092
    %v9167 = vpack.c.b16 %v9095, %v9094
    %v9168 = vpack.c.b16 %v9097, %v9096
    %v9169 = vpack.c.b16 %v9099, %v9098
    %v9170 = vpack.c.b16 %v9101, %v9100
    %v9171 = vpack.c.b16 %v9103, %v9102
    %v9172 = vpack.c.b16 %v9105, %v9104
    %v9173 = vpack.c.b16 %v9107, %v9106
    %v9174 = vpack.c.b16 %v9109, %v9108
    %v9175 = vpack.c.b16 %v9111, %v9110
    %v9176 = vpack.c.b16 %v9113, %v9112
    %v9177 = vpack.c.b16 %v9115, %v9114
    %v9178 = vpack.c.b16 %v9117, %v9116
    %v9179 = vpack.c.b16 %v9119, %v9118
    %v9180 = vpack.c.b16 %v9121, %v9120
    %v9181 = vpack.c.b16 %v9123, %v9122
    %v9182 = vpack.c.b16 %v9125, %v9124
    %v9183 = vpack.c.b16 %v9127, %v9126
    %v9184 = vpack.c.b16 %v9129, %v9128
    %v9185 = vpack.c.b16 %v9131, %v9130
    %v9186 = vpack.c.b16 %v9133, %v9132
    %v9187 = vpack.c.b16 %v9135, %v9134
    %v9188 = vpack.c.b16 %v9137, %v9136
    %v9189 = vpack.c.b16 %v9139, %v9138
    %v9190 = vpack.c.b16 %v9141, %v9140
    %v9191 = vpack.c.b16 %v9143, %v9142
    %v9192 = vpack.c.b16 %v9145, %v9144
    %v9193 = vpack.c.b16 %v9147, %v9146
    %v9194 = vpack.c.b16 %v9149, %v9148
    %v9195 = vpack.c.b16 %v9151, %v9150
    %v9196 = vpack.c.b16 %v9153, %v9152
    %v9197 = vpack.c.b16 %v9155, %v9154
    %v9198 = vpack.c.b16 %v9157, %v9156
    %v9199 = vpack.c.b16 %v9159, %v9158
    %9240 = vmatpush.bf16.msra.mxu0 %v9167
    %9241 = vmatpush.bf16.msra.mxu0 %v9166
    %9242 = vmatpush.bf16.msra.mxu0 %v9165
    %9243 = vmatpush.bf16.msra.mxu0 %v9164
    %9244 = vmatpush.bf16.msra.mxu0 %v9163
    %9245 = vmatpush.bf16.msra.mxu0 %v9162
    %9246 = vmatpush.bf16.msra.mxu0 %v9161
    %9247 = vmatpush.bf16.msra.mxu0 %v9160
    %9248 = vmatmul.bf16.gmra.mxu0 %v8911
    %v9249 = vpop.f32.mrf.mxu0
    %v9250 = vadd.f32 %v8998, %v9249
    %v9251 = vpop.f32.mrf.mxu0
    %9252 = vdwg.mxu0
    %9253 = vmatpush.bf16.msra.mxu0 %v9175
    %9254 = vmatpush.bf16.msra.mxu0 %v9174
    %9255 = vmatpush.bf16.msra.mxu0 %v9173
    %9256 = vmatpush.bf16.msra.mxu0 %v9172
    %9257 = vmatpush.bf16.msra.mxu0 %v9171
    %9258 = vmatpush.bf16.msra.mxu0 %v9170
    %9259 = vmatpush.bf16.msra.mxu0 %v9169
    %9260 = vmatpush.bf16.msra.mxu0 %v9168
    %9261 = vmatmul.bf16.gmra.mxu0 %v8912
    %v9262 = vpop.f32.mrf.mxu0
    %v9263 = vadd.f32 %v9250, %v9262
    %v9264 = vpop.f32.mrf.mxu0
    %9265 = vdwg.mxu0
    %9266 = vmatpush.bf16.msra.mxu0 %v9183
    %9267 = vmatpush.bf16.msra.mxu0 %v9182
    %9268 = vmatpush.bf16.msra.mxu0 %v9181
    %9269 = vmatpush.bf16.msra.mxu0 %v9180
    %9270 = vmatpush.bf16.msra.mxu0 %v9179
    %9271 = vmatpush.bf16.msra.mxu0 %v9178
    %9272 = vmatpush.bf16.msra.mxu0 %v9177
    %9273 = vmatpush.bf16.msra.mxu0 %v9176
    %9274 = vmatmul.bf16.gmra.mxu0 %v8913
    %v9275 = vpop.f32.mrf.mxu0
    %v9276 = vadd.f32 %v9263, %v9275
    %v9277 = vpop.f32.mrf.mxu0
    %9278 = vdwg.mxu0
    %9279 = vmatpush.bf16.msra.mxu0 %v9191
    %9280 = vmatpush.bf16.msra.mxu0 %v9190
    %9281 = vmatpush.bf16.msra.mxu0 %v9189
    %9282 = vmatpush.bf16.msra.mxu0 %v9188
    %9283 = vmatpush.bf16.msra.mxu0 %v9187
    %9284 = vmatpush.bf16.msra.mxu0 %v9186
    %9285 = vmatpush.bf16.msra.mxu0 %v9185
    %9286 = vmatpush.bf16.msra.mxu0 %v9184
    %9287 = vmatmul.bf16.gmra.mxu0 %v8914
    %v9288 = vpop.f32.mrf.mxu0
    %v9289 = vadd.f32 %v9276, %v9288
    %v9290 = vpop.f32.mrf.mxu0
    %9291 = vdwg.mxu0
    %9292 = vmatpush.bf16.msra.mxu0 %v9199
    %9293 = vmatpush.bf16.msra.mxu0 %v9198
    %9294 = vmatpush.bf16.msra.mxu0 %v9197
    %9295 = vmatpush.bf16.msra.mxu0 %v9196
    %9296 = vmatpush.bf16.msra.mxu0 %v9195
    %9297 = vmatpush.bf16.msra.mxu0 %v9194
    %9298 = vmatpush.bf16.msra.mxu0 %v9193
    %9299 = vmatpush.bf16.msra.mxu0 %v9192
    %9300 = vmatmul.bf16.gmra.mxu0 %v8915
    %v9301 = vpop.f32.mrf.mxu0
    %v9302 = vadd.f32 %v9289, %v9301
    %v9303 = vpop.f32.mrf.mxu0
    %9304 = vdwg.mxu0
    %vm9305 = vcmask 74752
    %9306 = vst.msk [vmem:[#allocation5] sm:$0x3] %vm9305, %v9302
    // Predicated region
    $region50: #{lenet_forward.1} parent=1 // pred_check
      _
    $region51: #{lenet_forward.1} parent=1 // pred_check_branch
      %9308 = sbr.rel (0) target = $region53
    $region52: #{lenet_forward.1} parent=1 // pred_region
      %9310 = vsyncadd [#allocation6], 0
      %s9312 = sshll.u32 [#allocation5], 4
      %s9313 = int_to_ptr.vmem [resolvable:$true] %s9312
      %s9314 = sshll.u32 %s12, 4
      %s9315 = int_to_ptr.hbm [resolvable:$true] %s9314
      %9317 = dma.vmem_to_hbm [thread:$0]  %s9313, 32, %s9315, [#allocation6]
    $region53: #{lenet_forward.1} parent=1 // pred_fallthru
      _
    // Predicated region
    $region54: #{lenet_forward.1} parent=1 // pred_check
      _
    $region55: #{lenet_forward.1} parent=1 // pred_check_branch
      %9319 = sbr.rel (0) target = $region57
    $region56: #{lenet_forward.1} parent=1 // pred_region
      %9321 = dma.done [#allocation6], 32
    $region57: #{lenet_forward.1} parent=1 // pred_fallthru
      _
    %9322 = vsyncpa [#allocation6], 1

</llo_original>
